<compile_context>
chip_gen: v7x
topology: tpu7x:2x2x1
jax: 0.10.0
libtpu: 0.0.40
codegen_flags: <defaults>
</compile_context>

<pallas_src>
import jax
import jax.numpy as jnp
from jax.experimental import pallas as pl
from jax.experimental.pallas import tpu as pltpu

D_MODEL = 32
N_HEADS = 4
HEAD_DIM = D_MODEL // N_HEADS
FFN_DIM = 64
LN_EPS = 1e-5
NEG_INF = -1e9  # stands in for float('-inf') in additive masks


# ----------------------------- kernel helpers ------------------------------

def _layernorm(x, g, b):
    mean = jnp.mean(x, axis=-1, keepdims=True)
    var = jnp.mean(jnp.square(x - mean), axis=-1, keepdims=True)
    return (x - mean) * jax.lax.rsqrt(var + LN_EPS) * g + b


def _softmax(s):
    # exact normalization (review: no approx reciprocal, keeps torch parity)
    s = s - jnp.max(s, axis=-1, keepdims=True)
    p = jnp.exp(s)
    return p / jnp.sum(p, axis=-1, keepdims=True)


def _erf(x):
    # Abramowitz & Stegun 7.1.26 rational approximation (|err| <= 1.5e-7),
    # built only from ops guaranteed to lower in Mosaic (exp, mul/add, where).
    a1, a2, a3, a4, a5 = (0.254829592, -0.284496736, 1.421413741,
                          -1.453152027, 1.061405429)
    pp = 0.3275911
    ax = jnp.abs(x)
    t = 1.0 / (1.0 + pp * ax)
    poly = ((((a5 * t + a4) * t + a3) * t + a2) * t + a1) * t
    y = 1.0 - poly * jnp.exp(-ax * ax)
    return jnp.where(x >= 0, y, -y)


def _gelu_exact(y):
    # matches torch F.gelu default (erf gelu) to ~1e-7
    return 0.5 * y * (1.0 + _erf(y * 0.7071067811865476))


# --------------------------- fused decoder kernel ---------------------------

def _make_decoder_layer_kernel(T, B, S, E, H):
    Dh = E // H

    def kernel(x_ref, enc_ref, causal_ref, dpad_ref, epad_ref,
               sa_q_w, sa_q_b, sa_k_w, sa_k_b, sa_v_w, sa_v_b, sa_o_w, sa_o_b,
               ln1_g, ln1_b,
               ca_q_w, ca_q_b, ca_k_w, ca_k_b, ca_v_w, ca_v_b, ca_o_w, ca_o_b,
               ln2_g, ln2_b,
               fc1_w, fc1_b, fc2_w, fc2_b, ln3_g, ln3_b,
               out_ref, sk_ref, sv_ref, ck_ref, cv_ref):
        f32 = jnp.float32
        causal = causal_ref[...]                                  # (T, T) additive

        # hoist operands that are reused by every batch iteration
        sa_o_bv = sa_o_b[...]
        ca_o_bv = ca_o_b[...]
        ln1_gv, ln1_bv = ln1_g[...], ln1_b[...]
        ln2_gv, ln2_bv = ln2_g[...], ln2_b[...]
        ln3_gv, ln3_bv = ln3_g[...], ln3_b[...]
        fc1_wv, fc1_bv = fc1_w[...], fc1_b[...]
        fc2_wv, fc2_bv = fc2_w[...], fc2_b[...]

        # Fully unrolled: B=2, H=4 -> 8 tiny head problems per attention.
        # TODO(synk): for larger B/H, switch to lax.fori_loop(..., unroll=True)
        # or a batch grid axis with dimension_semantics=("parallel",) so v7x's
        # second TensorCore is used and vreg live ranges stay bounded.
        for b in range(B):
            x_b = x_ref[:, b * E:(b + 1) * E]                     # (T, E)
            enc_b = enc_ref[:, b * E:(b + 1) * E]                 # (S, E)

            # masks computed ONCE per batch (hoisted out of the head loops)
            self_mask = causal + dpad_ref[b:b + 1, :]                     # (T, T)
            cross_mask = jnp.broadcast_to(epad_ref[b:b + 1, :], (T, S))   # (T, S)

            # ---------------------- self attention ----------------------
            sa = None
            for h in range(H):
                # per-head projections: weights pre-split -> results at lane
                # offset 0, no lane-shift slicing anywhere.
                q = jnp.dot(x_b, sa_q_w[h], preferred_element_type=f32) + sa_q_b[h]
                k = jnp.dot(x_b, sa_k_w[h], preferred_element_type=f32) + sa_k_b[h]
                v = jnp.dot(x_b, sa_v_w[h], preferred_element_type=f32) + sa_v_b[h]
                sk_ref[b, h] = k            # K/V caches written directly in their
                sv_ref[b, h] = v            # final (B, H, T, Dh) layout
                s = jax.lax.dot_general(q, k, (((1,), (1,)), ((), ())),
                                        preferred_element_type=f32)      # (T, T)
                ctx = jnp.dot(_softmax(s + self_mask), v,
                              preferred_element_type=f32)                # (T, Dh)
                part = jnp.dot(ctx, sa_o_w[h], preferred_element_type=f32)  # (T, E)
                sa = part if sa is None else sa + part
            # post-LN (normalize_before=False), dropout = identity (inference)
            h1 = _layernorm(x_b + sa + sa_o_bv, ln1_gv, ln1_bv)

            # ---------------------- cross attention ----------------------
            ca = None
            for h in range(H):
                q = jnp.dot(h1, ca_q_w[h], preferred_element_type=f32) + ca_q_b[h]
                k = jnp.dot(enc_b, ca_k_w[h], preferred_element_type=f32) + ca_k_b[h]
                v = jnp.dot(enc_b, ca_v_w[h], preferred_element_type=f32) + ca_v_b[h]
                ck_ref[b, h] = k            # final (B, H, S, Dh) layout
                cv_ref[b, h] = v
                s = jax.lax.dot_general(q, k, (((1,), (1,)), ((), ())),
                                        preferred_element_type=f32)      # (T, S)
                ctx = jnp.dot(_softmax(s + cross_mask), v,
                              preferred_element_type=f32)                # (T, Dh)
                part = jnp.dot(ctx, ca_o_w[h], preferred_element_type=f32)
                ca = part if ca is None else ca + part
            h2 = _layernorm(h1 + ca + ca_o_bv, ln2_gv, ln2_bv)

            # ------------------------ feed forward ------------------------
            ff = jnp.dot(h2, fc1_wv, preferred_element_type=f32) + fc1_bv
            ff = _gelu_exact(ff)
            ff = jnp.dot(ff, fc2_wv, preferred_element_type=f32) + fc2_bv
            out_ref[:, b * E:(b + 1) * E] = _layernorm(h2 + ff, ln3_gv, ln3_bv)

    return kernel


def _fused_decoder_layer(x2d, enc2d, causal, dpad, epad, p, *, T, B, S, E, H):
    Dh = E // H
    f32 = jnp.float32
    return pl.pallas_call(
        _make_decoder_layer_kernel(T, B, S, E, H),
        out_shape=(
            jax.ShapeDtypeStruct((T, B * E), f32),     # layer output (time-major slab)
            jax.ShapeDtypeStruct((B, H, T, Dh), f32),  # self-attn K cache (final layout)
            jax.ShapeDtypeStruct((B, H, T, Dh), f32),  # self-attn V cache
            jax.ShapeDtypeStruct((B, H, S, Dh), f32),  # cross-attn K cache
            jax.ShapeDtypeStruct((B, H, S, Dh), f32),  # cross-attn V cache
        ),
        # everything (weights + activations) is << 1 MiB; limit set explicitly so
        # the same kernel stays inside the smaller v7x scoped-VMEM budget.
        compiler_params=pltpu.CompilerParams(vmem_limit_bytes=32 * 1024 * 1024),
    )(x2d, enc2d, causal, dpad, epad,
      p["sa_q_w"], p["sa_q_b"], p["sa_k_w"], p["sa_k_b"], p["sa_v_w"], p["sa_v_b"],
      p["sa_o_w"], p["sa_o_b"], p["ln1_g"], p["ln1_b"],
      p["ca_q_w"], p["ca_q_b"], p["ca_k_w"], p["ca_k_b"], p["ca_v_w"], p["ca_v_b"],
      p["ca_o_w"], p["ca_o_b"], p["ln2_g"], p["ln2_b"],
      p["fc1_w"], p["fc1_b"], p["fc2_w"], p["fc2_b"], p["ln3_g"], p["ln3_b"])


# ------------------------------ module forward ------------------------------

def _to_additive(mask, shape):
    """bool(True=masked) or additive float mask -> additive f32 of `shape`."""
    if mask is None:
        return jnp.zeros(shape, jnp.float32)
    if mask.dtype == jnp.bool_:
        return jnp.where(mask, NEG_INF, 0.0).astype(jnp.float32)
    return jnp.broadcast_to(mask.astype(jnp.float32), shape)


def decoder_layer_forward(params, x, encoder_hidden_states,
                          encoder_attn_mask=None, causal_mask=None,
                          decoder_padding_mask=None):
    """Mirrors DecoderLayer.forward for the fresh-state (no incremental cache) case.

    x: (T, B, E); encoder_hidden_states: (S, B, E);
    causal_mask: additive (T, T); encoder_attn_mask / decoder_padding_mask:
    bool (B, S)/(B, T) with True = masked (or additive float).
    """
    # TODO(synk): incremental-decoding cache *consumption* (_use_saved_state /
    # reusing a passed-in layer_state) is not implemented; fresh-state path only.
    T, B, E = x.shape
    S = encoder_hidden_states.shape[0]
    H, Dh = N_HEADS, HEAD_DIM

    # trailing-dim merges are layout-preserving bitcasts (no transpose, no HBM
    # round trip) -- the kernel does all per-batch layout work in VMEM.
    x2d = x.reshape(T, B * E)
    enc2d = encoder_hidden_states.reshape(S, B * E)

    causal = (jnp.zeros((T, T), jnp.float32) if causal_mask is None
              else jnp.broadcast_to(causal_mask.astype(jnp.float32), (T, T)))
    dpad = _to_additive(decoder_padding_mask, (B, T))
    epad = _to_additive(encoder_attn_mask, (B, S))

    out2d, sk, sv, ck, cv = _fused_decoder_layer(
        x2d, enc2d, causal, dpad, epad, params, T=T, B=B, S=S, E=E, H=H)

    out = out2d.reshape(T, B, E)                      # free trailing-dim split
    layer_state = {
        "self": {
            "prev_key": sk,                           # (B, H, T, Dh), no reshapes
            "prev_value": sv,
            "prev_key_padding_mask": decoder_padding_mask,
        },
        "encoder_decoder": {
            "prev_key": ck,                           # (B, H, S, Dh)
            "prev_value": cv,
            "prev_key_padding_mask": None,
        },
    }
    self_attn_weights = None  # output_attentions=False
    return out, self_attn_weights, layer_state


# ------------------------------ param handling ------------------------------

def _init_attn_params(key):
    ks = jax.random.split(key, 8)

    def w(k, din, dout):
        return jax.random.normal(k, (din, dout), jnp.float32) * 0.02

    def b(k, d):
        return jax.random.normal(k, (d,), jnp.float32) * 0.01

    return {
        "q_w": w(ks[0], D_MODEL, D_MODEL), "q_b": b(ks[1], D_MODEL),
        "k_w": w(ks[2], D_MODEL, D_MODEL), "k_b": b(ks[3], D_MODEL),
        "v_w": w(ks[4], D_MODEL, D_MODEL), "v_b": b(ks[5], D_MODEL),
        "o_w": w(ks[6], D_MODEL, D_MODEL), "o_b": b(ks[7], D_MODEL),
    }


def init_params(key):
    ks = jax.random.split(key, 6)
    return {
        "self_attn": _init_attn_params(ks[0]),
        "encoder_attn": _init_attn_params(ks[1]),
        "fc1_w": jax.random.normal(ks[2], (D_MODEL, FFN_DIM), jnp.float32) * 0.02,
        "fc1_b": jax.random.normal(ks[3], (FFN_DIM,), jnp.float32) * 0.01,
        "fc2_w": jax.random.normal(ks[4], (FFN_DIM, D_MODEL), jnp.float32) * 0.02,
        "fc2_b": jax.random.normal(ks[5], (D_MODEL,), jnp.float32) * 0.01,
        "ln1_g": jnp.ones((D_MODEL,), jnp.float32),
        "ln1_b": jnp.zeros((D_MODEL,), jnp.float32),
        "ln2_g": jnp.ones((D_MODEL,), jnp.float32),
        "ln2_b": jnp.zeros((D_MODEL,), jnp.float32),
        "ln3_g": jnp.ones((D_MODEL,), jnp.float32),
        "ln3_b": jnp.zeros((D_MODEL,), jnp.float32),
    }


def prepare_params(raw):
    """One-time prep: split Q/K/V/out weights per head (so the kernel never does
    lane-offset head slicing), fold 1/sqrt(Dh) into q, make biases 2-D rows."""
    H, Dh, E = N_HEADS, HEAD_DIM, D_MODEL
    scaling = Dh ** (-0.5)
    sa, ca = raw["self_attn"], raw["encoder_attn"]

    heads_w = lambda w: w.reshape(E, H, Dh).transpose(1, 0, 2)   # (H, E, Dh)
    heads_b = lambda v: v.reshape(H, 1, Dh)                      # (H, 1, Dh)
    heads_o = lambda w: w.reshape(H, Dh, E)                      # (H, Dh, E)
    row = lambda v: v.reshape(1, -1)

    return {
        # self attention (q pre-scaled)
        "sa_q_w": heads_w(sa["q_w"] * scaling), "sa_q_b": heads_b(sa["q_b"] * scaling),
        "sa_k_w": heads_w(sa["k_w"]), "sa_k_b": heads_b(sa["k_b"]),
        "sa_v_w": heads_w(sa["v_w"]), "sa_v_b": heads_b(sa["v_b"]),
        "sa_o_w": heads_o(sa["o_w"]), "sa_o_b": row(sa["o_b"]),
        "ln1_g": row(raw["ln1_g"]), "ln1_b": row(raw["ln1_b"]),
        # cross attention (q pre-scaled)
        "ca_q_w": heads_w(ca["q_w"] * scaling), "ca_q_b": heads_b(ca["q_b"] * scaling),
        "ca_k_w": heads_w(ca["k_w"]), "ca_k_b": heads_b(ca["k_b"]),
        "ca_v_w": heads_w(ca["v_w"]), "ca_v_b": heads_b(ca["v_b"]),
        "ca_o_w": heads_o(ca["o_w"]), "ca_o_b": row(ca["o_b"]),
        "ln2_g": row(raw["ln2_g"]), "ln2_b": row(raw["ln2_b"]),
        # FFN
        "fc1_w": raw["fc1_w"], "fc1_b": row(raw["fc1_b"]),
        "fc2_w": raw["fc2_w"], "fc2_b": row(raw["fc2_b"]),
        "ln3_g": row(raw["ln3_g"]), "ln3_b": row(raw["ln3_b"]),
    }


# --------------------------------- main ------------------------------------

if __name__ == "__main__":
    key = jax.random.PRNGKey(0)
    k_p, k_x, k_enc = jax.random.split(key, 3)

    T, B, S_ENC = 8, 2, 10
    params = prepare_params(init_params(k_p))

    x = jax.random.normal(k_x, (T, B, D_MODEL), jnp.float32)            # (T, B, E)
    enc = jax.random.normal(k_enc, (S_ENC, B, D_MODEL), jnp.float32)    # (S, B, E)

    # causal (future-masking) additive mask (T, T)
    causal_mask = jnp.where(
        jnp.arange(T)[:, None] >= jnp.arange(T)[None, :], 0.0, NEG_INF
    ).astype(jnp.float32)

    # encoder key-padding mask: last 2 encoder positions of batch 1 are padding
    encoder_attn_mask = jnp.zeros((B, S_ENC), jnp.bool_).at[1, -2:].set(True)

    fwd = jax.jit(decoder_layer_forward)
    out, self_attn_weights, layer_state = fwd(
        params, x, enc,
        encoder_attn_mask=encoder_attn_mask,
        causal_mask=causal_mask,
        decoder_padding_mask=None,
    )

    out = jax.block_until_ready(out)
    jax.block_until_ready(layer_state["self"]["prev_key"])
    assert out.shape == (T, B, D_MODEL)
    assert self_attn_weights is None
    assert layer_state["self"]["prev_key"].shape == (B, N_HEADS, T, HEAD_DIM)
    assert layer_state["self"]["prev_value"].shape == (B, N_HEADS, T, HEAD_DIM)
    assert layer_state["encoder_decoder"]["prev_key"].shape == (B, N_HEADS, S_ENC, HEAD_DIM)
    assert layer_state["encoder_decoder"]["prev_value"].shape == (B, N_HEADS, S_ENC, HEAD_DIM)
    print("KERNEL_OK")
</pallas_src>

<mosaic_0001>
module attributes {stable_mosaic.version = 11 : i64} {
  func.func @kernel(%arg0: memref<8x64xf32, #tpu.memory_space<vmem>>, %arg1: memref<10x64xf32, #tpu.memory_space<vmem>>, %arg2: memref<8x8xf32, #tpu.memory_space<vmem>>, %arg3: memref<2x8xf32, #tpu.memory_space<vmem>>, %arg4: memref<2x10xf32, #tpu.memory_space<vmem>>, %arg5: memref<4x32x8xf32, #tpu.memory_space<vmem>>, %arg6: memref<4x1x8xf32, #tpu.memory_space<vmem>>, %arg7: memref<4x32x8xf32, #tpu.memory_space<vmem>>, %arg8: memref<4x1x8xf32, #tpu.memory_space<vmem>>, %arg9: memref<4x32x8xf32, #tpu.memory_space<vmem>>, %arg10: memref<4x1x8xf32, #tpu.memory_space<vmem>>, %arg11: memref<4x8x32xf32, #tpu.memory_space<vmem>>, %arg12: memref<1x32xf32, #tpu.memory_space<vmem>>, %arg13: memref<1x32xf32, #tpu.memory_space<vmem>>, %arg14: memref<1x32xf32, #tpu.memory_space<vmem>>, %arg15: memref<4x32x8xf32, #tpu.memory_space<vmem>>, %arg16: memref<4x1x8xf32, #tpu.memory_space<vmem>>, %arg17: memref<4x32x8xf32, #tpu.memory_space<vmem>>, %arg18: memref<4x1x8xf32, #tpu.memory_space<vmem>>, %arg19: memref<4x32x8xf32, #tpu.memory_space<vmem>>, %arg20: memref<4x1x8xf32, #tpu.memory_space<vmem>>, %arg21: memref<4x8x32xf32, #tpu.memory_space<vmem>>, %arg22: memref<1x32xf32, #tpu.memory_space<vmem>>, %arg23: memref<1x32xf32, #tpu.memory_space<vmem>>, %arg24: memref<1x32xf32, #tpu.memory_space<vmem>>, %arg25: memref<32x64xf32, #tpu.memory_space<vmem>>, %arg26: memref<1x64xf32, #tpu.memory_space<vmem>>, %arg27: memref<64x32xf32, #tpu.memory_space<vmem>>, %arg28: memref<1x32xf32, #tpu.memory_space<vmem>>, %arg29: memref<1x32xf32, #tpu.memory_space<vmem>>, %arg30: memref<1x32xf32, #tpu.memory_space<vmem>>, %arg31: memref<8x64xf32, #tpu.memory_space<vmem>>, %arg32: memref<2x4x8x8xf32, #tpu.memory_space<vmem>>, %arg33: memref<2x4x8x8xf32, #tpu.memory_space<vmem>>, %arg34: memref<2x4x10x8xf32, #tpu.memory_space<vmem>>, %arg35: memref<2x4x10x8xf32, #tpu.memory_space<vmem>>) attributes {dimension_semantics = [], scalar_prefetch = 0 : i64, scratch_operands = 0 : i64, tpu.core_type = #tpu.core_type<tc>} {
    %c0 = arith.constant 0 : index
    %c0_0 = arith.constant 0 : index
    %0 = vector.load %arg2[%c0, %c0_0] : memref<8x8xf32, #tpu.memory_space<vmem>>, vector<8x8xf32>
    %c0_1 = arith.constant 0 : index
    %c0_2 = arith.constant 0 : index
    %1 = vector.load %arg12[%c0_1, %c0_2] : memref<1x32xf32, #tpu.memory_space<vmem>>, vector<1x32xf32>
    %c0_3 = arith.constant 0 : index
    %c0_4 = arith.constant 0 : index
    %2 = vector.load %arg22[%c0_3, %c0_4] : memref<1x32xf32, #tpu.memory_space<vmem>>, vector<1x32xf32>
    %c0_5 = arith.constant 0 : index
    %c0_6 = arith.constant 0 : index
    %3 = vector.load %arg13[%c0_5, %c0_6] : memref<1x32xf32, #tpu.memory_space<vmem>>, vector<1x32xf32>
    %c0_7 = arith.constant 0 : index
    %c0_8 = arith.constant 0 : index
    %4 = vector.load %arg14[%c0_7, %c0_8] : memref<1x32xf32, #tpu.memory_space<vmem>>, vector<1x32xf32>
    %c0_9 = arith.constant 0 : index
    %c0_10 = arith.constant 0 : index
    %5 = vector.load %arg23[%c0_9, %c0_10] : memref<1x32xf32, #tpu.memory_space<vmem>>, vector<1x32xf32>
    %c0_11 = arith.constant 0 : index
    %c0_12 = arith.constant 0 : index
    %6 = vector.load %arg24[%c0_11, %c0_12] : memref<1x32xf32, #tpu.memory_space<vmem>>, vector<1x32xf32>
    %c0_13 = arith.constant 0 : index
    %c0_14 = arith.constant 0 : index
    %7 = vector.load %arg29[%c0_13, %c0_14] : memref<1x32xf32, #tpu.memory_space<vmem>>, vector<1x32xf32>
    %c0_15 = arith.constant 0 : index
    %c0_16 = arith.constant 0 : index
    %8 = vector.load %arg30[%c0_15, %c0_16] : memref<1x32xf32, #tpu.memory_space<vmem>>, vector<1x32xf32>
    %c0_17 = arith.constant 0 : index
    %c0_18 = arith.constant 0 : index
    %9 = vector.load %arg25[%c0_17, %c0_18] : memref<32x64xf32, #tpu.memory_space<vmem>>, vector<32x64xf32>
    %c0_19 = arith.constant 0 : index
    %c0_20 = arith.constant 0 : index
    %10 = vector.load %arg26[%c0_19, %c0_20] : memref<1x64xf32, #tpu.memory_space<vmem>>, vector<1x64xf32>
    %c0_21 = arith.constant 0 : index
    %c0_22 = arith.constant 0 : index
    %11 = vector.load %arg27[%c0_21, %c0_22] : memref<64x32xf32, #tpu.memory_space<vmem>>, vector<64x32xf32>
    %c0_23 = arith.constant 0 : index
    %c0_24 = arith.constant 0 : index
    %12 = vector.load %arg28[%c0_23, %c0_24] : memref<1x32xf32, #tpu.memory_space<vmem>>, vector<1x32xf32>
    %c0_25 = arith.constant 0 : index
    %c0_26 = arith.constant 0 : index
    %13 = vector.load %arg0[%c0_25, %c0_26] : memref<8x64xf32, #tpu.memory_space<vmem>>, vector<8x32xf32>
    %c0_27 = arith.constant 0 : index
    %c0_28 = arith.constant 0 : index
    %14 = vector.load %arg1[%c0_27, %c0_28] : memref<10x64xf32, #tpu.memory_space<vmem>>, vector<10x32xf32>
    %c0_29 = arith.constant 0 : index
    %c0_30 = arith.constant 0 : index
    %15 = vector.load %arg3[%c0_29, %c0_30] : memref<2x8xf32, #tpu.memory_space<vmem>>, vector<1x8xf32>
    %16 = vector.broadcast %15 : vector<1x8xf32> to vector<8x8xf32>
    %17 = arith.addf %0, %16 : vector<8x8xf32>
    %c0_31 = arith.constant 0 : index
    %c0_32 = arith.constant 0 : index
    %18 = vector.load %arg4[%c0_31, %c0_32] : memref<2x10xf32, #tpu.memory_space<vmem>>, vector<1x10xf32>
    %19 = vector.shape_cast %18 : vector<1x10xf32> to vector<1x10xf32>
    %20 = vector.broadcast %19 : vector<1x10xf32> to vector<8x10xf32>
    %c0_33 = arith.constant 0 : index
    %c0_34 = arith.constant 0 : index
    %c0_35 = arith.constant 0 : index
    %21 = vector.load %arg5[%c0_33, %c0_34, %c0_35] : memref<4x32x8xf32, #tpu.memory_space<vmem>>, vector<1x32x8xf32>
    %22 = vector.shape_cast %21 : vector<1x32x8xf32> to vector<32x8xf32>
    %cst = arith.constant dense<0.000000e+00> : vector<8x8xf32>
    %23 = tpu.matmul %13, %22, %cst {dimension_numbers = #tpu.dot_dimension_numbers<[1], [0], [0], [1], [0, 0, 1, 1], [], []>} : vector<8x32xf32>, vector<32x8xf32>, vector<8x8xf32> -> vector<8x8xf32>
    %c0_36 = arith.constant 0 : index
    %c0_37 = arith.constant 0 : index
    %c0_38 = arith.constant 0 : index
    %24 = vector.load %arg6[%c0_36, %c0_37, %c0_38] : memref<4x1x8xf32, #tpu.memory_space<vmem>>, vector<1x1x8xf32>
    %25 = vector.shape_cast %24 : vector<1x1x8xf32> to vector<1x8xf32>
    %26 = vector.broadcast %25 : vector<1x8xf32> to vector<8x8xf32>
    %27 = arith.addf %23, %26 : vector<8x8xf32>
    %c0_39 = arith.constant 0 : index
    %c0_40 = arith.constant 0 : index
    %c0_41 = arith.constant 0 : index
    %28 = vector.load %arg7[%c0_39, %c0_40, %c0_41] : memref<4x32x8xf32, #tpu.memory_space<vmem>>, vector<1x32x8xf32>
    %29 = vector.shape_cast %28 : vector<1x32x8xf32> to vector<32x8xf32>
    %cst_42 = arith.constant dense<0.000000e+00> : vector<8x8xf32>
    %30 = tpu.matmul %13, %29, %cst_42 {dimension_numbers = #tpu.dot_dimension_numbers<[1], [0], [0], [1], [0, 0, 1, 1], [], []>} : vector<8x32xf32>, vector<32x8xf32>, vector<8x8xf32> -> vector<8x8xf32>
    %c0_43 = arith.constant 0 : index
    %c0_44 = arith.constant 0 : index
    %c0_45 = arith.constant 0 : index
    %31 = vector.load %arg8[%c0_43, %c0_44, %c0_45] : memref<4x1x8xf32, #tpu.memory_space<vmem>>, vector<1x1x8xf32>
    %32 = vector.shape_cast %31 : vector<1x1x8xf32> to vector<1x8xf32>
    %33 = vector.broadcast %32 : vector<1x8xf32> to vector<8x8xf32>
    %34 = arith.addf %30, %33 : vector<8x8xf32>
    %c0_46 = arith.constant 0 : index
    %c0_47 = arith.constant 0 : index
    %c0_48 = arith.constant 0 : index
    %35 = vector.load %arg9[%c0_46, %c0_47, %c0_48] : memref<4x32x8xf32, #tpu.memory_space<vmem>>, vector<1x32x8xf32>
    %36 = vector.shape_cast %35 : vector<1x32x8xf32> to vector<32x8xf32>
    %cst_49 = arith.constant dense<0.000000e+00> : vector<8x8xf32>
    %37 = tpu.matmul %13, %36, %cst_49 {dimension_numbers = #tpu.dot_dimension_numbers<[1], [0], [0], [1], [0, 0, 1, 1], [], []>} : vector<8x32xf32>, vector<32x8xf32>, vector<8x8xf32> -> vector<8x8xf32>
    %c0_50 = arith.constant 0 : index
    %c0_51 = arith.constant 0 : index
    %c0_52 = arith.constant 0 : index
    %38 = vector.load %arg10[%c0_50, %c0_51, %c0_52] : memref<4x1x8xf32, #tpu.memory_space<vmem>>, vector<1x1x8xf32>
    %39 = vector.shape_cast %38 : vector<1x1x8xf32> to vector<1x8xf32>
    %40 = vector.broadcast %39 : vector<1x8xf32> to vector<8x8xf32>
    %41 = arith.addf %37, %40 : vector<8x8xf32>
    %c0_53 = arith.constant 0 : index
    %c0_54 = arith.constant 0 : index
    %c0_55 = arith.constant 0 : index
    %c0_56 = arith.constant 0 : index
    %42 = vector.load %arg32[%c0_53, %c0_54, %c0_55, %c0_56] : memref<2x4x8x8xf32, #tpu.memory_space<vmem>>, vector<1x1x8x8xf32>
    %43 = vector.shape_cast %42 : vector<1x1x8x8xf32> to vector<8x8xf32>
    %44 = vector.shape_cast %34 : vector<8x8xf32> to vector<1x1x8x8xf32>
    tpu.vector_store %arg32[%c0_53, %c0_54, %c0_55, %c0_56], %44 {strides = array<i32>} : memref<2x4x8x8xf32, #tpu.memory_space<vmem>>, vector<1x1x8x8xf32>,
    %c0_57 = arith.constant 0 : index
    %c0_58 = arith.constant 0 : index
    %c0_59 = arith.constant 0 : index
    %c0_60 = arith.constant 0 : index
    %45 = vector.load %arg33[%c0_57, %c0_58, %c0_59, %c0_60] : memref<2x4x8x8xf32, #tpu.memory_space<vmem>>, vector<1x1x8x8xf32>
    %46 = vector.shape_cast %45 : vector<1x1x8x8xf32> to vector<8x8xf32>
    %47 = vector.shape_cast %41 : vector<8x8xf32> to vector<1x1x8x8xf32>
    tpu.vector_store %arg33[%c0_57, %c0_58, %c0_59, %c0_60], %47 {strides = array<i32>} : memref<2x4x8x8xf32, #tpu.memory_space<vmem>>, vector<1x1x8x8xf32>,
    %cst_61 = arith.constant dense<0.000000e+00> : vector<8x8xf32>
    %48 = tpu.matmul %27, %34, %cst_61 {dimension_numbers = #tpu.dot_dimension_numbers<[1], [1], [0], [0], [0, 0, 1, 0], [], []>} : vector<8x8xf32>, vector<8x8xf32>, vector<8x8xf32> -> vector<8x8xf32>
    %49 = arith.addf %48, %17 : vector<8x8xf32>
    %cst_62 = arith.constant dense<0xFF800000> : vector<8xf32>
    %50 = vector.multi_reduction <maximumf>, %49, %cst_62 [1] : vector<8x8xf32> to vector<8xf32>
    %51 = vector.shape_cast %50 : vector<8xf32> to vector<8x1xf32>
    %52 = vector.broadcast %51 : vector<8x1xf32> to vector<8x8xf32>
    %53 = arith.subf %49, %52 : vector<8x8xf32>
    %54 = math.exp %53 : vector<8x8xf32>
    %cst_63 = arith.constant dense<0.000000e+00> : vector<8xf32>
    %55 = vector.multi_reduction <add>, %54, %cst_63 [1] : vector<8x8xf32> to vector<8xf32>
    %56 = vector.shape_cast %55 : vector<8xf32> to vector<8x1xf32>
    %57 = vector.broadcast %56 : vector<8x1xf32> to vector<8x8xf32>
    %58 = arith.divf %54, %57 : vector<8x8xf32>
    %cst_64 = arith.constant dense<0.000000e+00> : vector<8x8xf32>
    %59 = tpu.matmul %58, %41, %cst_64 {dimension_numbers = #tpu.dot_dimension_numbers<[1], [0], [0], [1], [0, 0, 1, 1], [], []>} : vector<8x8xf32>, vector<8x8xf32>, vector<8x8xf32> -> vector<8x8xf32>
    %c0_65 = arith.constant 0 : index
    %c0_66 = arith.constant 0 : index
    %c0_67 = arith.constant 0 : index
    %60 = vector.load %arg11[%c0_65, %c0_66, %c0_67] : memref<4x8x32xf32, #tpu.memory_space<vmem>>, vector<1x8x32xf32>
    %61 = vector.shape_cast %60 : vector<1x8x32xf32> to vector<8x32xf32>
    %cst_68 = arith.constant dense<0.000000e+00> : vector<8x32xf32>
    %62 = tpu.matmul %59, %61, %cst_68 {dimension_numbers = #tpu.dot_dimension_numbers<[1], [0], [0], [1], [0, 0, 1, 1], [], []>} : vector<8x8xf32>, vector<8x32xf32>, vector<8x32xf32> -> vector<8x32xf32>
    %c1 = arith.constant 1 : index
    %c0_69 = arith.constant 0 : index
    %c0_70 = arith.constant 0 : index
    %63 = vector.load %arg5[%c1, %c0_69, %c0_70] : memref<4x32x8xf32, #tpu.memory_space<vmem>>, vector<1x32x8xf32>
    %64 = vector.shape_cast %63 : vector<1x32x8xf32> to vector<32x8xf32>
    %cst_71 = arith.constant dense<0.000000e+00> : vector<8x8xf32>
    %65 = tpu.matmul %13, %64, %cst_71 {dimension_numbers = #tpu.dot_dimension_numbers<[1], [0], [0], [1], [0, 0, 1, 1], [], []>} : vector<8x32xf32>, vector<32x8xf32>, vector<8x8xf32> -> vector<8x8xf32>
    %c1_72 = arith.constant 1 : index
    %c0_73 = arith.constant 0 : index
    %c0_74 = arith.constant 0 : index
    %66 = vector.load %arg6[%c1_72, %c0_73, %c0_74] : memref<4x1x8xf32, #tpu.memory_space<vmem>>, vector<1x1x8xf32>
    %67 = vector.shape_cast %66 : vector<1x1x8xf32> to vector<1x8xf32>
    %68 = vector.broadcast %67 : vector<1x8xf32> to vector<8x8xf32>
    %69 = arith.addf %65, %68 : vector<8x8xf32>
    %c1_75 = arith.constant 1 : index
    %c0_76 = arith.constant 0 : index
    %c0_77 = arith.constant 0 : index
    %70 = vector.load %arg7[%c1_75, %c0_76, %c0_77] : memref<4x32x8xf32, #tpu.memory_space<vmem>>, vector<1x32x8xf32>
    %71 = vector.shape_cast %70 : vector<1x32x8xf32> to vector<32x8xf32>
    %cst_78 = arith.constant dense<0.000000e+00> : vector<8x8xf32>
    %72 = tpu.matmul %13, %71, %cst_78 {dimension_numbers = #tpu.dot_dimension_numbers<[1], [0], [0], [1], [0, 0, 1, 1], [], []>} : vector<8x32xf32>, vector<32x8xf32>, vector<8x8xf32> -> vector<8x8xf32>
    %c1_79 = arith.constant 1 : index
    %c0_80 = arith.constant 0 : index
    %c0_81 = arith.constant 0 : index
    %73 = vector.load %arg8[%c1_79, %c0_80, %c0_81] : memref<4x1x8xf32, #tpu.memory_space<vmem>>, vector<1x1x8xf32>
    %74 = vector.shape_cast %73 : vector<1x1x8xf32> to vector<1x8xf32>
    %75 = vector.broadcast %74 : vector<1x8xf32> to vector<8x8xf32>
    %76 = arith.addf %72, %75 : vector<8x8xf32>
    %c1_82 = arith.constant 1 : index
    %c0_83 = arith.constant 0 : index
    %c0_84 = arith.constant 0 : index
    %77 = vector.load %arg9[%c1_82, %c0_83, %c0_84] : memref<4x32x8xf32, #tpu.memory_space<vmem>>, vector<1x32x8xf32>
    %78 = vector.shape_cast %77 : vector<1x32x8xf32> to vector<32x8xf32>
    %cst_85 = arith.constant dense<0.000000e+00> : vector<8x8xf32>
    %79 = tpu.matmul %13, %78, %cst_85 {dimension_numbers = #tpu.dot_dimension_numbers<[1], [0], [0], [1], [0, 0, 1, 1], [], []>} : vector<8x32xf32>, vector<32x8xf32>, vector<8x8xf32> -> vector<8x8xf32>
    %c1_86 = arith.constant 1 : index
    %c0_87 = arith.constant 0 : index
    %c0_88 = arith.constant 0 : index
    %80 = vector.load %arg10[%c1_86, %c0_87, %c0_88] : memref<4x1x8xf32, #tpu.memory_space<vmem>>, vector<1x1x8xf32>
    %81 = vector.shape_cast %80 : vector<1x1x8xf32> to vector<1x8xf32>
    %82 = vector.broadcast %81 : vector<1x8xf32> to vector<8x8xf32>
    %83 = arith.addf %79, %82 : vector<8x8xf32>
    %c0_89 = arith.constant 0 : index
    %c1_90 = arith.constant 1 : index
    %c0_91 = arith.constant 0 : index
    %c0_92 = arith.constant 0 : index
    %84 = vector.load %arg32[%c0_89, %c1_90, %c0_91, %c0_92] : memref<2x4x8x8xf32, #tpu.memory_space<vmem>>, vector<1x1x8x8xf32>
    %85 = vector.shape_cast %84 : vector<1x1x8x8xf32> to vector<8x8xf32>
    %86 = vector.shape_cast %76 : vector<8x8xf32> to vector<1x1x8x8xf32>
    tpu.vector_store %arg32[%c0_89, %c1_90, %c0_91, %c0_92], %86 {strides = array<i32>} : memref<2x4x8x8xf32, #tpu.memory_space<vmem>>, vector<1x1x8x8xf32>,
    %c0_93 = arith.constant 0 : index
    %c1_94 = arith.constant 1 : index
    %c0_95 = arith.constant 0 : index
    %c0_96 = arith.constant 0 : index
    %87 = vector.load %arg33[%c0_93, %c1_94, %c0_95, %c0_96] : memref<2x4x8x8xf32, #tpu.memory_space<vmem>>, vector<1x1x8x8xf32>
    %88 = vector.shape_cast %87 : vector<1x1x8x8xf32> to vector<8x8xf32>
    %89 = vector.shape_cast %83 : vector<8x8xf32> to vector<1x1x8x8xf32>
    tpu.vector_store %arg33[%c0_93, %c1_94, %c0_95, %c0_96], %89 {strides = array<i32>} : memref<2x4x8x8xf32, #tpu.memory_space<vmem>>, vector<1x1x8x8xf32>,
    %cst_97 = arith.constant dense<0.000000e+00> : vector<8x8xf32>
    %90 = tpu.matmul %69, %76, %cst_97 {dimension_numbers = #tpu.dot_dimension_numbers<[1], [1], [0], [0], [0, 0, 1, 0], [], []>} : vector<8x8xf32>, vector<8x8xf32>, vector<8x8xf32> -> vector<8x8xf32>
    %91 = arith.addf %90, %17 : vector<8x8xf32>
    %cst_98 = arith.constant dense<0xFF800000> : vector<8xf32>
    %92 = vector.multi_reduction <maximumf>, %91, %cst_98 [1] : vector<8x8xf32> to vector<8xf32>
    %93 = vector.shape_cast %92 : vector<8xf32> to vector<8x1xf32>
    %94 = vector.broadcast %93 : vector<8x1xf32> to vector<8x8xf32>
    %95 = arith.subf %91, %94 : vector<8x8xf32>
    %96 = math.exp %95 : vector<8x8xf32>
    %cst_99 = arith.constant dense<0.000000e+00> : vector<8xf32>
    %97 = vector.multi_reduction <add>, %96, %cst_99 [1] : vector<8x8xf32> to vector<8xf32>
    %98 = vector.shape_cast %97 : vector<8xf32> to vector<8x1xf32>
    %99 = vector.broadcast %98 : vector<8x1xf32> to vector<8x8xf32>
    %100 = arith.divf %96, %99 : vector<8x8xf32>
    %cst_100 = arith.constant dense<0.000000e+00> : vector<8x8xf32>
    %101 = tpu.matmul %100, %83, %cst_100 {dimension_numbers = #tpu.dot_dimension_numbers<[1], [0], [0], [1], [0, 0, 1, 1], [], []>} : vector<8x8xf32>, vector<8x8xf32>, vector<8x8xf32> -> vector<8x8xf32>
    %c1_101 = arith.constant 1 : index
    %c0_102 = arith.constant 0 : index
    %c0_103 = arith.constant 0 : index
    %102 = vector.load %arg11[%c1_101, %c0_102, %c0_103] : memref<4x8x32xf32, #tpu.memory_space<vmem>>, vector<1x8x32xf32>
    %103 = vector.shape_cast %102 : vector<1x8x32xf32> to vector<8x32xf32>
    %cst_104 = arith.constant dense<0.000000e+00> : vector<8x32xf32>
    %104 = tpu.matmul %101, %103, %cst_104 {dimension_numbers = #tpu.dot_dimension_numbers<[1], [0], [0], [1], [0, 0, 1, 1], [], []>} : vector<8x8xf32>, vector<8x32xf32>, vector<8x32xf32> -> vector<8x32xf32>
    %105 = arith.addf %62, %104 : vector<8x32xf32>
    %c2 = arith.constant 2 : index
    %c0_105 = arith.constant 0 : index
    %c0_106 = arith.constant 0 : index
    %106 = vector.load %arg5[%c2, %c0_105, %c0_106] : memref<4x32x8xf32, #tpu.memory_space<vmem>>, vector<1x32x8xf32>
    %107 = vector.shape_cast %106 : vector<1x32x8xf32> to vector<32x8xf32>
    %cst_107 = arith.constant dense<0.000000e+00> : vector<8x8xf32>
    %108 = tpu.matmul %13, %107, %cst_107 {dimension_numbers = #tpu.dot_dimension_numbers<[1], [0], [0], [1], [0, 0, 1, 1], [], []>} : vector<8x32xf32>, vector<32x8xf32>, vector<8x8xf32> -> vector<8x8xf32>
    %c2_108 = arith.constant 2 : index
    %c0_109 = arith.constant 0 : index
    %c0_110 = arith.constant 0 : index
    %109 = vector.load %arg6[%c2_108, %c0_109, %c0_110] : memref<4x1x8xf32, #tpu.memory_space<vmem>>, vector<1x1x8xf32>
    %110 = vector.shape_cast %109 : vector<1x1x8xf32> to vector<1x8xf32>
    %111 = vector.broadcast %110 : vector<1x8xf32> to vector<8x8xf32>
    %112 = arith.addf %108, %111 : vector<8x8xf32>
    %c2_111 = arith.constant 2 : index
    %c0_112 = arith.constant 0 : index
    %c0_113 = arith.constant 0 : index
    %113 = vector.load %arg7[%c2_111, %c0_112, %c0_113] : memref<4x32x8xf32, #tpu.memory_space<vmem>>, vector<1x32x8xf32>
    %114 = vector.shape_cast %113 : vector<1x32x8xf32> to vector<32x8xf32>
    %cst_114 = arith.constant dense<0.000000e+00> : vector<8x8xf32>
    %115 = tpu.matmul %13, %114, %cst_114 {dimension_numbers = #tpu.dot_dimension_numbers<[1], [0], [0], [1], [0, 0, 1, 1], [], []>} : vector<8x32xf32>, vector<32x8xf32>, vector<8x8xf32> -> vector<8x8xf32>
    %c2_115 = arith.constant 2 : index
    %c0_116 = arith.constant 0 : index
    %c0_117 = arith.constant 0 : index
    %116 = vector.load %arg8[%c2_115, %c0_116, %c0_117] : memref<4x1x8xf32, #tpu.memory_space<vmem>>, vector<1x1x8xf32>
    %117 = vector.shape_cast %116 : vector<1x1x8xf32> to vector<1x8xf32>
    %118 = vector.broadcast %117 : vector<1x8xf32> to vector<8x8xf32>
    %119 = arith.addf %115, %118 : vector<8x8xf32>
    %c2_118 = arith.constant 2 : index
    %c0_119 = arith.constant 0 : index
    %c0_120 = arith.constant 0 : index
    %120 = vector.load %arg9[%c2_118, %c0_119, %c0_120] : memref<4x32x8xf32, #tpu.memory_space<vmem>>, vector<1x32x8xf32>
    %121 = vector.shape_cast %120 : vector<1x32x8xf32> to vector<32x8xf32>
    %cst_121 = arith.constant dense<0.000000e+00> : vector<8x8xf32>
    %122 = tpu.matmul %13, %121, %cst_121 {dimension_numbers = #tpu.dot_dimension_numbers<[1], [0], [0], [1], [0, 0, 1, 1], [], []>} : vector<8x32xf32>, vector<32x8xf32>, vector<8x8xf32> -> vector<8x8xf32>
    %c2_122 = arith.constant 2 : index
    %c0_123 = arith.constant 0 : index
    %c0_124 = arith.constant 0 : index
    %123 = vector.load %arg10[%c2_122, %c0_123, %c0_124] : memref<4x1x8xf32, #tpu.memory_space<vmem>>, vector<1x1x8xf32>
    %124 = vector.shape_cast %123 : vector<1x1x8xf32> to vector<1x8xf32>
    %125 = vector.broadcast %124 : vector<1x8xf32> to vector<8x8xf32>
    %126 = arith.addf %122, %125 : vector<8x8xf32>
    %c0_125 = arith.constant 0 : index
    %c2_126 = arith.constant 2 : index
    %c0_127 = arith.constant 0 : index
    %c0_128 = arith.constant 0 : index
    %127 = vector.load %arg32[%c0_125, %c2_126, %c0_127, %c0_128] : memref<2x4x8x8xf32, #tpu.memory_space<vmem>>, vector<1x1x8x8xf32>
    %128 = vector.shape_cast %127 : vector<1x1x8x8xf32> to vector<8x8xf32>
    %129 = vector.shape_cast %119 : vector<8x8xf32> to vector<1x1x8x8xf32>
    tpu.vector_store %arg32[%c0_125, %c2_126, %c0_127, %c0_128], %129 {strides = array<i32>} : memref<2x4x8x8xf32, #tpu.memory_space<vmem>>, vector<1x1x8x8xf32>,
    %c0_129 = arith.constant 0 : index
    %c2_130 = arith.constant 2 : index
    %c0_131 = arith.constant 0 : index
    %c0_132 = arith.constant 0 : index
    %130 = vector.load %arg33[%c0_129, %c2_130, %c0_131, %c0_132] : memref<2x4x8x8xf32, #tpu.memory_space<vmem>>, vector<1x1x8x8xf32>
    %131 = vector.shape_cast %130 : vector<1x1x8x8xf32> to vector<8x8xf32>
    %132 = vector.shape_cast %126 : vector<8x8xf32> to vector<1x1x8x8xf32>
    tpu.vector_store %arg33[%c0_129, %c2_130, %c0_131, %c0_132], %132 {strides = array<i32>} : memref<2x4x8x8xf32, #tpu.memory_space<vmem>>, vector<1x1x8x8xf32>,
    %cst_133 = arith.constant dense<0.000000e+00> : vector<8x8xf32>
    %133 = tpu.matmul %112, %119, %cst_133 {dimension_numbers = #tpu.dot_dimension_numbers<[1], [1], [0], [0], [0, 0, 1, 0], [], []>} : vector<8x8xf32>, vector<8x8xf32>, vector<8x8xf32> -> vector<8x8xf32>
    %134 = arith.addf %133, %17 : vector<8x8xf32>
    %cst_134 = arith.constant dense<0xFF800000> : vector<8xf32>
    %135 = vector.multi_reduction <maximumf>, %134, %cst_134 [1] : vector<8x8xf32> to vector<8xf32>
    %136 = vector.shape_cast %135 : vector<8xf32> to vector<8x1xf32>
    %137 = vector.broadcast %136 : vector<8x1xf32> to vector<8x8xf32>
    %138 = arith.subf %134, %137 : vector<8x8xf32>
    %139 = math.exp %138 : vector<8x8xf32>
    %cst_135 = arith.constant dense<0.000000e+00> : vector<8xf32>
    %140 = vector.multi_reduction <add>, %139, %cst_135 [1] : vector<8x8xf32> to vector<8xf32>
    %141 = vector.shape_cast %140 : vector<8xf32> to vector<8x1xf32>
    %142 = vector.broadcast %141 : vector<8x1xf32> to vector<8x8xf32>
    %143 = arith.divf %139, %142 : vector<8x8xf32>
    %cst_136 = arith.constant dense<0.000000e+00> : vector<8x8xf32>
    %144 = tpu.matmul %143, %126, %cst_136 {dimension_numbers = #tpu.dot_dimension_numbers<[1], [0], [0], [1], [0, 0, 1, 1], [], []>} : vector<8x8xf32>, vector<8x8xf32>, vector<8x8xf32> -> vector<8x8xf32>
    %c2_137 = arith.constant 2 : index
    %c0_138 = arith.constant 0 : index
    %c0_139 = arith.constant 0 : index
    %145 = vector.load %arg11[%c2_137, %c0_138, %c0_139] : memref<4x8x32xf32, #tpu.memory_space<vmem>>, vector<1x8x32xf32>
    %146 = vector.shape_cast %145 : vector<1x8x32xf32> to vector<8x32xf32>
    %cst_140 = arith.constant dense<0.000000e+00> : vector<8x32xf32>
    %147 = tpu.matmul %144, %146, %cst_140 {dimension_numbers = #tpu.dot_dimension_numbers<[1], [0], [0], [1], [0, 0, 1, 1], [], []>} : vector<8x8xf32>, vector<8x32xf32>, vector<8x32xf32> -> vector<8x32xf32>
    %148 = arith.addf %105, %147 : vector<8x32xf32>
    %c3 = arith.constant 3 : index
    %c0_141 = arith.constant 0 : index
    %c0_142 = arith.constant 0 : index
    %149 = vector.load %arg5[%c3, %c0_141, %c0_142] : memref<4x32x8xf32, #tpu.memory_space<vmem>>, vector<1x32x8xf32>
    %150 = vector.shape_cast %149 : vector<1x32x8xf32> to vector<32x8xf32>
    %cst_143 = arith.constant dense<0.000000e+00> : vector<8x8xf32>
    %151 = tpu.matmul %13, %150, %cst_143 {dimension_numbers = #tpu.dot_dimension_numbers<[1], [0], [0], [1], [0, 0, 1, 1], [], []>} : vector<8x32xf32>, vector<32x8xf32>, vector<8x8xf32> -> vector<8x8xf32>
    %c3_144 = arith.constant 3 : index
    %c0_145 = arith.constant 0 : index
    %c0_146 = arith.constant 0 : index
    %152 = vector.load %arg6[%c3_144, %c0_145, %c0_146] : memref<4x1x8xf32, #tpu.memory_space<vmem>>, vector<1x1x8xf32>
    %153 = vector.shape_cast %152 : vector<1x1x8xf32> to vector<1x8xf32>
    %154 = vector.broadcast %153 : vector<1x8xf32> to vector<8x8xf32>
    %155 = arith.addf %151, %154 : vector<8x8xf32>
    %c3_147 = arith.constant 3 : index
    %c0_148 = arith.constant 0 : index
    %c0_149 = arith.constant 0 : index
    %156 = vector.load %arg7[%c3_147, %c0_148, %c0_149] : memref<4x32x8xf32, #tpu.memory_space<vmem>>, vector<1x32x8xf32>
    %157 = vector.shape_cast %156 : vector<1x32x8xf32> to vector<32x8xf32>
    %cst_150 = arith.constant dense<0.000000e+00> : vector<8x8xf32>
    %158 = tpu.matmul %13, %157, %cst_150 {dimension_numbers = #tpu.dot_dimension_numbers<[1], [0], [0], [1], [0, 0, 1, 1], [], []>} : vector<8x32xf32>, vector<32x8xf32>, vector<8x8xf32> -> vector<8x8xf32>
    %c3_151 = arith.constant 3 : index
    %c0_152 = arith.constant 0 : index
    %c0_153 = arith.constant 0 : index
    %159 = vector.load %arg8[%c3_151, %c0_152, %c0_153] : memref<4x1x8xf32, #tpu.memory_space<vmem>>, vector<1x1x8xf32>
    %160 = vector.shape_cast %159 : vector<1x1x8xf32> to vector<1x8xf32>
    %161 = vector.broadcast %160 : vector<1x8xf32> to vector<8x8xf32>
    %162 = arith.addf %158, %161 : vector<8x8xf32>
    %c3_154 = arith.constant 3 : index
    %c0_155 = arith.constant 0 : index
    %c0_156 = arith.constant 0 : index
    %163 = vector.load %arg9[%c3_154, %c0_155, %c0_156] : memref<4x32x8xf32, #tpu.memory_space<vmem>>, vector<1x32x8xf32>
    %164 = vector.shape_cast %163 : vector<1x32x8xf32> to vector<32x8xf32>
    %cst_157 = arith.constant dense<0.000000e+00> : vector<8x8xf32>
    %165 = tpu.matmul %13, %164, %cst_157 {dimension_numbers = #tpu.dot_dimension_numbers<[1], [0], [0], [1], [0, 0, 1, 1], [], []>} : vector<8x32xf32>, vector<32x8xf32>, vector<8x8xf32> -> vector<8x8xf32>
    %c3_158 = arith.constant 3 : index
    %c0_159 = arith.constant 0 : index
    %c0_160 = arith.constant 0 : index
    %166 = vector.load %arg10[%c3_158, %c0_159, %c0_160] : memref<4x1x8xf32, #tpu.memory_space<vmem>>, vector<1x1x8xf32>
    %167 = vector.shape_cast %166 : vector<1x1x8xf32> to vector<1x8xf32>
    %168 = vector.broadcast %167 : vector<1x8xf32> to vector<8x8xf32>
    %169 = arith.addf %165, %168 : vector<8x8xf32>
    %c0_161 = arith.constant 0 : index
    %c3_162 = arith.constant 3 : index
    %c0_163 = arith.constant 0 : index
    %c0_164 = arith.constant 0 : index
    %170 = vector.load %arg32[%c0_161, %c3_162, %c0_163, %c0_164] : memref<2x4x8x8xf32, #tpu.memory_space<vmem>>, vector<1x1x8x8xf32>
    %171 = vector.shape_cast %170 : vector<1x1x8x8xf32> to vector<8x8xf32>
    %172 = vector.shape_cast %162 : vector<8x8xf32> to vector<1x1x8x8xf32>
    tpu.vector_store %arg32[%c0_161, %c3_162, %c0_163, %c0_164], %172 {strides = array<i32>} : memref<2x4x8x8xf32, #tpu.memory_space<vmem>>, vector<1x1x8x8xf32>,
    %c0_165 = arith.constant 0 : index
    %c3_166 = arith.constant 3 : index
    %c0_167 = arith.constant 0 : index
    %c0_168 = arith.constant 0 : index
    %173 = vector.load %arg33[%c0_165, %c3_166, %c0_167, %c0_168] : memref<2x4x8x8xf32, #tpu.memory_space<vmem>>, vector<1x1x8x8xf32>
    %174 = vector.shape_cast %173 : vector<1x1x8x8xf32> to vector<8x8xf32>
    %175 = vector.shape_cast %169 : vector<8x8xf32> to vector<1x1x8x8xf32>
    tpu.vector_store %arg33[%c0_165, %c3_166, %c0_167, %c0_168], %175 {strides = array<i32>} : memref<2x4x8x8xf32, #tpu.memory_space<vmem>>, vector<1x1x8x8xf32>,
    %cst_169 = arith.constant dense<0.000000e+00> : vector<8x8xf32>
    %176 = tpu.matmul %155, %162, %cst_169 {dimension_numbers = #tpu.dot_dimension_numbers<[1], [1], [0], [0], [0, 0, 1, 0], [], []>} : vector<8x8xf32>, vector<8x8xf32>, vector<8x8xf32> -> vector<8x8xf32>
    %177 = arith.addf %176, %17 : vector<8x8xf32>
    %cst_170 = arith.constant dense<0xFF800000> : vector<8xf32>
    %178 = vector.multi_reduction <maximumf>, %177, %cst_170 [1] : vector<8x8xf32> to vector<8xf32>
    %179 = vector.shape_cast %178 : vector<8xf32> to vector<8x1xf32>
    %180 = vector.broadcast %179 : vector<8x1xf32> to vector<8x8xf32>
    %181 = arith.subf %177, %180 : vector<8x8xf32>
    %182 = math.exp %181 : vector<8x8xf32>
    %cst_171 = arith.constant dense<0.000000e+00> : vector<8xf32>
    %183 = vector.multi_reduction <add>, %182, %cst_171 [1] : vector<8x8xf32> to vector<8xf32>
    %184 = vector.shape_cast %183 : vector<8xf32> to vector<8x1xf32>
    %185 = vector.broadcast %184 : vector<8x1xf32> to vector<8x8xf32>
    %186 = arith.divf %182, %185 : vector<8x8xf32>
    %cst_172 = arith.constant dense<0.000000e+00> : vector<8x8xf32>
    %187 = tpu.matmul %186, %169, %cst_172 {dimension_numbers = #tpu.dot_dimension_numbers<[1], [0], [0], [1], [0, 0, 1, 1], [], []>} : vector<8x8xf32>, vector<8x8xf32>, vector<8x8xf32> -> vector<8x8xf32>
    %c3_173 = arith.constant 3 : index
    %c0_174 = arith.constant 0 : index
    %c0_175 = arith.constant 0 : index
    %188 = vector.load %arg11[%c3_173, %c0_174, %c0_175] : memref<4x8x32xf32, #tpu.memory_space<vmem>>, vector<1x8x32xf32>
    %189 = vector.shape_cast %188 : vector<1x8x32xf32> to vector<8x32xf32>
    %cst_176 = arith.constant dense<0.000000e+00> : vector<8x32xf32>
    %190 = tpu.matmul %187, %189, %cst_176 {dimension_numbers = #tpu.dot_dimension_numbers<[1], [0], [0], [1], [0, 0, 1, 1], [], []>} : vector<8x8xf32>, vector<8x32xf32>, vector<8x32xf32> -> vector<8x32xf32>
    %191 = arith.addf %148, %190 : vector<8x32xf32>
    %192 = arith.addf %13, %191 : vector<8x32xf32>
    %193 = vector.broadcast %1 : vector<1x32xf32> to vector<8x32xf32>
    %194 = arith.addf %192, %193 : vector<8x32xf32>
    %cst_177 = arith.constant dense<0.000000e+00> : vector<8xf32>
    %195 = vector.multi_reduction <add>, %194, %cst_177 [1] : vector<8x32xf32> to vector<8xf32>
    %196 = vector.shape_cast %195 : vector<8xf32> to vector<8x1xf32>
    %cst_178 = arith.constant 3.200000e+01 : f32
    %197 = vector.broadcast %cst_178 : f32 to vector<8x1xf32>
    %198 = arith.divf %196, %197 : vector<8x1xf32>
    %199 = vector.broadcast %198 : vector<8x1xf32> to vector<8x32xf32>
    %200 = arith.subf %194, %199 : vector<8x32xf32>
    %201 = arith.mulf %200, %200 : vector<8x32xf32>
    %cst_179 = arith.constant dense<0.000000e+00> : vector<8xf32>
    %202 = vector.multi_reduction <add>, %201, %cst_179 [1] : vector<8x32xf32> to vector<8xf32>
    %203 = vector.shape_cast %202 : vector<8xf32> to vector<8x1xf32>
    %cst_180 = arith.constant 3.200000e+01 : f32
    %204 = vector.broadcast %cst_180 : f32 to vector<8x1xf32>
    %205 = arith.divf %203, %204 : vector<8x1xf32>
    %206 = vector.broadcast %198 : vector<8x1xf32> to vector<8x32xf32>
    %207 = arith.subf %194, %206 : vector<8x32xf32>
    %cst_181 = arith.constant 9.99999974E-6 : f32
    %208 = vector.broadcast %cst_181 : f32 to vector<8x1xf32>
    %209 = arith.addf %205, %208 : vector<8x1xf32>
    %210 = math.rsqrt %209 : vector<8x1xf32>
    %211 = vector.broadcast %210 : vector<8x1xf32> to vector<8x32xf32>
    %212 = arith.mulf %207, %211 : vector<8x32xf32>
    %213 = vector.broadcast %3 : vector<1x32xf32> to vector<8x32xf32>
    %214 = arith.mulf %212, %213 : vector<8x32xf32>
    %215 = vector.broadcast %4 : vector<1x32xf32> to vector<8x32xf32>
    %216 = arith.addf %214, %215 : vector<8x32xf32>
    %c0_182 = arith.constant 0 : index
    %c0_183 = arith.constant 0 : index
    %c0_184 = arith.constant 0 : index
    %217 = vector.load %arg15[%c0_182, %c0_183, %c0_184] : memref<4x32x8xf32, #tpu.memory_space<vmem>>, vector<1x32x8xf32>
    %218 = vector.shape_cast %217 : vector<1x32x8xf32> to vector<32x8xf32>
    %cst_185 = arith.constant dense<0.000000e+00> : vector<8x8xf32>
    %219 = tpu.matmul %216, %218, %cst_185 {dimension_numbers = #tpu.dot_dimension_numbers<[1], [0], [0], [1], [0, 0, 1, 1], [], []>} : vector<8x32xf32>, vector<32x8xf32>, vector<8x8xf32> -> vector<8x8xf32>
    %c0_186 = arith.constant 0 : index
    %c0_187 = arith.constant 0 : index
    %c0_188 = arith.constant 0 : index
    %220 = vector.load %arg16[%c0_186, %c0_187, %c0_188] : memref<4x1x8xf32, #tpu.memory_space<vmem>>, vector<1x1x8xf32>
    %221 = vector.shape_cast %220 : vector<1x1x8xf32> to vector<1x8xf32>
    %222 = vector.broadcast %221 : vector<1x8xf32> to vector<8x8xf32>
    %223 = arith.addf %219, %222 : vector<8x8xf32>
    %c0_189 = arith.constant 0 : index
    %c0_190 = arith.constant 0 : index
    %c0_191 = arith.constant 0 : index
    %224 = vector.load %arg17[%c0_189, %c0_190, %c0_191] : memref<4x32x8xf32, #tpu.memory_space<vmem>>, vector<1x32x8xf32>
    %225 = vector.shape_cast %224 : vector<1x32x8xf32> to vector<32x8xf32>
    %cst_192 = arith.constant dense<0.000000e+00> : vector<10x8xf32>
    %226 = tpu.matmul %14, %225, %cst_192 {dimension_numbers = #tpu.dot_dimension_numbers<[1], [0], [0], [1], [0, 0, 1, 1], [], []>} : vector<10x32xf32>, vector<32x8xf32>, vector<10x8xf32> -> vector<10x8xf32>
    %c0_193 = arith.constant 0 : index
    %c0_194 = arith.constant 0 : index
    %c0_195 = arith.constant 0 : index
    %227 = vector.load %arg18[%c0_193, %c0_194, %c0_195] : memref<4x1x8xf32, #tpu.memory_space<vmem>>, vector<1x1x8xf32>
    %228 = vector.shape_cast %227 : vector<1x1x8xf32> to vector<1x8xf32>
    %229 = vector.broadcast %228 : vector<1x8xf32> to vector<10x8xf32>
    %230 = arith.addf %226, %229 : vector<10x8xf32>
    %c0_196 = arith.constant 0 : index
    %c0_197 = arith.constant 0 : index
    %c0_198 = arith.constant 0 : index
    %231 = vector.load %arg19[%c0_196, %c0_197, %c0_198] : memref<4x32x8xf32, #tpu.memory_space<vmem>>, vector<1x32x8xf32>
    %232 = vector.shape_cast %231 : vector<1x32x8xf32> to vector<32x8xf32>
    %cst_199 = arith.constant dense<0.000000e+00> : vector<10x8xf32>
    %233 = tpu.matmul %14, %232, %cst_199 {dimension_numbers = #tpu.dot_dimension_numbers<[1], [0], [0], [1], [0, 0, 1, 1], [], []>} : vector<10x32xf32>, vector<32x8xf32>, vector<10x8xf32> -> vector<10x8xf32>
    %c0_200 = arith.constant 0 : index
    %c0_201 = arith.constant 0 : index
    %c0_202 = arith.constant 0 : index
    %234 = vector.load %arg20[%c0_200, %c0_201, %c0_202] : memref<4x1x8xf32, #tpu.memory_space<vmem>>, vector<1x1x8xf32>
    %235 = vector.shape_cast %234 : vector<1x1x8xf32> to vector<1x8xf32>
    %236 = vector.broadcast %235 : vector<1x8xf32> to vector<10x8xf32>
    %237 = arith.addf %233, %236 : vector<10x8xf32>
    %c0_203 = arith.constant 0 : index
    %c0_204 = arith.constant 0 : index
    %c0_205 = arith.constant 0 : index
    %c0_206 = arith.constant 0 : index
    %238 = vector.load %arg34[%c0_203, %c0_204, %c0_205, %c0_206] : memref<2x4x10x8xf32, #tpu.memory_space<vmem>>, vector<1x1x10x8xf32>
    %239 = vector.shape_cast %238 : vector<1x1x10x8xf32> to vector<10x8xf32>
    %240 = vector.shape_cast %230 : vector<10x8xf32> to vector<1x1x10x8xf32>
    tpu.vector_store %arg34[%c0_203, %c0_204, %c0_205, %c0_206], %240 {strides = array<i32>} : memref<2x4x10x8xf32, #tpu.memory_space<vmem>>, vector<1x1x10x8xf32>,
    %c0_207 = arith.constant 0 : index
    %c0_208 = arith.constant 0 : index
    %c0_209 = arith.constant 0 : index
    %c0_210 = arith.constant 0 : index
    %241 = vector.load %arg35[%c0_207, %c0_208, %c0_209, %c0_210] : memref<2x4x10x8xf32, #tpu.memory_space<vmem>>, vector<1x1x10x8xf32>
    %242 = vector.shape_cast %241 : vector<1x1x10x8xf32> to vector<10x8xf32>
    %243 = vector.shape_cast %237 : vector<10x8xf32> to vector<1x1x10x8xf32>
    tpu.vector_store %arg35[%c0_207, %c0_208, %c0_209, %c0_210], %243 {strides = array<i32>} : memref<2x4x10x8xf32, #tpu.memory_space<vmem>>, vector<1x1x10x8xf32>,
    %cst_211 = arith.constant dense<0.000000e+00> : vector<8x10xf32>
    %244 = tpu.matmul %223, %230, %cst_211 {dimension_numbers = #tpu.dot_dimension_numbers<[1], [1], [0], [0], [0, 0, 1, 0], [], []>} : vector<8x8xf32>, vector<10x8xf32>, vector<8x10xf32> -> vector<8x10xf32>
    %245 = arith.addf %244, %20 : vector<8x10xf32>
    %cst_212 = arith.constant dense<0xFF800000> : vector<8xf32>
    %246 = vector.multi_reduction <maximumf>, %245, %cst_212 [1] : vector<8x10xf32> to vector<8xf32>
    %247 = vector.shape_cast %246 : vector<8xf32> to vector<8x1xf32>
    %248 = vector.broadcast %247 : vector<8x1xf32> to vector<8x10xf32>
    %249 = arith.subf %245, %248 : vector<8x10xf32>
    %250 = math.exp %249 : vector<8x10xf32>
    %cst_213 = arith.constant dense<0.000000e+00> : vector<8xf32>
    %251 = vector.multi_reduction <add>, %250, %cst_213 [1] : vector<8x10xf32> to vector<8xf32>
    %252 = vector.shape_cast %251 : vector<8xf32> to vector<8x1xf32>
    %253 = vector.broadcast %252 : vector<8x1xf32> to vector<8x10xf32>
    %254 = arith.divf %250, %253 : vector<8x10xf32>
    %cst_214 = arith.constant dense<0.000000e+00> : vector<8x8xf32>
    %255 = tpu.matmul %254, %237, %cst_214 {dimension_numbers = #tpu.dot_dimension_numbers<[1], [0], [0], [1], [0, 0, 1, 1], [], []>} : vector<8x10xf32>, vector<10x8xf32>, vector<8x8xf32> -> vector<8x8xf32>
    %c0_215 = arith.constant 0 : index
    %c0_216 = arith.constant 0 : index
    %c0_217 = arith.constant 0 : index
    %256 = vector.load %arg21[%c0_215, %c0_216, %c0_217] : memref<4x8x32xf32, #tpu.memory_space<vmem>>, vector<1x8x32xf32>
    %257 = vector.shape_cast %256 : vector<1x8x32xf32> to vector<8x32xf32>
    %cst_218 = arith.constant dense<0.000000e+00> : vector<8x32xf32>
    %258 = tpu.matmul %255, %257, %cst_218 {dimension_numbers = #tpu.dot_dimension_numbers<[1], [0], [0], [1], [0, 0, 1, 1], [], []>} : vector<8x8xf32>, vector<8x32xf32>, vector<8x32xf32> -> vector<8x32xf32>
    %c1_219 = arith.constant 1 : index
    %c0_220 = arith.constant 0 : index
    %c0_221 = arith.constant 0 : index
    %259 = vector.load %arg15[%c1_219, %c0_220, %c0_221] : memref<4x32x8xf32, #tpu.memory_space<vmem>>, vector<1x32x8xf32>
    %260 = vector.shape_cast %259 : vector<1x32x8xf32> to vector<32x8xf32>
    %cst_222 = arith.constant dense<0.000000e+00> : vector<8x8xf32>
    %261 = tpu.matmul %216, %260, %cst_222 {dimension_numbers = #tpu.dot_dimension_numbers<[1], [0], [0], [1], [0, 0, 1, 1], [], []>} : vector<8x32xf32>, vector<32x8xf32>, vector<8x8xf32> -> vector<8x8xf32>
    %c1_223 = arith.constant 1 : index
    %c0_224 = arith.constant 0 : index
    %c0_225 = arith.constant 0 : index
    %262 = vector.load %arg16[%c1_223, %c0_224, %c0_225] : memref<4x1x8xf32, #tpu.memory_space<vmem>>, vector<1x1x8xf32>
    %263 = vector.shape_cast %262 : vector<1x1x8xf32> to vector<1x8xf32>
    %264 = vector.broadcast %263 : vector<1x8xf32> to vector<8x8xf32>
    %265 = arith.addf %261, %264 : vector<8x8xf32>
    %c1_226 = arith.constant 1 : index
    %c0_227 = arith.constant 0 : index
    %c0_228 = arith.constant 0 : index
    %266 = vector.load %arg17[%c1_226, %c0_227, %c0_228] : memref<4x32x8xf32, #tpu.memory_space<vmem>>, vector<1x32x8xf32>
    %267 = vector.shape_cast %266 : vector<1x32x8xf32> to vector<32x8xf32>
    %cst_229 = arith.constant dense<0.000000e+00> : vector<10x8xf32>
    %268 = tpu.matmul %14, %267, %cst_229 {dimension_numbers = #tpu.dot_dimension_numbers<[1], [0], [0], [1], [0, 0, 1, 1], [], []>} : vector<10x32xf32>, vector<32x8xf32>, vector<10x8xf32> -> vector<10x8xf32>
    %c1_230 = arith.constant 1 : index
    %c0_231 = arith.constant 0 : index
    %c0_232 = arith.constant 0 : index
    %269 = vector.load %arg18[%c1_230, %c0_231, %c0_232] : memref<4x1x8xf32, #tpu.memory_space<vmem>>, vector<1x1x8xf32>
    %270 = vector.shape_cast %269 : vector<1x1x8xf32> to vector<1x8xf32>
    %271 = vector.broadcast %270 : vector<1x8xf32> to vector<10x8xf32>
    %272 = arith.addf %268, %271 : vector<10x8xf32>
    %c1_233 = arith.constant 1 : index
    %c0_234 = arith.constant 0 : index
    %c0_235 = arith.constant 0 : index
    %273 = vector.load %arg19[%c1_233, %c0_234, %c0_235] : memref<4x32x8xf32, #tpu.memory_space<vmem>>, vector<1x32x8xf32>
    %274 = vector.shape_cast %273 : vector<1x32x8xf32> to vector<32x8xf32>
    %cst_236 = arith.constant dense<0.000000e+00> : vector<10x8xf32>
    %275 = tpu.matmul %14, %274, %cst_236 {dimension_numbers = #tpu.dot_dimension_numbers<[1], [0], [0], [1], [0, 0, 1, 1], [], []>} : vector<10x32xf32>, vector<32x8xf32>, vector<10x8xf32> -> vector<10x8xf32>
    %c1_237 = arith.constant 1 : index
    %c0_238 = arith.constant 0 : index
    %c0_239 = arith.constant 0 : index
    %276 = vector.load %arg20[%c1_237, %c0_238, %c0_239] : memref<4x1x8xf32, #tpu.memory_space<vmem>>, vector<1x1x8xf32>
    %277 = vector.shape_cast %276 : vector<1x1x8xf32> to vector<1x8xf32>
    %278 = vector.broadcast %277 : vector<1x8xf32> to vector<10x8xf32>
    %279 = arith.addf %275, %278 : vector<10x8xf32>
    %c0_240 = arith.constant 0 : index
    %c1_241 = arith.constant 1 : index
    %c0_242 = arith.constant 0 : index
    %c0_243 = arith.constant 0 : index
    %280 = vector.load %arg34[%c0_240, %c1_241, %c0_242, %c0_243] : memref<2x4x10x8xf32, #tpu.memory_space<vmem>>, vector<1x1x10x8xf32>
    %281 = vector.shape_cast %280 : vector<1x1x10x8xf32> to vector<10x8xf32>
    %282 = vector.shape_cast %272 : vector<10x8xf32> to vector<1x1x10x8xf32>
    tpu.vector_store %arg34[%c0_240, %c1_241, %c0_242, %c0_243], %282 {strides = array<i32>} : memref<2x4x10x8xf32, #tpu.memory_space<vmem>>, vector<1x1x10x8xf32>,
    %c0_244 = arith.constant 0 : index
    %c1_245 = arith.constant 1 : index
    %c0_246 = arith.constant 0 : index
    %c0_247 = arith.constant 0 : index
    %283 = vector.load %arg35[%c0_244, %c1_245, %c0_246, %c0_247] : memref<2x4x10x8xf32, #tpu.memory_space<vmem>>, vector<1x1x10x8xf32>
    %284 = vector.shape_cast %283 : vector<1x1x10x8xf32> to vector<10x8xf32>
    %285 = vector.shape_cast %279 : vector<10x8xf32> to vector<1x1x10x8xf32>
    tpu.vector_store %arg35[%c0_244, %c1_245, %c0_246, %c0_247], %285 {strides = array<i32>} : memref<2x4x10x8xf32, #tpu.memory_space<vmem>>, vector<1x1x10x8xf32>,
    %cst_248 = arith.constant dense<0.000000e+00> : vector<8x10xf32>
    %286 = tpu.matmul %265, %272, %cst_248 {dimension_numbers = #tpu.dot_dimension_numbers<[1], [1], [0], [0], [0, 0, 1, 0], [], []>} : vector<8x8xf32>, vector<10x8xf32>, vector<8x10xf32> -> vector<8x10xf32>
    %287 = arith.addf %286, %20 : vector<8x10xf32>
    %cst_249 = arith.constant dense<0xFF800000> : vector<8xf32>
    %288 = vector.multi_reduction <maximumf>, %287, %cst_249 [1] : vector<8x10xf32> to vector<8xf32>
    %289 = vector.shape_cast %288 : vector<8xf32> to vector<8x1xf32>
    %290 = vector.broadcast %289 : vector<8x1xf32> to vector<8x10xf32>
    %291 = arith.subf %287, %290 : vector<8x10xf32>
    %292 = math.exp %291 : vector<8x10xf32>
    %cst_250 = arith.constant dense<0.000000e+00> : vector<8xf32>
    %293 = vector.multi_reduction <add>, %292, %cst_250 [1] : vector<8x10xf32> to vector<8xf32>
    %294 = vector.shape_cast %293 : vector<8xf32> to vector<8x1xf32>
    %295 = vector.broadcast %294 : vector<8x1xf32> to vector<8x10xf32>
    %296 = arith.divf %292, %295 : vector<8x10xf32>
    %cst_251 = arith.constant dense<0.000000e+00> : vector<8x8xf32>
    %297 = tpu.matmul %296, %279, %cst_251 {dimension_numbers = #tpu.dot_dimension_numbers<[1], [0], [0], [1], [0, 0, 1, 1], [], []>} : vector<8x10xf32>, vector<10x8xf32>, vector<8x8xf32> -> vector<8x8xf32>
    %c1_252 = arith.constant 1 : index
    %c0_253 = arith.constant 0 : index
    %c0_254 = arith.constant 0 : index
    %298 = vector.load %arg21[%c1_252, %c0_253, %c0_254] : memref<4x8x32xf32, #tpu.memory_space<vmem>>, vector<1x8x32xf32>
    %299 = vector.shape_cast %298 : vector<1x8x32xf32> to vector<8x32xf32>
    %cst_255 = arith.constant dense<0.000000e+00> : vector<8x32xf32>
    %300 = tpu.matmul %297, %299, %cst_255 {dimension_numbers = #tpu.dot_dimension_numbers<[1], [0], [0], [1], [0, 0, 1, 1], [], []>} : vector<8x8xf32>, vector<8x32xf32>, vector<8x32xf32> -> vector<8x32xf32>
    %301 = arith.addf %258, %300 : vector<8x32xf32>
    %c2_256 = arith.constant 2 : index
    %c0_257 = arith.constant 0 : index
    %c0_258 = arith.constant 0 : index
    %302 = vector.load %arg15[%c2_256, %c0_257, %c0_258] : memref<4x32x8xf32, #tpu.memory_space<vmem>>, vector<1x32x8xf32>
    %303 = vector.shape_cast %302 : vector<1x32x8xf32> to vector<32x8xf32>
    %cst_259 = arith.constant dense<0.000000e+00> : vector<8x8xf32>
    %304 = tpu.matmul %216, %303, %cst_259 {dimension_numbers = #tpu.dot_dimension_numbers<[1], [0], [0], [1], [0, 0, 1, 1], [], []>} : vector<8x32xf32>, vector<32x8xf32>, vector<8x8xf32> -> vector<8x8xf32>
    %c2_260 = arith.constant 2 : index
    %c0_261 = arith.constant 0 : index
    %c0_262 = arith.constant 0 : index
    %305 = vector.load %arg16[%c2_260, %c0_261, %c0_262] : memref<4x1x8xf32, #tpu.memory_space<vmem>>, vector<1x1x8xf32>
    %306 = vector.shape_cast %305 : vector<1x1x8xf32> to vector<1x8xf32>
    %307 = vector.broadcast %306 : vector<1x8xf32> to vector<8x8xf32>
    %308 = arith.addf %304, %307 : vector<8x8xf32>
    %c2_263 = arith.constant 2 : index
    %c0_264 = arith.constant 0 : index
    %c0_265 = arith.constant 0 : index
    %309 = vector.load %arg17[%c2_263, %c0_264, %c0_265] : memref<4x32x8xf32, #tpu.memory_space<vmem>>, vector<1x32x8xf32>
    %310 = vector.shape_cast %309 : vector<1x32x8xf32> to vector<32x8xf32>
    %cst_266 = arith.constant dense<0.000000e+00> : vector<10x8xf32>
    %311 = tpu.matmul %14, %310, %cst_266 {dimension_numbers = #tpu.dot_dimension_numbers<[1], [0], [0], [1], [0, 0, 1, 1], [], []>} : vector<10x32xf32>, vector<32x8xf32>, vector<10x8xf32> -> vector<10x8xf32>
    %c2_267 = arith.constant 2 : index
    %c0_268 = arith.constant 0 : index
    %c0_269 = arith.constant 0 : index
    %312 = vector.load %arg18[%c2_267, %c0_268, %c0_269] : memref<4x1x8xf32, #tpu.memory_space<vmem>>, vector<1x1x8xf32>
    %313 = vector.shape_cast %312 : vector<1x1x8xf32> to vector<1x8xf32>
    %314 = vector.broadcast %313 : vector<1x8xf32> to vector<10x8xf32>
    %315 = arith.addf %311, %314 : vector<10x8xf32>
    %c2_270 = arith.constant 2 : index
    %c0_271 = arith.constant 0 : index
    %c0_272 = arith.constant 0 : index
    %316 = vector.load %arg19[%c2_270, %c0_271, %c0_272] : memref<4x32x8xf32, #tpu.memory_space<vmem>>, vector<1x32x8xf32>
    %317 = vector.shape_cast %316 : vector<1x32x8xf32> to vector<32x8xf32>
    %cst_273 = arith.constant dense<0.000000e+00> : vector<10x8xf32>
    %318 = tpu.matmul %14, %317, %cst_273 {dimension_numbers = #tpu.dot_dimension_numbers<[1], [0], [0], [1], [0, 0, 1, 1], [], []>} : vector<10x32xf32>, vector<32x8xf32>, vector<10x8xf32> -> vector<10x8xf32>
    %c2_274 = arith.constant 2 : index
    %c0_275 = arith.constant 0 : index
    %c0_276 = arith.constant 0 : index
    %319 = vector.load %arg20[%c2_274, %c0_275, %c0_276] : memref<4x1x8xf32, #tpu.memory_space<vmem>>, vector<1x1x8xf32>
    %320 = vector.shape_cast %319 : vector<1x1x8xf32> to vector<1x8xf32>
    %321 = vector.broadcast %320 : vector<1x8xf32> to vector<10x8xf32>
    %322 = arith.addf %318, %321 : vector<10x8xf32>
    %c0_277 = arith.constant 0 : index
    %c2_278 = arith.constant 2 : index
    %c0_279 = arith.constant 0 : index
    %c0_280 = arith.constant 0 : index
    %323 = vector.load %arg34[%c0_277, %c2_278, %c0_279, %c0_280] : memref<2x4x10x8xf32, #tpu.memory_space<vmem>>, vector<1x1x10x8xf32>
    %324 = vector.shape_cast %323 : vector<1x1x10x8xf32> to vector<10x8xf32>
    %325 = vector.shape_cast %315 : vector<10x8xf32> to vector<1x1x10x8xf32>
    tpu.vector_store %arg34[%c0_277, %c2_278, %c0_279, %c0_280], %325 {strides = array<i32>} : memref<2x4x10x8xf32, #tpu.memory_space<vmem>>, vector<1x1x10x8xf32>,
    %c0_281 = arith.constant 0 : index
    %c2_282 = arith.constant 2 : index
    %c0_283 = arith.constant 0 : index
    %c0_284 = arith.constant 0 : index
    %326 = vector.load %arg35[%c0_281, %c2_282, %c0_283, %c0_284] : memref<2x4x10x8xf32, #tpu.memory_space<vmem>>, vector<1x1x10x8xf32>
    %327 = vector.shape_cast %326 : vector<1x1x10x8xf32> to vector<10x8xf32>
    %328 = vector.shape_cast %322 : vector<10x8xf32> to vector<1x1x10x8xf32>
    tpu.vector_store %arg35[%c0_281, %c2_282, %c0_283, %c0_284], %328 {strides = array<i32>} : memref<2x4x10x8xf32, #tpu.memory_space<vmem>>, vector<1x1x10x8xf32>,
    %cst_285 = arith.constant dense<0.000000e+00> : vector<8x10xf32>
    %329 = tpu.matmul %308, %315, %cst_285 {dimension_numbers = #tpu.dot_dimension_numbers<[1], [1], [0], [0], [0, 0, 1, 0], [], []>} : vector<8x8xf32>, vector<10x8xf32>, vector<8x10xf32> -> vector<8x10xf32>
    %330 = arith.addf %329, %20 : vector<8x10xf32>
    %cst_286 = arith.constant dense<0xFF800000> : vector<8xf32>
    %331 = vector.multi_reduction <maximumf>, %330, %cst_286 [1] : vector<8x10xf32> to vector<8xf32>
    %332 = vector.shape_cast %331 : vector<8xf32> to vector<8x1xf32>
    %333 = vector.broadcast %332 : vector<8x1xf32> to vector<8x10xf32>
    %334 = arith.subf %330, %333 : vector<8x10xf32>
    %335 = math.exp %334 : vector<8x10xf32>
    %cst_287 = arith.constant dense<0.000000e+00> : vector<8xf32>
    %336 = vector.multi_reduction <add>, %335, %cst_287 [1] : vector<8x10xf32> to vector<8xf32>
    %337 = vector.shape_cast %336 : vector<8xf32> to vector<8x1xf32>
    %338 = vector.broadcast %337 : vector<8x1xf32> to vector<8x10xf32>
    %339 = arith.divf %335, %338 : vector<8x10xf32>
    %cst_288 = arith.constant dense<0.000000e+00> : vector<8x8xf32>
    %340 = tpu.matmul %339, %322, %cst_288 {dimension_numbers = #tpu.dot_dimension_numbers<[1], [0], [0], [1], [0, 0, 1, 1], [], []>} : vector<8x10xf32>, vector<10x8xf32>, vector<8x8xf32> -> vector<8x8xf32>
    %c2_289 = arith.constant 2 : index
    %c0_290 = arith.constant 0 : index
    %c0_291 = arith.constant 0 : index
    %341 = vector.load %arg21[%c2_289, %c0_290, %c0_291] : memref<4x8x32xf32, #tpu.memory_space<vmem>>, vector<1x8x32xf32>
    %342 = vector.shape_cast %341 : vector<1x8x32xf32> to vector<8x32xf32>
    %cst_292 = arith.constant dense<0.000000e+00> : vector<8x32xf32>
    %343 = tpu.matmul %340, %342, %cst_292 {dimension_numbers = #tpu.dot_dimension_numbers<[1], [0], [0], [1], [0, 0, 1, 1], [], []>} : vector<8x8xf32>, vector<8x32xf32>, vector<8x32xf32> -> vector<8x32xf32>
    %344 = arith.addf %301, %343 : vector<8x32xf32>
    %c3_293 = arith.constant 3 : index
    %c0_294 = arith.constant 0 : index
    %c0_295 = arith.constant 0 : index
    %345 = vector.load %arg15[%c3_293, %c0_294, %c0_295] : memref<4x32x8xf32, #tpu.memory_space<vmem>>, vector<1x32x8xf32>
    %346 = vector.shape_cast %345 : vector<1x32x8xf32> to vector<32x8xf32>
    %cst_296 = arith.constant dense<0.000000e+00> : vector<8x8xf32>
    %347 = tpu.matmul %216, %346, %cst_296 {dimension_numbers = #tpu.dot_dimension_numbers<[1], [0], [0], [1], [0, 0, 1, 1], [], []>} : vector<8x32xf32>, vector<32x8xf32>, vector<8x8xf32> -> vector<8x8xf32>
    %c3_297 = arith.constant 3 : index
    %c0_298 = arith.constant 0 : index
    %c0_299 = arith.constant 0 : index
    %348 = vector.load %arg16[%c3_297, %c0_298, %c0_299] : memref<4x1x8xf32, #tpu.memory_space<vmem>>, vector<1x1x8xf32>
    %349 = vector.shape_cast %348 : vector<1x1x8xf32> to vector<1x8xf32>
    %350 = vector.broadcast %349 : vector<1x8xf32> to vector<8x8xf32>
    %351 = arith.addf %347, %350 : vector<8x8xf32>
    %c3_300 = arith.constant 3 : index
    %c0_301 = arith.constant 0 : index
    %c0_302 = arith.constant 0 : index
    %352 = vector.load %arg17[%c3_300, %c0_301, %c0_302] : memref<4x32x8xf32, #tpu.memory_space<vmem>>, vector<1x32x8xf32>
    %353 = vector.shape_cast %352 : vector<1x32x8xf32> to vector<32x8xf32>
    %cst_303 = arith.constant dense<0.000000e+00> : vector<10x8xf32>
    %354 = tpu.matmul %14, %353, %cst_303 {dimension_numbers = #tpu.dot_dimension_numbers<[1], [0], [0], [1], [0, 0, 1, 1], [], []>} : vector<10x32xf32>, vector<32x8xf32>, vector<10x8xf32> -> vector<10x8xf32>
    %c3_304 = arith.constant 3 : index
    %c0_305 = arith.constant 0 : index
    %c0_306 = arith.constant 0 : index
    %355 = vector.load %arg18[%c3_304, %c0_305, %c0_306] : memref<4x1x8xf32, #tpu.memory_space<vmem>>, vector<1x1x8xf32>
    %356 = vector.shape_cast %355 : vector<1x1x8xf32> to vector<1x8xf32>
    %357 = vector.broadcast %356 : vector<1x8xf32> to vector<10x8xf32>
    %358 = arith.addf %354, %357 : vector<10x8xf32>
    %c3_307 = arith.constant 3 : index
    %c0_308 = arith.constant 0 : index
    %c0_309 = arith.constant 0 : index
    %359 = vector.load %arg19[%c3_307, %c0_308, %c0_309] : memref<4x32x8xf32, #tpu.memory_space<vmem>>, vector<1x32x8xf32>
    %360 = vector.shape_cast %359 : vector<1x32x8xf32> to vector<32x8xf32>
    %cst_310 = arith.constant dense<0.000000e+00> : vector<10x8xf32>
    %361 = tpu.matmul %14, %360, %cst_310 {dimension_numbers = #tpu.dot_dimension_numbers<[1], [0], [0], [1], [0, 0, 1, 1], [], []>} : vector<10x32xf32>, vector<32x8xf32>, vector<10x8xf32> -> vector<10x8xf32>
    %c3_311 = arith.constant 3 : index
    %c0_312 = arith.constant 0 : index
    %c0_313 = arith.constant 0 : index
    %362 = vector.load %arg20[%c3_311, %c0_312, %c0_313] : memref<4x1x8xf32, #tpu.memory_space<vmem>>, vector<1x1x8xf32>
    %363 = vector.shape_cast %362 : vector<1x1x8xf32> to vector<1x8xf32>
    %364 = vector.broadcast %363 : vector<1x8xf32> to vector<10x8xf32>
    %365 = arith.addf %361, %364 : vector<10x8xf32>
    %c0_314 = arith.constant 0 : index
    %c3_315 = arith.constant 3 : index
    %c0_316 = arith.constant 0 : index
    %c0_317 = arith.constant 0 : index
    %366 = vector.load %arg34[%c0_314, %c3_315, %c0_316, %c0_317] : memref<2x4x10x8xf32, #tpu.memory_space<vmem>>, vector<1x1x10x8xf32>
    %367 = vector.shape_cast %366 : vector<1x1x10x8xf32> to vector<10x8xf32>
    %368 = vector.shape_cast %358 : vector<10x8xf32> to vector<1x1x10x8xf32>
    tpu.vector_store %arg34[%c0_314, %c3_315, %c0_316, %c0_317], %368 {strides = array<i32>} : memref<2x4x10x8xf32, #tpu.memory_space<vmem>>, vector<1x1x10x8xf32>,
    %c0_318 = arith.constant 0 : index
    %c3_319 = arith.constant 3 : index
    %c0_320 = arith.constant 0 : index
    %c0_321 = arith.constant 0 : index
    %369 = vector.load %arg35[%c0_318, %c3_319, %c0_320, %c0_321] : memref<2x4x10x8xf32, #tpu.memory_space<vmem>>, vector<1x1x10x8xf32>
    %370 = vector.shape_cast %369 : vector<1x1x10x8xf32> to vector<10x8xf32>
    %371 = vector.shape_cast %365 : vector<10x8xf32> to vector<1x1x10x8xf32>
    tpu.vector_store %arg35[%c0_318, %c3_319, %c0_320, %c0_321], %371 {strides = array<i32>} : memref<2x4x10x8xf32, #tpu.memory_space<vmem>>, vector<1x1x10x8xf32>,
    %cst_322 = arith.constant dense<0.000000e+00> : vector<8x10xf32>
    %372 = tpu.matmul %351, %358, %cst_322 {dimension_numbers = #tpu.dot_dimension_numbers<[1], [1], [0], [0], [0, 0, 1, 0], [], []>} : vector<8x8xf32>, vector<10x8xf32>, vector<8x10xf32> -> vector<8x10xf32>
    %373 = arith.addf %372, %20 : vector<8x10xf32>
    %cst_323 = arith.constant dense<0xFF800000> : vector<8xf32>
    %374 = vector.multi_reduction <maximumf>, %373, %cst_323 [1] : vector<8x10xf32> to vector<8xf32>
    %375 = vector.shape_cast %374 : vector<8xf32> to vector<8x1xf32>
    %376 = vector.broadcast %375 : vector<8x1xf32> to vector<8x10xf32>
    %377 = arith.subf %373, %376 : vector<8x10xf32>
    %378 = math.exp %377 : vector<8x10xf32>
    %cst_324 = arith.constant dense<0.000000e+00> : vector<8xf32>
    %379 = vector.multi_reduction <add>, %378, %cst_324 [1] : vector<8x10xf32> to vector<8xf32>
    %380 = vector.shape_cast %379 : vector<8xf32> to vector<8x1xf32>
    %381 = vector.broadcast %380 : vector<8x1xf32> to vector<8x10xf32>
    %382 = arith.divf %378, %381 : vector<8x10xf32>
    %cst_325 = arith.constant dense<0.000000e+00> : vector<8x8xf32>
    %383 = tpu.matmul %382, %365, %cst_325 {dimension_numbers = #tpu.dot_dimension_numbers<[1], [0], [0], [1], [0, 0, 1, 1], [], []>} : vector<8x10xf32>, vector<10x8xf32>, vector<8x8xf32> -> vector<8x8xf32>
    %c3_326 = arith.constant 3 : index
    %c0_327 = arith.constant 0 : index
    %c0_328 = arith.constant 0 : index
    %384 = vector.load %arg21[%c3_326, %c0_327, %c0_328] : memref<4x8x32xf32, #tpu.memory_space<vmem>>, vector<1x8x32xf32>
    %385 = vector.shape_cast %384 : vector<1x8x32xf32> to vector<8x32xf32>
    %cst_329 = arith.constant dense<0.000000e+00> : vector<8x32xf32>
    %386 = tpu.matmul %383, %385, %cst_329 {dimension_numbers = #tpu.dot_dimension_numbers<[1], [0], [0], [1], [0, 0, 1, 1], [], []>} : vector<8x8xf32>, vector<8x32xf32>, vector<8x32xf32> -> vector<8x32xf32>
    %387 = arith.addf %344, %386 : vector<8x32xf32>
    %388 = arith.addf %216, %387 : vector<8x32xf32>
    %389 = vector.broadcast %2 : vector<1x32xf32> to vector<8x32xf32>
    %390 = arith.addf %388, %389 : vector<8x32xf32>
    %cst_330 = arith.constant dense<0.000000e+00> : vector<8xf32>
    %391 = vector.multi_reduction <add>, %390, %cst_330 [1] : vector<8x32xf32> to vector<8xf32>
    %392 = vector.shape_cast %391 : vector<8xf32> to vector<8x1xf32>
    %cst_331 = arith.constant 3.200000e+01 : f32
    %393 = vector.broadcast %cst_331 : f32 to vector<8x1xf32>
    %394 = arith.divf %392, %393 : vector<8x1xf32>
    %395 = vector.broadcast %394 : vector<8x1xf32> to vector<8x32xf32>
    %396 = arith.subf %390, %395 : vector<8x32xf32>
    %397 = arith.mulf %396, %396 : vector<8x32xf32>
    %cst_332 = arith.constant dense<0.000000e+00> : vector<8xf32>
    %398 = vector.multi_reduction <add>, %397, %cst_332 [1] : vector<8x32xf32> to vector<8xf32>
    %399 = vector.shape_cast %398 : vector<8xf32> to vector<8x1xf32>
    %cst_333 = arith.constant 3.200000e+01 : f32
    %400 = vector.broadcast %cst_333 : f32 to vector<8x1xf32>
    %401 = arith.divf %399, %400 : vector<8x1xf32>
    %402 = vector.broadcast %394 : vector<8x1xf32> to vector<8x32xf32>
    %403 = arith.subf %390, %402 : vector<8x32xf32>
    %cst_334 = arith.constant 9.99999974E-6 : f32
    %404 = vector.broadcast %cst_334 : f32 to vector<8x1xf32>
    %405 = arith.addf %401, %404 : vector<8x1xf32>
    %406 = math.rsqrt %405 : vector<8x1xf32>
    %407 = vector.broadcast %406 : vector<8x1xf32> to vector<8x32xf32>
    %408 = arith.mulf %403, %407 : vector<8x32xf32>
    %409 = vector.broadcast %5 : vector<1x32xf32> to vector<8x32xf32>
    %410 = arith.mulf %408, %409 : vector<8x32xf32>
    %411 = vector.broadcast %6 : vector<1x32xf32> to vector<8x32xf32>
    %412 = arith.addf %410, %411 : vector<8x32xf32>
    %cst_335 = arith.constant dense<0.000000e+00> : vector<8x64xf32>
    %413 = tpu.matmul %412, %9, %cst_335 {dimension_numbers = #tpu.dot_dimension_numbers<[1], [0], [0], [1], [0, 0, 1, 1], [], []>} : vector<8x32xf32>, vector<32x64xf32>, vector<8x64xf32> -> vector<8x64xf32>
    %414 = vector.broadcast %10 : vector<1x64xf32> to vector<8x64xf32>
    %415 = arith.addf %413, %414 : vector<8x64xf32>
    %cst_336 = arith.constant 5.000000e-01 : f32
    %416 = vector.broadcast %cst_336 : f32 to vector<8x64xf32>
    %417 = arith.mulf %416, %415 : vector<8x64xf32>
    %cst_337 = arith.constant 0.707106769 : f32
    %418 = vector.broadcast %cst_337 : f32 to vector<8x64xf32>
    %419 = arith.mulf %415, %418 : vector<8x64xf32>
    %420 = math.absf %419 : vector<8x64xf32>
    %cst_338 = arith.constant 0.327591091 : f32
    %421 = vector.broadcast %cst_338 : f32 to vector<8x64xf32>
    %422 = arith.mulf %421, %420 : vector<8x64xf32>
    %cst_339 = arith.constant 1.000000e+00 : f32
    %423 = vector.broadcast %cst_339 : f32 to vector<8x64xf32>
    %424 = arith.addf %423, %422 : vector<8x64xf32>
    %cst_340 = arith.constant 1.000000e+00 : f32
    %425 = vector.broadcast %cst_340 : f32 to vector<8x64xf32>
    %426 = arith.divf %425, %424 : vector<8x64xf32>
    %cst_341 = arith.constant 1.06140542 : f32
    %427 = vector.broadcast %cst_341 : f32 to vector<8x64xf32>
    %428 = arith.mulf %427, %426 : vector<8x64xf32>
    %cst_342 = arith.constant -1.45315206 : f32
    %429 = vector.broadcast %cst_342 : f32 to vector<8x64xf32>
    %430 = arith.addf %428, %429 : vector<8x64xf32>
    %431 = arith.mulf %430, %426 : vector<8x64xf32>
    %cst_343 = arith.constant 1.42141378 : f32
    %432 = vector.broadcast %cst_343 : f32 to vector<8x64xf32>
    %433 = arith.addf %431, %432 : vector<8x64xf32>
    %434 = arith.mulf %433, %426 : vector<8x64xf32>
    %cst_344 = arith.constant -0.284496725 : f32
    %435 = vector.broadcast %cst_344 : f32 to vector<8x64xf32>
    %436 = arith.addf %434, %435 : vector<8x64xf32>
    %437 = arith.mulf %436, %426 : vector<8x64xf32>
    %cst_345 = arith.constant 0.254829586 : f32
    %438 = vector.broadcast %cst_345 : f32 to vector<8x64xf32>
    %439 = arith.addf %437, %438 : vector<8x64xf32>
    %440 = arith.mulf %439, %426 : vector<8x64xf32>
    %cst_346 = arith.constant 0.000000e+00 : f32
    %441 = vector.broadcast %cst_346 : f32 to vector<8x64xf32>
    %442 = arith.subf %441, %420 : vector<8x64xf32>
    %443 = arith.mulf %442, %420 : vector<8x64xf32>
    %444 = math.exp %443 : vector<8x64xf32>
    %445 = arith.mulf %440, %444 : vector<8x64xf32>
    %cst_347 = arith.constant 1.000000e+00 : f32
    %446 = vector.broadcast %cst_347 : f32 to vector<8x64xf32>
    %447 = arith.subf %446, %445 : vector<8x64xf32>
    %cst_348 = arith.constant 0.000000e+00 : f32
    %448 = vector.broadcast %cst_348 : f32 to vector<8x64xf32>
    %449 = arith.cmpf oge, %419, %448 : vector<8x64xf32>
    %cst_349 = arith.constant 0.000000e+00 : f32
    %450 = vector.broadcast %cst_349 : f32 to vector<8x64xf32>
    %451 = arith.subf %450, %447 : vector<8x64xf32>
    %452 = arith.select %449, %447, %451 : vector<8x64xi1>, vector<8x64xf32>
    %cst_350 = arith.constant 1.000000e+00 : f32
    %453 = vector.broadcast %cst_350 : f32 to vector<8x64xf32>
    %454 = arith.addf %453, %452 : vector<8x64xf32>
    %455 = arith.mulf %417, %454 : vector<8x64xf32>
    %cst_351 = arith.constant dense<0.000000e+00> : vector<8x32xf32>
    %456 = tpu.matmul %455, %11, %cst_351 {dimension_numbers = #tpu.dot_dimension_numbers<[1], [0], [0], [1], [0, 0, 1, 1], [], []>} : vector<8x64xf32>, vector<64x32xf32>, vector<8x32xf32> -> vector<8x32xf32>
    %457 = vector.broadcast %12 : vector<1x32xf32> to vector<8x32xf32>
    %458 = arith.addf %456, %457 : vector<8x32xf32>
    %459 = arith.addf %412, %458 : vector<8x32xf32>
    %cst_352 = arith.constant dense<0.000000e+00> : vector<8xf32>
    %460 = vector.multi_reduction <add>, %459, %cst_352 [1] : vector<8x32xf32> to vector<8xf32>
    %461 = vector.shape_cast %460 : vector<8xf32> to vector<8x1xf32>
    %cst_353 = arith.constant 3.200000e+01 : f32
    %462 = vector.broadcast %cst_353 : f32 to vector<8x1xf32>
    %463 = arith.divf %461, %462 : vector<8x1xf32>
    %464 = vector.broadcast %463 : vector<8x1xf32> to vector<8x32xf32>
    %465 = arith.subf %459, %464 : vector<8x32xf32>
    %466 = arith.mulf %465, %465 : vector<8x32xf32>
    %cst_354 = arith.constant dense<0.000000e+00> : vector<8xf32>
    %467 = vector.multi_reduction <add>, %466, %cst_354 [1] : vector<8x32xf32> to vector<8xf32>
    %468 = vector.shape_cast %467 : vector<8xf32> to vector<8x1xf32>
    %cst_355 = arith.constant 3.200000e+01 : f32
    %469 = vector.broadcast %cst_355 : f32 to vector<8x1xf32>
    %470 = arith.divf %468, %469 : vector<8x1xf32>
    %471 = vector.broadcast %463 : vector<8x1xf32> to vector<8x32xf32>
    %472 = arith.subf %459, %471 : vector<8x32xf32>
    %cst_356 = arith.constant 9.99999974E-6 : f32
    %473 = vector.broadcast %cst_356 : f32 to vector<8x1xf32>
    %474 = arith.addf %470, %473 : vector<8x1xf32>
    %475 = math.rsqrt %474 : vector<8x1xf32>
    %476 = vector.broadcast %475 : vector<8x1xf32> to vector<8x32xf32>
    %477 = arith.mulf %472, %476 : vector<8x32xf32>
    %478 = vector.broadcast %7 : vector<1x32xf32> to vector<8x32xf32>
    %479 = arith.mulf %477, %478 : vector<8x32xf32>
    %480 = vector.broadcast %8 : vector<1x32xf32> to vector<8x32xf32>
    %481 = arith.addf %479, %480 : vector<8x32xf32>
    %c0_357 = arith.constant 0 : index
    %c0_358 = arith.constant 0 : index
    %482 = vector.load %arg31[%c0_357, %c0_358] : memref<8x64xf32, #tpu.memory_space<vmem>>, vector<8x32xf32>
    tpu.vector_store %arg31[%c0_357, %c0_358], %481 {strides = array<i32>} : memref<8x64xf32, #tpu.memory_space<vmem>>, vector<8x32xf32>,
    %c0_359 = arith.constant 0 : index
    %c32 = arith.constant 32 : index
    %483 = vector.load %arg0[%c0_359, %c32] : memref<8x64xf32, #tpu.memory_space<vmem>>, vector<8x32xf32>
    %c0_360 = arith.constant 0 : index
    %c32_361 = arith.constant 32 : index
    %484 = vector.load %arg1[%c0_360, %c32_361] : memref<10x64xf32, #tpu.memory_space<vmem>>, vector<10x32xf32>
    %c1_362 = arith.constant 1 : index
    %c0_363 = arith.constant 0 : index
    %485 = vector.load %arg3[%c1_362, %c0_363] : memref<2x8xf32, #tpu.memory_space<vmem>>, vector<1x8xf32>
    %486 = vector.broadcast %485 : vector<1x8xf32> to vector<8x8xf32>
    %487 = arith.addf %0, %486 : vector<8x8xf32>
    %c1_364 = arith.constant 1 : index
    %c0_365 = arith.constant 0 : index
    %488 = vector.load %arg4[%c1_364, %c0_365] : memref<2x10xf32, #tpu.memory_space<vmem>>, vector<1x10xf32>
    %489 = vector.shape_cast %488 : vector<1x10xf32> to vector<1x10xf32>
    %490 = vector.broadcast %489 : vector<1x10xf32> to vector<8x10xf32>
    %c0_366 = arith.constant 0 : index
    %c0_367 = arith.constant 0 : index
    %c0_368 = arith.constant 0 : index
    %491 = vector.load %arg5[%c0_366, %c0_367, %c0_368] : memref<4x32x8xf32, #tpu.memory_space<vmem>>, vector<1x32x8xf32>
    %492 = vector.shape_cast %491 : vector<1x32x8xf32> to vector<32x8xf32>
    %cst_369 = arith.constant dense<0.000000e+00> : vector<8x8xf32>
    %493 = tpu.matmul %483, %492, %cst_369 {dimension_numbers = #tpu.dot_dimension_numbers<[1], [0], [0], [1], [0, 0, 1, 1], [], []>} : vector<8x32xf32>, vector<32x8xf32>, vector<8x8xf32> -> vector<8x8xf32>
    %c0_370 = arith.constant 0 : index
    %c0_371 = arith.constant 0 : index
    %c0_372 = arith.constant 0 : index
    %494 = vector.load %arg6[%c0_370, %c0_371, %c0_372] : memref<4x1x8xf32, #tpu.memory_space<vmem>>, vector<1x1x8xf32>
    %495 = vector.shape_cast %494 : vector<1x1x8xf32> to vector<1x8xf32>
    %496 = vector.broadcast %495 : vector<1x8xf32> to vector<8x8xf32>
    %497 = arith.addf %493, %496 : vector<8x8xf32>
    %c0_373 = arith.constant 0 : index
    %c0_374 = arith.constant 0 : index
    %c0_375 = arith.constant 0 : index
    %498 = vector.load %arg7[%c0_373, %c0_374, %c0_375] : memref<4x32x8xf32, #tpu.memory_space<vmem>>, vector<1x32x8xf32>
    %499 = vector.shape_cast %498 : vector<1x32x8xf32> to vector<32x8xf32>
    %cst_376 = arith.constant dense<0.000000e+00> : vector<8x8xf32>
    %500 = tpu.matmul %483, %499, %cst_376 {dimension_numbers = #tpu.dot_dimension_numbers<[1], [0], [0], [1], [0, 0, 1, 1], [], []>} : vector<8x32xf32>, vector<32x8xf32>, vector<8x8xf32> -> vector<8x8xf32>
    %c0_377 = arith.constant 0 : index
    %c0_378 = arith.constant 0 : index
    %c0_379 = arith.constant 0 : index
    %501 = vector.load %arg8[%c0_377, %c0_378, %c0_379] : memref<4x1x8xf32, #tpu.memory_space<vmem>>, vector<1x1x8xf32>
    %502 = vector.shape_cast %501 : vector<1x1x8xf32> to vector<1x8xf32>
    %503 = vector.broadcast %502 : vector<1x8xf32> to vector<8x8xf32>
    %504 = arith.addf %500, %503 : vector<8x8xf32>
    %c0_380 = arith.constant 0 : index
    %c0_381 = arith.constant 0 : index
    %c0_382 = arith.constant 0 : index
    %505 = vector.load %arg9[%c0_380, %c0_381, %c0_382] : memref<4x32x8xf32, #tpu.memory_space<vmem>>, vector<1x32x8xf32>
    %506 = vector.shape_cast %505 : vector<1x32x8xf32> to vector<32x8xf32>
    %cst_383 = arith.constant dense<0.000000e+00> : vector<8x8xf32>
    %507 = tpu.matmul %483, %506, %cst_383 {dimension_numbers = #tpu.dot_dimension_numbers<[1], [0], [0], [1], [0, 0, 1, 1], [], []>} : vector<8x32xf32>, vector<32x8xf32>, vector<8x8xf32> -> vector<8x8xf32>
    %c0_384 = arith.constant 0 : index
    %c0_385 = arith.constant 0 : index
    %c0_386 = arith.constant 0 : index
    %508 = vector.load %arg10[%c0_384, %c0_385, %c0_386] : memref<4x1x8xf32, #tpu.memory_space<vmem>>, vector<1x1x8xf32>
    %509 = vector.shape_cast %508 : vector<1x1x8xf32> to vector<1x8xf32>
    %510 = vector.broadcast %509 : vector<1x8xf32> to vector<8x8xf32>
    %511 = arith.addf %507, %510 : vector<8x8xf32>
    %c1_387 = arith.constant 1 : index
    %c0_388 = arith.constant 0 : index
    %c0_389 = arith.constant 0 : index
    %c0_390 = arith.constant 0 : index
    %512 = vector.load %arg32[%c1_387, %c0_388, %c0_389, %c0_390] : memref<2x4x8x8xf32, #tpu.memory_space<vmem>>, vector<1x1x8x8xf32>
    %513 = vector.shape_cast %512 : vector<1x1x8x8xf32> to vector<8x8xf32>
    %514 = vector.shape_cast %504 : vector<8x8xf32> to vector<1x1x8x8xf32>
    tpu.vector_store %arg32[%c1_387, %c0_388, %c0_389, %c0_390], %514 {strides = array<i32>} : memref<2x4x8x8xf32, #tpu.memory_space<vmem>>, vector<1x1x8x8xf32>,
    %c1_391 = arith.constant 1 : index
    %c0_392 = arith.constant 0 : index
    %c0_393 = arith.constant 0 : index
    %c0_394 = arith.constant 0 : index
    %515 = vector.load %arg33[%c1_391, %c0_392, %c0_393, %c0_394] : memref<2x4x8x8xf32, #tpu.memory_space<vmem>>, vector<1x1x8x8xf32>
    %516 = vector.shape_cast %515 : vector<1x1x8x8xf32> to vector<8x8xf32>
    %517 = vector.shape_cast %511 : vector<8x8xf32> to vector<1x1x8x8xf32>
    tpu.vector_store %arg33[%c1_391, %c0_392, %c0_393, %c0_394], %517 {strides = array<i32>} : memref<2x4x8x8xf32, #tpu.memory_space<vmem>>, vector<1x1x8x8xf32>,
    %cst_395 = arith.constant dense<0.000000e+00> : vector<8x8xf32>
    %518 = tpu.matmul %497, %504, %cst_395 {dimension_numbers = #tpu.dot_dimension_numbers<[1], [1], [0], [0], [0, 0, 1, 0], [], []>} : vector<8x8xf32>, vector<8x8xf32>, vector<8x8xf32> -> vector<8x8xf32>
    %519 = arith.addf %518, %487 : vector<8x8xf32>
    %cst_396 = arith.constant dense<0xFF800000> : vector<8xf32>
    %520 = vector.multi_reduction <maximumf>, %519, %cst_396 [1] : vector<8x8xf32> to vector<8xf32>
    %521 = vector.shape_cast %520 : vector<8xf32> to vector<8x1xf32>
    %522 = vector.broadcast %521 : vector<8x1xf32> to vector<8x8xf32>
    %523 = arith.subf %519, %522 : vector<8x8xf32>
    %524 = math.exp %523 : vector<8x8xf32>
    %cst_397 = arith.constant dense<0.000000e+00> : vector<8xf32>
    %525 = vector.multi_reduction <add>, %524, %cst_397 [1] : vector<8x8xf32> to vector<8xf32>
    %526 = vector.shape_cast %525 : vector<8xf32> to vector<8x1xf32>
    %527 = vector.broadcast %526 : vector<8x1xf32> to vector<8x8xf32>
    %528 = arith.divf %524, %527 : vector<8x8xf32>
    %cst_398 = arith.constant dense<0.000000e+00> : vector<8x8xf32>
    %529 = tpu.matmul %528, %511, %cst_398 {dimension_numbers = #tpu.dot_dimension_numbers<[1], [0], [0], [1], [0, 0, 1, 1], [], []>} : vector<8x8xf32>, vector<8x8xf32>, vector<8x8xf32> -> vector<8x8xf32>
    %c0_399 = arith.constant 0 : index
    %c0_400 = arith.constant 0 : index
    %c0_401 = arith.constant 0 : index
    %530 = vector.load %arg11[%c0_399, %c0_400, %c0_401] : memref<4x8x32xf32, #tpu.memory_space<vmem>>, vector<1x8x32xf32>
    %531 = vector.shape_cast %530 : vector<1x8x32xf32> to vector<8x32xf32>
    %cst_402 = arith.constant dense<0.000000e+00> : vector<8x32xf32>
    %532 = tpu.matmul %529, %531, %cst_402 {dimension_numbers = #tpu.dot_dimension_numbers<[1], [0], [0], [1], [0, 0, 1, 1], [], []>} : vector<8x8xf32>, vector<8x32xf32>, vector<8x32xf32> -> vector<8x32xf32>
    %c1_403 = arith.constant 1 : index
    %c0_404 = arith.constant 0 : index
    %c0_405 = arith.constant 0 : index
    %533 = vector.load %arg5[%c1_403, %c0_404, %c0_405] : memref<4x32x8xf32, #tpu.memory_space<vmem>>, vector<1x32x8xf32>
    %534 = vector.shape_cast %533 : vector<1x32x8xf32> to vector<32x8xf32>
    %cst_406 = arith.constant dense<0.000000e+00> : vector<8x8xf32>
    %535 = tpu.matmul %483, %534, %cst_406 {dimension_numbers = #tpu.dot_dimension_numbers<[1], [0], [0], [1], [0, 0, 1, 1], [], []>} : vector<8x32xf32>, vector<32x8xf32>, vector<8x8xf32> -> vector<8x8xf32>
    %c1_407 = arith.constant 1 : index
    %c0_408 = arith.constant 0 : index
    %c0_409 = arith.constant 0 : index
    %536 = vector.load %arg6[%c1_407, %c0_408, %c0_409] : memref<4x1x8xf32, #tpu.memory_space<vmem>>, vector<1x1x8xf32>
    %537 = vector.shape_cast %536 : vector<1x1x8xf32> to vector<1x8xf32>
    %538 = vector.broadcast %537 : vector<1x8xf32> to vector<8x8xf32>
    %539 = arith.addf %535, %538 : vector<8x8xf32>
    %c1_410 = arith.constant 1 : index
    %c0_411 = arith.constant 0 : index
    %c0_412 = arith.constant 0 : index
    %540 = vector.load %arg7[%c1_410, %c0_411, %c0_412] : memref<4x32x8xf32, #tpu.memory_space<vmem>>, vector<1x32x8xf32>
    %541 = vector.shape_cast %540 : vector<1x32x8xf32> to vector<32x8xf32>
    %cst_413 = arith.constant dense<0.000000e+00> : vector<8x8xf32>
    %542 = tpu.matmul %483, %541, %cst_413 {dimension_numbers = #tpu.dot_dimension_numbers<[1], [0], [0], [1], [0, 0, 1, 1], [], []>} : vector<8x32xf32>, vector<32x8xf32>, vector<8x8xf32> -> vector<8x8xf32>
    %c1_414 = arith.constant 1 : index
    %c0_415 = arith.constant 0 : index
    %c0_416 = arith.constant 0 : index
    %543 = vector.load %arg8[%c1_414, %c0_415, %c0_416] : memref<4x1x8xf32, #tpu.memory_space<vmem>>, vector<1x1x8xf32>
    %544 = vector.shape_cast %543 : vector<1x1x8xf32> to vector<1x8xf32>
    %545 = vector.broadcast %544 : vector<1x8xf32> to vector<8x8xf32>
    %546 = arith.addf %542, %545 : vector<8x8xf32>
    %c1_417 = arith.constant 1 : index
    %c0_418 = arith.constant 0 : index
    %c0_419 = arith.constant 0 : index
    %547 = vector.load %arg9[%c1_417, %c0_418, %c0_419] : memref<4x32x8xf32, #tpu.memory_space<vmem>>, vector<1x32x8xf32>
    %548 = vector.shape_cast %547 : vector<1x32x8xf32> to vector<32x8xf32>
    %cst_420 = arith.constant dense<0.000000e+00> : vector<8x8xf32>
    %549 = tpu.matmul %483, %548, %cst_420 {dimension_numbers = #tpu.dot_dimension_numbers<[1], [0], [0], [1], [0, 0, 1, 1], [], []>} : vector<8x32xf32>, vector<32x8xf32>, vector<8x8xf32> -> vector<8x8xf32>
    %c1_421 = arith.constant 1 : index
    %c0_422 = arith.constant 0 : index
    %c0_423 = arith.constant 0 : index
    %550 = vector.load %arg10[%c1_421, %c0_422, %c0_423] : memref<4x1x8xf32, #tpu.memory_space<vmem>>, vector<1x1x8xf32>
    %551 = vector.shape_cast %550 : vector<1x1x8xf32> to vector<1x8xf32>
    %552 = vector.broadcast %551 : vector<1x8xf32> to vector<8x8xf32>
    %553 = arith.addf %549, %552 : vector<8x8xf32>
    %c1_424 = arith.constant 1 : index
    %c1_425 = arith.constant 1 : index
    %c0_426 = arith.constant 0 : index
    %c0_427 = arith.constant 0 : index
    %554 = vector.load %arg32[%c1_424, %c1_425, %c0_426, %c0_427] : memref<2x4x8x8xf32, #tpu.memory_space<vmem>>, vector<1x1x8x8xf32>
    %555 = vector.shape_cast %554 : vector<1x1x8x8xf32> to vector<8x8xf32>
    %556 = vector.shape_cast %546 : vector<8x8xf32> to vector<1x1x8x8xf32>
    tpu.vector_store %arg32[%c1_424, %c1_425, %c0_426, %c0_427], %556 {strides = array<i32>} : memref<2x4x8x8xf32, #tpu.memory_space<vmem>>, vector<1x1x8x8xf32>,
    %c1_428 = arith.constant 1 : index
    %c1_429 = arith.constant 1 : index
    %c0_430 = arith.constant 0 : index
    %c0_431 = arith.constant 0 : index
    %557 = vector.load %arg33[%c1_428, %c1_429, %c0_430, %c0_431] : memref<2x4x8x8xf32, #tpu.memory_space<vmem>>, vector<1x1x8x8xf32>
    %558 = vector.shape_cast %557 : vector<1x1x8x8xf32> to vector<8x8xf32>
    %559 = vector.shape_cast %553 : vector<8x8xf32> to vector<1x1x8x8xf32>
    tpu.vector_store %arg33[%c1_428, %c1_429, %c0_430, %c0_431], %559 {strides = array<i32>} : memref<2x4x8x8xf32, #tpu.memory_space<vmem>>, vector<1x1x8x8xf32>,
    %cst_432 = arith.constant dense<0.000000e+00> : vector<8x8xf32>
    %560 = tpu.matmul %539, %546, %cst_432 {dimension_numbers = #tpu.dot_dimension_numbers<[1], [1], [0], [0], [0, 0, 1, 0], [], []>} : vector<8x8xf32>, vector<8x8xf32>, vector<8x8xf32> -> vector<8x8xf32>
    %561 = arith.addf %560, %487 : vector<8x8xf32>
    %cst_433 = arith.constant dense<0xFF800000> : vector<8xf32>
    %562 = vector.multi_reduction <maximumf>, %561, %cst_433 [1] : vector<8x8xf32> to vector<8xf32>
    %563 = vector.shape_cast %562 : vector<8xf32> to vector<8x1xf32>
    %564 = vector.broadcast %563 : vector<8x1xf32> to vector<8x8xf32>
    %565 = arith.subf %561, %564 : vector<8x8xf32>
    %566 = math.exp %565 : vector<8x8xf32>
    %cst_434 = arith.constant dense<0.000000e+00> : vector<8xf32>
    %567 = vector.multi_reduction <add>, %566, %cst_434 [1] : vector<8x8xf32> to vector<8xf32>
    %568 = vector.shape_cast %567 : vector<8xf32> to vector<8x1xf32>
    %569 = vector.broadcast %568 : vector<8x1xf32> to vector<8x8xf32>
    %570 = arith.divf %566, %569 : vector<8x8xf32>
    %cst_435 = arith.constant dense<0.000000e+00> : vector<8x8xf32>
    %571 = tpu.matmul %570, %553, %cst_435 {dimension_numbers = #tpu.dot_dimension_numbers<[1], [0], [0], [1], [0, 0, 1, 1], [], []>} : vector<8x8xf32>, vector<8x8xf32>, vector<8x8xf32> -> vector<8x8xf32>
    %c1_436 = arith.constant 1 : index
    %c0_437 = arith.constant 0 : index
    %c0_438 = arith.constant 0 : index
    %572 = vector.load %arg11[%c1_436, %c0_437, %c0_438] : memref<4x8x32xf32, #tpu.memory_space<vmem>>, vector<1x8x32xf32>
    %573 = vector.shape_cast %572 : vector<1x8x32xf32> to vector<8x32xf32>
    %cst_439 = arith.constant dense<0.000000e+00> : vector<8x32xf32>
    %574 = tpu.matmul %571, %573, %cst_439 {dimension_numbers = #tpu.dot_dimension_numbers<[1], [0], [0], [1], [0, 0, 1, 1], [], []>} : vector<8x8xf32>, vector<8x32xf32>, vector<8x32xf32> -> vector<8x32xf32>
    %575 = arith.addf %532, %574 : vector<8x32xf32>
    %c2_440 = arith.constant 2 : index
    %c0_441 = arith.constant 0 : index
    %c0_442 = arith.constant 0 : index
    %576 = vector.load %arg5[%c2_440, %c0_441, %c0_442] : memref<4x32x8xf32, #tpu.memory_space<vmem>>, vector<1x32x8xf32>
    %577 = vector.shape_cast %576 : vector<1x32x8xf32> to vector<32x8xf32>
    %cst_443 = arith.constant dense<0.000000e+00> : vector<8x8xf32>
    %578 = tpu.matmul %483, %577, %cst_443 {dimension_numbers = #tpu.dot_dimension_numbers<[1], [0], [0], [1], [0, 0, 1, 1], [], []>} : vector<8x32xf32>, vector<32x8xf32>, vector<8x8xf32> -> vector<8x8xf32>
    %c2_444 = arith.constant 2 : index
    %c0_445 = arith.constant 0 : index
    %c0_446 = arith.constant 0 : index
    %579 = vector.load %arg6[%c2_444, %c0_445, %c0_446] : memref<4x1x8xf32, #tpu.memory_space<vmem>>, vector<1x1x8xf32>
    %580 = vector.shape_cast %579 : vector<1x1x8xf32> to vector<1x8xf32>
    %581 = vector.broadcast %580 : vector<1x8xf32> to vector<8x8xf32>
    %582 = arith.addf %578, %581 : vector<8x8xf32>
    %c2_447 = arith.constant 2 : index
    %c0_448 = arith.constant 0 : index
    %c0_449 = arith.constant 0 : index
    %583 = vector.load %arg7[%c2_447, %c0_448, %c0_449] : memref<4x32x8xf32, #tpu.memory_space<vmem>>, vector<1x32x8xf32>
    %584 = vector.shape_cast %583 : vector<1x32x8xf32> to vector<32x8xf32>
    %cst_450 = arith.constant dense<0.000000e+00> : vector<8x8xf32>
    %585 = tpu.matmul %483, %584, %cst_450 {dimension_numbers = #tpu.dot_dimension_numbers<[1], [0], [0], [1], [0, 0, 1, 1], [], []>} : vector<8x32xf32>, vector<32x8xf32>, vector<8x8xf32> -> vector<8x8xf32>
    %c2_451 = arith.constant 2 : index
    %c0_452 = arith.constant 0 : index
    %c0_453 = arith.constant 0 : index
    %586 = vector.load %arg8[%c2_451, %c0_452, %c0_453] : memref<4x1x8xf32, #tpu.memory_space<vmem>>, vector<1x1x8xf32>
    %587 = vector.shape_cast %586 : vector<1x1x8xf32> to vector<1x8xf32>
    %588 = vector.broadcast %587 : vector<1x8xf32> to vector<8x8xf32>
    %589 = arith.addf %585, %588 : vector<8x8xf32>
    %c2_454 = arith.constant 2 : index
    %c0_455 = arith.constant 0 : index
    %c0_456 = arith.constant 0 : index
    %590 = vector.load %arg9[%c2_454, %c0_455, %c0_456] : memref<4x32x8xf32, #tpu.memory_space<vmem>>, vector<1x32x8xf32>
    %591 = vector.shape_cast %590 : vector<1x32x8xf32> to vector<32x8xf32>
    %cst_457 = arith.constant dense<0.000000e+00> : vector<8x8xf32>
    %592 = tpu.matmul %483, %591, %cst_457 {dimension_numbers = #tpu.dot_dimension_numbers<[1], [0], [0], [1], [0, 0, 1, 1], [], []>} : vector<8x32xf32>, vector<32x8xf32>, vector<8x8xf32> -> vector<8x8xf32>
    %c2_458 = arith.constant 2 : index
    %c0_459 = arith.constant 0 : index
    %c0_460 = arith.constant 0 : index
    %593 = vector.load %arg10[%c2_458, %c0_459, %c0_460] : memref<4x1x8xf32, #tpu.memory_space<vmem>>, vector<1x1x8xf32>
    %594 = vector.shape_cast %593 : vector<1x1x8xf32> to vector<1x8xf32>
    %595 = vector.broadcast %594 : vector<1x8xf32> to vector<8x8xf32>
    %596 = arith.addf %592, %595 : vector<8x8xf32>
    %c1_461 = arith.constant 1 : index
    %c2_462 = arith.constant 2 : index
    %c0_463 = arith.constant 0 : index
    %c0_464 = arith.constant 0 : index
    %597 = vector.load %arg32[%c1_461, %c2_462, %c0_463, %c0_464] : memref<2x4x8x8xf32, #tpu.memory_space<vmem>>, vector<1x1x8x8xf32>
    %598 = vector.shape_cast %597 : vector<1x1x8x8xf32> to vector<8x8xf32>
    %599 = vector.shape_cast %589 : vector<8x8xf32> to vector<1x1x8x8xf32>
    tpu.vector_store %arg32[%c1_461, %c2_462, %c0_463, %c0_464], %599 {strides = array<i32>} : memref<2x4x8x8xf32, #tpu.memory_space<vmem>>, vector<1x1x8x8xf32>,
    %c1_465 = arith.constant 1 : index
    %c2_466 = arith.constant 2 : index
    %c0_467 = arith.constant 0 : index
    %c0_468 = arith.constant 0 : index
    %600 = vector.load %arg33[%c1_465, %c2_466, %c0_467, %c0_468] : memref<2x4x8x8xf32, #tpu.memory_space<vmem>>, vector<1x1x8x8xf32>
    %601 = vector.shape_cast %600 : vector<1x1x8x8xf32> to vector<8x8xf32>
    %602 = vector.shape_cast %596 : vector<8x8xf32> to vector<1x1x8x8xf32>
    tpu.vector_store %arg33[%c1_465, %c2_466, %c0_467, %c0_468], %602 {strides = array<i32>} : memref<2x4x8x8xf32, #tpu.memory_space<vmem>>, vector<1x1x8x8xf32>,
    %cst_469 = arith.constant dense<0.000000e+00> : vector<8x8xf32>
    %603 = tpu.matmul %582, %589, %cst_469 {dimension_numbers = #tpu.dot_dimension_numbers<[1], [1], [0], [0], [0, 0, 1, 0], [], []>} : vector<8x8xf32>, vector<8x8xf32>, vector<8x8xf32> -> vector<8x8xf32>
    %604 = arith.addf %603, %487 : vector<8x8xf32>
    %cst_470 = arith.constant dense<0xFF800000> : vector<8xf32>
    %605 = vector.multi_reduction <maximumf>, %604, %cst_470 [1] : vector<8x8xf32> to vector<8xf32>
    %606 = vector.shape_cast %605 : vector<8xf32> to vector<8x1xf32>
    %607 = vector.broadcast %606 : vector<8x1xf32> to vector<8x8xf32>
    %608 = arith.subf %604, %607 : vector<8x8xf32>
    %609 = math.exp %608 : vector<8x8xf32>
    %cst_471 = arith.constant dense<0.000000e+00> : vector<8xf32>
    %610 = vector.multi_reduction <add>, %609, %cst_471 [1] : vector<8x8xf32> to vector<8xf32>
    %611 = vector.shape_cast %610 : vector<8xf32> to vector<8x1xf32>
    %612 = vector.broadcast %611 : vector<8x1xf32> to vector<8x8xf32>
    %613 = arith.divf %609, %612 : vector<8x8xf32>
    %cst_472 = arith.constant dense<0.000000e+00> : vector<8x8xf32>
    %614 = tpu.matmul %613, %596, %cst_472 {dimension_numbers = #tpu.dot_dimension_numbers<[1], [0], [0], [1], [0, 0, 1, 1], [], []>} : vector<8x8xf32>, vector<8x8xf32>, vector<8x8xf32> -> vector<8x8xf32>
    %c2_473 = arith.constant 2 : index
    %c0_474 = arith.constant 0 : index
    %c0_475 = arith.constant 0 : index
    %615 = vector.load %arg11[%c2_473, %c0_474, %c0_475] : memref<4x8x32xf32, #tpu.memory_space<vmem>>, vector<1x8x32xf32>
    %616 = vector.shape_cast %615 : vector<1x8x32xf32> to vector<8x32xf32>
    %cst_476 = arith.constant dense<0.000000e+00> : vector<8x32xf32>
    %617 = tpu.matmul %614, %616, %cst_476 {dimension_numbers = #tpu.dot_dimension_numbers<[1], [0], [0], [1], [0, 0, 1, 1], [], []>} : vector<8x8xf32>, vector<8x32xf32>, vector<8x32xf32> -> vector<8x32xf32>
    %618 = arith.addf %575, %617 : vector<8x32xf32>
    %c3_477 = arith.constant 3 : index
    %c0_478 = arith.constant 0 : index
    %c0_479 = arith.constant 0 : index
    %619 = vector.load %arg5[%c3_477, %c0_478, %c0_479] : memref<4x32x8xf32, #tpu.memory_space<vmem>>, vector<1x32x8xf32>
    %620 = vector.shape_cast %619 : vector<1x32x8xf32> to vector<32x8xf32>
    %cst_480 = arith.constant dense<0.000000e+00> : vector<8x8xf32>
    %621 = tpu.matmul %483, %620, %cst_480 {dimension_numbers = #tpu.dot_dimension_numbers<[1], [0], [0], [1], [0, 0, 1, 1], [], []>} : vector<8x32xf32>, vector<32x8xf32>, vector<8x8xf32> -> vector<8x8xf32>
    %c3_481 = arith.constant 3 : index
    %c0_482 = arith.constant 0 : index
    %c0_483 = arith.constant 0 : index
    %622 = vector.load %arg6[%c3_481, %c0_482, %c0_483] : memref<4x1x8xf32, #tpu.memory_space<vmem>>, vector<1x1x8xf32>
    %623 = vector.shape_cast %622 : vector<1x1x8xf32> to vector<1x8xf32>
    %624 = vector.broadcast %623 : vector<1x8xf32> to vector<8x8xf32>
    %625 = arith.addf %621, %624 : vector<8x8xf32>
    %c3_484 = arith.constant 3 : index
    %c0_485 = arith.constant 0 : index
    %c0_486 = arith.constant 0 : index
    %626 = vector.load %arg7[%c3_484, %c0_485, %c0_486] : memref<4x32x8xf32, #tpu.memory_space<vmem>>, vector<1x32x8xf32>
    %627 = vector.shape_cast %626 : vector<1x32x8xf32> to vector<32x8xf32>
    %cst_487 = arith.constant dense<0.000000e+00> : vector<8x8xf32>
    %628 = tpu.matmul %483, %627, %cst_487 {dimension_numbers = #tpu.dot_dimension_numbers<[1], [0], [0], [1], [0, 0, 1, 1], [], []>} : vector<8x32xf32>, vector<32x8xf32>, vector<8x8xf32> -> vector<8x8xf32>
    %c3_488 = arith.constant 3 : index
    %c0_489 = arith.constant 0 : index
    %c0_490 = arith.constant 0 : index
    %629 = vector.load %arg8[%c3_488, %c0_489, %c0_490] : memref<4x1x8xf32, #tpu.memory_space<vmem>>, vector<1x1x8xf32>
    %630 = vector.shape_cast %629 : vector<1x1x8xf32> to vector<1x8xf32>
    %631 = vector.broadcast %630 : vector<1x8xf32> to vector<8x8xf32>
    %632 = arith.addf %628, %631 : vector<8x8xf32>
    %c3_491 = arith.constant 3 : index
    %c0_492 = arith.constant 0 : index
    %c0_493 = arith.constant 0 : index
    %633 = vector.load %arg9[%c3_491, %c0_492, %c0_493] : memref<4x32x8xf32, #tpu.memory_space<vmem>>, vector<1x32x8xf32>
    %634 = vector.shape_cast %633 : vector<1x32x8xf32> to vector<32x8xf32>
    %cst_494 = arith.constant dense<0.000000e+00> : vector<8x8xf32>
    %635 = tpu.matmul %483, %634, %cst_494 {dimension_numbers = #tpu.dot_dimension_numbers<[1], [0], [0], [1], [0, 0, 1, 1], [], []>} : vector<8x32xf32>, vector<32x8xf32>, vector<8x8xf32> -> vector<8x8xf32>
    %c3_495 = arith.constant 3 : index
    %c0_496 = arith.constant 0 : index
    %c0_497 = arith.constant 0 : index
    %636 = vector.load %arg10[%c3_495, %c0_496, %c0_497] : memref<4x1x8xf32, #tpu.memory_space<vmem>>, vector<1x1x8xf32>
    %637 = vector.shape_cast %636 : vector<1x1x8xf32> to vector<1x8xf32>
    %638 = vector.broadcast %637 : vector<1x8xf32> to vector<8x8xf32>
    %639 = arith.addf %635, %638 : vector<8x8xf32>
    %c1_498 = arith.constant 1 : index
    %c3_499 = arith.constant 3 : index
    %c0_500 = arith.constant 0 : index
    %c0_501 = arith.constant 0 : index
    %640 = vector.load %arg32[%c1_498, %c3_499, %c0_500, %c0_501] : memref<2x4x8x8xf32, #tpu.memory_space<vmem>>, vector<1x1x8x8xf32>
    %641 = vector.shape_cast %640 : vector<1x1x8x8xf32> to vector<8x8xf32>
    %642 = vector.shape_cast %632 : vector<8x8xf32> to vector<1x1x8x8xf32>
    tpu.vector_store %arg32[%c1_498, %c3_499, %c0_500, %c0_501], %642 {strides = array<i32>} : memref<2x4x8x8xf32, #tpu.memory_space<vmem>>, vector<1x1x8x8xf32>,
    %c1_502 = arith.constant 1 : index
    %c3_503 = arith.constant 3 : index
    %c0_504 = arith.constant 0 : index
    %c0_505 = arith.constant 0 : index
    %643 = vector.load %arg33[%c1_502, %c3_503, %c0_504, %c0_505] : memref<2x4x8x8xf32, #tpu.memory_space<vmem>>, vector<1x1x8x8xf32>
    %644 = vector.shape_cast %643 : vector<1x1x8x8xf32> to vector<8x8xf32>
    %645 = vector.shape_cast %639 : vector<8x8xf32> to vector<1x1x8x8xf32>
    tpu.vector_store %arg33[%c1_502, %c3_503, %c0_504, %c0_505], %645 {strides = array<i32>} : memref<2x4x8x8xf32, #tpu.memory_space<vmem>>, vector<1x1x8x8xf32>,
    %cst_506 = arith.constant dense<0.000000e+00> : vector<8x8xf32>
    %646 = tpu.matmul %625, %632, %cst_506 {dimension_numbers = #tpu.dot_dimension_numbers<[1], [1], [0], [0], [0, 0, 1, 0], [], []>} : vector<8x8xf32>, vector<8x8xf32>, vector<8x8xf32> -> vector<8x8xf32>
    %647 = arith.addf %646, %487 : vector<8x8xf32>
    %cst_507 = arith.constant dense<0xFF800000> : vector<8xf32>
    %648 = vector.multi_reduction <maximumf>, %647, %cst_507 [1] : vector<8x8xf32> to vector<8xf32>
    %649 = vector.shape_cast %648 : vector<8xf32> to vector<8x1xf32>
    %650 = vector.broadcast %649 : vector<8x1xf32> to vector<8x8xf32>
    %651 = arith.subf %647, %650 : vector<8x8xf32>
    %652 = math.exp %651 : vector<8x8xf32>
    %cst_508 = arith.constant dense<0.000000e+00> : vector<8xf32>
    %653 = vector.multi_reduction <add>, %652, %cst_508 [1] : vector<8x8xf32> to vector<8xf32>
    %654 = vector.shape_cast %653 : vector<8xf32> to vector<8x1xf32>
    %655 = vector.broadcast %654 : vector<8x1xf32> to vector<8x8xf32>
    %656 = arith.divf %652, %655 : vector<8x8xf32>
    %cst_509 = arith.constant dense<0.000000e+00> : vector<8x8xf32>
    %657 = tpu.matmul %656, %639, %cst_509 {dimension_numbers = #tpu.dot_dimension_numbers<[1], [0], [0], [1], [0, 0, 1, 1], [], []>} : vector<8x8xf32>, vector<8x8xf32>, vector<8x8xf32> -> vector<8x8xf32>
    %c3_510 = arith.constant 3 : index
    %c0_511 = arith.constant 0 : index
    %c0_512 = arith.constant 0 : index
    %658 = vector.load %arg11[%c3_510, %c0_511, %c0_512] : memref<4x8x32xf32, #tpu.memory_space<vmem>>, vector<1x8x32xf32>
    %659 = vector.shape_cast %658 : vector<1x8x32xf32> to vector<8x32xf32>
    %cst_513 = arith.constant dense<0.000000e+00> : vector<8x32xf32>
    %660 = tpu.matmul %657, %659, %cst_513 {dimension_numbers = #tpu.dot_dimension_numbers<[1], [0], [0], [1], [0, 0, 1, 1], [], []>} : vector<8x8xf32>, vector<8x32xf32>, vector<8x32xf32> -> vector<8x32xf32>
    %661 = arith.addf %618, %660 : vector<8x32xf32>
    %662 = arith.addf %483, %661 : vector<8x32xf32>
    %663 = vector.broadcast %1 : vector<1x32xf32> to vector<8x32xf32>
    %664 = arith.addf %662, %663 : vector<8x32xf32>
    %cst_514 = arith.constant dense<0.000000e+00> : vector<8xf32>
    %665 = vector.multi_reduction <add>, %664, %cst_514 [1] : vector<8x32xf32> to vector<8xf32>
    %666 = vector.shape_cast %665 : vector<8xf32> to vector<8x1xf32>
    %cst_515 = arith.constant 3.200000e+01 : f32
    %667 = vector.broadcast %cst_515 : f32 to vector<8x1xf32>
    %668 = arith.divf %666, %667 : vector<8x1xf32>
    %669 = vector.broadcast %668 : vector<8x1xf32> to vector<8x32xf32>
    %670 = arith.subf %664, %669 : vector<8x32xf32>
    %671 = arith.mulf %670, %670 : vector<8x32xf32>
    %cst_516 = arith.constant dense<0.000000e+00> : vector<8xf32>
    %672 = vector.multi_reduction <add>, %671, %cst_516 [1] : vector<8x32xf32> to vector<8xf32>
    %673 = vector.shape_cast %672 : vector<8xf32> to vector<8x1xf32>
    %cst_517 = arith.constant 3.200000e+01 : f32
    %674 = vector.broadcast %cst_517 : f32 to vector<8x1xf32>
    %675 = arith.divf %673, %674 : vector<8x1xf32>
    %676 = vector.broadcast %668 : vector<8x1xf32> to vector<8x32xf32>
    %677 = arith.subf %664, %676 : vector<8x32xf32>
    %cst_518 = arith.constant 9.99999974E-6 : f32
    %678 = vector.broadcast %cst_518 : f32 to vector<8x1xf32>
    %679 = arith.addf %675, %678 : vector<8x1xf32>
    %680 = math.rsqrt %679 : vector<8x1xf32>
    %681 = vector.broadcast %680 : vector<8x1xf32> to vector<8x32xf32>
    %682 = arith.mulf %677, %681 : vector<8x32xf32>
    %683 = vector.broadcast %3 : vector<1x32xf32> to vector<8x32xf32>
    %684 = arith.mulf %682, %683 : vector<8x32xf32>
    %685 = vector.broadcast %4 : vector<1x32xf32> to vector<8x32xf32>
    %686 = arith.addf %684, %685 : vector<8x32xf32>
    %c0_519 = arith.constant 0 : index
    %c0_520 = arith.constant 0 : index
    %c0_521 = arith.constant 0 : index
    %687 = vector.load %arg15[%c0_519, %c0_520, %c0_521] : memref<4x32x8xf32, #tpu.memory_space<vmem>>, vector<1x32x8xf32>
    %688 = vector.shape_cast %687 : vector<1x32x8xf32> to vector<32x8xf32>
    %cst_522 = arith.constant dense<0.000000e+00> : vector<8x8xf32>
    %689 = tpu.matmul %686, %688, %cst_522 {dimension_numbers = #tpu.dot_dimension_numbers<[1], [0], [0], [1], [0, 0, 1, 1], [], []>} : vector<8x32xf32>, vector<32x8xf32>, vector<8x8xf32> -> vector<8x8xf32>
    %c0_523 = arith.constant 0 : index
    %c0_524 = arith.constant 0 : index
    %c0_525 = arith.constant 0 : index
    %690 = vector.load %arg16[%c0_523, %c0_524, %c0_525] : memref<4x1x8xf32, #tpu.memory_space<vmem>>, vector<1x1x8xf32>
    %691 = vector.shape_cast %690 : vector<1x1x8xf32> to vector<1x8xf32>
    %692 = vector.broadcast %691 : vector<1x8xf32> to vector<8x8xf32>
    %693 = arith.addf %689, %692 : vector<8x8xf32>
    %c0_526 = arith.constant 0 : index
    %c0_527 = arith.constant 0 : index
    %c0_528 = arith.constant 0 : index
    %694 = vector.load %arg17[%c0_526, %c0_527, %c0_528] : memref<4x32x8xf32, #tpu.memory_space<vmem>>, vector<1x32x8xf32>
    %695 = vector.shape_cast %694 : vector<1x32x8xf32> to vector<32x8xf32>
    %cst_529 = arith.constant dense<0.000000e+00> : vector<10x8xf32>
    %696 = tpu.matmul %484, %695, %cst_529 {dimension_numbers = #tpu.dot_dimension_numbers<[1], [0], [0], [1], [0, 0, 1, 1], [], []>} : vector<10x32xf32>, vector<32x8xf32>, vector<10x8xf32> -> vector<10x8xf32>
    %c0_530 = arith.constant 0 : index
    %c0_531 = arith.constant 0 : index
    %c0_532 = arith.constant 0 : index
    %697 = vector.load %arg18[%c0_530, %c0_531, %c0_532] : memref<4x1x8xf32, #tpu.memory_space<vmem>>, vector<1x1x8xf32>
    %698 = vector.shape_cast %697 : vector<1x1x8xf32> to vector<1x8xf32>
    %699 = vector.broadcast %698 : vector<1x8xf32> to vector<10x8xf32>
    %700 = arith.addf %696, %699 : vector<10x8xf32>
    %c0_533 = arith.constant 0 : index
    %c0_534 = arith.constant 0 : index
    %c0_535 = arith.constant 0 : index
    %701 = vector.load %arg19[%c0_533, %c0_534, %c0_535] : memref<4x32x8xf32, #tpu.memory_space<vmem>>, vector<1x32x8xf32>
    %702 = vector.shape_cast %701 : vector<1x32x8xf32> to vector<32x8xf32>
    %cst_536 = arith.constant dense<0.000000e+00> : vector<10x8xf32>
    %703 = tpu.matmul %484, %702, %cst_536 {dimension_numbers = #tpu.dot_dimension_numbers<[1], [0], [0], [1], [0, 0, 1, 1], [], []>} : vector<10x32xf32>, vector<32x8xf32>, vector<10x8xf32> -> vector<10x8xf32>
    %c0_537 = arith.constant 0 : index
    %c0_538 = arith.constant 0 : index
    %c0_539 = arith.constant 0 : index
    %704 = vector.load %arg20[%c0_537, %c0_538, %c0_539] : memref<4x1x8xf32, #tpu.memory_space<vmem>>, vector<1x1x8xf32>
    %705 = vector.shape_cast %704 : vector<1x1x8xf32> to vector<1x8xf32>
    %706 = vector.broadcast %705 : vector<1x8xf32> to vector<10x8xf32>
    %707 = arith.addf %703, %706 : vector<10x8xf32>
    %c1_540 = arith.constant 1 : index
    %c0_541 = arith.constant 0 : index
    %c0_542 = arith.constant 0 : index
    %c0_543 = arith.constant 0 : index
    %708 = vector.load %arg34[%c1_540, %c0_541, %c0_542, %c0_543] : memref<2x4x10x8xf32, #tpu.memory_space<vmem>>, vector<1x1x10x8xf32>
    %709 = vector.shape_cast %708 : vector<1x1x10x8xf32> to vector<10x8xf32>
    %710 = vector.shape_cast %700 : vector<10x8xf32> to vector<1x1x10x8xf32>
    tpu.vector_store %arg34[%c1_540, %c0_541, %c0_542, %c0_543], %710 {strides = array<i32>} : memref<2x4x10x8xf32, #tpu.memory_space<vmem>>, vector<1x1x10x8xf32>,
    %c1_544 = arith.constant 1 : index
    %c0_545 = arith.constant 0 : index
    %c0_546 = arith.constant 0 : index
    %c0_547 = arith.constant 0 : index
    %711 = vector.load %arg35[%c1_544, %c0_545, %c0_546, %c0_547] : memref<2x4x10x8xf32, #tpu.memory_space<vmem>>, vector<1x1x10x8xf32>
    %712 = vector.shape_cast %711 : vector<1x1x10x8xf32> to vector<10x8xf32>
    %713 = vector.shape_cast %707 : vector<10x8xf32> to vector<1x1x10x8xf32>
    tpu.vector_store %arg35[%c1_544, %c0_545, %c0_546, %c0_547], %713 {strides = array<i32>} : memref<2x4x10x8xf32, #tpu.memory_space<vmem>>, vector<1x1x10x8xf32>,
    %cst_548 = arith.constant dense<0.000000e+00> : vector<8x10xf32>
    %714 = tpu.matmul %693, %700, %cst_548 {dimension_numbers = #tpu.dot_dimension_numbers<[1], [1], [0], [0], [0, 0, 1, 0], [], []>} : vector<8x8xf32>, vector<10x8xf32>, vector<8x10xf32> -> vector<8x10xf32>
    %715 = arith.addf %714, %490 : vector<8x10xf32>
    %cst_549 = arith.constant dense<0xFF800000> : vector<8xf32>
    %716 = vector.multi_reduction <maximumf>, %715, %cst_549 [1] : vector<8x10xf32> to vector<8xf32>
    %717 = vector.shape_cast %716 : vector<8xf32> to vector<8x1xf32>
    %718 = vector.broadcast %717 : vector<8x1xf32> to vector<8x10xf32>
    %719 = arith.subf %715, %718 : vector<8x10xf32>
    %720 = math.exp %719 : vector<8x10xf32>
    %cst_550 = arith.constant dense<0.000000e+00> : vector<8xf32>
    %721 = vector.multi_reduction <add>, %720, %cst_550 [1] : vector<8x10xf32> to vector<8xf32>
    %722 = vector.shape_cast %721 : vector<8xf32> to vector<8x1xf32>
    %723 = vector.broadcast %722 : vector<8x1xf32> to vector<8x10xf32>
    %724 = arith.divf %720, %723 : vector<8x10xf32>
    %cst_551 = arith.constant dense<0.000000e+00> : vector<8x8xf32>
    %725 = tpu.matmul %724, %707, %cst_551 {dimension_numbers = #tpu.dot_dimension_numbers<[1], [0], [0], [1], [0, 0, 1, 1], [], []>} : vector<8x10xf32>, vector<10x8xf32>, vector<8x8xf32> -> vector<8x8xf32>
    %c0_552 = arith.constant 0 : index
    %c0_553 = arith.constant 0 : index
    %c0_554 = arith.constant 0 : index
    %726 = vector.load %arg21[%c0_552, %c0_553, %c0_554] : memref<4x8x32xf32, #tpu.memory_space<vmem>>, vector<1x8x32xf32>
    %727 = vector.shape_cast %726 : vector<1x8x32xf32> to vector<8x32xf32>
    %cst_555 = arith.constant dense<0.000000e+00> : vector<8x32xf32>
    %728 = tpu.matmul %725, %727, %cst_555 {dimension_numbers = #tpu.dot_dimension_numbers<[1], [0], [0], [1], [0, 0, 1, 1], [], []>} : vector<8x8xf32>, vector<8x32xf32>, vector<8x32xf32> -> vector<8x32xf32>
    %c1_556 = arith.constant 1 : index
    %c0_557 = arith.constant 0 : index
    %c0_558 = arith.constant 0 : index
    %729 = vector.load %arg15[%c1_556, %c0_557, %c0_558] : memref<4x32x8xf32, #tpu.memory_space<vmem>>, vector<1x32x8xf32>
    %730 = vector.shape_cast %729 : vector<1x32x8xf32> to vector<32x8xf32>
    %cst_559 = arith.constant dense<0.000000e+00> : vector<8x8xf32>
    %731 = tpu.matmul %686, %730, %cst_559 {dimension_numbers = #tpu.dot_dimension_numbers<[1], [0], [0], [1], [0, 0, 1, 1], [], []>} : vector<8x32xf32>, vector<32x8xf32>, vector<8x8xf32> -> vector<8x8xf32>
    %c1_560 = arith.constant 1 : index
    %c0_561 = arith.constant 0 : index
    %c0_562 = arith.constant 0 : index
    %732 = vector.load %arg16[%c1_560, %c0_561, %c0_562] : memref<4x1x8xf32, #tpu.memory_space<vmem>>, vector<1x1x8xf32>
    %733 = vector.shape_cast %732 : vector<1x1x8xf32> to vector<1x8xf32>
    %734 = vector.broadcast %733 : vector<1x8xf32> to vector<8x8xf32>
    %735 = arith.addf %731, %734 : vector<8x8xf32>
    %c1_563 = arith.constant 1 : index
    %c0_564 = arith.constant 0 : index
    %c0_565 = arith.constant 0 : index
    %736 = vector.load %arg17[%c1_563, %c0_564, %c0_565] : memref<4x32x8xf32, #tpu.memory_space<vmem>>, vector<1x32x8xf32>
    %737 = vector.shape_cast %736 : vector<1x32x8xf32> to vector<32x8xf32>
    %cst_566 = arith.constant dense<0.000000e+00> : vector<10x8xf32>
    %738 = tpu.matmul %484, %737, %cst_566 {dimension_numbers = #tpu.dot_dimension_numbers<[1], [0], [0], [1], [0, 0, 1, 1], [], []>} : vector<10x32xf32>, vector<32x8xf32>, vector<10x8xf32> -> vector<10x8xf32>
    %c1_567 = arith.constant 1 : index
    %c0_568 = arith.constant 0 : index
    %c0_569 = arith.constant 0 : index
    %739 = vector.load %arg18[%c1_567, %c0_568, %c0_569] : memref<4x1x8xf32, #tpu.memory_space<vmem>>, vector<1x1x8xf32>
    %740 = vector.shape_cast %739 : vector<1x1x8xf32> to vector<1x8xf32>
    %741 = vector.broadcast %740 : vector<1x8xf32> to vector<10x8xf32>
    %742 = arith.addf %738, %741 : vector<10x8xf32>
    %c1_570 = arith.constant 1 : index
    %c0_571 = arith.constant 0 : index
    %c0_572 = arith.constant 0 : index
    %743 = vector.load %arg19[%c1_570, %c0_571, %c0_572] : memref<4x32x8xf32, #tpu.memory_space<vmem>>, vector<1x32x8xf32>
    %744 = vector.shape_cast %743 : vector<1x32x8xf32> to vector<32x8xf32>
    %cst_573 = arith.constant dense<0.000000e+00> : vector<10x8xf32>
    %745 = tpu.matmul %484, %744, %cst_573 {dimension_numbers = #tpu.dot_dimension_numbers<[1], [0], [0], [1], [0, 0, 1, 1], [], []>} : vector<10x32xf32>, vector<32x8xf32>, vector<10x8xf32> -> vector<10x8xf32>
    %c1_574 = arith.constant 1 : index
    %c0_575 = arith.constant 0 : index
    %c0_576 = arith.constant 0 : index
    %746 = vector.load %arg20[%c1_574, %c0_575, %c0_576] : memref<4x1x8xf32, #tpu.memory_space<vmem>>, vector<1x1x8xf32>
    %747 = vector.shape_cast %746 : vector<1x1x8xf32> to vector<1x8xf32>
    %748 = vector.broadcast %747 : vector<1x8xf32> to vector<10x8xf32>
    %749 = arith.addf %745, %748 : vector<10x8xf32>
    %c1_577 = arith.constant 1 : index
    %c1_578 = arith.constant 1 : index
    %c0_579 = arith.constant 0 : index
    %c0_580 = arith.constant 0 : index
    %750 = vector.load %arg34[%c1_577, %c1_578, %c0_579, %c0_580] : memref<2x4x10x8xf32, #tpu.memory_space<vmem>>, vector<1x1x10x8xf32>
    %751 = vector.shape_cast %750 : vector<1x1x10x8xf32> to vector<10x8xf32>
    %752 = vector.shape_cast %742 : vector<10x8xf32> to vector<1x1x10x8xf32>
    tpu.vector_store %arg34[%c1_577, %c1_578, %c0_579, %c0_580], %752 {strides = array<i32>} : memref<2x4x10x8xf32, #tpu.memory_space<vmem>>, vector<1x1x10x8xf32>,
    %c1_581 = arith.constant 1 : index
    %c1_582 = arith.constant 1 : index
    %c0_583 = arith.constant 0 : index
    %c0_584 = arith.constant 0 : index
    %753 = vector.load %arg35[%c1_581, %c1_582, %c0_583, %c0_584] : memref<2x4x10x8xf32, #tpu.memory_space<vmem>>, vector<1x1x10x8xf32>
    %754 = vector.shape_cast %753 : vector<1x1x10x8xf32> to vector<10x8xf32>
    %755 = vector.shape_cast %749 : vector<10x8xf32> to vector<1x1x10x8xf32>
    tpu.vector_store %arg35[%c1_581, %c1_582, %c0_583, %c0_584], %755 {strides = array<i32>} : memref<2x4x10x8xf32, #tpu.memory_space<vmem>>, vector<1x1x10x8xf32>,
    %cst_585 = arith.constant dense<0.000000e+00> : vector<8x10xf32>
    %756 = tpu.matmul %735, %742, %cst_585 {dimension_numbers = #tpu.dot_dimension_numbers<[1], [1], [0], [0], [0, 0, 1, 0], [], []>} : vector<8x8xf32>, vector<10x8xf32>, vector<8x10xf32> -> vector<8x10xf32>
    %757 = arith.addf %756, %490 : vector<8x10xf32>
    %cst_586 = arith.constant dense<0xFF800000> : vector<8xf32>
    %758 = vector.multi_reduction <maximumf>, %757, %cst_586 [1] : vector<8x10xf32> to vector<8xf32>
    %759 = vector.shape_cast %758 : vector<8xf32> to vector<8x1xf32>
    %760 = vector.broadcast %759 : vector<8x1xf32> to vector<8x10xf32>
    %761 = arith.subf %757, %760 : vector<8x10xf32>
    %762 = math.exp %761 : vector<8x10xf32>
    %cst_587 = arith.constant dense<0.000000e+00> : vector<8xf32>
    %763 = vector.multi_reduction <add>, %762, %cst_587 [1] : vector<8x10xf32> to vector<8xf32>
    %764 = vector.shape_cast %763 : vector<8xf32> to vector<8x1xf32>
    %765 = vector.broadcast %764 : vector<8x1xf32> to vector<8x10xf32>
    %766 = arith.divf %762, %765 : vector<8x10xf32>
    %cst_588 = arith.constant dense<0.000000e+00> : vector<8x8xf32>
    %767 = tpu.matmul %766, %749, %cst_588 {dimension_numbers = #tpu.dot_dimension_numbers<[1], [0], [0], [1], [0, 0, 1, 1], [], []>} : vector<8x10xf32>, vector<10x8xf32>, vector<8x8xf32> -> vector<8x8xf32>
    %c1_589 = arith.constant 1 : index
    %c0_590 = arith.constant 0 : index
    %c0_591 = arith.constant 0 : index
    %768 = vector.load %arg21[%c1_589, %c0_590, %c0_591] : memref<4x8x32xf32, #tpu.memory_space<vmem>>, vector<1x8x32xf32>
    %769 = vector.shape_cast %768 : vector<1x8x32xf32> to vector<8x32xf32>
    %cst_592 = arith.constant dense<0.000000e+00> : vector<8x32xf32>
    %770 = tpu.matmul %767, %769, %cst_592 {dimension_numbers = #tpu.dot_dimension_numbers<[1], [0], [0], [1], [0, 0, 1, 1], [], []>} : vector<8x8xf32>, vector<8x32xf32>, vector<8x32xf32> -> vector<8x32xf32>
    %771 = arith.addf %728, %770 : vector<8x32xf32>
    %c2_593 = arith.constant 2 : index
    %c0_594 = arith.constant 0 : index
    %c0_595 = arith.constant 0 : index
    %772 = vector.load %arg15[%c2_593, %c0_594, %c0_595] : memref<4x32x8xf32, #tpu.memory_space<vmem>>, vector<1x32x8xf32>
    %773 = vector.shape_cast %772 : vector<1x32x8xf32> to vector<32x8xf32>
    %cst_596 = arith.constant dense<0.000000e+00> : vector<8x8xf32>
    %774 = tpu.matmul %686, %773, %cst_596 {dimension_numbers = #tpu.dot_dimension_numbers<[1], [0], [0], [1], [0, 0, 1, 1], [], []>} : vector<8x32xf32>, vector<32x8xf32>, vector<8x8xf32> -> vector<8x8xf32>
    %c2_597 = arith.constant 2 : index
    %c0_598 = arith.constant 0 : index
    %c0_599 = arith.constant 0 : index
    %775 = vector.load %arg16[%c2_597, %c0_598, %c0_599] : memref<4x1x8xf32, #tpu.memory_space<vmem>>, vector<1x1x8xf32>
    %776 = vector.shape_cast %775 : vector<1x1x8xf32> to vector<1x8xf32>
    %777 = vector.broadcast %776 : vector<1x8xf32> to vector<8x8xf32>
    %778 = arith.addf %774, %777 : vector<8x8xf32>
    %c2_600 = arith.constant 2 : index
    %c0_601 = arith.constant 0 : index
    %c0_602 = arith.constant 0 : index
    %779 = vector.load %arg17[%c2_600, %c0_601, %c0_602] : memref<4x32x8xf32, #tpu.memory_space<vmem>>, vector<1x32x8xf32>
    %780 = vector.shape_cast %779 : vector<1x32x8xf32> to vector<32x8xf32>
    %cst_603 = arith.constant dense<0.000000e+00> : vector<10x8xf32>
    %781 = tpu.matmul %484, %780, %cst_603 {dimension_numbers = #tpu.dot_dimension_numbers<[1], [0], [0], [1], [0, 0, 1, 1], [], []>} : vector<10x32xf32>, vector<32x8xf32>, vector<10x8xf32> -> vector<10x8xf32>
    %c2_604 = arith.constant 2 : index
    %c0_605 = arith.constant 0 : index
    %c0_606 = arith.constant 0 : index
    %782 = vector.load %arg18[%c2_604, %c0_605, %c0_606] : memref<4x1x8xf32, #tpu.memory_space<vmem>>, vector<1x1x8xf32>
    %783 = vector.shape_cast %782 : vector<1x1x8xf32> to vector<1x8xf32>
    %784 = vector.broadcast %783 : vector<1x8xf32> to vector<10x8xf32>
    %785 = arith.addf %781, %784 : vector<10x8xf32>
    %c2_607 = arith.constant 2 : index
    %c0_608 = arith.constant 0 : index
    %c0_609 = arith.constant 0 : index
    %786 = vector.load %arg19[%c2_607, %c0_608, %c0_609] : memref<4x32x8xf32, #tpu.memory_space<vmem>>, vector<1x32x8xf32>
    %787 = vector.shape_cast %786 : vector<1x32x8xf32> to vector<32x8xf32>
    %cst_610 = arith.constant dense<0.000000e+00> : vector<10x8xf32>
    %788 = tpu.matmul %484, %787, %cst_610 {dimension_numbers = #tpu.dot_dimension_numbers<[1], [0], [0], [1], [0, 0, 1, 1], [], []>} : vector<10x32xf32>, vector<32x8xf32>, vector<10x8xf32> -> vector<10x8xf32>
    %c2_611 = arith.constant 2 : index
    %c0_612 = arith.constant 0 : index
    %c0_613 = arith.constant 0 : index
    %789 = vector.load %arg20[%c2_611, %c0_612, %c0_613] : memref<4x1x8xf32, #tpu.memory_space<vmem>>, vector<1x1x8xf32>
    %790 = vector.shape_cast %789 : vector<1x1x8xf32> to vector<1x8xf32>
    %791 = vector.broadcast %790 : vector<1x8xf32> to vector<10x8xf32>
    %792 = arith.addf %788, %791 : vector<10x8xf32>
    %c1_614 = arith.constant 1 : index
    %c2_615 = arith.constant 2 : index
    %c0_616 = arith.constant 0 : index
    %c0_617 = arith.constant 0 : index
    %793 = vector.load %arg34[%c1_614, %c2_615, %c0_616, %c0_617] : memref<2x4x10x8xf32, #tpu.memory_space<vmem>>, vector<1x1x10x8xf32>
    %794 = vector.shape_cast %793 : vector<1x1x10x8xf32> to vector<10x8xf32>
    %795 = vector.shape_cast %785 : vector<10x8xf32> to vector<1x1x10x8xf32>
    tpu.vector_store %arg34[%c1_614, %c2_615, %c0_616, %c0_617], %795 {strides = array<i32>} : memref<2x4x10x8xf32, #tpu.memory_space<vmem>>, vector<1x1x10x8xf32>,
    %c1_618 = arith.constant 1 : index
    %c2_619 = arith.constant 2 : index
    %c0_620 = arith.constant 0 : index
    %c0_621 = arith.constant 0 : index
    %796 = vector.load %arg35[%c1_618, %c2_619, %c0_620, %c0_621] : memref<2x4x10x8xf32, #tpu.memory_space<vmem>>, vector<1x1x10x8xf32>
    %797 = vector.shape_cast %796 : vector<1x1x10x8xf32> to vector<10x8xf32>
    %798 = vector.shape_cast %792 : vector<10x8xf32> to vector<1x1x10x8xf32>
    tpu.vector_store %arg35[%c1_618, %c2_619, %c0_620, %c0_621], %798 {strides = array<i32>} : memref<2x4x10x8xf32, #tpu.memory_space<vmem>>, vector<1x1x10x8xf32>,
    %cst_622 = arith.constant dense<0.000000e+00> : vector<8x10xf32>
    %799 = tpu.matmul %778, %785, %cst_622 {dimension_numbers = #tpu.dot_dimension_numbers<[1], [1], [0], [0], [0, 0, 1, 0], [], []>} : vector<8x8xf32>, vector<10x8xf32>, vector<8x10xf32> -> vector<8x10xf32>
    %800 = arith.addf %799, %490 : vector<8x10xf32>
    %cst_623 = arith.constant dense<0xFF800000> : vector<8xf32>
    %801 = vector.multi_reduction <maximumf>, %800, %cst_623 [1] : vector<8x10xf32> to vector<8xf32>
    %802 = vector.shape_cast %801 : vector<8xf32> to vector<8x1xf32>
    %803 = vector.broadcast %802 : vector<8x1xf32> to vector<8x10xf32>
    %804 = arith.subf %800, %803 : vector<8x10xf32>
    %805 = math.exp %804 : vector<8x10xf32>
    %cst_624 = arith.constant dense<0.000000e+00> : vector<8xf32>
    %806 = vector.multi_reduction <add>, %805, %cst_624 [1] : vector<8x10xf32> to vector<8xf32>
    %807 = vector.shape_cast %806 : vector<8xf32> to vector<8x1xf32>
    %808 = vector.broadcast %807 : vector<8x1xf32> to vector<8x10xf32>
    %809 = arith.divf %805, %808 : vector<8x10xf32>
    %cst_625 = arith.constant dense<0.000000e+00> : vector<8x8xf32>
    %810 = tpu.matmul %809, %792, %cst_625 {dimension_numbers = #tpu.dot_dimension_numbers<[1], [0], [0], [1], [0, 0, 1, 1], [], []>} : vector<8x10xf32>, vector<10x8xf32>, vector<8x8xf32> -> vector<8x8xf32>
    %c2_626 = arith.constant 2 : index
    %c0_627 = arith.constant 0 : index
    %c0_628 = arith.constant 0 : index
    %811 = vector.load %arg21[%c2_626, %c0_627, %c0_628] : memref<4x8x32xf32, #tpu.memory_space<vmem>>, vector<1x8x32xf32>
    %812 = vector.shape_cast %811 : vector<1x8x32xf32> to vector<8x32xf32>
    %cst_629 = arith.constant dense<0.000000e+00> : vector<8x32xf32>
    %813 = tpu.matmul %810, %812, %cst_629 {dimension_numbers = #tpu.dot_dimension_numbers<[1], [0], [0], [1], [0, 0, 1, 1], [], []>} : vector<8x8xf32>, vector<8x32xf32>, vector<8x32xf32> -> vector<8x32xf32>
    %814 = arith.addf %771, %813 : vector<8x32xf32>
    %c3_630 = arith.constant 3 : index
    %c0_631 = arith.constant 0 : index
    %c0_632 = arith.constant 0 : index
    %815 = vector.load %arg15[%c3_630, %c0_631, %c0_632] : memref<4x32x8xf32, #tpu.memory_space<vmem>>, vector<1x32x8xf32>
    %816 = vector.shape_cast %815 : vector<1x32x8xf32> to vector<32x8xf32>
    %cst_633 = arith.constant dense<0.000000e+00> : vector<8x8xf32>
    %817 = tpu.matmul %686, %816, %cst_633 {dimension_numbers = #tpu.dot_dimension_numbers<[1], [0], [0], [1], [0, 0, 1, 1], [], []>} : vector<8x32xf32>, vector<32x8xf32>, vector<8x8xf32> -> vector<8x8xf32>
    %c3_634 = arith.constant 3 : index
    %c0_635 = arith.constant 0 : index
    %c0_636 = arith.constant 0 : index
    %818 = vector.load %arg16[%c3_634, %c0_635, %c0_636] : memref<4x1x8xf32, #tpu.memory_space<vmem>>, vector<1x1x8xf32>
    %819 = vector.shape_cast %818 : vector<1x1x8xf32> to vector<1x8xf32>
    %820 = vector.broadcast %819 : vector<1x8xf32> to vector<8x8xf32>
    %821 = arith.addf %817, %820 : vector<8x8xf32>
    %c3_637 = arith.constant 3 : index
    %c0_638 = arith.constant 0 : index
    %c0_639 = arith.constant 0 : index
    %822 = vector.load %arg17[%c3_637, %c0_638, %c0_639] : memref<4x32x8xf32, #tpu.memory_space<vmem>>, vector<1x32x8xf32>
    %823 = vector.shape_cast %822 : vector<1x32x8xf32> to vector<32x8xf32>
    %cst_640 = arith.constant dense<0.000000e+00> : vector<10x8xf32>
    %824 = tpu.matmul %484, %823, %cst_640 {dimension_numbers = #tpu.dot_dimension_numbers<[1], [0], [0], [1], [0, 0, 1, 1], [], []>} : vector<10x32xf32>, vector<32x8xf32>, vector<10x8xf32> -> vector<10x8xf32>
    %c3_641 = arith.constant 3 : index
    %c0_642 = arith.constant 0 : index
    %c0_643 = arith.constant 0 : index
    %825 = vector.load %arg18[%c3_641, %c0_642, %c0_643] : memref<4x1x8xf32, #tpu.memory_space<vmem>>, vector<1x1x8xf32>
    %826 = vector.shape_cast %825 : vector<1x1x8xf32> to vector<1x8xf32>
    %827 = vector.broadcast %826 : vector<1x8xf32> to vector<10x8xf32>
    %828 = arith.addf %824, %827 : vector<10x8xf32>
    %c3_644 = arith.constant 3 : index
    %c0_645 = arith.constant 0 : index
    %c0_646 = arith.constant 0 : index
    %829 = vector.load %arg19[%c3_644, %c0_645, %c0_646] : memref<4x32x8xf32, #tpu.memory_space<vmem>>, vector<1x32x8xf32>
    %830 = vector.shape_cast %829 : vector<1x32x8xf32> to vector<32x8xf32>
    %cst_647 = arith.constant dense<0.000000e+00> : vector<10x8xf32>
    %831 = tpu.matmul %484, %830, %cst_647 {dimension_numbers = #tpu.dot_dimension_numbers<[1], [0], [0], [1], [0, 0, 1, 1], [], []>} : vector<10x32xf32>, vector<32x8xf32>, vector<10x8xf32> -> vector<10x8xf32>
    %c3_648 = arith.constant 3 : index
    %c0_649 = arith.constant 0 : index
    %c0_650 = arith.constant 0 : index
    %832 = vector.load %arg20[%c3_648, %c0_649, %c0_650] : memref<4x1x8xf32, #tpu.memory_space<vmem>>, vector<1x1x8xf32>
    %833 = vector.shape_cast %832 : vector<1x1x8xf32> to vector<1x8xf32>
    %834 = vector.broadcast %833 : vector<1x8xf32> to vector<10x8xf32>
    %835 = arith.addf %831, %834 : vector<10x8xf32>
    %c1_651 = arith.constant 1 : index
    %c3_652 = arith.constant 3 : index
    %c0_653 = arith.constant 0 : index
    %c0_654 = arith.constant 0 : index
    %836 = vector.load %arg34[%c1_651, %c3_652, %c0_653, %c0_654] : memref<2x4x10x8xf32, #tpu.memory_space<vmem>>, vector<1x1x10x8xf32>
    %837 = vector.shape_cast %836 : vector<1x1x10x8xf32> to vector<10x8xf32>
    %838 = vector.shape_cast %828 : vector<10x8xf32> to vector<1x1x10x8xf32>
    tpu.vector_store %arg34[%c1_651, %c3_652, %c0_653, %c0_654], %838 {strides = array<i32>} : memref<2x4x10x8xf32, #tpu.memory_space<vmem>>, vector<1x1x10x8xf32>,
    %c1_655 = arith.constant 1 : index
    %c3_656 = arith.constant 3 : index
    %c0_657 = arith.constant 0 : index
    %c0_658 = arith.constant 0 : index
    %839 = vector.load %arg35[%c1_655, %c3_656, %c0_657, %c0_658] : memref<2x4x10x8xf32, #tpu.memory_space<vmem>>, vector<1x1x10x8xf32>
    %840 = vector.shape_cast %839 : vector<1x1x10x8xf32> to vector<10x8xf32>
    %841 = vector.shape_cast %835 : vector<10x8xf32> to vector<1x1x10x8xf32>
    tpu.vector_store %arg35[%c1_655, %c3_656, %c0_657, %c0_658], %841 {strides = array<i32>} : memref<2x4x10x8xf32, #tpu.memory_space<vmem>>, vector<1x1x10x8xf32>,
    %cst_659 = arith.constant dense<0.000000e+00> : vector<8x10xf32>
    %842 = tpu.matmul %821, %828, %cst_659 {dimension_numbers = #tpu.dot_dimension_numbers<[1], [1], [0], [0], [0, 0, 1, 0], [], []>} : vector<8x8xf32>, vector<10x8xf32>, vector<8x10xf32> -> vector<8x10xf32>
    %843 = arith.addf %842, %490 : vector<8x10xf32>
    %cst_660 = arith.constant dense<0xFF800000> : vector<8xf32>
    %844 = vector.multi_reduction <maximumf>, %843, %cst_660 [1] : vector<8x10xf32> to vector<8xf32>
    %845 = vector.shape_cast %844 : vector<8xf32> to vector<8x1xf32>
    %846 = vector.broadcast %845 : vector<8x1xf32> to vector<8x10xf32>
    %847 = arith.subf %843, %846 : vector<8x10xf32>
    %848 = math.exp %847 : vector<8x10xf32>
    %cst_661 = arith.constant dense<0.000000e+00> : vector<8xf32>
    %849 = vector.multi_reduction <add>, %848, %cst_661 [1] : vector<8x10xf32> to vector<8xf32>
    %850 = vector.shape_cast %849 : vector<8xf32> to vector<8x1xf32>
    %851 = vector.broadcast %850 : vector<8x1xf32> to vector<8x10xf32>
    %852 = arith.divf %848, %851 : vector<8x10xf32>
    %cst_662 = arith.constant dense<0.000000e+00> : vector<8x8xf32>
    %853 = tpu.matmul %852, %835, %cst_662 {dimension_numbers = #tpu.dot_dimension_numbers<[1], [0], [0], [1], [0, 0, 1, 1], [], []>} : vector<8x10xf32>, vector<10x8xf32>, vector<8x8xf32> -> vector<8x8xf32>
    %c3_663 = arith.constant 3 : index
    %c0_664 = arith.constant 0 : index
    %c0_665 = arith.constant 0 : index
    %854 = vector.load %arg21[%c3_663, %c0_664, %c0_665] : memref<4x8x32xf32, #tpu.memory_space<vmem>>, vector<1x8x32xf32>
    %855 = vector.shape_cast %854 : vector<1x8x32xf32> to vector<8x32xf32>
    %cst_666 = arith.constant dense<0.000000e+00> : vector<8x32xf32>
    %856 = tpu.matmul %853, %855, %cst_666 {dimension_numbers = #tpu.dot_dimension_numbers<[1], [0], [0], [1], [0, 0, 1, 1], [], []>} : vector<8x8xf32>, vector<8x32xf32>, vector<8x32xf32> -> vector<8x32xf32>
    %857 = arith.addf %814, %856 : vector<8x32xf32>
    %858 = arith.addf %686, %857 : vector<8x32xf32>
    %859 = vector.broadcast %2 : vector<1x32xf32> to vector<8x32xf32>
    %860 = arith.addf %858, %859 : vector<8x32xf32>
    %cst_667 = arith.constant dense<0.000000e+00> : vector<8xf32>
    %861 = vector.multi_reduction <add>, %860, %cst_667 [1] : vector<8x32xf32> to vector<8xf32>
    %862 = vector.shape_cast %861 : vector<8xf32> to vector<8x1xf32>
    %cst_668 = arith.constant 3.200000e+01 : f32
    %863 = vector.broadcast %cst_668 : f32 to vector<8x1xf32>
    %864 = arith.divf %862, %863 : vector<8x1xf32>
    %865 = vector.broadcast %864 : vector<8x1xf32> to vector<8x32xf32>
    %866 = arith.subf %860, %865 : vector<8x32xf32>
    %867 = arith.mulf %866, %866 : vector<8x32xf32>
    %cst_669 = arith.constant dense<0.000000e+00> : vector<8xf32>
    %868 = vector.multi_reduction <add>, %867, %cst_669 [1] : vector<8x32xf32> to vector<8xf32>
    %869 = vector.shape_cast %868 : vector<8xf32> to vector<8x1xf32>
    %cst_670 = arith.constant 3.200000e+01 : f32
    %870 = vector.broadcast %cst_670 : f32 to vector<8x1xf32>
    %871 = arith.divf %869, %870 : vector<8x1xf32>
    %872 = vector.broadcast %864 : vector<8x1xf32> to vector<8x32xf32>
    %873 = arith.subf %860, %872 : vector<8x32xf32>
    %cst_671 = arith.constant 9.99999974E-6 : f32
    %874 = vector.broadcast %cst_671 : f32 to vector<8x1xf32>
    %875 = arith.addf %871, %874 : vector<8x1xf32>
    %876 = math.rsqrt %875 : vector<8x1xf32>
    %877 = vector.broadcast %876 : vector<8x1xf32> to vector<8x32xf32>
    %878 = arith.mulf %873, %877 : vector<8x32xf32>
    %879 = vector.broadcast %5 : vector<1x32xf32> to vector<8x32xf32>
    %880 = arith.mulf %878, %879 : vector<8x32xf32>
    %881 = vector.broadcast %6 : vector<1x32xf32> to vector<8x32xf32>
    %882 = arith.addf %880, %881 : vector<8x32xf32>
    %cst_672 = arith.constant dense<0.000000e+00> : vector<8x64xf32>
    %883 = tpu.matmul %882, %9, %cst_672 {dimension_numbers = #tpu.dot_dimension_numbers<[1], [0], [0], [1], [0, 0, 1, 1], [], []>} : vector<8x32xf32>, vector<32x64xf32>, vector<8x64xf32> -> vector<8x64xf32>
    %884 = vector.broadcast %10 : vector<1x64xf32> to vector<8x64xf32>
    %885 = arith.addf %883, %884 : vector<8x64xf32>
    %cst_673 = arith.constant 5.000000e-01 : f32
    %886 = vector.broadcast %cst_673 : f32 to vector<8x64xf32>
    %887 = arith.mulf %886, %885 : vector<8x64xf32>
    %cst_674 = arith.constant 0.707106769 : f32
    %888 = vector.broadcast %cst_674 : f32 to vector<8x64xf32>
    %889 = arith.mulf %885, %888 : vector<8x64xf32>
    %890 = math.absf %889 : vector<8x64xf32>
    %cst_675 = arith.constant 0.327591091 : f32
    %891 = vector.broadcast %cst_675 : f32 to vector<8x64xf32>
    %892 = arith.mulf %891, %890 : vector<8x64xf32>
    %cst_676 = arith.constant 1.000000e+00 : f32
    %893 = vector.broadcast %cst_676 : f32 to vector<8x64xf32>
    %894 = arith.addf %893, %892 : vector<8x64xf32>
    %cst_677 = arith.constant 1.000000e+00 : f32
    %895 = vector.broadcast %cst_677 : f32 to vector<8x64xf32>
    %896 = arith.divf %895, %894 : vector<8x64xf32>
    %cst_678 = arith.constant 1.06140542 : f32
    %897 = vector.broadcast %cst_678 : f32 to vector<8x64xf32>
    %898 = arith.mulf %897, %896 : vector<8x64xf32>
    %cst_679 = arith.constant -1.45315206 : f32
    %899 = vector.broadcast %cst_679 : f32 to vector<8x64xf32>
    %900 = arith.addf %898, %899 : vector<8x64xf32>
    %901 = arith.mulf %900, %896 : vector<8x64xf32>
    %cst_680 = arith.constant 1.42141378 : f32
    %902 = vector.broadcast %cst_680 : f32 to vector<8x64xf32>
    %903 = arith.addf %901, %902 : vector<8x64xf32>
    %904 = arith.mulf %903, %896 : vector<8x64xf32>
    %cst_681 = arith.constant -0.284496725 : f32
    %905 = vector.broadcast %cst_681 : f32 to vector<8x64xf32>
    %906 = arith.addf %904, %905 : vector<8x64xf32>
    %907 = arith.mulf %906, %896 : vector<8x64xf32>
    %cst_682 = arith.constant 0.254829586 : f32
    %908 = vector.broadcast %cst_682 : f32 to vector<8x64xf32>
    %909 = arith.addf %907, %908 : vector<8x64xf32>
    %910 = arith.mulf %909, %896 : vector<8x64xf32>
    %cst_683 = arith.constant 0.000000e+00 : f32
    %911 = vector.broadcast %cst_683 : f32 to vector<8x64xf32>
    %912 = arith.subf %911, %890 : vector<8x64xf32>
    %913 = arith.mulf %912, %890 : vector<8x64xf32>
    %914 = math.exp %913 : vector<8x64xf32>
    %915 = arith.mulf %910, %914 : vector<8x64xf32>
    %cst_684 = arith.constant 1.000000e+00 : f32
    %916 = vector.broadcast %cst_684 : f32 to vector<8x64xf32>
    %917 = arith.subf %916, %915 : vector<8x64xf32>
    %cst_685 = arith.constant 0.000000e+00 : f32
    %918 = vector.broadcast %cst_685 : f32 to vector<8x64xf32>
    %919 = arith.cmpf oge, %889, %918 : vector<8x64xf32>
    %cst_686 = arith.constant 0.000000e+00 : f32
    %920 = vector.broadcast %cst_686 : f32 to vector<8x64xf32>
    %921 = arith.subf %920, %917 : vector<8x64xf32>
    %922 = arith.select %919, %917, %921 : vector<8x64xi1>, vector<8x64xf32>
    %cst_687 = arith.constant 1.000000e+00 : f32
    %923 = vector.broadcast %cst_687 : f32 to vector<8x64xf32>
    %924 = arith.addf %923, %922 : vector<8x64xf32>
    %925 = arith.mulf %887, %924 : vector<8x64xf32>
    %cst_688 = arith.constant dense<0.000000e+00> : vector<8x32xf32>
    %926 = tpu.matmul %925, %11, %cst_688 {dimension_numbers = #tpu.dot_dimension_numbers<[1], [0], [0], [1], [0, 0, 1, 1], [], []>} : vector<8x64xf32>, vector<64x32xf32>, vector<8x32xf32> -> vector<8x32xf32>
    %927 = vector.broadcast %12 : vector<1x32xf32> to vector<8x32xf32>
    %928 = arith.addf %926, %927 : vector<8x32xf32>
    %929 = arith.addf %882, %928 : vector<8x32xf32>
    %cst_689 = arith.constant dense<0.000000e+00> : vector<8xf32>
    %930 = vector.multi_reduction <add>, %929, %cst_689 [1] : vector<8x32xf32> to vector<8xf32>
    %931 = vector.shape_cast %930 : vector<8xf32> to vector<8x1xf32>
    %cst_690 = arith.constant 3.200000e+01 : f32
    %932 = vector.broadcast %cst_690 : f32 to vector<8x1xf32>
    %933 = arith.divf %931, %932 : vector<8x1xf32>
    %934 = vector.broadcast %933 : vector<8x1xf32> to vector<8x32xf32>
    %935 = arith.subf %929, %934 : vector<8x32xf32>
    %936 = arith.mulf %935, %935 : vector<8x32xf32>
    %cst_691 = arith.constant dense<0.000000e+00> : vector<8xf32>
    %937 = vector.multi_reduction <add>, %936, %cst_691 [1] : vector<8x32xf32> to vector<8xf32>
    %938 = vector.shape_cast %937 : vector<8xf32> to vector<8x1xf32>
    %cst_692 = arith.constant 3.200000e+01 : f32
    %939 = vector.broadcast %cst_692 : f32 to vector<8x1xf32>
    %940 = arith.divf %938, %939 : vector<8x1xf32>
    %941 = vector.broadcast %933 : vector<8x1xf32> to vector<8x32xf32>
    %942 = arith.subf %929, %941 : vector<8x32xf32>
    %cst_693 = arith.constant 9.99999974E-6 : f32
    %943 = vector.broadcast %cst_693 : f32 to vector<8x1xf32>
    %944 = arith.addf %940, %943 : vector<8x1xf32>
    %945 = math.rsqrt %944 : vector<8x1xf32>
    %946 = vector.broadcast %945 : vector<8x1xf32> to vector<8x32xf32>
    %947 = arith.mulf %942, %946 : vector<8x32xf32>
    %948 = vector.broadcast %7 : vector<1x32xf32> to vector<8x32xf32>
    %949 = arith.mulf %947, %948 : vector<8x32xf32>
    %950 = vector.broadcast %8 : vector<1x32xf32> to vector<8x32xf32>
    %951 = arith.addf %949, %950 : vector<8x32xf32>
    %c0_694 = arith.constant 0 : index
    %c32_695 = arith.constant 32 : index
    %952 = vector.load %arg31[%c0_694, %c32_695] : memref<8x64xf32, #tpu.memory_space<vmem>>, vector<8x32xf32>
    tpu.vector_store %arg31[%c0_694, %c32_695], %951 {strides = array<i32>} : memref<8x64xf32, #tpu.memory_space<vmem>>, vector<8x32xf32>,
    return
  }
}

</mosaic_0001>

<llo_original>
// kernel: decoder_layer_forward.1
$region0: #{decoder_layer_forward.1}
  #allocation0 [shape = 'u32[]', space=smem, size = 0x4, offset = 0x4, fixed_abs, tag = 'smem constant byte address 0x4 - core index']
  #allocation1 [shape = 'u32[144,128]{1,0:T(1,128)}', space=vmem, size = 0x12000, scoped, tag = 'internal scratch']
  %s0 = inlined_call_operand.smem [shape: u32[36], index: -1, kind: input, shape index: {}]
  %s1 = sld [smem:[%s0]]
  %s2 = scalar_lea.smem %s0, 1
  %s3 = sld [smem:[%s2]]
  %s4 = scalar_lea.smem %s0, 2
  %s5 = sld [smem:[%s4]]
  %s6 = scalar_lea.smem %s0, 3
  %s7 = sld [smem:[%s6]]
  %s8 = scalar_lea.smem %s0, 4
  %s9 = sld [smem:[%s8]]
  %s10 = scalar_lea.smem %s0, 5
  %s11 = sld [smem:[%s10]]
  %s12 = scalar_lea.smem %s0, 6
  %s13 = sld [smem:[%s12]]
  %s14 = scalar_lea.smem %s0, 7
  %s15 = sld [smem:[%s14]]
  %s16 = scalar_lea.smem %s0, 8
  %s17 = sld [smem:[%s16]]
  %s18 = scalar_lea.smem %s0, 9
  %s19 = sld [smem:[%s18]]
  %s20 = scalar_lea.smem %s0, 10
  %s21 = sld [smem:[%s20]]
  %s22 = scalar_lea.smem %s0, 11
  %s23 = sld [smem:[%s22]]
  %s24 = scalar_lea.smem %s0, 12
  %s25 = sld [smem:[%s24]]
  %s26 = scalar_lea.smem %s0, 13
  %s27 = sld [smem:[%s26]]
  %s28 = scalar_lea.smem %s0, 14
  %s29 = sld [smem:[%s28]]
  %s30 = scalar_lea.smem %s0, 15
  %s31 = sld [smem:[%s30]]
  %s32 = scalar_lea.smem %s0, 16
  %s33 = sld [smem:[%s32]]
  %s34 = scalar_lea.smem %s0, 17
  %s35 = sld [smem:[%s34]]
  %s36 = scalar_lea.smem %s0, 18
  %s37 = sld [smem:[%s36]]
  %s38 = scalar_lea.smem %s0, 19
  %s39 = sld [smem:[%s38]]
  %s40 = scalar_lea.smem %s0, 20
  %s41 = sld [smem:[%s40]]
  %s42 = scalar_lea.smem %s0, 21
  %s43 = sld [smem:[%s42]]
  %s44 = scalar_lea.smem %s0, 22
  %s45 = sld [smem:[%s44]]
  %s46 = scalar_lea.smem %s0, 23
  %s47 = sld [smem:[%s46]]
  %s48 = scalar_lea.smem %s0, 24
  %s49 = sld [smem:[%s48]]
  %s50 = scalar_lea.smem %s0, 25
  %s51 = sld [smem:[%s50]]
  %s52 = scalar_lea.smem %s0, 26
  %s53 = sld [smem:[%s52]]
  %s54 = scalar_lea.smem %s0, 27
  %s55 = sld [smem:[%s54]]
  %s56 = scalar_lea.smem %s0, 28
  %s57 = sld [smem:[%s56]]
  %s58 = scalar_lea.smem %s0, 29
  %s59 = sld [smem:[%s58]]
  %s60 = scalar_lea.smem %s0, 30
  %s61 = sld [smem:[%s60]]
  %s62 = scalar_lea.smem %s0, 31
  %s63 = sld [smem:[%s62]]
  %s64 = scalar_lea.smem %s0, 32
  %s65 = sld [smem:[%s64]]
  %s66 = scalar_lea.smem %s0, 33
  %s67 = sld [smem:[%s66]]
  %s68 = scalar_lea.smem %s0, 34
  %s69 = sld [smem:[%s68]]
  %s70 = scalar_lea.smem %s0, 35
  %s71 = sld [smem:[%s70]]
  %72 = xla_tuple %s63, %s65, %s67, %s69, %s71
  %s73 = sld [smem:[#allocation0]]
  $region166: #{decoder_layer_forward.1} parent=0
    _
  %s75 = ssub.s32 1, %s73
  %s76 = scalar_select 0, %s75, %s73
  $region1: #{decoder_layer_forward.1} parent=0
    #allocation2 [shape = 'u8[32768]{0}', space=vmem, size = 0x8000, scoped, tag = 'output window, operand 1, single buffered']
    #allocation3 [shape = 's32[1]{0}', space=sflag, size = 0x4, scoped, tag = 'scoped memory for decoder_layer_forward.1']
    #allocation4 [shape = 'u8[32768]{0}', space=vmem, size = 0x8000, scoped, tag = 'output window, operand 2, single buffered']
    #allocation5 [shape = 's32[1]{0}', space=sflag, size = 0x4, scoped, tag = 'scoped memory for decoder_layer_forward.1']
    %77 = vsyncpa [#allocation3], 0
    %78 = vsyncpa [#allocation5], 0
    // Predicated region
    $region2: #{decoder_layer_forward.1} parent=1 // pred_check
      _
    $region3: #{decoder_layer_forward.1} parent=1 // pred_check_branch
      %80 = sbr.rel (0) target = $region5
    $region4: #{decoder_layer_forward.1} parent=1 // pred_region
      _
    $region5: #{decoder_layer_forward.1} parent=1 // pred_fallthru
      _
    // Predicated region
    $region6: #{decoder_layer_forward.1} parent=1 // pred_check
      _
    $region7: #{decoder_layer_forward.1} parent=1 // pred_check_branch
      %82 = sbr.rel (0) target = $region9
    $region8: #{decoder_layer_forward.1} parent=1 // pred_region
      _
    $region9: #{decoder_layer_forward.1} parent=1 // pred_fallthru
      _
    // Predicated region
    $region10: #{decoder_layer_forward.1} parent=1 // pred_check
      _
    $region11: #{decoder_layer_forward.1} parent=1 // pred_check_branch
      %84 = sbr.rel (0) target = $region13
    $region12: #{decoder_layer_forward.1} parent=1 // pred_region
      _
    $region13: #{decoder_layer_forward.1} parent=1 // pred_fallthru
      _
    // Predicated region
    $region14: #{decoder_layer_forward.1} parent=1 // pred_check
      _
    $region15: #{decoder_layer_forward.1} parent=1 // pred_check_branch
      %86 = sbr.rel (0) target = $region17
    $region16: #{decoder_layer_forward.1} parent=1 // pred_region
      _
    $region17: #{decoder_layer_forward.1} parent=1 // pred_fallthru
      _
    // Predicated region
    $region18: #{decoder_layer_forward.1} parent=1 // pred_check
      _
    $region19: #{decoder_layer_forward.1} parent=1 // pred_check_branch
      %88 = sbr.rel (0) target = $region21
    $region20: #{decoder_layer_forward.1} parent=1 // pred_region
      _
    $region21: #{decoder_layer_forward.1} parent=1 // pred_fallthru
      _
    // Predicated region
    $region22: #{decoder_layer_forward.1} parent=1 // pred_check
      _
    $region23: #{decoder_layer_forward.1} parent=1 // pred_check_branch
      %90 = sbr.rel (0) target = $region25
    $region24: #{decoder_layer_forward.1} parent=1 // pred_region
      _
    $region25: #{decoder_layer_forward.1} parent=1 // pred_fallthru
      _
    // Predicated region
    $region26: #{decoder_layer_forward.1} parent=1 // pred_check
      _
    $region27: #{decoder_layer_forward.1} parent=1 // pred_check_branch
      %92 = sbr.rel (0) target = $region29
    $region28: #{decoder_layer_forward.1} parent=1 // pred_region
      _
    $region29: #{decoder_layer_forward.1} parent=1 // pred_fallthru
      _
    // Predicated region
    $region30: #{decoder_layer_forward.1} parent=1 // pred_check
      _
    $region31: #{decoder_layer_forward.1} parent=1 // pred_check_branch
      %94 = sbr.rel (0) target = $region33
    $region32: #{decoder_layer_forward.1} parent=1 // pred_region
      _
    $region33: #{decoder_layer_forward.1} parent=1 // pred_fallthru
      _
    // Predicated region
    $region34: #{decoder_layer_forward.1} parent=1 // pred_check
      _
    $region35: #{decoder_layer_forward.1} parent=1 // pred_check_branch
      %96 = sbr.rel (0) target = $region37
    $region36: #{decoder_layer_forward.1} parent=1 // pred_region
      _
    $region37: #{decoder_layer_forward.1} parent=1 // pred_fallthru
      _
    // Predicated region
    $region38: #{decoder_layer_forward.1} parent=1 // pred_check
      _
    $region39: #{decoder_layer_forward.1} parent=1 // pred_check_branch
      %98 = sbr.rel (0) target = $region41
    $region40: #{decoder_layer_forward.1} parent=1 // pred_region
      _
    $region41: #{decoder_layer_forward.1} parent=1 // pred_fallthru
      _
    // Predicated region
    $region42: #{decoder_layer_forward.1} parent=1 // pred_check
      _
    $region43: #{decoder_layer_forward.1} parent=1 // pred_check_branch
      %100 = sbr.rel (0) target = $region45
    $region44: #{decoder_layer_forward.1} parent=1 // pred_region
      _
    $region45: #{decoder_layer_forward.1} parent=1 // pred_fallthru
      _
    // Predicated region
    $region46: #{decoder_layer_forward.1} parent=1 // pred_check
      _
    $region47: #{decoder_layer_forward.1} parent=1 // pred_check_branch
      %102 = sbr.rel (0) target = $region49
    $region48: #{decoder_layer_forward.1} parent=1 // pred_region
      _
    $region49: #{decoder_layer_forward.1} parent=1 // pred_fallthru
      _
    // Predicated region
    $region50: #{decoder_layer_forward.1} parent=1 // pred_check
      _
    $region51: #{decoder_layer_forward.1} parent=1 // pred_check_branch
      %104 = sbr.rel (0) target = $region53
    $region52: #{decoder_layer_forward.1} parent=1 // pred_region
      _
    $region53: #{decoder_layer_forward.1} parent=1 // pred_fallthru
      _
    // Predicated region
    $region54: #{decoder_layer_forward.1} parent=1 // pred_check
      _
    $region55: #{decoder_layer_forward.1} parent=1 // pred_check_branch
      %106 = sbr.rel (0) target = $region57
    $region56: #{decoder_layer_forward.1} parent=1 // pred_region
      _
    $region57: #{decoder_layer_forward.1} parent=1 // pred_fallthru
      _
    // Predicated region
    $region58: #{decoder_layer_forward.1} parent=1 // pred_check
      _
    $region59: #{decoder_layer_forward.1} parent=1 // pred_check_branch
      %108 = sbr.rel (0) target = $region61
    $region60: #{decoder_layer_forward.1} parent=1 // pred_region
      _
    $region61: #{decoder_layer_forward.1} parent=1 // pred_fallthru
      _
    // Predicated region
    $region62: #{decoder_layer_forward.1} parent=1 // pred_check
      _
    $region63: #{decoder_layer_forward.1} parent=1 // pred_check_branch
      %110 = sbr.rel (0) target = $region65
    $region64: #{decoder_layer_forward.1} parent=1 // pred_region
      _
    $region65: #{decoder_layer_forward.1} parent=1 // pred_fallthru
      _
    // Predicated region
    $region66: #{decoder_layer_forward.1} parent=1 // pred_check
      _
    $region67: #{decoder_layer_forward.1} parent=1 // pred_check_branch
      %112 = sbr.rel (0) target = $region69
    $region68: #{decoder_layer_forward.1} parent=1 // pred_region
      _
    $region69: #{decoder_layer_forward.1} parent=1 // pred_fallthru
      _
    // Predicated region
    $region70: #{decoder_layer_forward.1} parent=1 // pred_check
      _
    $region71: #{decoder_layer_forward.1} parent=1 // pred_check_branch
      %114 = sbr.rel (0) target = $region73
    $region72: #{decoder_layer_forward.1} parent=1 // pred_region
      _
    $region73: #{decoder_layer_forward.1} parent=1 // pred_fallthru
      _
    // Predicated region
    $region74: #{decoder_layer_forward.1} parent=1 // pred_check
      _
    $region75: #{decoder_layer_forward.1} parent=1 // pred_check_branch
      %116 = sbr.rel (0) target = $region77
    $region76: #{decoder_layer_forward.1} parent=1 // pred_region
      _
    $region77: #{decoder_layer_forward.1} parent=1 // pred_fallthru
      _
    // Predicated region
    $region78: #{decoder_layer_forward.1} parent=1 // pred_check
      _
    $region79: #{decoder_layer_forward.1} parent=1 // pred_check_branch
      %118 = sbr.rel (0) target = $region81
    $region80: #{decoder_layer_forward.1} parent=1 // pred_region
      _
    $region81: #{decoder_layer_forward.1} parent=1 // pred_fallthru
      _
    // Predicated region
    $region82: #{decoder_layer_forward.1} parent=1 // pred_check
      _
    $region83: #{decoder_layer_forward.1} parent=1 // pred_check_branch
      %120 = sbr.rel (0) target = $region85
    $region84: #{decoder_layer_forward.1} parent=1 // pred_region
      _
    $region85: #{decoder_layer_forward.1} parent=1 // pred_fallthru
      _
    // Predicated region
    $region86: #{decoder_layer_forward.1} parent=1 // pred_check
      _
    $region87: #{decoder_layer_forward.1} parent=1 // pred_check_branch
      %122 = sbr.rel (0) target = $region89
    $region88: #{decoder_layer_forward.1} parent=1 // pred_region
      _
    $region89: #{decoder_layer_forward.1} parent=1 // pred_fallthru
      _
    // Predicated region
    $region90: #{decoder_layer_forward.1} parent=1 // pred_check
      _
    $region91: #{decoder_layer_forward.1} parent=1 // pred_check_branch
      %124 = sbr.rel (0) target = $region93
    $region92: #{decoder_layer_forward.1} parent=1 // pred_region
      _
    $region93: #{decoder_layer_forward.1} parent=1 // pred_fallthru
      _
    // Predicated region
    $region94: #{decoder_layer_forward.1} parent=1 // pred_check
      _
    $region95: #{decoder_layer_forward.1} parent=1 // pred_check_branch
      %126 = sbr.rel (0) target = $region97
    $region96: #{decoder_layer_forward.1} parent=1 // pred_region
      _
    $region97: #{decoder_layer_forward.1} parent=1 // pred_fallthru
      _
    // Predicated region
    $region98: #{decoder_layer_forward.1} parent=1 // pred_check
      _
    $region99: #{decoder_layer_forward.1} parent=1 // pred_check_branch
      %128 = sbr.rel (0) target = $region101
    $region100: #{decoder_layer_forward.1} parent=1 // pred_region
      _
    $region101: #{decoder_layer_forward.1} parent=1 // pred_fallthru
      _
    // Predicated region
    $region102: #{decoder_layer_forward.1} parent=1 // pred_check
      _
    $region103: #{decoder_layer_forward.1} parent=1 // pred_check_branch
      %130 = sbr.rel (0) target = $region105
    $region104: #{decoder_layer_forward.1} parent=1 // pred_region
      _
    $region105: #{decoder_layer_forward.1} parent=1 // pred_fallthru
      _
    // Predicated region
    $region106: #{decoder_layer_forward.1} parent=1 // pred_check
      _
    $region107: #{decoder_layer_forward.1} parent=1 // pred_check_branch
      %132 = sbr.rel (0) target = $region109
    $region108: #{decoder_layer_forward.1} parent=1 // pred_region
      _
    $region109: #{decoder_layer_forward.1} parent=1 // pred_fallthru
      _
    // Predicated region
    $region110: #{decoder_layer_forward.1} parent=1 // pred_check
      _
    $region111: #{decoder_layer_forward.1} parent=1 // pred_check_branch
      %134 = sbr.rel (0) target = $region113
    $region112: #{decoder_layer_forward.1} parent=1 // pred_region
      _
    $region113: #{decoder_layer_forward.1} parent=1 // pred_fallthru
      _
    // Predicated region
    $region114: #{decoder_layer_forward.1} parent=1 // pred_check
      _
    $region115: #{decoder_layer_forward.1} parent=1 // pred_check_branch
      %136 = sbr.rel (0) target = $region117
    $region116: #{decoder_layer_forward.1} parent=1 // pred_region
      _
    $region117: #{decoder_layer_forward.1} parent=1 // pred_fallthru
      _
    // Predicated region
    $region118: #{decoder_layer_forward.1} parent=1 // pred_check
      _
    $region119: #{decoder_layer_forward.1} parent=1 // pred_check_branch
      %138 = sbr.rel (0) target = $region121
    $region120: #{decoder_layer_forward.1} parent=1 // pred_region
      _
    $region121: #{decoder_layer_forward.1} parent=1 // pred_fallthru
      _
    // Predicated region
    $region122: #{decoder_layer_forward.1} parent=1 // pred_check
      _
    $region123: #{decoder_layer_forward.1} parent=1 // pred_check_branch
      %140 = sbr.rel (0) target = $region125
    $region124: #{decoder_layer_forward.1} parent=1 // pred_region
      _
    $region125: #{decoder_layer_forward.1} parent=1 // pred_fallthru
      _
    %v141 = vld [vmem:[%s5] sm:$0xff]
    %v142 = vld [vmem:[%s25] sm:$0x1]
    %v143 = vld [vmem:[%s45] sm:$0x1]
    %v144 = vld [vmem:[%s27] sm:$0x1]
    %v145 = vld [vmem:[%s29] sm:$0x1]
    %v146 = vld [vmem:[%s47] sm:$0x1]
    %v147 = vld [vmem:[%s49] sm:$0x1]
    %v148 = vld [vmem:[%s59] sm:$0x1]
    %v149 = vld [vmem:[%s61] sm:$0x1]
    %v150 = vld [vmem:[%s51] sm:$0xff]
    %v151 = vld [vmem:[%s51 + $0x8] sm:$0xff]
    %v152 = vld [vmem:[%s51 + $0x10] sm:$0xff]
    %v153 = vld [vmem:[%s51 + $0x18] sm:$0xff]
    %v154 = vld [vmem:[%s53] sm:$0x1]
    %v155 = vld [vmem:[%s55] sm:$0xff]
    %v156 = vld [vmem:[%s55 + $0x8] sm:$0xff]
    %v157 = vld [vmem:[%s55 + $0x10] sm:$0xff]
    %v158 = vld [vmem:[%s55 + $0x18] sm:$0xff]
    %v159 = vld [vmem:[%s55 + $0x20] sm:$0xff]
    %v160 = vld [vmem:[%s55 + $0x28] sm:$0xff]
    %v161 = vld [vmem:[%s55 + $0x30] sm:$0xff]
    %v162 = vld [vmem:[%s55 + $0x38] sm:$0xff]
    %v163 = vld [vmem:[%s57] sm:$0x1]
    %v164 = vld [vmem:[%s1] sm:$0xff]
    %v165 = vld [vmem:[%s3] sm:$0xff]
    %v166 = vld [vmem:[%s3 + $0x8] sm:$0x3]
    %v167 = vld [vmem:[%s7] sm:$0x1]
    %v168 = vlaneseq
    %v169 = vshrl.u32 %v168, 7
    %v170 = vsub.s32 0, %v169
    %v171 = vrot.slane %v167, %v170
    %v172 = vadd.f32 %v141, %v171
    %v173 = vld [vmem:[%s9] sm:$0x1]
    %v174 = vlaneseq
    %v175 = vshrl.u32 %v174, 7
    %v176 = vsub.s32 0, %v175
    %v177 = vrot.slane %v173, %v176
    %v178 = vld [vmem:[%s11] sm:$0xff]
    %v179 = vld [vmem:[%s11 + $0x8] sm:$0xff]
    %v180 = vld [vmem:[%s11 + $0x10] sm:$0xff]
    %v181 = vld [vmem:[%s11 + $0x18] sm:$0xff]
    %v182 = vld [vmem:[%s13] sm:$0x1]
    %v184 = vlaneseq
    %v185 = vshrl.u32 %v184, 7
    %v186 = vsub.s32 0, %v185
    %v187 = vrot.slane %v182, %v186
    %vm189 = vcmask 261120
    %v191 = vsel %vm189, %v164, 0
    %193 = vmatprep.subr.mxu0 0.0
    %194 = vmatpush1.msra.mxu0 %v178
    %195 = vmatprep.subr.mxu0 0.0
    %196 = vmatpush1.msra.mxu0 %v179
    %197 = vmatprep.subr.mxu0 0.0
    %198 = vmatpush1.msra.mxu0 %v180
    %199 = vmatprep.subr.mxu0 0.0
    %200 = vmatpush1.msra.mxu0 %v181
    %201 = vmatprep.subr.mxu0 0.0
    %202 = vmatpush1.msra.mxu0 0.0
    %203 = vmatprep.subr.mxu0 0.0
    %204 = vmatpush1.msra.mxu0 0.0
    %205 = vmatprep.subr.mxu0 0.0
    %206 = vmatpush1.msra.mxu0 0.0
    %207 = vmatprep.subr.mxu0 0.0
    %208 = vmatpush1.msra.mxu0 0.0
    %209 = vmatprep.subr.mxu0 0.0
    %210 = vmatpush1.msra.mxu0 0.0
    %211 = vmatprep.subr.mxu0 0.0
    %212 = vmatpush1.msra.mxu0 0.0
    %213 = vmatprep.subr.mxu0 0.0
    %214 = vmatpush1.msra.mxu0 0.0
    %215 = vmatprep.subr.mxu0 0.0
    %216 = vmatpush1.msra.mxu0 0.0
    %217 = vmatprep.subr.mxu0 0.0
    %218 = vmatpush1.msra.mxu0 0.0
    %219 = vmatprep.subr.mxu0 0.0
    %220 = vmatpush1.msra.mxu0 0.0
    %221 = vmatprep.subr.mxu0 0.0
    %222 = vmatpush1.msra.mxu0 0.0
    %223 = vmatprep.subr.mxu0 0.0
    %224 = vmatpush1.msra.mxu0 0.0
    %225 = vmatprep.subr.mxu0 0.0
    %226 = vmatpush1.msra.mxu0 0.0
    %227 = vmatprep.subr.mxu0 0.0
    %228 = vmatpush1.msra.mxu0 0.0
    %229 = vmatprep.subr.mxu0 0.0
    %230 = vmatpush1.msra.mxu0 0.0
    %231 = vmatprep.subr.mxu0 0.0
    %232 = vmatpush1.msra.mxu0 0.0
    %233 = vmatprep.subr.mxu0 0.0
    %234 = vmatpush1.msra.mxu0 0.0
    %235 = vmatprep.subr.mxu0 0.0
    %236 = vmatpush1.msra.mxu0 0.0
    %237 = vmatprep.subr.mxu0 0.0
    %238 = vmatpush1.msra.mxu0 0.0
    %239 = vmatprep.subr.mxu0 0.0
    %240 = vmatpush1.msra.mxu0 0.0
    %241 = vmatprep.subr.mxu0 0.0
    %242 = vmatpush1.msra.mxu0 0.0
    %243 = vmatprep.subr.mxu0 0.0
    %244 = vmatpush1.msra.mxu0 0.0
    %245 = vmatprep.subr.mxu0 0.0
    %246 = vmatpush1.msra.mxu0 0.0
    %247 = vmatprep.subr.mxu0 0.0
    %248 = vmatpush1.msra.mxu0 0.0
    %249 = vmatprep.subr.mxu0 0.0
    %250 = vmatpush1.msra.mxu0 0.0
    %251 = vmatprep.subr.mxu0 0.0
    %252 = vmatpush1.msra.mxu0 0.0
    %253 = vmatprep.subr.mxu0 0.0
    %254 = vmatpush1.msra.mxu0 0.0
    %255 = vmatprep.subr.mxu0 0.0
    %256 = vmatpush1.msra.mxu0 0.0
    %257 = vmatprep.mubr.f32.mxu0 0.0
    %258 = vmatmul.mubr.f32.gmra.mrb[0].mxu0 %v191
    %v259 = vpop.f32.mrb[0].mxu0
    %v260 = vadd.f32 %v187, %v259
    %v261 = vpop.f32.mrb[0].mxu0
    %262 = vdwg.mxu0
    %v263 = vld [vmem:[%s15] sm:$0xff]
    %v264 = vld [vmem:[%s15 + $0x8] sm:$0xff]
    %v265 = vld [vmem:[%s15 + $0x10] sm:$0xff]
    %v266 = vld [vmem:[%s15 + $0x18] sm:$0xff]
    %v267 = vld [vmem:[%s17] sm:$0x1]
    %v269 = vlaneseq
    %v270 = vshrl.u32 %v269, 7
    %v271 = vsub.s32 0, %v270
    %v272 = vrot.slane %v267, %v271
    %274 = vmatprep.subr.mxu0 0.0
    %275 = vmatpush1.msra.mxu0 %v263
    %276 = vmatprep.subr.mxu0 0.0
    %277 = vmatpush1.msra.mxu0 %v264
    %278 = vmatprep.subr.mxu0 0.0
    %279 = vmatpush1.msra.mxu0 %v265
    %280 = vmatprep.subr.mxu0 0.0
    %281 = vmatpush1.msra.mxu0 %v266
    %282 = vmatprep.subr.mxu0 0.0
    %283 = vmatpush1.msra.mxu0 0.0
    %284 = vmatprep.subr.mxu0 0.0
    %285 = vmatpush1.msra.mxu0 0.0
    %286 = vmatprep.subr.mxu0 0.0
    %287 = vmatpush1.msra.mxu0 0.0
    %288 = vmatprep.subr.mxu0 0.0
    %289 = vmatpush1.msra.mxu0 0.0
    %290 = vmatprep.subr.mxu0 0.0
    %291 = vmatpush1.msra.mxu0 0.0
    %292 = vmatprep.subr.mxu0 0.0
    %293 = vmatpush1.msra.mxu0 0.0
    %294 = vmatprep.subr.mxu0 0.0
    %295 = vmatpush1.msra.mxu0 0.0
    %296 = vmatprep.subr.mxu0 0.0
    %297 = vmatpush1.msra.mxu0 0.0
    %298 = vmatprep.subr.mxu0 0.0
    %299 = vmatpush1.msra.mxu0 0.0
    %300 = vmatprep.subr.mxu0 0.0
    %301 = vmatpush1.msra.mxu0 0.0
    %302 = vmatprep.subr.mxu0 0.0
    %303 = vmatpush1.msra.mxu0 0.0
    %304 = vmatprep.subr.mxu0 0.0
    %305 = vmatpush1.msra.mxu0 0.0
    %306 = vmatprep.subr.mxu0 0.0
    %307 = vmatpush1.msra.mxu0 0.0
    %308 = vmatprep.subr.mxu0 0.0
    %309 = vmatpush1.msra.mxu0 0.0
    %310 = vmatprep.subr.mxu0 0.0
    %311 = vmatpush1.msra.mxu0 0.0
    %312 = vmatprep.subr.mxu0 0.0
    %313 = vmatpush1.msra.mxu0 0.0
    %314 = vmatprep.subr.mxu0 0.0
    %315 = vmatpush1.msra.mxu0 0.0
    %316 = vmatprep.subr.mxu0 0.0
    %317 = vmatpush1.msra.mxu0 0.0
    %318 = vmatprep.subr.mxu0 0.0
    %319 = vmatpush1.msra.mxu0 0.0
    %320 = vmatprep.subr.mxu0 0.0
    %321 = vmatpush1.msra.mxu0 0.0
    %322 = vmatprep.subr.mxu0 0.0
    %323 = vmatpush1.msra.mxu0 0.0
    %324 = vmatprep.subr.mxu0 0.0
    %325 = vmatpush1.msra.mxu0 0.0
    %326 = vmatprep.subr.mxu0 0.0
    %327 = vmatpush1.msra.mxu0 0.0
    %328 = vmatprep.subr.mxu0 0.0
    %329 = vmatpush1.msra.mxu0 0.0
    %330 = vmatprep.subr.mxu0 0.0
    %331 = vmatpush1.msra.mxu0 0.0
    %332 = vmatprep.subr.mxu0 0.0
    %333 = vmatpush1.msra.mxu0 0.0
    %334 = vmatprep.subr.mxu0 0.0
    %335 = vmatpush1.msra.mxu0 0.0
    %336 = vmatprep.subr.mxu0 0.0
    %337 = vmatpush1.msra.mxu0 0.0
    %338 = vmatprep.mubr.f32.mxu0 0.0
    %339 = vmatmul.mubr.f32.gmra.mrb[0].mxu0 %v191
    %v340 = vpop.f32.mrb[0].mxu0
    %v341 = vadd.f32 %v272, %v340
    %v342 = vpop.f32.mrb[0].mxu0
    %343 = vdwg.mxu0
    %v344 = vld [vmem:[%s19] sm:$0xff]
    %v345 = vld [vmem:[%s19 + $0x8] sm:$0xff]
    %v346 = vld [vmem:[%s19 + $0x10] sm:$0xff]
    %v347 = vld [vmem:[%s19 + $0x18] sm:$0xff]
    %v348 = vld [vmem:[%s21] sm:$0x1]
    %v350 = vlaneseq
    %v351 = vshrl.u32 %v350, 7
    %v352 = vsub.s32 0, %v351
    %v353 = vrot.slane %v348, %v352
    %355 = vmatprep.subr.mxu0 0.0
    %356 = vmatpush1.msra.mxu0 %v344
    %357 = vmatprep.subr.mxu0 0.0
    %358 = vmatpush1.msra.mxu0 %v345
    %359 = vmatprep.subr.mxu0 0.0
    %360 = vmatpush1.msra.mxu0 %v346
    %361 = vmatprep.subr.mxu0 0.0
    %362 = vmatpush1.msra.mxu0 %v347
    %363 = vmatprep.subr.mxu0 0.0
    %364 = vmatpush1.msra.mxu0 0.0
    %365 = vmatprep.subr.mxu0 0.0
    %366 = vmatpush1.msra.mxu0 0.0
    %367 = vmatprep.subr.mxu0 0.0
    %368 = vmatpush1.msra.mxu0 0.0
    %369 = vmatprep.subr.mxu0 0.0
    %370 = vmatpush1.msra.mxu0 0.0
    %371 = vmatprep.subr.mxu0 0.0
    %372 = vmatpush1.msra.mxu0 0.0
    %373 = vmatprep.subr.mxu0 0.0
    %374 = vmatpush1.msra.mxu0 0.0
    %375 = vmatprep.subr.mxu0 0.0
    %376 = vmatpush1.msra.mxu0 0.0
    %377 = vmatprep.subr.mxu0 0.0
    %378 = vmatpush1.msra.mxu0 0.0
    %379 = vmatprep.subr.mxu0 0.0
    %380 = vmatpush1.msra.mxu0 0.0
    %381 = vmatprep.subr.mxu0 0.0
    %382 = vmatpush1.msra.mxu0 0.0
    %383 = vmatprep.subr.mxu0 0.0
    %384 = vmatpush1.msra.mxu0 0.0
    %385 = vmatprep.subr.mxu0 0.0
    %386 = vmatpush1.msra.mxu0 0.0
    %387 = vmatprep.subr.mxu0 0.0
    %388 = vmatpush1.msra.mxu0 0.0
    %389 = vmatprep.subr.mxu0 0.0
    %390 = vmatpush1.msra.mxu0 0.0
    %391 = vmatprep.subr.mxu0 0.0
    %392 = vmatpush1.msra.mxu0 0.0
    %393 = vmatprep.subr.mxu0 0.0
    %394 = vmatpush1.msra.mxu0 0.0
    %395 = vmatprep.subr.mxu0 0.0
    %396 = vmatpush1.msra.mxu0 0.0
    %397 = vmatprep.subr.mxu0 0.0
    %398 = vmatpush1.msra.mxu0 0.0
    %399 = vmatprep.subr.mxu0 0.0
    %400 = vmatpush1.msra.mxu0 0.0
    %401 = vmatprep.subr.mxu0 0.0
    %402 = vmatpush1.msra.mxu0 0.0
    %403 = vmatprep.subr.mxu0 0.0
    %404 = vmatpush1.msra.mxu0 0.0
    %405 = vmatprep.subr.mxu0 0.0
    %406 = vmatpush1.msra.mxu0 0.0
    %407 = vmatprep.subr.mxu0 0.0
    %408 = vmatpush1.msra.mxu0 0.0
    %409 = vmatprep.subr.mxu0 0.0
    %410 = vmatpush1.msra.mxu0 0.0
    %411 = vmatprep.subr.mxu0 0.0
    %412 = vmatpush1.msra.mxu0 0.0
    %413 = vmatprep.subr.mxu0 0.0
    %414 = vmatpush1.msra.mxu0 0.0
    %415 = vmatprep.subr.mxu0 0.0
    %416 = vmatpush1.msra.mxu0 0.0
    %417 = vmatprep.subr.mxu0 0.0
    %418 = vmatpush1.msra.mxu0 0.0
    %419 = vmatprep.mubr.f32.mxu0 0.0
    %420 = vmatmul.mubr.f32.gmra.mrb[0].mxu0 %v191
    %v421 = vpop.f32.mrb[0].mxu0
    %v422 = vadd.f32 %v353, %v421
    %v423 = vpop.f32.mrb[0].mxu0
    %424 = vdwg.mxu0
    %vm425 = vcmask 64512
    %426 = vst.msk [vmem:[#allocation2] sm:$0xff] %vm425, %v341
    %427 = vst.msk [vmem:[#allocation4] sm:$0xff] %vm425, %v422
    %v429 = vsel %vm425, %v260, 0
    %v432 = vsel %vm425, %v341, 0
    %434 = vmatprep.subr.mxu0 0.0
    %435 = vmatpush1.xpose.msra.mxu0 %v432
    %436 = vmatprep.subr.mxu0 0.0
    %437 = vmatpush1.xpose.msra.mxu0 0.0
    %438 = vmatprep.subr.mxu0 0.0
    %439 = vmatpush1.xpose.msra.mxu0 0.0
    %440 = vmatprep.subr.mxu0 0.0
    %441 = vmatpush1.xpose.msra.mxu0 0.0
    %442 = vmatprep.subr.mxu0 0.0
    %443 = vmatpush1.xpose.msra.mxu0 0.0
    %444 = vmatprep.subr.mxu0 0.0
    %445 = vmatpush1.xpose.msra.mxu0 0.0
    %446 = vmatprep.subr.mxu0 0.0
    %447 = vmatpush1.xpose.msra.mxu0 0.0
    %448 = vmatprep.subr.mxu0 0.0
    %449 = vmatpush1.xpose.msra.mxu0 0.0
    %450 = vmatprep.subr.mxu0 0.0
    %451 = vmatpush1.xpose.msra.mxu0 0.0
    %452 = vmatprep.subr.mxu0 0.0
    %453 = vmatpush1.xpose.msra.mxu0 0.0
    %454 = vmatprep.subr.mxu0 0.0
    %455 = vmatpush1.xpose.msra.mxu0 0.0
    %456 = vmatprep.subr.mxu0 0.0
    %457 = vmatpush1.xpose.msra.mxu0 0.0
    %458 = vmatprep.subr.mxu0 0.0
    %459 = vmatpush1.xpose.msra.mxu0 0.0
    %460 = vmatprep.subr.mxu0 0.0
    %461 = vmatpush1.xpose.msra.mxu0 0.0
    %462 = vmatprep.subr.mxu0 0.0
    %463 = vmatpush1.xpose.msra.mxu0 0.0
    %464 = vmatprep.subr.mxu0 0.0
    %465 = vmatpush1.xpose.msra.mxu0 0.0
    %466 = vmatprep.subr.mxu0 0.0
    %467 = vmatpush1.xpose.msra.mxu0 0.0
    %468 = vmatprep.subr.mxu0 0.0
    %469 = vmatpush1.xpose.msra.mxu0 0.0
    %470 = vmatprep.subr.mxu0 0.0
    %471 = vmatpush1.xpose.msra.mxu0 0.0
    %472 = vmatprep.subr.mxu0 0.0
    %473 = vmatpush1.xpose.msra.mxu0 0.0
    %474 = vmatprep.subr.mxu0 0.0
    %475 = vmatpush1.xpose.msra.mxu0 0.0
    %476 = vmatprep.subr.mxu0 0.0
    %477 = vmatpush1.xpose.msra.mxu0 0.0
    %478 = vmatprep.subr.mxu0 0.0
    %479 = vmatpush1.xpose.msra.mxu0 0.0
    %480 = vmatprep.subr.mxu0 0.0
    %481 = vmatpush1.xpose.msra.mxu0 0.0
    %482 = vmatprep.subr.mxu0 0.0
    %483 = vmatpush1.xpose.msra.mxu0 0.0
    %484 = vmatprep.subr.mxu0 0.0
    %485 = vmatpush1.xpose.msra.mxu0 0.0
    %486 = vmatprep.subr.mxu0 0.0
    %487 = vmatpush1.xpose.msra.mxu0 0.0
    %488 = vmatprep.subr.mxu0 0.0
    %489 = vmatpush1.xpose.msra.mxu0 0.0
    %490 = vmatprep.subr.mxu0 0.0
    %491 = vmatpush1.xpose.msra.mxu0 0.0
    %492 = vmatprep.subr.mxu0 0.0
    %493 = vmatpush1.xpose.msra.mxu0 0.0
    %494 = vmatprep.subr.mxu0 0.0
    %495 = vmatpush1.xpose.msra.mxu0 0.0
    %496 = vmatprep.subr.mxu0 0.0
    %497 = vmatpush1.xpose.msra.mxu0 0.0
    %498 = vmatprep.mubr.f32.mxu0 0.0
    %499 = vmatmul.mubr.f32.gmra.mrb[0].mxu0 %v429
    %v500 = vpop.f32.mrb[0].mxu0
    %v501 = vadd.f32 %v172, %v500
    %v502 = vpop.f32.mrb[0].mxu0
    %503 = vdwg.mxu0
    %v504 = vsel %vm425, %v501, -inf
    %505 = vmax.xlane.f32.xlu0 %v504
    %v506 = vpop.xlane.xlu0 %505
    %v507 = vsub.f32 %v501, %v506
    %v508 = vmul.f32 %v507, 1.442695
    %v509 = vpow.pop %v508
    %v510 = vsel %vm425, %v509, 0.0
    %511 = vadd.xlane.f32.xlu0 %v510
    %v512 = vpop.xlane.xlu0 %511
    %v513 = vrcp.pop %v512
    %v514 = vmul.f32 %v509, %v513
    %v516 = vsel %vm425, %v514, 0
    %518 = vmatprep.subr.mxu0 0.0
    %519 = vmatpush1.msra.mxu0 %v422
    %520 = vmatprep.subr.mxu0 0.0
    %521 = vmatpush1.msra.mxu0 0.0
    %522 = vmatprep.subr.mxu0 0.0
    %523 = vmatpush1.msra.mxu0 0.0
    %524 = vmatprep.subr.mxu0 0.0
    %525 = vmatpush1.msra.mxu0 0.0
    %526 = vmatprep.subr.mxu0 0.0
    %527 = vmatpush1.msra.mxu0 0.0
    %528 = vmatprep.subr.mxu0 0.0
    %529 = vmatpush1.msra.mxu0 0.0
    %530 = vmatprep.subr.mxu0 0.0
    %531 = vmatpush1.msra.mxu0 0.0
    %532 = vmatprep.subr.mxu0 0.0
    %533 = vmatpush1.msra.mxu0 0.0
    %534 = vmatprep.subr.mxu0 0.0
    %535 = vmatpush1.msra.mxu0 0.0
    %536 = vmatprep.subr.mxu0 0.0
    %537 = vmatpush1.msra.mxu0 0.0
    %538 = vmatprep.subr.mxu0 0.0
    %539 = vmatpush1.msra.mxu0 0.0
    %540 = vmatprep.subr.mxu0 0.0
    %541 = vmatpush1.msra.mxu0 0.0
    %542 = vmatprep.subr.mxu0 0.0
    %543 = vmatpush1.msra.mxu0 0.0
    %544 = vmatprep.subr.mxu0 0.0
    %545 = vmatpush1.msra.mxu0 0.0
    %546 = vmatprep.subr.mxu0 0.0
    %547 = vmatpush1.msra.mxu0 0.0
    %548 = vmatprep.subr.mxu0 0.0
    %549 = vmatpush1.msra.mxu0 0.0
    %550 = vmatprep.subr.mxu0 0.0
    %551 = vmatpush1.msra.mxu0 0.0
    %552 = vmatprep.subr.mxu0 0.0
    %553 = vmatpush1.msra.mxu0 0.0
    %554 = vmatprep.subr.mxu0 0.0
    %555 = vmatpush1.msra.mxu0 0.0
    %556 = vmatprep.subr.mxu0 0.0
    %557 = vmatpush1.msra.mxu0 0.0
    %558 = vmatprep.subr.mxu0 0.0
    %559 = vmatpush1.msra.mxu0 0.0
    %560 = vmatprep.subr.mxu0 0.0
    %561 = vmatpush1.msra.mxu0 0.0
    %562 = vmatprep.subr.mxu0 0.0
    %563 = vmatpush1.msra.mxu0 0.0
    %564 = vmatprep.subr.mxu0 0.0
    %565 = vmatpush1.msra.mxu0 0.0
    %566 = vmatprep.subr.mxu0 0.0
    %567 = vmatpush1.msra.mxu0 0.0
    %568 = vmatprep.subr.mxu0 0.0
    %569 = vmatpush1.msra.mxu0 0.0
    %570 = vmatprep.subr.mxu0 0.0
    %571 = vmatpush1.msra.mxu0 0.0
    %572 = vmatprep.subr.mxu0 0.0
    %573 = vmatpush1.msra.mxu0 0.0
    %574 = vmatprep.subr.mxu0 0.0
    %575 = vmatpush1.msra.mxu0 0.0
    %576 = vmatprep.subr.mxu0 0.0
    %577 = vmatpush1.msra.mxu0 0.0
    %578 = vmatprep.subr.mxu0 0.0
    %579 = vmatpush1.msra.mxu0 0.0
    %580 = vmatprep.subr.mxu0 0.0
    %581 = vmatpush1.msra.mxu0 0.0
    %582 = vmatprep.mubr.f32.mxu0 0.0
    %583 = vmatmul.mubr.f32.gmra.mrb[0].mxu0 %v516
    %v584 = vpop.f32.mrb[0].mxu0
    %v585 = vadd.f32 0.0, %v584
    %v586 = vpop.f32.mrb[0].mxu0
    %587 = vdwg.mxu0
    %v588 = vld [vmem:[%s23] sm:$0xff]
    %s589 = scalar_lea.vmem %s11, 32
    %v590 = vld [vmem:[%s589] sm:$0xff]
    %v591 = vld [vmem:[%s589 + $0x8] sm:$0xff]
    %v592 = vld [vmem:[%s589 + $0x10] sm:$0xff]
    %v593 = vld [vmem:[%s589 + $0x18] sm:$0xff]
    %s594 = scalar_lea.vmem %s13, 1
    %v595 = vld [vmem:[%s594] sm:$0x1]
    %v597 = vlaneseq
    %v598 = vshrl.u32 %v597, 7
    %v599 = vsub.s32 0, %v598
    %v600 = vrot.slane %v595, %v599
    %602 = vmatprep.subr.mxu0 0.0
    %603 = vmatpush1.msra.mxu0 %v590
    %604 = vmatprep.subr.mxu0 0.0
    %605 = vmatpush1.msra.mxu0 %v591
    %606 = vmatprep.subr.mxu0 0.0
    %607 = vmatpush1.msra.mxu0 %v592
    %608 = vmatprep.subr.mxu0 0.0
    %609 = vmatpush1.msra.mxu0 %v593
    %610 = vmatprep.subr.mxu0 0.0
    %611 = vmatpush1.msra.mxu0 0.0
    %612 = vmatprep.subr.mxu0 0.0
    %613 = vmatpush1.msra.mxu0 0.0
    %614 = vmatprep.subr.mxu0 0.0
    %615 = vmatpush1.msra.mxu0 0.0
    %616 = vmatprep.subr.mxu0 0.0
    %617 = vmatpush1.msra.mxu0 0.0
    %618 = vmatprep.subr.mxu0 0.0
    %619 = vmatpush1.msra.mxu0 0.0
    %620 = vmatprep.subr.mxu0 0.0
    %621 = vmatpush1.msra.mxu0 0.0
    %622 = vmatprep.subr.mxu0 0.0
    %623 = vmatpush1.msra.mxu0 0.0
    %624 = vmatprep.subr.mxu0 0.0
    %625 = vmatpush1.msra.mxu0 0.0
    %626 = vmatprep.subr.mxu0 0.0
    %627 = vmatpush1.msra.mxu0 0.0
    %628 = vmatprep.subr.mxu0 0.0
    %629 = vmatpush1.msra.mxu0 0.0
    %630 = vmatprep.subr.mxu0 0.0
    %631 = vmatpush1.msra.mxu0 0.0
    %632 = vmatprep.subr.mxu0 0.0
    %633 = vmatpush1.msra.mxu0 0.0
    %634 = vmatprep.subr.mxu0 0.0
    %635 = vmatpush1.msra.mxu0 0.0
    %636 = vmatprep.subr.mxu0 0.0
    %637 = vmatpush1.msra.mxu0 0.0
    %638 = vmatprep.subr.mxu0 0.0
    %639 = vmatpush1.msra.mxu0 0.0
    %640 = vmatprep.subr.mxu0 0.0
    %641 = vmatpush1.msra.mxu0 0.0
    %642 = vmatprep.subr.mxu0 0.0
    %643 = vmatpush1.msra.mxu0 0.0
    %644 = vmatprep.subr.mxu0 0.0
    %645 = vmatpush1.msra.mxu0 0.0
    %646 = vmatprep.subr.mxu0 0.0
    %647 = vmatpush1.msra.mxu0 0.0
    %648 = vmatprep.subr.mxu0 0.0
    %649 = vmatpush1.msra.mxu0 0.0
    %650 = vmatprep.subr.mxu0 0.0
    %651 = vmatpush1.msra.mxu0 0.0
    %652 = vmatprep.subr.mxu0 0.0
    %653 = vmatpush1.msra.mxu0 0.0
    %654 = vmatprep.subr.mxu0 0.0
    %655 = vmatpush1.msra.mxu0 0.0
    %656 = vmatprep.subr.mxu0 0.0
    %657 = vmatpush1.msra.mxu0 0.0
    %658 = vmatprep.subr.mxu0 0.0
    %659 = vmatpush1.msra.mxu0 0.0
    %660 = vmatprep.subr.mxu0 0.0
    %661 = vmatpush1.msra.mxu0 0.0
    %662 = vmatprep.subr.mxu0 0.0
    %663 = vmatpush1.msra.mxu0 0.0
    %664 = vmatprep.subr.mxu0 0.0
    %665 = vmatpush1.msra.mxu0 0.0
    %666 = vmatprep.mubr.f32.mxu0 0.0
    %667 = vmatmul.mubr.f32.gmra.mrb[0].mxu0 %v191
    %v668 = vpop.f32.mrb[0].mxu0
    %v669 = vadd.f32 %v600, %v668
    %v670 = vpop.f32.mrb[0].mxu0
    %671 = vdwg.mxu0
    %s672 = scalar_lea.vmem %s15, 32
    %v673 = vld [vmem:[%s672] sm:$0xff]
    %v674 = vld [vmem:[%s672 + $0x8] sm:$0xff]
    %v675 = vld [vmem:[%s672 + $0x10] sm:$0xff]
    %v676 = vld [vmem:[%s672 + $0x18] sm:$0xff]
    %s677 = scalar_lea.vmem %s17, 1
    %v678 = vld [vmem:[%s677] sm:$0x1]
    %v680 = vlaneseq
    %v681 = vshrl.u32 %v680, 7
    %v682 = vsub.s32 0, %v681
    %v683 = vrot.slane %v678, %v682
    %685 = vmatprep.subr.mxu0 0.0
    %686 = vmatpush1.msra.mxu0 %v673
    %687 = vmatprep.subr.mxu0 0.0
    %688 = vmatpush1.msra.mxu0 %v674
    %689 = vmatprep.subr.mxu0 0.0
    %690 = vmatpush1.msra.mxu0 %v675
    %691 = vmatprep.subr.mxu0 0.0
    %692 = vmatpush1.msra.mxu0 %v676
    %693 = vmatprep.subr.mxu0 0.0
    %694 = vmatpush1.msra.mxu0 0.0
    %695 = vmatprep.subr.mxu0 0.0
    %696 = vmatpush1.msra.mxu0 0.0
    %697 = vmatprep.subr.mxu0 0.0
    %698 = vmatpush1.msra.mxu0 0.0
    %699 = vmatprep.subr.mxu0 0.0
    %700 = vmatpush1.msra.mxu0 0.0
    %701 = vmatprep.subr.mxu0 0.0
    %702 = vmatpush1.msra.mxu0 0.0
    %703 = vmatprep.subr.mxu0 0.0
    %704 = vmatpush1.msra.mxu0 0.0
    %705 = vmatprep.subr.mxu0 0.0
    %706 = vmatpush1.msra.mxu0 0.0
    %707 = vmatprep.subr.mxu0 0.0
    %708 = vmatpush1.msra.mxu0 0.0
    %709 = vmatprep.subr.mxu0 0.0
    %710 = vmatpush1.msra.mxu0 0.0
    %711 = vmatprep.subr.mxu0 0.0
    %712 = vmatpush1.msra.mxu0 0.0
    %713 = vmatprep.subr.mxu0 0.0
    %714 = vmatpush1.msra.mxu0 0.0
    %715 = vmatprep.subr.mxu0 0.0
    %716 = vmatpush1.msra.mxu0 0.0
    %717 = vmatprep.subr.mxu0 0.0
    %718 = vmatpush1.msra.mxu0 0.0
    %719 = vmatprep.subr.mxu0 0.0
    %720 = vmatpush1.msra.mxu0 0.0
    %721 = vmatprep.subr.mxu0 0.0
    %722 = vmatpush1.msra.mxu0 0.0
    %723 = vmatprep.subr.mxu0 0.0
    %724 = vmatpush1.msra.mxu0 0.0
    %725 = vmatprep.subr.mxu0 0.0
    %726 = vmatpush1.msra.mxu0 0.0
    %727 = vmatprep.subr.mxu0 0.0
    %728 = vmatpush1.msra.mxu0 0.0
    %729 = vmatprep.subr.mxu0 0.0
    %730 = vmatpush1.msra.mxu0 0.0
    %731 = vmatprep.subr.mxu0 0.0
    %732 = vmatpush1.msra.mxu0 0.0
    %733 = vmatprep.subr.mxu0 0.0
    %734 = vmatpush1.msra.mxu0 0.0
    %735 = vmatprep.subr.mxu0 0.0
    %736 = vmatpush1.msra.mxu0 0.0
    %737 = vmatprep.subr.mxu0 0.0
    %738 = vmatpush1.msra.mxu0 0.0
    %739 = vmatprep.subr.mxu0 0.0
    %740 = vmatpush1.msra.mxu0 0.0
    %741 = vmatprep.subr.mxu0 0.0
    %742 = vmatpush1.msra.mxu0 0.0
    %743 = vmatprep.subr.mxu0 0.0
    %744 = vmatpush1.msra.mxu0 0.0
    %745 = vmatprep.subr.mxu0 0.0
    %746 = vmatpush1.msra.mxu0 0.0
    %747 = vmatprep.subr.mxu0 0.0
    %748 = vmatpush1.msra.mxu0 0.0
    %749 = vmatprep.mubr.f32.mxu0 0.0
    %750 = vmatmul.mubr.f32.gmra.mrb[0].mxu0 %v191
    %v751 = vpop.f32.mrb[0].mxu0
    %v752 = vadd.f32 %v683, %v751
    %v753 = vpop.f32.mrb[0].mxu0
    %754 = vdwg.mxu0
    %s755 = scalar_lea.vmem %s19, 32
    %v756 = vld [vmem:[%s755] sm:$0xff]
    %v757 = vld [vmem:[%s755 + $0x8] sm:$0xff]
    %v758 = vld [vmem:[%s755 + $0x10] sm:$0xff]
    %v759 = vld [vmem:[%s755 + $0x18] sm:$0xff]
    %s760 = scalar_lea.vmem %s21, 1
    %v761 = vld [vmem:[%s760] sm:$0x1]
    %v763 = vlaneseq
    %v764 = vshrl.u32 %v763, 7
    %v765 = vsub.s32 0, %v764
    %v766 = vrot.slane %v761, %v765
    %768 = vmatprep.subr.mxu0 0.0
    %769 = vmatpush1.msra.mxu0 %v756
    %770 = vmatprep.subr.mxu0 0.0
    %771 = vmatpush1.msra.mxu0 %v757
    %772 = vmatprep.subr.mxu0 0.0
    %773 = vmatpush1.msra.mxu0 %v758
    %774 = vmatprep.subr.mxu0 0.0
    %775 = vmatpush1.msra.mxu0 %v759
    %776 = vmatprep.subr.mxu0 0.0
    %777 = vmatpush1.msra.mxu0 0.0
    %778 = vmatprep.subr.mxu0 0.0
    %779 = vmatpush1.msra.mxu0 0.0
    %780 = vmatprep.subr.mxu0 0.0
    %781 = vmatpush1.msra.mxu0 0.0
    %782 = vmatprep.subr.mxu0 0.0
    %783 = vmatpush1.msra.mxu0 0.0
    %784 = vmatprep.subr.mxu0 0.0
    %785 = vmatpush1.msra.mxu0 0.0
    %786 = vmatprep.subr.mxu0 0.0
    %787 = vmatpush1.msra.mxu0 0.0
    %788 = vmatprep.subr.mxu0 0.0
    %789 = vmatpush1.msra.mxu0 0.0
    %790 = vmatprep.subr.mxu0 0.0
    %791 = vmatpush1.msra.mxu0 0.0
    %792 = vmatprep.subr.mxu0 0.0
    %793 = vmatpush1.msra.mxu0 0.0
    %794 = vmatprep.subr.mxu0 0.0
    %795 = vmatpush1.msra.mxu0 0.0
    %796 = vmatprep.subr.mxu0 0.0
    %797 = vmatpush1.msra.mxu0 0.0
    %798 = vmatprep.subr.mxu0 0.0
    %799 = vmatpush1.msra.mxu0 0.0
    %800 = vmatprep.subr.mxu0 0.0
    %801 = vmatpush1.msra.mxu0 0.0
    %802 = vmatprep.subr.mxu0 0.0
    %803 = vmatpush1.msra.mxu0 0.0
    %804 = vmatprep.subr.mxu0 0.0
    %805 = vmatpush1.msra.mxu0 0.0
    %806 = vmatprep.subr.mxu0 0.0
    %807 = vmatpush1.msra.mxu0 0.0
    %808 = vmatprep.subr.mxu0 0.0
    %809 = vmatpush1.msra.mxu0 0.0
    %810 = vmatprep.subr.mxu0 0.0
    %811 = vmatpush1.msra.mxu0 0.0
    %812 = vmatprep.subr.mxu0 0.0
    %813 = vmatpush1.msra.mxu0 0.0
    %814 = vmatprep.subr.mxu0 0.0
    %815 = vmatpush1.msra.mxu0 0.0
    %816 = vmatprep.subr.mxu0 0.0
    %817 = vmatpush1.msra.mxu0 0.0
    %818 = vmatprep.subr.mxu0 0.0
    %819 = vmatpush1.msra.mxu0 0.0
    %820 = vmatprep.subr.mxu0 0.0
    %821 = vmatpush1.msra.mxu0 0.0
    %822 = vmatprep.subr.mxu0 0.0
    %823 = vmatpush1.msra.mxu0 0.0
    %824 = vmatprep.subr.mxu0 0.0
    %825 = vmatpush1.msra.mxu0 0.0
    %826 = vmatprep.subr.mxu0 0.0
    %827 = vmatpush1.msra.mxu0 0.0
    %828 = vmatprep.subr.mxu0 0.0
    %829 = vmatpush1.msra.mxu0 0.0
    %830 = vmatprep.subr.mxu0 0.0
    %831 = vmatpush1.msra.mxu0 0.0
    %832 = vmatprep.mubr.f32.mxu0 0.0
    %833 = vmatmul.mubr.f32.gmra.mrb[0].mxu0 %v191
    %v834 = vpop.f32.mrb[0].mxu0
    %v835 = vadd.f32 %v766, %v834
    %v836 = vpop.f32.mrb[0].mxu0
    %837 = vdwg.mxu0
    %s838 = scalar_lea.vmem [#allocation2], 8
    %839 = vst.msk [vmem:[%s838] sm:$0xff] %vm425, %v752
    %s840 = scalar_lea.vmem [#allocation4], 8
    %841 = vst.msk [vmem:[%s840] sm:$0xff] %vm425, %v835
    %v843 = vsel %vm425, %v669, 0
    %v846 = vsel %vm425, %v752, 0
    %848 = vmatprep.subr.mxu0 0.0
    %849 = vmatpush1.xpose.msra.mxu0 %v846
    %850 = vmatprep.subr.mxu0 0.0
    %851 = vmatpush1.xpose.msra.mxu0 0.0
    %852 = vmatprep.subr.mxu0 0.0
    %853 = vmatpush1.xpose.msra.mxu0 0.0
    %854 = vmatprep.subr.mxu0 0.0
    %855 = vmatpush1.xpose.msra.mxu0 0.0
    %856 = vmatprep.subr.mxu0 0.0
    %857 = vmatpush1.xpose.msra.mxu0 0.0
    %858 = vmatprep.subr.mxu0 0.0
    %859 = vmatpush1.xpose.msra.mxu0 0.0
    %860 = vmatprep.subr.mxu0 0.0
    %861 = vmatpush1.xpose.msra.mxu0 0.0
    %862 = vmatprep.subr.mxu0 0.0
    %863 = vmatpush1.xpose.msra.mxu0 0.0
    %864 = vmatprep.subr.mxu0 0.0
    %865 = vmatpush1.xpose.msra.mxu0 0.0
    %866 = vmatprep.subr.mxu0 0.0
    %867 = vmatpush1.xpose.msra.mxu0 0.0
    %868 = vmatprep.subr.mxu0 0.0
    %869 = vmatpush1.xpose.msra.mxu0 0.0
    %870 = vmatprep.subr.mxu0 0.0
    %871 = vmatpush1.xpose.msra.mxu0 0.0
    %872 = vmatprep.subr.mxu0 0.0
    %873 = vmatpush1.xpose.msra.mxu0 0.0
    %874 = vmatprep.subr.mxu0 0.0
    %875 = vmatpush1.xpose.msra.mxu0 0.0
    %876 = vmatprep.subr.mxu0 0.0
    %877 = vmatpush1.xpose.msra.mxu0 0.0
    %878 = vmatprep.subr.mxu0 0.0
    %879 = vmatpush1.xpose.msra.mxu0 0.0
    %880 = vmatprep.subr.mxu0 0.0
    %881 = vmatpush1.xpose.msra.mxu0 0.0
    %882 = vmatprep.subr.mxu0 0.0
    %883 = vmatpush1.xpose.msra.mxu0 0.0
    %884 = vmatprep.subr.mxu0 0.0
    %885 = vmatpush1.xpose.msra.mxu0 0.0
    %886 = vmatprep.subr.mxu0 0.0
    %887 = vmatpush1.xpose.msra.mxu0 0.0
    %888 = vmatprep.subr.mxu0 0.0
    %889 = vmatpush1.xpose.msra.mxu0 0.0
    %890 = vmatprep.subr.mxu0 0.0
    %891 = vmatpush1.xpose.msra.mxu0 0.0
    %892 = vmatprep.subr.mxu0 0.0
    %893 = vmatpush1.xpose.msra.mxu0 0.0
    %894 = vmatprep.subr.mxu0 0.0
    %895 = vmatpush1.xpose.msra.mxu0 0.0
    %896 = vmatprep.subr.mxu0 0.0
    %897 = vmatpush1.xpose.msra.mxu0 0.0
    %898 = vmatprep.subr.mxu0 0.0
    %899 = vmatpush1.xpose.msra.mxu0 0.0
    %900 = vmatprep.subr.mxu0 0.0
    %901 = vmatpush1.xpose.msra.mxu0 0.0
    %902 = vmatprep.subr.mxu0 0.0
    %903 = vmatpush1.xpose.msra.mxu0 0.0
    %904 = vmatprep.subr.mxu0 0.0
    %905 = vmatpush1.xpose.msra.mxu0 0.0
    %906 = vmatprep.subr.mxu0 0.0
    %907 = vmatpush1.xpose.msra.mxu0 0.0
    %908 = vmatprep.subr.mxu0 0.0
    %909 = vmatpush1.xpose.msra.mxu0 0.0
    %910 = vmatprep.subr.mxu0 0.0
    %911 = vmatpush1.xpose.msra.mxu0 0.0
    %912 = vmatprep.mubr.f32.mxu0 0.0
    %913 = vmatmul.mubr.f32.gmra.mrb[0].mxu0 %v843
    %v914 = vpop.f32.mrb[0].mxu0
    %v915 = vadd.f32 %v172, %v914
    %v916 = vpop.f32.mrb[0].mxu0
    %917 = vdwg.mxu0
    %v918 = vsel %vm425, %v915, -inf
    %919 = vmax.xlane.f32.xlu0 %v918
    %v920 = vpop.xlane.xlu0 %919
    %v921 = vsub.f32 %v915, %v920
    %v922 = vmul.f32 %v921, 1.442695
    %v923 = vpow.pop %v922
    %v924 = vsel %vm425, %v923, 0.0
    %925 = vadd.xlane.f32.xlu0 %v924
    %v926 = vpop.xlane.xlu0 %925
    %v927 = vrcp.pop %v926
    %v928 = vmul.f32 %v923, %v927
    %v930 = vsel %vm425, %v928, 0
    %932 = vmatprep.subr.mxu0 0.0
    %933 = vmatpush1.msra.mxu0 %v835
    %934 = vmatprep.subr.mxu0 0.0
    %935 = vmatpush1.msra.mxu0 0.0
    %936 = vmatprep.subr.mxu0 0.0
    %937 = vmatpush1.msra.mxu0 0.0
    %938 = vmatprep.subr.mxu0 0.0
    %939 = vmatpush1.msra.mxu0 0.0
    %940 = vmatprep.subr.mxu0 0.0
    %941 = vmatpush1.msra.mxu0 0.0
    %942 = vmatprep.subr.mxu0 0.0
    %943 = vmatpush1.msra.mxu0 0.0
    %944 = vmatprep.subr.mxu0 0.0
    %945 = vmatpush1.msra.mxu0 0.0
    %946 = vmatprep.subr.mxu0 0.0
    %947 = vmatpush1.msra.mxu0 0.0
    %948 = vmatprep.subr.mxu0 0.0
    %949 = vmatpush1.msra.mxu0 0.0
    %950 = vmatprep.subr.mxu0 0.0
    %951 = vmatpush1.msra.mxu0 0.0
    %952 = vmatprep.subr.mxu0 0.0
    %953 = vmatpush1.msra.mxu0 0.0
    %954 = vmatprep.subr.mxu0 0.0
    %955 = vmatpush1.msra.mxu0 0.0
    %956 = vmatprep.subr.mxu0 0.0
    %957 = vmatpush1.msra.mxu0 0.0
    %958 = vmatprep.subr.mxu0 0.0
    %959 = vmatpush1.msra.mxu0 0.0
    %960 = vmatprep.subr.mxu0 0.0
    %961 = vmatpush1.msra.mxu0 0.0
    %962 = vmatprep.subr.mxu0 0.0
    %963 = vmatpush1.msra.mxu0 0.0
    %964 = vmatprep.subr.mxu0 0.0
    %965 = vmatpush1.msra.mxu0 0.0
    %966 = vmatprep.subr.mxu0 0.0
    %967 = vmatpush1.msra.mxu0 0.0
    %968 = vmatprep.subr.mxu0 0.0
    %969 = vmatpush1.msra.mxu0 0.0
    %970 = vmatprep.subr.mxu0 0.0
    %971 = vmatpush1.msra.mxu0 0.0
    %972 = vmatprep.subr.mxu0 0.0
    %973 = vmatpush1.msra.mxu0 0.0
    %974 = vmatprep.subr.mxu0 0.0
    %975 = vmatpush1.msra.mxu0 0.0
    %976 = vmatprep.subr.mxu0 0.0
    %977 = vmatpush1.msra.mxu0 0.0
    %978 = vmatprep.subr.mxu0 0.0
    %979 = vmatpush1.msra.mxu0 0.0
    %980 = vmatprep.subr.mxu0 0.0
    %981 = vmatpush1.msra.mxu0 0.0
    %982 = vmatprep.subr.mxu0 0.0
    %983 = vmatpush1.msra.mxu0 0.0
    %984 = vmatprep.subr.mxu0 0.0
    %985 = vmatpush1.msra.mxu0 0.0
    %986 = vmatprep.subr.mxu0 0.0
    %987 = vmatpush1.msra.mxu0 0.0
    %988 = vmatprep.subr.mxu0 0.0
    %989 = vmatpush1.msra.mxu0 0.0
    %990 = vmatprep.subr.mxu0 0.0
    %991 = vmatpush1.msra.mxu0 0.0
    %992 = vmatprep.subr.mxu0 0.0
    %993 = vmatpush1.msra.mxu0 0.0
    %994 = vmatprep.subr.mxu0 0.0
    %995 = vmatpush1.msra.mxu0 0.0
    %996 = vmatprep.mubr.f32.mxu0 0.0
    %997 = vmatmul.mubr.f32.gmra.mrb[0].mxu0 %v930
    %v998 = vpop.f32.mrb[0].mxu0
    %v999 = vadd.f32 0.0, %v998
    %v1000 = vpop.f32.mrb[0].mxu0
    %1001 = vdwg.mxu0
    %s1002 = scalar_lea.vmem %s23, 8
    %v1003 = vld [vmem:[%s1002] sm:$0xff]
    %v1005 = vsel %vm425, %v999, 0
    %1007 = vmatprep.subr.mxu0 0.0
    %1008 = vmatpush1.msra.mxu0 %v1003
    %1009 = vmatprep.subr.mxu0 0.0
    %1010 = vmatpush1.msra.mxu0 0.0
    %1011 = vmatprep.subr.mxu0 0.0
    %1012 = vmatpush1.msra.mxu0 0.0
    %1013 = vmatprep.subr.mxu0 0.0
    %1014 = vmatpush1.msra.mxu0 0.0
    %1015 = vmatprep.subr.mxu0 0.0
    %1016 = vmatpush1.msra.mxu0 0.0
    %1017 = vmatprep.subr.mxu0 0.0
    %1018 = vmatpush1.msra.mxu0 0.0
    %1019 = vmatprep.subr.mxu0 0.0
    %1020 = vmatpush1.msra.mxu0 0.0
    %1021 = vmatprep.subr.mxu0 0.0
    %1022 = vmatpush1.msra.mxu0 0.0
    %1023 = vmatprep.subr.mxu0 0.0
    %1024 = vmatpush1.msra.mxu0 0.0
    %1025 = vmatprep.subr.mxu0 0.0
    %1026 = vmatpush1.msra.mxu0 0.0
    %1027 = vmatprep.subr.mxu0 0.0
    %1028 = vmatpush1.msra.mxu0 0.0
    %1029 = vmatprep.subr.mxu0 0.0
    %1030 = vmatpush1.msra.mxu0 0.0
    %1031 = vmatprep.subr.mxu0 0.0
    %1032 = vmatpush1.msra.mxu0 0.0
    %1033 = vmatprep.subr.mxu0 0.0
    %1034 = vmatpush1.msra.mxu0 0.0
    %1035 = vmatprep.subr.mxu0 0.0
    %1036 = vmatpush1.msra.mxu0 0.0
    %1037 = vmatprep.subr.mxu0 0.0
    %1038 = vmatpush1.msra.mxu0 0.0
    %1039 = vmatprep.subr.mxu0 0.0
    %1040 = vmatpush1.msra.mxu0 0.0
    %1041 = vmatprep.subr.mxu0 0.0
    %1042 = vmatpush1.msra.mxu0 0.0
    %1043 = vmatprep.subr.mxu0 0.0
    %1044 = vmatpush1.msra.mxu0 0.0
    %1045 = vmatprep.subr.mxu0 0.0
    %1046 = vmatpush1.msra.mxu0 0.0
    %1047 = vmatprep.subr.mxu0 0.0
    %1048 = vmatpush1.msra.mxu0 0.0
    %1049 = vmatprep.subr.mxu0 0.0
    %1050 = vmatpush1.msra.mxu0 0.0
    %1051 = vmatprep.subr.mxu0 0.0
    %1052 = vmatpush1.msra.mxu0 0.0
    %1053 = vmatprep.subr.mxu0 0.0
    %1054 = vmatpush1.msra.mxu0 0.0
    %1055 = vmatprep.subr.mxu0 0.0
    %1056 = vmatpush1.msra.mxu0 0.0
    %1057 = vmatprep.subr.mxu0 0.0
    %1058 = vmatpush1.msra.mxu0 0.0
    %1059 = vmatprep.subr.mxu0 0.0
    %1060 = vmatpush1.msra.mxu0 0.0
    %1061 = vmatprep.subr.mxu0 0.0
    %1062 = vmatpush1.msra.mxu0 0.0
    %1063 = vmatprep.subr.mxu0 0.0
    %1064 = vmatpush1.msra.mxu0 0.0
    %1065 = vmatprep.subr.mxu0 0.0
    %1066 = vmatpush1.msra.mxu0 0.0
    %1067 = vmatprep.subr.mxu0 0.0
    %1068 = vmatpush1.msra.mxu0 0.0
    %1069 = vmatprep.subr.mxu0 0.0
    %1070 = vmatpush1.msra.mxu0 0.0
    %1071 = vmatprep.mubr.f32.mxu0 0.0
    %1072 = vmatmul.mubr.f32.gmra.mrb[0].mxu0 %v1005
    %v1073 = vpop.f32.mrb[0].mxu0
    %v1074 = vadd.f32 0.0, %v1073
    %v1075 = vpop.f32.mrb[0].mxu0
    %1076 = vdwg.mxu0
    %v1078 = vsel %vm425, %v585, 0
    %1080 = vmatprep.subr.mxu0 0.0
    %1081 = vmatpush1.msra.mxu0 %v588
    %1082 = vmatprep.subr.mxu0 0.0
    %1083 = vmatpush1.msra.mxu0 0.0
    %1084 = vmatprep.subr.mxu0 0.0
    %1085 = vmatpush1.msra.mxu0 0.0
    %1086 = vmatprep.subr.mxu0 0.0
    %1087 = vmatpush1.msra.mxu0 0.0
    %1088 = vmatprep.subr.mxu0 0.0
    %1089 = vmatpush1.msra.mxu0 0.0
    %1090 = vmatprep.subr.mxu0 0.0
    %1091 = vmatpush1.msra.mxu0 0.0
    %1092 = vmatprep.subr.mxu0 0.0
    %1093 = vmatpush1.msra.mxu0 0.0
    %1094 = vmatprep.subr.mxu0 0.0
    %1095 = vmatpush1.msra.mxu0 0.0
    %1096 = vmatprep.subr.mxu0 0.0
    %1097 = vmatpush1.msra.mxu0 0.0
    %1098 = vmatprep.subr.mxu0 0.0
    %1099 = vmatpush1.msra.mxu0 0.0
    %1100 = vmatprep.subr.mxu0 0.0
    %1101 = vmatpush1.msra.mxu0 0.0
    %1102 = vmatprep.subr.mxu0 0.0
    %1103 = vmatpush1.msra.mxu0 0.0
    %1104 = vmatprep.subr.mxu0 0.0
    %1105 = vmatpush1.msra.mxu0 0.0
    %1106 = vmatprep.subr.mxu0 0.0
    %1107 = vmatpush1.msra.mxu0 0.0
    %1108 = vmatprep.subr.mxu0 0.0
    %1109 = vmatpush1.msra.mxu0 0.0
    %1110 = vmatprep.subr.mxu0 0.0
    %1111 = vmatpush1.msra.mxu0 0.0
    %1112 = vmatprep.subr.mxu0 0.0
    %1113 = vmatpush1.msra.mxu0 0.0
    %1114 = vmatprep.subr.mxu0 0.0
    %1115 = vmatpush1.msra.mxu0 0.0
    %1116 = vmatprep.subr.mxu0 0.0
    %1117 = vmatpush1.msra.mxu0 0.0
    %1118 = vmatprep.subr.mxu0 0.0
    %1119 = vmatpush1.msra.mxu0 0.0
    %1120 = vmatprep.subr.mxu0 0.0
    %1121 = vmatpush1.msra.mxu0 0.0
    %1122 = vmatprep.subr.mxu0 0.0
    %1123 = vmatpush1.msra.mxu0 0.0
    %1124 = vmatprep.subr.mxu0 0.0
    %1125 = vmatpush1.msra.mxu0 0.0
    %1126 = vmatprep.subr.mxu0 0.0
    %1127 = vmatpush1.msra.mxu0 0.0
    %1128 = vmatprep.subr.mxu0 0.0
    %1129 = vmatpush1.msra.mxu0 0.0
    %1130 = vmatprep.subr.mxu0 0.0
    %1131 = vmatpush1.msra.mxu0 0.0
    %1132 = vmatprep.subr.mxu0 0.0
    %1133 = vmatpush1.msra.mxu0 0.0
    %1134 = vmatprep.subr.mxu0 0.0
    %1135 = vmatpush1.msra.mxu0 0.0
    %1136 = vmatprep.subr.mxu0 0.0
    %1137 = vmatpush1.msra.mxu0 0.0
    %1138 = vmatprep.subr.mxu0 0.0
    %1139 = vmatpush1.msra.mxu0 0.0
    %1140 = vmatprep.subr.mxu0 0.0
    %1141 = vmatpush1.msra.mxu0 0.0
    %1142 = vmatprep.subr.mxu0 0.0
    %1143 = vmatpush1.msra.mxu0 0.0
    %1144 = vmatprep.mubr.f32.mxu0 0.0
    %1145 = vmatmul.mubr.f32.gmra.mrb[0].mxu0 %v1078
    %v1146 = vpop.f32.mrb[0].mxu0
    %v1147 = vadd.f32 %v1074, %v1146
    %v1148 = vpop.f32.mrb[0].mxu0
    %1149 = vdwg.mxu0
    %s1150 = scalar_lea.vmem %s11, 64
    %v1151 = vld [vmem:[%s1150] sm:$0xff]
    %v1152 = vld [vmem:[%s1150 + $0x8] sm:$0xff]
    %v1153 = vld [vmem:[%s1150 + $0x10] sm:$0xff]
    %v1154 = vld [vmem:[%s1150 + $0x18] sm:$0xff]
    %s1155 = scalar_lea.vmem %s13, 2
    %v1156 = vld [vmem:[%s1155] sm:$0x1]
    %v1158 = vlaneseq
    %v1159 = vshrl.u32 %v1158, 7
    %v1160 = vsub.s32 0, %v1159
    %v1161 = vrot.slane %v1156, %v1160
    %1163 = vmatprep.subr.mxu0 0.0
    %1164 = vmatpush1.msra.mxu0 %v1151
    %1165 = vmatprep.subr.mxu0 0.0
    %1166 = vmatpush1.msra.mxu0 %v1152
    %1167 = vmatprep.subr.mxu0 0.0
    %1168 = vmatpush1.msra.mxu0 %v1153
    %1169 = vmatprep.subr.mxu0 0.0
    %1170 = vmatpush1.msra.mxu0 %v1154
    %1171 = vmatprep.subr.mxu0 0.0
    %1172 = vmatpush1.msra.mxu0 0.0
    %1173 = vmatprep.subr.mxu0 0.0
    %1174 = vmatpush1.msra.mxu0 0.0
    %1175 = vmatprep.subr.mxu0 0.0
    %1176 = vmatpush1.msra.mxu0 0.0
    %1177 = vmatprep.subr.mxu0 0.0
    %1178 = vmatpush1.msra.mxu0 0.0
    %1179 = vmatprep.subr.mxu0 0.0
    %1180 = vmatpush1.msra.mxu0 0.0
    %1181 = vmatprep.subr.mxu0 0.0
    %1182 = vmatpush1.msra.mxu0 0.0
    %1183 = vmatprep.subr.mxu0 0.0
    %1184 = vmatpush1.msra.mxu0 0.0
    %1185 = vmatprep.subr.mxu0 0.0
    %1186 = vmatpush1.msra.mxu0 0.0
    %1187 = vmatprep.subr.mxu0 0.0
    %1188 = vmatpush1.msra.mxu0 0.0
    %1189 = vmatprep.subr.mxu0 0.0
    %1190 = vmatpush1.msra.mxu0 0.0
    %1191 = vmatprep.subr.mxu0 0.0
    %1192 = vmatpush1.msra.mxu0 0.0
    %1193 = vmatprep.subr.mxu0 0.0
    %1194 = vmatpush1.msra.mxu0 0.0
    %1195 = vmatprep.subr.mxu0 0.0
    %1196 = vmatpush1.msra.mxu0 0.0
    %1197 = vmatprep.subr.mxu0 0.0
    %1198 = vmatpush1.msra.mxu0 0.0
    %1199 = vmatprep.subr.mxu0 0.0
    %1200 = vmatpush1.msra.mxu0 0.0
    %1201 = vmatprep.subr.mxu0 0.0
    %1202 = vmatpush1.msra.mxu0 0.0
    %1203 = vmatprep.subr.mxu0 0.0
    %1204 = vmatpush1.msra.mxu0 0.0
    %1205 = vmatprep.subr.mxu0 0.0
    %1206 = vmatpush1.msra.mxu0 0.0
    %1207 = vmatprep.subr.mxu0 0.0
    %1208 = vmatpush1.msra.mxu0 0.0
    %1209 = vmatprep.subr.mxu0 0.0
    %1210 = vmatpush1.msra.mxu0 0.0
    %1211 = vmatprep.subr.mxu0 0.0
    %1212 = vmatpush1.msra.mxu0 0.0
    %1213 = vmatprep.subr.mxu0 0.0
    %1214 = vmatpush1.msra.mxu0 0.0
    %1215 = vmatprep.subr.mxu0 0.0
    %1216 = vmatpush1.msra.mxu0 0.0
    %1217 = vmatprep.subr.mxu0 0.0
    %1218 = vmatpush1.msra.mxu0 0.0
    %1219 = vmatprep.subr.mxu0 0.0
    %1220 = vmatpush1.msra.mxu0 0.0
    %1221 = vmatprep.subr.mxu0 0.0
    %1222 = vmatpush1.msra.mxu0 0.0
    %1223 = vmatprep.subr.mxu0 0.0
    %1224 = vmatpush1.msra.mxu0 0.0
    %1225 = vmatprep.subr.mxu0 0.0
    %1226 = vmatpush1.msra.mxu0 0.0
    %1227 = vmatprep.mubr.f32.mxu0 0.0
    %1228 = vmatmul.mubr.f32.gmra.mrb[0].mxu0 %v191
    %v1229 = vpop.f32.mrb[0].mxu0
    %v1230 = vadd.f32 %v1161, %v1229
    %v1231 = vpop.f32.mrb[0].mxu0
    %1232 = vdwg.mxu0
    %s1233 = scalar_lea.vmem %s15, 64
    %v1234 = vld [vmem:[%s1233] sm:$0xff]
    %v1235 = vld [vmem:[%s1233 + $0x8] sm:$0xff]
    %v1236 = vld [vmem:[%s1233 + $0x10] sm:$0xff]
    %v1237 = vld [vmem:[%s1233 + $0x18] sm:$0xff]
    %s1238 = scalar_lea.vmem %s17, 2
    %v1239 = vld [vmem:[%s1238] sm:$0x1]
    %v1241 = vlaneseq
    %v1242 = vshrl.u32 %v1241, 7
    %v1243 = vsub.s32 0, %v1242
    %v1244 = vrot.slane %v1239, %v1243
    %1246 = vmatprep.subr.mxu0 0.0
    %1247 = vmatpush1.msra.mxu0 %v1234
    %1248 = vmatprep.subr.mxu0 0.0
    %1249 = vmatpush1.msra.mxu0 %v1235
    %1250 = vmatprep.subr.mxu0 0.0
    %1251 = vmatpush1.msra.mxu0 %v1236
    %1252 = vmatprep.subr.mxu0 0.0
    %1253 = vmatpush1.msra.mxu0 %v1237
    %1254 = vmatprep.subr.mxu0 0.0
    %1255 = vmatpush1.msra.mxu0 0.0
    %1256 = vmatprep.subr.mxu0 0.0
    %1257 = vmatpush1.msra.mxu0 0.0
    %1258 = vmatprep.subr.mxu0 0.0
    %1259 = vmatpush1.msra.mxu0 0.0
    %1260 = vmatprep.subr.mxu0 0.0
    %1261 = vmatpush1.msra.mxu0 0.0
    %1262 = vmatprep.subr.mxu0 0.0
    %1263 = vmatpush1.msra.mxu0 0.0
    %1264 = vmatprep.subr.mxu0 0.0
    %1265 = vmatpush1.msra.mxu0 0.0
    %1266 = vmatprep.subr.mxu0 0.0
    %1267 = vmatpush1.msra.mxu0 0.0
    %1268 = vmatprep.subr.mxu0 0.0
    %1269 = vmatpush1.msra.mxu0 0.0
    %1270 = vmatprep.subr.mxu0 0.0
    %1271 = vmatpush1.msra.mxu0 0.0
    %1272 = vmatprep.subr.mxu0 0.0
    %1273 = vmatpush1.msra.mxu0 0.0
    %1274 = vmatprep.subr.mxu0 0.0
    %1275 = vmatpush1.msra.mxu0 0.0
    %1276 = vmatprep.subr.mxu0 0.0
    %1277 = vmatpush1.msra.mxu0 0.0
    %1278 = vmatprep.subr.mxu0 0.0
    %1279 = vmatpush1.msra.mxu0 0.0
    %1280 = vmatprep.subr.mxu0 0.0
    %1281 = vmatpush1.msra.mxu0 0.0
    %1282 = vmatprep.subr.mxu0 0.0
    %1283 = vmatpush1.msra.mxu0 0.0
    %1284 = vmatprep.subr.mxu0 0.0
    %1285 = vmatpush1.msra.mxu0 0.0
    %1286 = vmatprep.subr.mxu0 0.0
    %1287 = vmatpush1.msra.mxu0 0.0
    %1288 = vmatprep.subr.mxu0 0.0
    %1289 = vmatpush1.msra.mxu0 0.0
    %1290 = vmatprep.subr.mxu0 0.0
    %1291 = vmatpush1.msra.mxu0 0.0
    %1292 = vmatprep.subr.mxu0 0.0
    %1293 = vmatpush1.msra.mxu0 0.0
    %1294 = vmatprep.subr.mxu0 0.0
    %1295 = vmatpush1.msra.mxu0 0.0
    %1296 = vmatprep.subr.mxu0 0.0
    %1297 = vmatpush1.msra.mxu0 0.0
    %1298 = vmatprep.subr.mxu0 0.0
    %1299 = vmatpush1.msra.mxu0 0.0
    %1300 = vmatprep.subr.mxu0 0.0
    %1301 = vmatpush1.msra.mxu0 0.0
    %1302 = vmatprep.subr.mxu0 0.0
    %1303 = vmatpush1.msra.mxu0 0.0
    %1304 = vmatprep.subr.mxu0 0.0
    %1305 = vmatpush1.msra.mxu0 0.0
    %1306 = vmatprep.subr.mxu0 0.0
    %1307 = vmatpush1.msra.mxu0 0.0
    %1308 = vmatprep.subr.mxu0 0.0
    %1309 = vmatpush1.msra.mxu0 0.0
    %1310 = vmatprep.mubr.f32.mxu0 0.0
    %1311 = vmatmul.mubr.f32.gmra.mrb[0].mxu0 %v191
    %v1312 = vpop.f32.mrb[0].mxu0
    %v1313 = vadd.f32 %v1244, %v1312
    %v1314 = vpop.f32.mrb[0].mxu0
    %1315 = vdwg.mxu0
    %s1316 = scalar_lea.vmem %s19, 64
    %v1317 = vld [vmem:[%s1316] sm:$0xff]
    %v1318 = vld [vmem:[%s1316 + $0x8] sm:$0xff]
    %v1319 = vld [vmem:[%s1316 + $0x10] sm:$0xff]
    %v1320 = vld [vmem:[%s1316 + $0x18] sm:$0xff]
    %s1321 = scalar_lea.vmem %s21, 2
    %v1322 = vld [vmem:[%s1321] sm:$0x1]
    %v1324 = vlaneseq
    %v1325 = vshrl.u32 %v1324, 7
    %v1326 = vsub.s32 0, %v1325
    %v1327 = vrot.slane %v1322, %v1326
    %1329 = vmatprep.subr.mxu0 0.0
    %1330 = vmatpush1.msra.mxu0 %v1317
    %1331 = vmatprep.subr.mxu0 0.0
    %1332 = vmatpush1.msra.mxu0 %v1318
    %1333 = vmatprep.subr.mxu0 0.0
    %1334 = vmatpush1.msra.mxu0 %v1319
    %1335 = vmatprep.subr.mxu0 0.0
    %1336 = vmatpush1.msra.mxu0 %v1320
    %1337 = vmatprep.subr.mxu0 0.0
    %1338 = vmatpush1.msra.mxu0 0.0
    %1339 = vmatprep.subr.mxu0 0.0
    %1340 = vmatpush1.msra.mxu0 0.0
    %1341 = vmatprep.subr.mxu0 0.0
    %1342 = vmatpush1.msra.mxu0 0.0
    %1343 = vmatprep.subr.mxu0 0.0
    %1344 = vmatpush1.msra.mxu0 0.0
    %1345 = vmatprep.subr.mxu0 0.0
    %1346 = vmatpush1.msra.mxu0 0.0
    %1347 = vmatprep.subr.mxu0 0.0
    %1348 = vmatpush1.msra.mxu0 0.0
    %1349 = vmatprep.subr.mxu0 0.0
    %1350 = vmatpush1.msra.mxu0 0.0
    %1351 = vmatprep.subr.mxu0 0.0
    %1352 = vmatpush1.msra.mxu0 0.0
    %1353 = vmatprep.subr.mxu0 0.0
    %1354 = vmatpush1.msra.mxu0 0.0
    %1355 = vmatprep.subr.mxu0 0.0
    %1356 = vmatpush1.msra.mxu0 0.0
    %1357 = vmatprep.subr.mxu0 0.0
    %1358 = vmatpush1.msra.mxu0 0.0
    %1359 = vmatprep.subr.mxu0 0.0
    %1360 = vmatpush1.msra.mxu0 0.0
    %1361 = vmatprep.subr.mxu0 0.0
    %1362 = vmatpush1.msra.mxu0 0.0
    %1363 = vmatprep.subr.mxu0 0.0
    %1364 = vmatpush1.msra.mxu0 0.0
    %1365 = vmatprep.subr.mxu0 0.0
    %1366 = vmatpush1.msra.mxu0 0.0
    %1367 = vmatprep.subr.mxu0 0.0
    %1368 = vmatpush1.msra.mxu0 0.0
    %1369 = vmatprep.subr.mxu0 0.0
    %1370 = vmatpush1.msra.mxu0 0.0
    %1371 = vmatprep.subr.mxu0 0.0
    %1372 = vmatpush1.msra.mxu0 0.0
    %1373 = vmatprep.subr.mxu0 0.0
    %1374 = vmatpush1.msra.mxu0 0.0
    %1375 = vmatprep.subr.mxu0 0.0
    %1376 = vmatpush1.msra.mxu0 0.0
    %1377 = vmatprep.subr.mxu0 0.0
    %1378 = vmatpush1.msra.mxu0 0.0
    %1379 = vmatprep.subr.mxu0 0.0
    %1380 = vmatpush1.msra.mxu0 0.0
    %1381 = vmatprep.subr.mxu0 0.0
    %1382 = vmatpush1.msra.mxu0 0.0
    %1383 = vmatprep.subr.mxu0 0.0
    %1384 = vmatpush1.msra.mxu0 0.0
    %1385 = vmatprep.subr.mxu0 0.0
    %1386 = vmatpush1.msra.mxu0 0.0
    %1387 = vmatprep.subr.mxu0 0.0
    %1388 = vmatpush1.msra.mxu0 0.0
    %1389 = vmatprep.subr.mxu0 0.0
    %1390 = vmatpush1.msra.mxu0 0.0
    %1391 = vmatprep.subr.mxu0 0.0
    %1392 = vmatpush1.msra.mxu0 0.0
    %1393 = vmatprep.mubr.f32.mxu0 0.0
    %1394 = vmatmul.mubr.f32.gmra.mrb[0].mxu0 %v191
    %v1395 = vpop.f32.mrb[0].mxu0
    %v1396 = vadd.f32 %v1327, %v1395
    %v1397 = vpop.f32.mrb[0].mxu0
    %1398 = vdwg.mxu0
    %s1399 = scalar_lea.vmem [#allocation2], 16
    %1400 = vst.msk [vmem:[%s1399] sm:$0xff] %vm425, %v1313
    %s1401 = scalar_lea.vmem [#allocation4], 16
    %1402 = vst.msk [vmem:[%s1401] sm:$0xff] %vm425, %v1396
    %v1404 = vsel %vm425, %v1230, 0
    %v1407 = vsel %vm425, %v1313, 0
    %1409 = vmatprep.subr.mxu0 0.0
    %1410 = vmatpush1.xpose.msra.mxu0 %v1407
    %1411 = vmatprep.subr.mxu0 0.0
    %1412 = vmatpush1.xpose.msra.mxu0 0.0
    %1413 = vmatprep.subr.mxu0 0.0
    %1414 = vmatpush1.xpose.msra.mxu0 0.0
    %1415 = vmatprep.subr.mxu0 0.0
    %1416 = vmatpush1.xpose.msra.mxu0 0.0
    %1417 = vmatprep.subr.mxu0 0.0
    %1418 = vmatpush1.xpose.msra.mxu0 0.0
    %1419 = vmatprep.subr.mxu0 0.0
    %1420 = vmatpush1.xpose.msra.mxu0 0.0
    %1421 = vmatprep.subr.mxu0 0.0
    %1422 = vmatpush1.xpose.msra.mxu0 0.0
    %1423 = vmatprep.subr.mxu0 0.0
    %1424 = vmatpush1.xpose.msra.mxu0 0.0
    %1425 = vmatprep.subr.mxu0 0.0
    %1426 = vmatpush1.xpose.msra.mxu0 0.0
    %1427 = vmatprep.subr.mxu0 0.0
    %1428 = vmatpush1.xpose.msra.mxu0 0.0
    %1429 = vmatprep.subr.mxu0 0.0
    %1430 = vmatpush1.xpose.msra.mxu0 0.0
    %1431 = vmatprep.subr.mxu0 0.0
    %1432 = vmatpush1.xpose.msra.mxu0 0.0
    %1433 = vmatprep.subr.mxu0 0.0
    %1434 = vmatpush1.xpose.msra.mxu0 0.0
    %1435 = vmatprep.subr.mxu0 0.0
    %1436 = vmatpush1.xpose.msra.mxu0 0.0
    %1437 = vmatprep.subr.mxu0 0.0
    %1438 = vmatpush1.xpose.msra.mxu0 0.0
    %1439 = vmatprep.subr.mxu0 0.0
    %1440 = vmatpush1.xpose.msra.mxu0 0.0
    %1441 = vmatprep.subr.mxu0 0.0
    %1442 = vmatpush1.xpose.msra.mxu0 0.0
    %1443 = vmatprep.subr.mxu0 0.0
    %1444 = vmatpush1.xpose.msra.mxu0 0.0
    %1445 = vmatprep.subr.mxu0 0.0
    %1446 = vmatpush1.xpose.msra.mxu0 0.0
    %1447 = vmatprep.subr.mxu0 0.0
    %1448 = vmatpush1.xpose.msra.mxu0 0.0
    %1449 = vmatprep.subr.mxu0 0.0
    %1450 = vmatpush1.xpose.msra.mxu0 0.0
    %1451 = vmatprep.subr.mxu0 0.0
    %1452 = vmatpush1.xpose.msra.mxu0 0.0
    %1453 = vmatprep.subr.mxu0 0.0
    %1454 = vmatpush1.xpose.msra.mxu0 0.0
    %1455 = vmatprep.subr.mxu0 0.0
    %1456 = vmatpush1.xpose.msra.mxu0 0.0
    %1457 = vmatprep.subr.mxu0 0.0
    %1458 = vmatpush1.xpose.msra.mxu0 0.0
    %1459 = vmatprep.subr.mxu0 0.0
    %1460 = vmatpush1.xpose.msra.mxu0 0.0
    %1461 = vmatprep.subr.mxu0 0.0
    %1462 = vmatpush1.xpose.msra.mxu0 0.0
    %1463 = vmatprep.subr.mxu0 0.0
    %1464 = vmatpush1.xpose.msra.mxu0 0.0
    %1465 = vmatprep.subr.mxu0 0.0
    %1466 = vmatpush1.xpose.msra.mxu0 0.0
    %1467 = vmatprep.subr.mxu0 0.0
    %1468 = vmatpush1.xpose.msra.mxu0 0.0
    %1469 = vmatprep.subr.mxu0 0.0
    %1470 = vmatpush1.xpose.msra.mxu0 0.0
    %1471 = vmatprep.subr.mxu0 0.0
    %1472 = vmatpush1.xpose.msra.mxu0 0.0
    %1473 = vmatprep.mubr.f32.mxu0 0.0
    %1474 = vmatmul.mubr.f32.gmra.mrb[0].mxu0 %v1404
    %v1475 = vpop.f32.mrb[0].mxu0
    %v1476 = vadd.f32 %v172, %v1475
    %v1477 = vpop.f32.mrb[0].mxu0
    %1478 = vdwg.mxu0
    %v1479 = vsel %vm425, %v1476, -inf
    %1480 = vmax.xlane.f32.xlu0 %v1479
    %v1481 = vpop.xlane.xlu0 %1480
    %v1482 = vsub.f32 %v1476, %v1481
    %v1483 = vmul.f32 %v1482, 1.442695
    %v1484 = vpow.pop %v1483
    %v1485 = vsel %vm425, %v1484, 0.0
    %1486 = vadd.xlane.f32.xlu0 %v1485
    %v1487 = vpop.xlane.xlu0 %1486
    %v1488 = vrcp.pop %v1487
    %v1489 = vmul.f32 %v1484, %v1488
    %v1491 = vsel %vm425, %v1489, 0
    %1493 = vmatprep.subr.mxu0 0.0
    %1494 = vmatpush1.msra.mxu0 %v1396
    %1495 = vmatprep.subr.mxu0 0.0
    %1496 = vmatpush1.msra.mxu0 0.0
    %1497 = vmatprep.subr.mxu0 0.0
    %1498 = vmatpush1.msra.mxu0 0.0
    %1499 = vmatprep.subr.mxu0 0.0
    %1500 = vmatpush1.msra.mxu0 0.0
    %1501 = vmatprep.subr.mxu0 0.0
    %1502 = vmatpush1.msra.mxu0 0.0
    %1503 = vmatprep.subr.mxu0 0.0
    %1504 = vmatpush1.msra.mxu0 0.0
    %1505 = vmatprep.subr.mxu0 0.0
    %1506 = vmatpush1.msra.mxu0 0.0
    %1507 = vmatprep.subr.mxu0 0.0
    %1508 = vmatpush1.msra.mxu0 0.0
    %1509 = vmatprep.subr.mxu0 0.0
    %1510 = vmatpush1.msra.mxu0 0.0
    %1511 = vmatprep.subr.mxu0 0.0
    %1512 = vmatpush1.msra.mxu0 0.0
    %1513 = vmatprep.subr.mxu0 0.0
    %1514 = vmatpush1.msra.mxu0 0.0
    %1515 = vmatprep.subr.mxu0 0.0
    %1516 = vmatpush1.msra.mxu0 0.0
    %1517 = vmatprep.subr.mxu0 0.0
    %1518 = vmatpush1.msra.mxu0 0.0
    %1519 = vmatprep.subr.mxu0 0.0
    %1520 = vmatpush1.msra.mxu0 0.0
    %1521 = vmatprep.subr.mxu0 0.0
    %1522 = vmatpush1.msra.mxu0 0.0
    %1523 = vmatprep.subr.mxu0 0.0
    %1524 = vmatpush1.msra.mxu0 0.0
    %1525 = vmatprep.subr.mxu0 0.0
    %1526 = vmatpush1.msra.mxu0 0.0
    %1527 = vmatprep.subr.mxu0 0.0
    %1528 = vmatpush1.msra.mxu0 0.0
    %1529 = vmatprep.subr.mxu0 0.0
    %1530 = vmatpush1.msra.mxu0 0.0
    %1531 = vmatprep.subr.mxu0 0.0
    %1532 = vmatpush1.msra.mxu0 0.0
    %1533 = vmatprep.subr.mxu0 0.0
    %1534 = vmatpush1.msra.mxu0 0.0
    %1535 = vmatprep.subr.mxu0 0.0
    %1536 = vmatpush1.msra.mxu0 0.0
    %1537 = vmatprep.subr.mxu0 0.0
    %1538 = vmatpush1.msra.mxu0 0.0
    %1539 = vmatprep.subr.mxu0 0.0
    %1540 = vmatpush1.msra.mxu0 0.0
    %1541 = vmatprep.subr.mxu0 0.0
    %1542 = vmatpush1.msra.mxu0 0.0
    %1543 = vmatprep.subr.mxu0 0.0
    %1544 = vmatpush1.msra.mxu0 0.0
    %1545 = vmatprep.subr.mxu0 0.0
    %1546 = vmatpush1.msra.mxu0 0.0
    %1547 = vmatprep.subr.mxu0 0.0
    %1548 = vmatpush1.msra.mxu0 0.0
    %1549 = vmatprep.subr.mxu0 0.0
    %1550 = vmatpush1.msra.mxu0 0.0
    %1551 = vmatprep.subr.mxu0 0.0
    %1552 = vmatpush1.msra.mxu0 0.0
    %1553 = vmatprep.subr.mxu0 0.0
    %1554 = vmatpush1.msra.mxu0 0.0
    %1555 = vmatprep.subr.mxu0 0.0
    %1556 = vmatpush1.msra.mxu0 0.0
    %1557 = vmatprep.mubr.f32.mxu0 0.0
    %1558 = vmatmul.mubr.f32.gmra.mrb[0].mxu0 %v1491
    %v1559 = vpop.f32.mrb[0].mxu0
    %v1560 = vadd.f32 0.0, %v1559
    %v1561 = vpop.f32.mrb[0].mxu0
    %1562 = vdwg.mxu0
    %s1563 = scalar_lea.vmem %s23, 16
    %v1564 = vld [vmem:[%s1563] sm:$0xff]
    %v1566 = vsel %vm425, %v1560, 0
    %1568 = vmatprep.subr.mxu0 0.0
    %1569 = vmatpush1.msra.mxu0 %v1564
    %1570 = vmatprep.subr.mxu0 0.0
    %1571 = vmatpush1.msra.mxu0 0.0
    %1572 = vmatprep.subr.mxu0 0.0
    %1573 = vmatpush1.msra.mxu0 0.0
    %1574 = vmatprep.subr.mxu0 0.0
    %1575 = vmatpush1.msra.mxu0 0.0
    %1576 = vmatprep.subr.mxu0 0.0
    %1577 = vmatpush1.msra.mxu0 0.0
    %1578 = vmatprep.subr.mxu0 0.0
    %1579 = vmatpush1.msra.mxu0 0.0
    %1580 = vmatprep.subr.mxu0 0.0
    %1581 = vmatpush1.msra.mxu0 0.0
    %1582 = vmatprep.subr.mxu0 0.0
    %1583 = vmatpush1.msra.mxu0 0.0
    %1584 = vmatprep.subr.mxu0 0.0
    %1585 = vmatpush1.msra.mxu0 0.0
    %1586 = vmatprep.subr.mxu0 0.0
    %1587 = vmatpush1.msra.mxu0 0.0
    %1588 = vmatprep.subr.mxu0 0.0
    %1589 = vmatpush1.msra.mxu0 0.0
    %1590 = vmatprep.subr.mxu0 0.0
    %1591 = vmatpush1.msra.mxu0 0.0
    %1592 = vmatprep.subr.mxu0 0.0
    %1593 = vmatpush1.msra.mxu0 0.0
    %1594 = vmatprep.subr.mxu0 0.0
    %1595 = vmatpush1.msra.mxu0 0.0
    %1596 = vmatprep.subr.mxu0 0.0
    %1597 = vmatpush1.msra.mxu0 0.0
    %1598 = vmatprep.subr.mxu0 0.0
    %1599 = vmatpush1.msra.mxu0 0.0
    %1600 = vmatprep.subr.mxu0 0.0
    %1601 = vmatpush1.msra.mxu0 0.0
    %1602 = vmatprep.subr.mxu0 0.0
    %1603 = vmatpush1.msra.mxu0 0.0
    %1604 = vmatprep.subr.mxu0 0.0
    %1605 = vmatpush1.msra.mxu0 0.0
    %1606 = vmatprep.subr.mxu0 0.0
    %1607 = vmatpush1.msra.mxu0 0.0
    %1608 = vmatprep.subr.mxu0 0.0
    %1609 = vmatpush1.msra.mxu0 0.0
    %1610 = vmatprep.subr.mxu0 0.0
    %1611 = vmatpush1.msra.mxu0 0.0
    %1612 = vmatprep.subr.mxu0 0.0
    %1613 = vmatpush1.msra.mxu0 0.0
    %1614 = vmatprep.subr.mxu0 0.0
    %1615 = vmatpush1.msra.mxu0 0.0
    %1616 = vmatprep.subr.mxu0 0.0
    %1617 = vmatpush1.msra.mxu0 0.0
    %1618 = vmatprep.subr.mxu0 0.0
    %1619 = vmatpush1.msra.mxu0 0.0
    %1620 = vmatprep.subr.mxu0 0.0
    %1621 = vmatpush1.msra.mxu0 0.0
    %1622 = vmatprep.subr.mxu0 0.0
    %1623 = vmatpush1.msra.mxu0 0.0
    %1624 = vmatprep.subr.mxu0 0.0
    %1625 = vmatpush1.msra.mxu0 0.0
    %1626 = vmatprep.subr.mxu0 0.0
    %1627 = vmatpush1.msra.mxu0 0.0
    %1628 = vmatprep.subr.mxu0 0.0
    %1629 = vmatpush1.msra.mxu0 0.0
    %1630 = vmatprep.subr.mxu0 0.0
    %1631 = vmatpush1.msra.mxu0 0.0
    %1632 = vmatprep.mubr.f32.mxu0 0.0
    %1633 = vmatmul.mubr.f32.gmra.mrb[0].mxu0 %v1566
    %v1634 = vpop.f32.mrb[0].mxu0
    %v1635 = vadd.f32 0.0, %v1634
    %v1636 = vpop.f32.mrb[0].mxu0
    %1637 = vdwg.mxu0
    %v1638 = vadd.f32 %v1147, %v1635
    %s1639 = scalar_lea.vmem %s11, 96
    %v1640 = vld [vmem:[%s1639] sm:$0xff]
    %v1641 = vld [vmem:[%s1639 + $0x8] sm:$0xff]
    %v1642 = vld [vmem:[%s1639 + $0x10] sm:$0xff]
    %v1643 = vld [vmem:[%s1639 + $0x18] sm:$0xff]
    %s1644 = scalar_lea.vmem %s13, 3
    %v1645 = vld [vmem:[%s1644] sm:$0x1]
    %v1647 = vlaneseq
    %v1648 = vshrl.u32 %v1647, 7
    %v1649 = vsub.s32 0, %v1648
    %v1650 = vrot.slane %v1645, %v1649
    %1652 = vmatprep.subr.mxu0 0.0
    %1653 = vmatpush1.msra.mxu0 %v1640
    %1654 = vmatprep.subr.mxu0 0.0
    %1655 = vmatpush1.msra.mxu0 %v1641
    %1656 = vmatprep.subr.mxu0 0.0
    %1657 = vmatpush1.msra.mxu0 %v1642
    %1658 = vmatprep.subr.mxu0 0.0
    %1659 = vmatpush1.msra.mxu0 %v1643
    %1660 = vmatprep.subr.mxu0 0.0
    %1661 = vmatpush1.msra.mxu0 0.0
    %1662 = vmatprep.subr.mxu0 0.0
    %1663 = vmatpush1.msra.mxu0 0.0
    %1664 = vmatprep.subr.mxu0 0.0
    %1665 = vmatpush1.msra.mxu0 0.0
    %1666 = vmatprep.subr.mxu0 0.0
    %1667 = vmatpush1.msra.mxu0 0.0
    %1668 = vmatprep.subr.mxu0 0.0
    %1669 = vmatpush1.msra.mxu0 0.0
    %1670 = vmatprep.subr.mxu0 0.0
    %1671 = vmatpush1.msra.mxu0 0.0
    %1672 = vmatprep.subr.mxu0 0.0
    %1673 = vmatpush1.msra.mxu0 0.0
    %1674 = vmatprep.subr.mxu0 0.0
    %1675 = vmatpush1.msra.mxu0 0.0
    %1676 = vmatprep.subr.mxu0 0.0
    %1677 = vmatpush1.msra.mxu0 0.0
    %1678 = vmatprep.subr.mxu0 0.0
    %1679 = vmatpush1.msra.mxu0 0.0
    %1680 = vmatprep.subr.mxu0 0.0
    %1681 = vmatpush1.msra.mxu0 0.0
    %1682 = vmatprep.subr.mxu0 0.0
    %1683 = vmatpush1.msra.mxu0 0.0
    %1684 = vmatprep.subr.mxu0 0.0
    %1685 = vmatpush1.msra.mxu0 0.0
    %1686 = vmatprep.subr.mxu0 0.0
    %1687 = vmatpush1.msra.mxu0 0.0
    %1688 = vmatprep.subr.mxu0 0.0
    %1689 = vmatpush1.msra.mxu0 0.0
    %1690 = vmatprep.subr.mxu0 0.0
    %1691 = vmatpush1.msra.mxu0 0.0
    %1692 = vmatprep.subr.mxu0 0.0
    %1693 = vmatpush1.msra.mxu0 0.0
    %1694 = vmatprep.subr.mxu0 0.0
    %1695 = vmatpush1.msra.mxu0 0.0
    %1696 = vmatprep.subr.mxu0 0.0
    %1697 = vmatpush1.msra.mxu0 0.0
    %1698 = vmatprep.subr.mxu0 0.0
    %1699 = vmatpush1.msra.mxu0 0.0
    %1700 = vmatprep.subr.mxu0 0.0
    %1701 = vmatpush1.msra.mxu0 0.0
    %1702 = vmatprep.subr.mxu0 0.0
    %1703 = vmatpush1.msra.mxu0 0.0
    %1704 = vmatprep.subr.mxu0 0.0
    %1705 = vmatpush1.msra.mxu0 0.0
    %1706 = vmatprep.subr.mxu0 0.0
    %1707 = vmatpush1.msra.mxu0 0.0
    %1708 = vmatprep.subr.mxu0 0.0
    %1709 = vmatpush1.msra.mxu0 0.0
    %1710 = vmatprep.subr.mxu0 0.0
    %1711 = vmatpush1.msra.mxu0 0.0
    %1712 = vmatprep.subr.mxu0 0.0
    %1713 = vmatpush1.msra.mxu0 0.0
    %1714 = vmatprep.subr.mxu0 0.0
    %1715 = vmatpush1.msra.mxu0 0.0
    %1716 = vmatprep.mubr.f32.mxu0 0.0
    %1717 = vmatmul.mubr.f32.gmra.mrb[0].mxu0 %v191
    %v1718 = vpop.f32.mrb[0].mxu0
    %v1719 = vadd.f32 %v1650, %v1718
    %v1720 = vpop.f32.mrb[0].mxu0
    %1721 = vdwg.mxu0
    %s1722 = scalar_lea.vmem %s15, 96
    %v1723 = vld [vmem:[%s1722] sm:$0xff]
    %v1724 = vld [vmem:[%s1722 + $0x8] sm:$0xff]
    %v1725 = vld [vmem:[%s1722 + $0x10] sm:$0xff]
    %v1726 = vld [vmem:[%s1722 + $0x18] sm:$0xff]
    %s1727 = scalar_lea.vmem %s17, 3
    %v1728 = vld [vmem:[%s1727] sm:$0x1]
    %v1730 = vlaneseq
    %v1731 = vshrl.u32 %v1730, 7
    %v1732 = vsub.s32 0, %v1731
    %v1733 = vrot.slane %v1728, %v1732
    %1735 = vmatprep.subr.mxu0 0.0
    %1736 = vmatpush1.msra.mxu0 %v1723
    %1737 = vmatprep.subr.mxu0 0.0
    %1738 = vmatpush1.msra.mxu0 %v1724
    %1739 = vmatprep.subr.mxu0 0.0
    %1740 = vmatpush1.msra.mxu0 %v1725
    %1741 = vmatprep.subr.mxu0 0.0
    %1742 = vmatpush1.msra.mxu0 %v1726
    %1743 = vmatprep.subr.mxu0 0.0
    %1744 = vmatpush1.msra.mxu0 0.0
    %1745 = vmatprep.subr.mxu0 0.0
    %1746 = vmatpush1.msra.mxu0 0.0
    %1747 = vmatprep.subr.mxu0 0.0
    %1748 = vmatpush1.msra.mxu0 0.0
    %1749 = vmatprep.subr.mxu0 0.0
    %1750 = vmatpush1.msra.mxu0 0.0
    %1751 = vmatprep.subr.mxu0 0.0
    %1752 = vmatpush1.msra.mxu0 0.0
    %1753 = vmatprep.subr.mxu0 0.0
    %1754 = vmatpush1.msra.mxu0 0.0
    %1755 = vmatprep.subr.mxu0 0.0
    %1756 = vmatpush1.msra.mxu0 0.0
    %1757 = vmatprep.subr.mxu0 0.0
    %1758 = vmatpush1.msra.mxu0 0.0
    %1759 = vmatprep.subr.mxu0 0.0
    %1760 = vmatpush1.msra.mxu0 0.0
    %1761 = vmatprep.subr.mxu0 0.0
    %1762 = vmatpush1.msra.mxu0 0.0
    %1763 = vmatprep.subr.mxu0 0.0
    %1764 = vmatpush1.msra.mxu0 0.0
    %1765 = vmatprep.subr.mxu0 0.0
    %1766 = vmatpush1.msra.mxu0 0.0
    %1767 = vmatprep.subr.mxu0 0.0
    %1768 = vmatpush1.msra.mxu0 0.0
    %1769 = vmatprep.subr.mxu0 0.0
    %1770 = vmatpush1.msra.mxu0 0.0
    %1771 = vmatprep.subr.mxu0 0.0
    %1772 = vmatpush1.msra.mxu0 0.0
    %1773 = vmatprep.subr.mxu0 0.0
    %1774 = vmatpush1.msra.mxu0 0.0
    %1775 = vmatprep.subr.mxu0 0.0
    %1776 = vmatpush1.msra.mxu0 0.0
    %1777 = vmatprep.subr.mxu0 0.0
    %1778 = vmatpush1.msra.mxu0 0.0
    %1779 = vmatprep.subr.mxu0 0.0
    %1780 = vmatpush1.msra.mxu0 0.0
    %1781 = vmatprep.subr.mxu0 0.0
    %1782 = vmatpush1.msra.mxu0 0.0
    %1783 = vmatprep.subr.mxu0 0.0
    %1784 = vmatpush1.msra.mxu0 0.0
    %1785 = vmatprep.subr.mxu0 0.0
    %1786 = vmatpush1.msra.mxu0 0.0
    %1787 = vmatprep.subr.mxu0 0.0
    %1788 = vmatpush1.msra.mxu0 0.0
    %1789 = vmatprep.subr.mxu0 0.0
    %1790 = vmatpush1.msra.mxu0 0.0
    %1791 = vmatprep.subr.mxu0 0.0
    %1792 = vmatpush1.msra.mxu0 0.0
    %1793 = vmatprep.subr.mxu0 0.0
    %1794 = vmatpush1.msra.mxu0 0.0
    %1795 = vmatprep.subr.mxu0 0.0
    %1796 = vmatpush1.msra.mxu0 0.0
    %1797 = vmatprep.subr.mxu0 0.0
    %1798 = vmatpush1.msra.mxu0 0.0
    %1799 = vmatprep.mubr.f32.mxu0 0.0
    %1800 = vmatmul.mubr.f32.gmra.mrb[0].mxu0 %v191
    %v1801 = vpop.f32.mrb[0].mxu0
    %v1802 = vadd.f32 %v1733, %v1801
    %v1803 = vpop.f32.mrb[0].mxu0
    %1804 = vdwg.mxu0
    %s1805 = scalar_lea.vmem %s19, 96
    %v1806 = vld [vmem:[%s1805] sm:$0xff]
    %v1807 = vld [vmem:[%s1805 + $0x8] sm:$0xff]
    %v1808 = vld [vmem:[%s1805 + $0x10] sm:$0xff]
    %v1809 = vld [vmem:[%s1805 + $0x18] sm:$0xff]
    %s1810 = scalar_lea.vmem %s21, 3
    %v1811 = vld [vmem:[%s1810] sm:$0x1]
    %v1813 = vlaneseq
    %v1814 = vshrl.u32 %v1813, 7
    %v1815 = vsub.s32 0, %v1814
    %v1816 = vrot.slane %v1811, %v1815
    %1818 = vmatprep.subr.mxu0 0.0
    %1819 = vmatpush1.msra.mxu0 %v1806
    %1820 = vmatprep.subr.mxu0 0.0
    %1821 = vmatpush1.msra.mxu0 %v1807
    %1822 = vmatprep.subr.mxu0 0.0
    %1823 = vmatpush1.msra.mxu0 %v1808
    %1824 = vmatprep.subr.mxu0 0.0
    %1825 = vmatpush1.msra.mxu0 %v1809
    %1826 = vmatprep.subr.mxu0 0.0
    %1827 = vmatpush1.msra.mxu0 0.0
    %1828 = vmatprep.subr.mxu0 0.0
    %1829 = vmatpush1.msra.mxu0 0.0
    %1830 = vmatprep.subr.mxu0 0.0
    %1831 = vmatpush1.msra.mxu0 0.0
    %1832 = vmatprep.subr.mxu0 0.0
    %1833 = vmatpush1.msra.mxu0 0.0
    %1834 = vmatprep.subr.mxu0 0.0
    %1835 = vmatpush1.msra.mxu0 0.0
    %1836 = vmatprep.subr.mxu0 0.0
    %1837 = vmatpush1.msra.mxu0 0.0
    %1838 = vmatprep.subr.mxu0 0.0
    %1839 = vmatpush1.msra.mxu0 0.0
    %1840 = vmatprep.subr.mxu0 0.0
    %1841 = vmatpush1.msra.mxu0 0.0
    %1842 = vmatprep.subr.mxu0 0.0
    %1843 = vmatpush1.msra.mxu0 0.0
    %1844 = vmatprep.subr.mxu0 0.0
    %1845 = vmatpush1.msra.mxu0 0.0
    %1846 = vmatprep.subr.mxu0 0.0
    %1847 = vmatpush1.msra.mxu0 0.0
    %1848 = vmatprep.subr.mxu0 0.0
    %1849 = vmatpush1.msra.mxu0 0.0
    %1850 = vmatprep.subr.mxu0 0.0
    %1851 = vmatpush1.msra.mxu0 0.0
    %1852 = vmatprep.subr.mxu0 0.0
    %1853 = vmatpush1.msra.mxu0 0.0
    %1854 = vmatprep.subr.mxu0 0.0
    %1855 = vmatpush1.msra.mxu0 0.0
    %1856 = vmatprep.subr.mxu0 0.0
    %1857 = vmatpush1.msra.mxu0 0.0
    %1858 = vmatprep.subr.mxu0 0.0
    %1859 = vmatpush1.msra.mxu0 0.0
    %1860 = vmatprep.subr.mxu0 0.0
    %1861 = vmatpush1.msra.mxu0 0.0
    %1862 = vmatprep.subr.mxu0 0.0
    %1863 = vmatpush1.msra.mxu0 0.0
    %1864 = vmatprep.subr.mxu0 0.0
    %1865 = vmatpush1.msra.mxu0 0.0
    %1866 = vmatprep.subr.mxu0 0.0
    %1867 = vmatpush1.msra.mxu0 0.0
    %1868 = vmatprep.subr.mxu0 0.0
    %1869 = vmatpush1.msra.mxu0 0.0
    %1870 = vmatprep.subr.mxu0 0.0
    %1871 = vmatpush1.msra.mxu0 0.0
    %1872 = vmatprep.subr.mxu0 0.0
    %1873 = vmatpush1.msra.mxu0 0.0
    %1874 = vmatprep.subr.mxu0 0.0
    %1875 = vmatpush1.msra.mxu0 0.0
    %1876 = vmatprep.subr.mxu0 0.0
    %1877 = vmatpush1.msra.mxu0 0.0
    %1878 = vmatprep.subr.mxu0 0.0
    %1879 = vmatpush1.msra.mxu0 0.0
    %1880 = vmatprep.subr.mxu0 0.0
    %1881 = vmatpush1.msra.mxu0 0.0
    %1882 = vmatprep.mubr.f32.mxu0 0.0
    %1883 = vmatmul.mubr.f32.gmra.mrb[0].mxu0 %v191
    %v1884 = vpop.f32.mrb[0].mxu0
    %v1885 = vadd.f32 %v1816, %v1884
    %v1886 = vpop.f32.mrb[0].mxu0
    %1887 = vdwg.mxu0
    %s1888 = scalar_lea.vmem [#allocation2], 24
    %1889 = vst.msk [vmem:[%s1888] sm:$0xff] %vm425, %v1802
    %s1890 = scalar_lea.vmem [#allocation4], 24
    %1891 = vst.msk [vmem:[%s1890] sm:$0xff] %vm425, %v1885
    %v1893 = vsel %vm425, %v1719, 0
    %v1896 = vsel %vm425, %v1802, 0
    %1898 = vmatprep.subr.mxu0 0.0
    %1899 = vmatpush1.xpose.msra.mxu0 %v1896
    %1900 = vmatprep.subr.mxu0 0.0
    %1901 = vmatpush1.xpose.msra.mxu0 0.0
    %1902 = vmatprep.subr.mxu0 0.0
    %1903 = vmatpush1.xpose.msra.mxu0 0.0
    %1904 = vmatprep.subr.mxu0 0.0
    %1905 = vmatpush1.xpose.msra.mxu0 0.0
    %1906 = vmatprep.subr.mxu0 0.0
    %1907 = vmatpush1.xpose.msra.mxu0 0.0
    %1908 = vmatprep.subr.mxu0 0.0
    %1909 = vmatpush1.xpose.msra.mxu0 0.0
    %1910 = vmatprep.subr.mxu0 0.0
    %1911 = vmatpush1.xpose.msra.mxu0 0.0
    %1912 = vmatprep.subr.mxu0 0.0
    %1913 = vmatpush1.xpose.msra.mxu0 0.0
    %1914 = vmatprep.subr.mxu0 0.0
    %1915 = vmatpush1.xpose.msra.mxu0 0.0
    %1916 = vmatprep.subr.mxu0 0.0
    %1917 = vmatpush1.xpose.msra.mxu0 0.0
    %1918 = vmatprep.subr.mxu0 0.0
    %1919 = vmatpush1.xpose.msra.mxu0 0.0
    %1920 = vmatprep.subr.mxu0 0.0
    %1921 = vmatpush1.xpose.msra.mxu0 0.0
    %1922 = vmatprep.subr.mxu0 0.0
    %1923 = vmatpush1.xpose.msra.mxu0 0.0
    %1924 = vmatprep.subr.mxu0 0.0
    %1925 = vmatpush1.xpose.msra.mxu0 0.0
    %1926 = vmatprep.subr.mxu0 0.0
    %1927 = vmatpush1.xpose.msra.mxu0 0.0
    %1928 = vmatprep.subr.mxu0 0.0
    %1929 = vmatpush1.xpose.msra.mxu0 0.0
    %1930 = vmatprep.subr.mxu0 0.0
    %1931 = vmatpush1.xpose.msra.mxu0 0.0
    %1932 = vmatprep.subr.mxu0 0.0
    %1933 = vmatpush1.xpose.msra.mxu0 0.0
    %1934 = vmatprep.subr.mxu0 0.0
    %1935 = vmatpush1.xpose.msra.mxu0 0.0
    %1936 = vmatprep.subr.mxu0 0.0
    %1937 = vmatpush1.xpose.msra.mxu0 0.0
    %1938 = vmatprep.subr.mxu0 0.0
    %1939 = vmatpush1.xpose.msra.mxu0 0.0
    %1940 = vmatprep.subr.mxu0 0.0
    %1941 = vmatpush1.xpose.msra.mxu0 0.0
    %1942 = vmatprep.subr.mxu0 0.0
    %1943 = vmatpush1.xpose.msra.mxu0 0.0
    %1944 = vmatprep.subr.mxu0 0.0
    %1945 = vmatpush1.xpose.msra.mxu0 0.0
    %1946 = vmatprep.subr.mxu0 0.0
    %1947 = vmatpush1.xpose.msra.mxu0 0.0
    %1948 = vmatprep.subr.mxu0 0.0
    %1949 = vmatpush1.xpose.msra.mxu0 0.0
    %1950 = vmatprep.subr.mxu0 0.0
    %1951 = vmatpush1.xpose.msra.mxu0 0.0
    %1952 = vmatprep.subr.mxu0 0.0
    %1953 = vmatpush1.xpose.msra.mxu0 0.0
    %1954 = vmatprep.subr.mxu0 0.0
    %1955 = vmatpush1.xpose.msra.mxu0 0.0
    %1956 = vmatprep.subr.mxu0 0.0
    %1957 = vmatpush1.xpose.msra.mxu0 0.0
    %1958 = vmatprep.subr.mxu0 0.0
    %1959 = vmatpush1.xpose.msra.mxu0 0.0
    %1960 = vmatprep.subr.mxu0 0.0
    %1961 = vmatpush1.xpose.msra.mxu0 0.0
    %1962 = vmatprep.mubr.f32.mxu0 0.0
    %1963 = vmatmul.mubr.f32.gmra.mrb[0].mxu0 %v1893
    %v1964 = vpop.f32.mrb[0].mxu0
    %v1965 = vadd.f32 %v172, %v1964
    %v1966 = vpop.f32.mrb[0].mxu0
    %1967 = vdwg.mxu0
    %v1968 = vsel %vm425, %v1965, -inf
    %1969 = vmax.xlane.f32.xlu0 %v1968
    %v1970 = vpop.xlane.xlu0 %1969
    %v1971 = vsub.f32 %v1965, %v1970
    %v1972 = vmul.f32 %v1971, 1.442695
    %v1973 = vpow.pop %v1972
    %v1974 = vsel %vm425, %v1973, 0.0
    %1975 = vadd.xlane.f32.xlu0 %v1974
    %v1976 = vpop.xlane.xlu0 %1975
    %v1977 = vrcp.pop %v1976
    %v1978 = vmul.f32 %v1973, %v1977
    %v1980 = vsel %vm425, %v1978, 0
    %1982 = vmatprep.subr.mxu0 0.0
    %1983 = vmatpush1.msra.mxu0 %v1885
    %1984 = vmatprep.subr.mxu0 0.0
    %1985 = vmatpush1.msra.mxu0 0.0
    %1986 = vmatprep.subr.mxu0 0.0
    %1987 = vmatpush1.msra.mxu0 0.0
    %1988 = vmatprep.subr.mxu0 0.0
    %1989 = vmatpush1.msra.mxu0 0.0
    %1990 = vmatprep.subr.mxu0 0.0
    %1991 = vmatpush1.msra.mxu0 0.0
    %1992 = vmatprep.subr.mxu0 0.0
    %1993 = vmatpush1.msra.mxu0 0.0
    %1994 = vmatprep.subr.mxu0 0.0
    %1995 = vmatpush1.msra.mxu0 0.0
    %1996 = vmatprep.subr.mxu0 0.0
    %1997 = vmatpush1.msra.mxu0 0.0
    %1998 = vmatprep.subr.mxu0 0.0
    %1999 = vmatpush1.msra.mxu0 0.0
    %2000 = vmatprep.subr.mxu0 0.0
    %2001 = vmatpush1.msra.mxu0 0.0
    %2002 = vmatprep.subr.mxu0 0.0
    %2003 = vmatpush1.msra.mxu0 0.0
    %2004 = vmatprep.subr.mxu0 0.0
    %2005 = vmatpush1.msra.mxu0 0.0
    %2006 = vmatprep.subr.mxu0 0.0
    %2007 = vmatpush1.msra.mxu0 0.0
    %2008 = vmatprep.subr.mxu0 0.0
    %2009 = vmatpush1.msra.mxu0 0.0
    %2010 = vmatprep.subr.mxu0 0.0
    %2011 = vmatpush1.msra.mxu0 0.0
    %2012 = vmatprep.subr.mxu0 0.0
    %2013 = vmatpush1.msra.mxu0 0.0
    %2014 = vmatprep.subr.mxu0 0.0
    %2015 = vmatpush1.msra.mxu0 0.0
    %2016 = vmatprep.subr.mxu0 0.0
    %2017 = vmatpush1.msra.mxu0 0.0
    %2018 = vmatprep.subr.mxu0 0.0
    %2019 = vmatpush1.msra.mxu0 0.0
    %2020 = vmatprep.subr.mxu0 0.0
    %2021 = vmatpush1.msra.mxu0 0.0
    %2022 = vmatprep.subr.mxu0 0.0
    %2023 = vmatpush1.msra.mxu0 0.0
    %2024 = vmatprep.subr.mxu0 0.0
    %2025 = vmatpush1.msra.mxu0 0.0
    %2026 = vmatprep.subr.mxu0 0.0
    %2027 = vmatpush1.msra.mxu0 0.0
    %2028 = vmatprep.subr.mxu0 0.0
    %2029 = vmatpush1.msra.mxu0 0.0
    %2030 = vmatprep.subr.mxu0 0.0
    %2031 = vmatpush1.msra.mxu0 0.0
    %2032 = vmatprep.subr.mxu0 0.0
    %2033 = vmatpush1.msra.mxu0 0.0
    %2034 = vmatprep.subr.mxu0 0.0
    %2035 = vmatpush1.msra.mxu0 0.0
    %2036 = vmatprep.subr.mxu0 0.0
    %2037 = vmatpush1.msra.mxu0 0.0
    %2038 = vmatprep.subr.mxu0 0.0
    %2039 = vmatpush1.msra.mxu0 0.0
    %2040 = vmatprep.subr.mxu0 0.0
    %2041 = vmatpush1.msra.mxu0 0.0
    %2042 = vmatprep.subr.mxu0 0.0
    %2043 = vmatpush1.msra.mxu0 0.0
    %2044 = vmatprep.subr.mxu0 0.0
    %2045 = vmatpush1.msra.mxu0 0.0
    %2046 = vmatprep.mubr.f32.mxu0 0.0
    %2047 = vmatmul.mubr.f32.gmra.mrb[0].mxu0 %v1980
    %v2048 = vpop.f32.mrb[0].mxu0
    %v2049 = vadd.f32 0.0, %v2048
    %v2050 = vpop.f32.mrb[0].mxu0
    %2051 = vdwg.mxu0
    %s2052 = scalar_lea.vmem %s23, 24
    %v2053 = vld [vmem:[%s2052] sm:$0xff]
    %v2055 = vsel %vm425, %v2049, 0
    %2057 = vmatprep.subr.mxu0 0.0
    %2058 = vmatpush1.msra.mxu0 %v2053
    %2059 = vmatprep.subr.mxu0 0.0
    %2060 = vmatpush1.msra.mxu0 0.0
    %2061 = vmatprep.subr.mxu0 0.0
    %2062 = vmatpush1.msra.mxu0 0.0
    %2063 = vmatprep.subr.mxu0 0.0
    %2064 = vmatpush1.msra.mxu0 0.0
    %2065 = vmatprep.subr.mxu0 0.0
    %2066 = vmatpush1.msra.mxu0 0.0
    %2067 = vmatprep.subr.mxu0 0.0
    %2068 = vmatpush1.msra.mxu0 0.0
    %2069 = vmatprep.subr.mxu0 0.0
    %2070 = vmatpush1.msra.mxu0 0.0
    %2071 = vmatprep.subr.mxu0 0.0
    %2072 = vmatpush1.msra.mxu0 0.0
    %2073 = vmatprep.subr.mxu0 0.0
    %2074 = vmatpush1.msra.mxu0 0.0
    %2075 = vmatprep.subr.mxu0 0.0
    %2076 = vmatpush1.msra.mxu0 0.0
    %2077 = vmatprep.subr.mxu0 0.0
    %2078 = vmatpush1.msra.mxu0 0.0
    %2079 = vmatprep.subr.mxu0 0.0
    %2080 = vmatpush1.msra.mxu0 0.0
    %2081 = vmatprep.subr.mxu0 0.0
    %2082 = vmatpush1.msra.mxu0 0.0
    %2083 = vmatprep.subr.mxu0 0.0
    %2084 = vmatpush1.msra.mxu0 0.0
    %2085 = vmatprep.subr.mxu0 0.0
    %2086 = vmatpush1.msra.mxu0 0.0
    %2087 = vmatprep.subr.mxu0 0.0
    %2088 = vmatpush1.msra.mxu0 0.0
    %2089 = vmatprep.subr.mxu0 0.0
    %2090 = vmatpush1.msra.mxu0 0.0
    %2091 = vmatprep.subr.mxu0 0.0
    %2092 = vmatpush1.msra.mxu0 0.0
    %2093 = vmatprep.subr.mxu0 0.0
    %2094 = vmatpush1.msra.mxu0 0.0
    %2095 = vmatprep.subr.mxu0 0.0
    %2096 = vmatpush1.msra.mxu0 0.0
    %2097 = vmatprep.subr.mxu0 0.0
    %2098 = vmatpush1.msra.mxu0 0.0
    %2099 = vmatprep.subr.mxu0 0.0
    %2100 = vmatpush1.msra.mxu0 0.0
    %2101 = vmatprep.subr.mxu0 0.0
    %2102 = vmatpush1.msra.mxu0 0.0
    %2103 = vmatprep.subr.mxu0 0.0
    %2104 = vmatpush1.msra.mxu0 0.0
    %2105 = vmatprep.subr.mxu0 0.0
    %2106 = vmatpush1.msra.mxu0 0.0
    %2107 = vmatprep.subr.mxu0 0.0
    %2108 = vmatpush1.msra.mxu0 0.0
    %2109 = vmatprep.subr.mxu0 0.0
    %2110 = vmatpush1.msra.mxu0 0.0
    %2111 = vmatprep.subr.mxu0 0.0
    %2112 = vmatpush1.msra.mxu0 0.0
    %2113 = vmatprep.subr.mxu0 0.0
    %2114 = vmatpush1.msra.mxu0 0.0
    %2115 = vmatprep.subr.mxu0 0.0
    %2116 = vmatpush1.msra.mxu0 0.0
    %2117 = vmatprep.subr.mxu0 0.0
    %2118 = vmatpush1.msra.mxu0 0.0
    %2119 = vmatprep.subr.mxu0 0.0
    %2120 = vmatpush1.msra.mxu0 0.0
    %2121 = vmatprep.mubr.f32.mxu0 0.0
    %2122 = vmatmul.mubr.f32.gmra.mrb[0].mxu0 %v2055
    %v2123 = vpop.f32.mrb[0].mxu0
    %v2124 = vadd.f32 0.0, %v2123
    %v2125 = vpop.f32.mrb[0].mxu0
    %2126 = vdwg.mxu0
    %v2127 = vadd.f32 %v1638, %v2124
    %v2128 = vadd.f32 %v164, %v2127
    %v2130 = vlaneseq
    %v2131 = vshrl.u32 %v2130, 7
    %v2132 = vsub.s32 0, %v2131
    %v2133 = vrot.slane %v142, %v2132
    %v2135 = vadd.f32 %v2128, %v2133
    %v2136 = vsel %vm189, %v2135, 0.0
    %2137 = vadd.xlane.f32.xlu0 %v2136
    %v2138 = vpop.xlane.xlu0 %2137
    %v2139 = vrcp.pop 32.0
    %v2140 = vmul.f32 %v2138, %v2139
    %v2141 = vsub.f32 %v2135, %v2140
    %v2142 = vmul.f32 %v2141, %v2141
    %v2143 = vsel %vm189, %v2142, 0.0
    %2144 = vadd.xlane.f32.xlu0 %v2143
    %v2145 = vpop.xlane.xlu0 %2144
    %v2146 = vmul.f32 %v2145, %v2139
    %v2147 = vadd.f32 %v2146, 1e-05
    %v2148 = vrsqrt.pop %v2147
    %v2149 = vmul.f32 %v2141, %v2148
    %v2151 = vlaneseq
    %v2152 = vshrl.u32 %v2151, 7
    %v2153 = vsub.s32 0, %v2152
    %v2154 = vrot.slane %v144, %v2153
    %v2156 = vmul.f32 %v2149, %v2154
    %v2158 = vlaneseq
    %v2159 = vshrl.u32 %v2158, 7
    %v2160 = vsub.s32 0, %v2159
    %v2161 = vrot.slane %v145, %v2160
    %v2163 = vadd.f32 %v2156, %v2161
    %v2164 = vld [vmem:[%s31] sm:$0xff]
    %v2165 = vld [vmem:[%s31 + $0x8] sm:$0xff]
    %v2166 = vld [vmem:[%s31 + $0x10] sm:$0xff]
    %v2167 = vld [vmem:[%s31 + $0x18] sm:$0xff]
    %v2168 = vld [vmem:[%s33] sm:$0x1]
    %v2170 = vlaneseq
    %v2171 = vshrl.u32 %v2170, 7
    %v2172 = vsub.s32 0, %v2171
    %v2173 = vrot.slane %v2168, %v2172
    %v2176 = vsel %vm189, %v2163, 0
    %2178 = vmatprep.subr.mxu0 0.0
    %2179 = vmatpush1.msra.mxu0 %v2164
    %2180 = vmatprep.subr.mxu0 0.0
    %2181 = vmatpush1.msra.mxu0 %v2165
    %2182 = vmatprep.subr.mxu0 0.0
    %2183 = vmatpush1.msra.mxu0 %v2166
    %2184 = vmatprep.subr.mxu0 0.0
    %2185 = vmatpush1.msra.mxu0 %v2167
    %2186 = vmatprep.subr.mxu0 0.0
    %2187 = vmatpush1.msra.mxu0 0.0
    %2188 = vmatprep.subr.mxu0 0.0
    %2189 = vmatpush1.msra.mxu0 0.0
    %2190 = vmatprep.subr.mxu0 0.0
    %2191 = vmatpush1.msra.mxu0 0.0
    %2192 = vmatprep.subr.mxu0 0.0
    %2193 = vmatpush1.msra.mxu0 0.0
    %2194 = vmatprep.subr.mxu0 0.0
    %2195 = vmatpush1.msra.mxu0 0.0
    %2196 = vmatprep.subr.mxu0 0.0
    %2197 = vmatpush1.msra.mxu0 0.0
    %2198 = vmatprep.subr.mxu0 0.0
    %2199 = vmatpush1.msra.mxu0 0.0
    %2200 = vmatprep.subr.mxu0 0.0
    %2201 = vmatpush1.msra.mxu0 0.0
    %2202 = vmatprep.subr.mxu0 0.0
    %2203 = vmatpush1.msra.mxu0 0.0
    %2204 = vmatprep.subr.mxu0 0.0
    %2205 = vmatpush1.msra.mxu0 0.0
    %2206 = vmatprep.subr.mxu0 0.0
    %2207 = vmatpush1.msra.mxu0 0.0
    %2208 = vmatprep.subr.mxu0 0.0
    %2209 = vmatpush1.msra.mxu0 0.0
    %2210 = vmatprep.subr.mxu0 0.0
    %2211 = vmatpush1.msra.mxu0 0.0
    %2212 = vmatprep.subr.mxu0 0.0
    %2213 = vmatpush1.msra.mxu0 0.0
    %2214 = vmatprep.subr.mxu0 0.0
    %2215 = vmatpush1.msra.mxu0 0.0
    %2216 = vmatprep.subr.mxu0 0.0
    %2217 = vmatpush1.msra.mxu0 0.0
    %2218 = vmatprep.subr.mxu0 0.0
    %2219 = vmatpush1.msra.mxu0 0.0
    %2220 = vmatprep.subr.mxu0 0.0
    %2221 = vmatpush1.msra.mxu0 0.0
    %2222 = vmatprep.subr.mxu0 0.0
    %2223 = vmatpush1.msra.mxu0 0.0
    %2224 = vmatprep.subr.mxu0 0.0
    %2225 = vmatpush1.msra.mxu0 0.0
    %2226 = vmatprep.subr.mxu0 0.0
    %2227 = vmatpush1.msra.mxu0 0.0
    %2228 = vmatprep.subr.mxu0 0.0
    %2229 = vmatpush1.msra.mxu0 0.0
    %2230 = vmatprep.subr.mxu0 0.0
    %2231 = vmatpush1.msra.mxu0 0.0
    %2232 = vmatprep.subr.mxu0 0.0
    %2233 = vmatpush1.msra.mxu0 0.0
    %2234 = vmatprep.subr.mxu0 0.0
    %2235 = vmatpush1.msra.mxu0 0.0
    %2236 = vmatprep.subr.mxu0 0.0
    %2237 = vmatpush1.msra.mxu0 0.0
    %2238 = vmatprep.subr.mxu0 0.0
    %2239 = vmatpush1.msra.mxu0 0.0
    %2240 = vmatprep.subr.mxu0 0.0
    %2241 = vmatpush1.msra.mxu0 0.0
    %2242 = vmatprep.mubr.f32.mxu0 0.0
    %2243 = vmatmul.mubr.f32.gmra.mrb[0].mxu0 %v2176
    %v2244 = vpop.f32.mrb[0].mxu0
    %v2245 = vadd.f32 %v2173, %v2244
    %v2246 = vpop.f32.mrb[0].mxu0
    %2247 = vdwg.mxu0
    %v2248 = vld [vmem:[%s35] sm:$0xff]
    %v2249 = vld [vmem:[%s35 + $0x8] sm:$0xff]
    %v2250 = vld [vmem:[%s35 + $0x10] sm:$0xff]
    %v2251 = vld [vmem:[%s35 + $0x18] sm:$0xff]
    %v2252 = vld [vmem:[%s37] sm:$0x1]
    %v2254 = vlaneseq
    %v2255 = vshrl.u32 %v2254, 7
    %v2256 = vsub.s32 0, %v2255
    %v2257 = vrot.slane %v2252, %v2256
    %v2260 = vsel %vm189, %v165, 0
    %v2263 = vsel %vm189, %v166, 0
    %2265 = vmatprep.subr.mxu0 0.0
    %2266 = vmatpush1.msra.mxu0 %v2248
    %2267 = vmatprep.subr.mxu0 0.0
    %2268 = vmatpush1.msra.mxu0 %v2249
    %2269 = vmatprep.subr.mxu0 0.0
    %2270 = vmatpush1.msra.mxu0 %v2250
    %2271 = vmatprep.subr.mxu0 0.0
    %2272 = vmatpush1.msra.mxu0 %v2251
    %2273 = vmatprep.subr.mxu0 0.0
    %2274 = vmatpush1.msra.mxu0 0.0
    %2275 = vmatprep.subr.mxu0 0.0
    %2276 = vmatpush1.msra.mxu0 0.0
    %2277 = vmatprep.subr.mxu0 0.0
    %2278 = vmatpush1.msra.mxu0 0.0
    %2279 = vmatprep.subr.mxu0 0.0
    %2280 = vmatpush1.msra.mxu0 0.0
    %2281 = vmatprep.subr.mxu0 0.0
    %2282 = vmatpush1.msra.mxu0 0.0
    %2283 = vmatprep.subr.mxu0 0.0
    %2284 = vmatpush1.msra.mxu0 0.0
    %2285 = vmatprep.subr.mxu0 0.0
    %2286 = vmatpush1.msra.mxu0 0.0
    %2287 = vmatprep.subr.mxu0 0.0
    %2288 = vmatpush1.msra.mxu0 0.0
    %2289 = vmatprep.subr.mxu0 0.0
    %2290 = vmatpush1.msra.mxu0 0.0
    %2291 = vmatprep.subr.mxu0 0.0
    %2292 = vmatpush1.msra.mxu0 0.0
    %2293 = vmatprep.subr.mxu0 0.0
    %2294 = vmatpush1.msra.mxu0 0.0
    %2295 = vmatprep.subr.mxu0 0.0
    %2296 = vmatpush1.msra.mxu0 0.0
    %2297 = vmatprep.subr.mxu0 0.0
    %2298 = vmatpush1.msra.mxu0 0.0
    %2299 = vmatprep.subr.mxu0 0.0
    %2300 = vmatpush1.msra.mxu0 0.0
    %2301 = vmatprep.subr.mxu0 0.0
    %2302 = vmatpush1.msra.mxu0 0.0
    %2303 = vmatprep.subr.mxu0 0.0
    %2304 = vmatpush1.msra.mxu0 0.0
    %2305 = vmatprep.subr.mxu0 0.0
    %2306 = vmatpush1.msra.mxu0 0.0
    %2307 = vmatprep.subr.mxu0 0.0
    %2308 = vmatpush1.msra.mxu0 0.0
    %2309 = vmatprep.subr.mxu0 0.0
    %2310 = vmatpush1.msra.mxu0 0.0
    %2311 = vmatprep.subr.mxu0 0.0
    %2312 = vmatpush1.msra.mxu0 0.0
    %2313 = vmatprep.subr.mxu0 0.0
    %2314 = vmatpush1.msra.mxu0 0.0
    %2315 = vmatprep.subr.mxu0 0.0
    %2316 = vmatpush1.msra.mxu0 0.0
    %2317 = vmatprep.subr.mxu0 0.0
    %2318 = vmatpush1.msra.mxu0 0.0
    %2319 = vmatprep.subr.mxu0 0.0
    %2320 = vmatpush1.msra.mxu0 0.0
    %2321 = vmatprep.subr.mxu0 0.0
    %2322 = vmatpush1.msra.mxu0 0.0
    %2323 = vmatprep.subr.mxu0 0.0
    %2324 = vmatpush1.msra.mxu0 0.0
    %2325 = vmatprep.subr.mxu0 0.0
    %2326 = vmatpush1.msra.mxu0 0.0
    %2327 = vmatprep.subr.mxu0 0.0
    %2328 = vmatpush1.msra.mxu0 0.0
    %2329 = vmatprep.mubr.f32.mxu0 0.0
    %2330 = vmatmul.mubr.f32.gmra.mrb[0].mxu0 %v2260
    %v2331 = vpop.f32.mrb[0].mxu0
    %v2332 = vadd.f32 %v2257, %v2331
    %v2333 = vpop.f32.mrb[0].mxu0
    %2334 = vmatprep.mubr.f32.mxu0 0.0
    %2335 = vmatmul.mubr.f32.gmra.mrb[0].mxu0 %v2263
    %v2336 = vpop.f32.mrb[0].mxu0
    %v2337 = vadd.f32 %v2257, %v2336
    %v2338 = vpop.f32.mrb[0].mxu0
    %2339 = vdwg.mxu0
    %v2340 = vld [vmem:[%s39] sm:$0xff]
    %v2341 = vld [vmem:[%s39 + $0x8] sm:$0xff]
    %v2342 = vld [vmem:[%s39 + $0x10] sm:$0xff]
    %v2343 = vld [vmem:[%s39 + $0x18] sm:$0xff]
    %v2344 = vld [vmem:[%s41] sm:$0x1]
    %v2346 = vlaneseq
    %v2347 = vshrl.u32 %v2346, 7
    %v2348 = vsub.s32 0, %v2347
    %v2349 = vrot.slane %v2344, %v2348
    %2351 = vmatprep.subr.mxu0 0.0
    %2352 = vmatpush1.msra.mxu0 %v2340
    %2353 = vmatprep.subr.mxu0 0.0
    %2354 = vmatpush1.msra.mxu0 %v2341
    %2355 = vmatprep.subr.mxu0 0.0
    %2356 = vmatpush1.msra.mxu0 %v2342
    %2357 = vmatprep.subr.mxu0 0.0
    %2358 = vmatpush1.msra.mxu0 %v2343
    %2359 = vmatprep.subr.mxu0 0.0
    %2360 = vmatpush1.msra.mxu0 0.0
    %2361 = vmatprep.subr.mxu0 0.0
    %2362 = vmatpush1.msra.mxu0 0.0
    %2363 = vmatprep.subr.mxu0 0.0
    %2364 = vmatpush1.msra.mxu0 0.0
    %2365 = vmatprep.subr.mxu0 0.0
    %2366 = vmatpush1.msra.mxu0 0.0
    %2367 = vmatprep.subr.mxu0 0.0
    %2368 = vmatpush1.msra.mxu0 0.0
    %2369 = vmatprep.subr.mxu0 0.0
    %2370 = vmatpush1.msra.mxu0 0.0
    %2371 = vmatprep.subr.mxu0 0.0
    %2372 = vmatpush1.msra.mxu0 0.0
    %2373 = vmatprep.subr.mxu0 0.0
    %2374 = vmatpush1.msra.mxu0 0.0
    %2375 = vmatprep.subr.mxu0 0.0
    %2376 = vmatpush1.msra.mxu0 0.0
    %2377 = vmatprep.subr.mxu0 0.0
    %2378 = vmatpush1.msra.mxu0 0.0
    %2379 = vmatprep.subr.mxu0 0.0
    %2380 = vmatpush1.msra.mxu0 0.0
    %2381 = vmatprep.subr.mxu0 0.0
    %2382 = vmatpush1.msra.mxu0 0.0
    %2383 = vmatprep.subr.mxu0 0.0
    %2384 = vmatpush1.msra.mxu0 0.0
    %2385 = vmatprep.subr.mxu0 0.0
    %2386 = vmatpush1.msra.mxu0 0.0
    %2387 = vmatprep.subr.mxu0 0.0
    %2388 = vmatpush1.msra.mxu0 0.0
    %2389 = vmatprep.subr.mxu0 0.0
    %2390 = vmatpush1.msra.mxu0 0.0
    %2391 = vmatprep.subr.mxu0 0.0
    %2392 = vmatpush1.msra.mxu0 0.0
    %2393 = vmatprep.subr.mxu0 0.0
    %2394 = vmatpush1.msra.mxu0 0.0
    %2395 = vmatprep.subr.mxu0 0.0
    %2396 = vmatpush1.msra.mxu0 0.0
    %2397 = vmatprep.subr.mxu0 0.0
    %2398 = vmatpush1.msra.mxu0 0.0
    %2399 = vmatprep.subr.mxu0 0.0
    %2400 = vmatpush1.msra.mxu0 0.0
    %2401 = vmatprep.subr.mxu0 0.0
    %2402 = vmatpush1.msra.mxu0 0.0
    %2403 = vmatprep.subr.mxu0 0.0
    %2404 = vmatpush1.msra.mxu0 0.0
    %2405 = vmatprep.subr.mxu0 0.0
    %2406 = vmatpush1.msra.mxu0 0.0
    %2407 = vmatprep.subr.mxu0 0.0
    %2408 = vmatpush1.msra.mxu0 0.0
    %2409 = vmatprep.subr.mxu0 0.0
    %2410 = vmatpush1.msra.mxu0 0.0
    %2411 = vmatprep.subr.mxu0 0.0
    %2412 = vmatpush1.msra.mxu0 0.0
    %2413 = vmatprep.subr.mxu0 0.0
    %2414 = vmatpush1.msra.mxu0 0.0
    %2415 = vmatprep.mubr.f32.mxu0 0.0
    %2416 = vmatmul.mubr.f32.gmra.mrb[0].mxu0 %v2260
    %v2417 = vpop.f32.mrb[0].mxu0
    %v2418 = vadd.f32 %v2349, %v2417
    %v2419 = vpop.f32.mrb[0].mxu0
    %2420 = vmatprep.mubr.f32.mxu0 0.0
    %2421 = vmatmul.mubr.f32.gmra.mrb[0].mxu0 %v2263
    %v2422 = vpop.f32.mrb[0].mxu0
    %v2423 = vadd.f32 %v2349, %v2422
    %v2424 = vpop.f32.mrb[0].mxu0
    %2425 = vdwg.mxu0
    %2426 = vst.msk [vmem:[%s69] sm:$0xff] %vm425, %v2332
    %vm2427 = vcmask 58368
    %2428 = vst.msk [vmem:[%s69 + $0x8] sm:$0x3] %vm2427, %v2337
    %2429 = vst.msk [vmem:[%s71] sm:$0xff] %vm425, %v2418
    %2430 = vst.msk [vmem:[%s71 + $0x8] sm:$0x3] %vm2427, %v2423
    %v2432 = vsel %vm425, %v2245, 0
    %v2435 = vsel %vm425, %v2332, 0
    %v2438 = vsel %vm425, %v2337, 0
    %2440 = vmatprep.subr.mxu0 0.0
    %2441 = vmatpush1.xpose.msra.mxu0 %v2435
    %2442 = vmatprep.subr.mxu0 0.0
    %2443 = vmatpush1.xpose.msra.mxu0 %v2438
    %2444 = vmatprep.subr.mxu0 0.0
    %2445 = vmatpush1.xpose.msra.mxu0 0.0
    %2446 = vmatprep.subr.mxu0 0.0
    %2447 = vmatpush1.xpose.msra.mxu0 0.0
    %2448 = vmatprep.subr.mxu0 0.0
    %2449 = vmatpush1.xpose.msra.mxu0 0.0
    %2450 = vmatprep.subr.mxu0 0.0
    %2451 = vmatpush1.xpose.msra.mxu0 0.0
    %2452 = vmatprep.subr.mxu0 0.0
    %2453 = vmatpush1.xpose.msra.mxu0 0.0
    %2454 = vmatprep.subr.mxu0 0.0
    %2455 = vmatpush1.xpose.msra.mxu0 0.0
    %2456 = vmatprep.subr.mxu0 0.0
    %2457 = vmatpush1.xpose.msra.mxu0 0.0
    %2458 = vmatprep.subr.mxu0 0.0
    %2459 = vmatpush1.xpose.msra.mxu0 0.0
    %2460 = vmatprep.subr.mxu0 0.0
    %2461 = vmatpush1.xpose.msra.mxu0 0.0
    %2462 = vmatprep.subr.mxu0 0.0
    %2463 = vmatpush1.xpose.msra.mxu0 0.0
    %2464 = vmatprep.subr.mxu0 0.0
    %2465 = vmatpush1.xpose.msra.mxu0 0.0
    %2466 = vmatprep.subr.mxu0 0.0
    %2467 = vmatpush1.xpose.msra.mxu0 0.0
    %2468 = vmatprep.subr.mxu0 0.0
    %2469 = vmatpush1.xpose.msra.mxu0 0.0
    %2470 = vmatprep.subr.mxu0 0.0
    %2471 = vmatpush1.xpose.msra.mxu0 0.0
    %2472 = vmatprep.subr.mxu0 0.0
    %2473 = vmatpush1.xpose.msra.mxu0 0.0
    %2474 = vmatprep.subr.mxu0 0.0
    %2475 = vmatpush1.xpose.msra.mxu0 0.0
    %2476 = vmatprep.subr.mxu0 0.0
    %2477 = vmatpush1.xpose.msra.mxu0 0.0
    %2478 = vmatprep.subr.mxu0 0.0
    %2479 = vmatpush1.xpose.msra.mxu0 0.0
    %2480 = vmatprep.subr.mxu0 0.0
    %2481 = vmatpush1.xpose.msra.mxu0 0.0
    %2482 = vmatprep.subr.mxu0 0.0
    %2483 = vmatpush1.xpose.msra.mxu0 0.0
    %2484 = vmatprep.subr.mxu0 0.0
    %2485 = vmatpush1.xpose.msra.mxu0 0.0
    %2486 = vmatprep.subr.mxu0 0.0
    %2487 = vmatpush1.xpose.msra.mxu0 0.0
    %2488 = vmatprep.subr.mxu0 0.0
    %2489 = vmatpush1.xpose.msra.mxu0 0.0
    %2490 = vmatprep.subr.mxu0 0.0
    %2491 = vmatpush1.xpose.msra.mxu0 0.0
    %2492 = vmatprep.subr.mxu0 0.0
    %2493 = vmatpush1.xpose.msra.mxu0 0.0
    %2494 = vmatprep.subr.mxu0 0.0
    %2495 = vmatpush1.xpose.msra.mxu0 0.0
    %2496 = vmatprep.subr.mxu0 0.0
    %2497 = vmatpush1.xpose.msra.mxu0 0.0
    %2498 = vmatprep.subr.mxu0 0.0
    %2499 = vmatpush1.xpose.msra.mxu0 0.0
    %2500 = vmatprep.subr.mxu0 0.0
    %2501 = vmatpush1.xpose.msra.mxu0 0.0
    %2502 = vmatprep.subr.mxu0 0.0
    %2503 = vmatpush1.xpose.msra.mxu0 0.0
    %2504 = vmatprep.mubr.f32.mxu0 0.0
    %2505 = vmatmul.mubr.f32.gmra.mrb[0].mxu0 %v2432
    %v2506 = vpop.f32.mrb[0].mxu0
    %v2507 = vadd.f32 %v177, %v2506
    %v2508 = vpop.f32.mrb[0].mxu0
    %2509 = vdwg.mxu0
    %vm2510 = vcmask 80896
    %v2511 = vsel %vm2510, %v2507, -inf
    %2512 = vmax.xlane.f32.xlu0 %v2511
    %v2513 = vpop.xlane.xlu0 %2512
    %v2514 = vsub.f32 %v2507, %v2513
    %v2515 = vmul.f32 %v2514, 1.442695
    %v2516 = vpow.pop %v2515
    %v2517 = vsel %vm2510, %v2516, 0.0
    %2518 = vadd.xlane.f32.xlu0 %v2517
    %v2519 = vpop.xlane.xlu0 %2518
    %v2520 = vrcp.pop %v2519
    %v2521 = vmul.f32 %v2516, %v2520
    %v2523 = vsel %vm2510, %v2521, 0
    %vm2525 = vcmask 1041408
    %v2527 = vsel %vm2525, %v2423, 0
    %2529 = vmatprep.subr.mxu0 0.0
    %2530 = vmatpush1.msra.mxu0 %v2418
    %2531 = vmatprep.subr.mxu0 0.0
    %2532 = vmatpush1.msra.mxu0 %v2527
    %2533 = vmatprep.subr.mxu0 0.0
    %2534 = vmatpush1.msra.mxu0 0.0
    %2535 = vmatprep.subr.mxu0 0.0
    %2536 = vmatpush1.msra.mxu0 0.0
    %2537 = vmatprep.subr.mxu0 0.0
    %2538 = vmatpush1.msra.mxu0 0.0
    %2539 = vmatprep.subr.mxu0 0.0
    %2540 = vmatpush1.msra.mxu0 0.0
    %2541 = vmatprep.subr.mxu0 0.0
    %2542 = vmatpush1.msra.mxu0 0.0
    %2543 = vmatprep.subr.mxu0 0.0
    %2544 = vmatpush1.msra.mxu0 0.0
    %2545 = vmatprep.subr.mxu0 0.0
    %2546 = vmatpush1.msra.mxu0 0.0
    %2547 = vmatprep.subr.mxu0 0.0
    %2548 = vmatpush1.msra.mxu0 0.0
    %2549 = vmatprep.subr.mxu0 0.0
    %2550 = vmatpush1.msra.mxu0 0.0
    %2551 = vmatprep.subr.mxu0 0.0
    %2552 = vmatpush1.msra.mxu0 0.0
    %2553 = vmatprep.subr.mxu0 0.0
    %2554 = vmatpush1.msra.mxu0 0.0
    %2555 = vmatprep.subr.mxu0 0.0
    %2556 = vmatpush1.msra.mxu0 0.0
    %2557 = vmatprep.subr.mxu0 0.0
    %2558 = vmatpush1.msra.mxu0 0.0
    %2559 = vmatprep.subr.mxu0 0.0
    %2560 = vmatpush1.msra.mxu0 0.0
    %2561 = vmatprep.subr.mxu0 0.0
    %2562 = vmatpush1.msra.mxu0 0.0
    %2563 = vmatprep.subr.mxu0 0.0
    %2564 = vmatpush1.msra.mxu0 0.0
    %2565 = vmatprep.subr.mxu0 0.0
    %2566 = vmatpush1.msra.mxu0 0.0
    %2567 = vmatprep.subr.mxu0 0.0
    %2568 = vmatpush1.msra.mxu0 0.0
    %2569 = vmatprep.subr.mxu0 0.0
    %2570 = vmatpush1.msra.mxu0 0.0
    %2571 = vmatprep.subr.mxu0 0.0
    %2572 = vmatpush1.msra.mxu0 0.0
    %2573 = vmatprep.subr.mxu0 0.0
    %2574 = vmatpush1.msra.mxu0 0.0
    %2575 = vmatprep.subr.mxu0 0.0
    %2576 = vmatpush1.msra.mxu0 0.0
    %2577 = vmatprep.subr.mxu0 0.0
    %2578 = vmatpush1.msra.mxu0 0.0
    %2579 = vmatprep.subr.mxu0 0.0
    %2580 = vmatpush1.msra.mxu0 0.0
    %2581 = vmatprep.subr.mxu0 0.0
    %2582 = vmatpush1.msra.mxu0 0.0
    %2583 = vmatprep.subr.mxu0 0.0
    %2584 = vmatpush1.msra.mxu0 0.0
    %2585 = vmatprep.subr.mxu0 0.0
    %2586 = vmatpush1.msra.mxu0 0.0
    %2587 = vmatprep.subr.mxu0 0.0
    %2588 = vmatpush1.msra.mxu0 0.0
    %2589 = vmatprep.subr.mxu0 0.0
    %2590 = vmatpush1.msra.mxu0 0.0
    %2591 = vmatprep.subr.mxu0 0.0
    %2592 = vmatpush1.msra.mxu0 0.0
    %2593 = vmatprep.mubr.f32.mxu0 0.0
    %2594 = vmatmul.mubr.f32.gmra.mrb[0].mxu0 %v2523
    %v2595 = vpop.f32.mrb[0].mxu0
    %v2596 = vadd.f32 0.0, %v2595
    %v2597 = vpop.f32.mrb[0].mxu0
    %2598 = vdwg.mxu0
    %v2599 = vld [vmem:[%s43] sm:$0xff]
    %s2600 = scalar_lea.vmem %s31, 32
    %v2601 = vld [vmem:[%s2600] sm:$0xff]
    %v2602 = vld [vmem:[%s2600 + $0x8] sm:$0xff]
    %v2603 = vld [vmem:[%s2600 + $0x10] sm:$0xff]
    %v2604 = vld [vmem:[%s2600 + $0x18] sm:$0xff]
    %s2605 = scalar_lea.vmem %s33, 1
    %v2606 = vld [vmem:[%s2605] sm:$0x1]
    %v2608 = vlaneseq
    %v2609 = vshrl.u32 %v2608, 7
    %v2610 = vsub.s32 0, %v2609
    %v2611 = vrot.slane %v2606, %v2610
    %2613 = vmatprep.subr.mxu0 0.0
    %2614 = vmatpush1.msra.mxu0 %v2601
    %2615 = vmatprep.subr.mxu0 0.0
    %2616 = vmatpush1.msra.mxu0 %v2602
    %2617 = vmatprep.subr.mxu0 0.0
    %2618 = vmatpush1.msra.mxu0 %v2603
    %2619 = vmatprep.subr.mxu0 0.0
    %2620 = vmatpush1.msra.mxu0 %v2604
    %2621 = vmatprep.subr.mxu0 0.0
    %2622 = vmatpush1.msra.mxu0 0.0
    %2623 = vmatprep.subr.mxu0 0.0
    %2624 = vmatpush1.msra.mxu0 0.0
    %2625 = vmatprep.subr.mxu0 0.0
    %2626 = vmatpush1.msra.mxu0 0.0
    %2627 = vmatprep.subr.mxu0 0.0
    %2628 = vmatpush1.msra.mxu0 0.0
    %2629 = vmatprep.subr.mxu0 0.0
    %2630 = vmatpush1.msra.mxu0 0.0
    %2631 = vmatprep.subr.mxu0 0.0
    %2632 = vmatpush1.msra.mxu0 0.0
    %2633 = vmatprep.subr.mxu0 0.0
    %2634 = vmatpush1.msra.mxu0 0.0
    %2635 = vmatprep.subr.mxu0 0.0
    %2636 = vmatpush1.msra.mxu0 0.0
    %2637 = vmatprep.subr.mxu0 0.0
    %2638 = vmatpush1.msra.mxu0 0.0
    %2639 = vmatprep.subr.mxu0 0.0
    %2640 = vmatpush1.msra.mxu0 0.0
    %2641 = vmatprep.subr.mxu0 0.0
    %2642 = vmatpush1.msra.mxu0 0.0
    %2643 = vmatprep.subr.mxu0 0.0
    %2644 = vmatpush1.msra.mxu0 0.0
    %2645 = vmatprep.subr.mxu0 0.0
    %2646 = vmatpush1.msra.mxu0 0.0
    %2647 = vmatprep.subr.mxu0 0.0
    %2648 = vmatpush1.msra.mxu0 0.0
    %2649 = vmatprep.subr.mxu0 0.0
    %2650 = vmatpush1.msra.mxu0 0.0
    %2651 = vmatprep.subr.mxu0 0.0
    %2652 = vmatpush1.msra.mxu0 0.0
    %2653 = vmatprep.subr.mxu0 0.0
    %2654 = vmatpush1.msra.mxu0 0.0
    %2655 = vmatprep.subr.mxu0 0.0
    %2656 = vmatpush1.msra.mxu0 0.0
    %2657 = vmatprep.subr.mxu0 0.0
    %2658 = vmatpush1.msra.mxu0 0.0
    %2659 = vmatprep.subr.mxu0 0.0
    %2660 = vmatpush1.msra.mxu0 0.0
    %2661 = vmatprep.subr.mxu0 0.0
    %2662 = vmatpush1.msra.mxu0 0.0
    %2663 = vmatprep.subr.mxu0 0.0
    %2664 = vmatpush1.msra.mxu0 0.0
    %2665 = vmatprep.subr.mxu0 0.0
    %2666 = vmatpush1.msra.mxu0 0.0
    %2667 = vmatprep.subr.mxu0 0.0
    %2668 = vmatpush1.msra.mxu0 0.0
    %2669 = vmatprep.subr.mxu0 0.0
    %2670 = vmatpush1.msra.mxu0 0.0
    %2671 = vmatprep.subr.mxu0 0.0
    %2672 = vmatpush1.msra.mxu0 0.0
    %2673 = vmatprep.subr.mxu0 0.0
    %2674 = vmatpush1.msra.mxu0 0.0
    %2675 = vmatprep.subr.mxu0 0.0
    %2676 = vmatpush1.msra.mxu0 0.0
    %2677 = vmatprep.mubr.f32.mxu0 0.0
    %2678 = vmatmul.mubr.f32.gmra.mrb[0].mxu0 %v2176
    %v2679 = vpop.f32.mrb[0].mxu0
    %v2680 = vadd.f32 %v2611, %v2679
    %v2681 = vpop.f32.mrb[0].mxu0
    %2682 = vdwg.mxu0
    %s2683 = scalar_lea.vmem %s35, 32
    %v2684 = vld [vmem:[%s2683] sm:$0xff]
    %v2685 = vld [vmem:[%s2683 + $0x8] sm:$0xff]
    %v2686 = vld [vmem:[%s2683 + $0x10] sm:$0xff]
    %v2687 = vld [vmem:[%s2683 + $0x18] sm:$0xff]
    %s2688 = scalar_lea.vmem %s37, 1
    %v2689 = vld [vmem:[%s2688] sm:$0x1]
    %v2691 = vlaneseq
    %v2692 = vshrl.u32 %v2691, 7
    %v2693 = vsub.s32 0, %v2692
    %v2694 = vrot.slane %v2689, %v2693
    %2696 = vmatprep.subr.mxu0 0.0
    %2697 = vmatpush1.msra.mxu0 %v2684
    %2698 = vmatprep.subr.mxu0 0.0
    %2699 = vmatpush1.msra.mxu0 %v2685
    %2700 = vmatprep.subr.mxu0 0.0
    %2701 = vmatpush1.msra.mxu0 %v2686
    %2702 = vmatprep.subr.mxu0 0.0
    %2703 = vmatpush1.msra.mxu0 %v2687
    %2704 = vmatprep.subr.mxu0 0.0
    %2705 = vmatpush1.msra.mxu0 0.0
    %2706 = vmatprep.subr.mxu0 0.0
    %2707 = vmatpush1.msra.mxu0 0.0
    %2708 = vmatprep.subr.mxu0 0.0
    %2709 = vmatpush1.msra.mxu0 0.0
    %2710 = vmatprep.subr.mxu0 0.0
    %2711 = vmatpush1.msra.mxu0 0.0
    %2712 = vmatprep.subr.mxu0 0.0
    %2713 = vmatpush1.msra.mxu0 0.0
    %2714 = vmatprep.subr.mxu0 0.0
    %2715 = vmatpush1.msra.mxu0 0.0
    %2716 = vmatprep.subr.mxu0 0.0
    %2717 = vmatpush1.msra.mxu0 0.0
    %2718 = vmatprep.subr.mxu0 0.0
    %2719 = vmatpush1.msra.mxu0 0.0
    %2720 = vmatprep.subr.mxu0 0.0
    %2721 = vmatpush1.msra.mxu0 0.0
    %2722 = vmatprep.subr.mxu0 0.0
    %2723 = vmatpush1.msra.mxu0 0.0
    %2724 = vmatprep.subr.mxu0 0.0
    %2725 = vmatpush1.msra.mxu0 0.0
    %2726 = vmatprep.subr.mxu0 0.0
    %2727 = vmatpush1.msra.mxu0 0.0
    %2728 = vmatprep.subr.mxu0 0.0
    %2729 = vmatpush1.msra.mxu0 0.0
    %2730 = vmatprep.subr.mxu0 0.0
    %2731 = vmatpush1.msra.mxu0 0.0
    %2732 = vmatprep.subr.mxu0 0.0
    %2733 = vmatpush1.msra.mxu0 0.0
    %2734 = vmatprep.subr.mxu0 0.0
    %2735 = vmatpush1.msra.mxu0 0.0
    %2736 = vmatprep.subr.mxu0 0.0
    %2737 = vmatpush1.msra.mxu0 0.0
    %2738 = vmatprep.subr.mxu0 0.0
    %2739 = vmatpush1.msra.mxu0 0.0
    %2740 = vmatprep.subr.mxu0 0.0
    %2741 = vmatpush1.msra.mxu0 0.0
    %2742 = vmatprep.subr.mxu0 0.0
    %2743 = vmatpush1.msra.mxu0 0.0
    %2744 = vmatprep.subr.mxu0 0.0
    %2745 = vmatpush1.msra.mxu0 0.0
    %2746 = vmatprep.subr.mxu0 0.0
    %2747 = vmatpush1.msra.mxu0 0.0
    %2748 = vmatprep.subr.mxu0 0.0
    %2749 = vmatpush1.msra.mxu0 0.0
    %2750 = vmatprep.subr.mxu0 0.0
    %2751 = vmatpush1.msra.mxu0 0.0
    %2752 = vmatprep.subr.mxu0 0.0
    %2753 = vmatpush1.msra.mxu0 0.0
    %2754 = vmatprep.subr.mxu0 0.0
    %2755 = vmatpush1.msra.mxu0 0.0
    %2756 = vmatprep.subr.mxu0 0.0
    %2757 = vmatpush1.msra.mxu0 0.0
    %2758 = vmatprep.subr.mxu0 0.0
    %2759 = vmatpush1.msra.mxu0 0.0
    %2760 = vmatprep.mubr.f32.mxu0 0.0
    %2761 = vmatmul.mubr.f32.gmra.mrb[0].mxu0 %v2260
    %v2762 = vpop.f32.mrb[0].mxu0
    %v2763 = vadd.f32 %v2694, %v2762
    %v2764 = vpop.f32.mrb[0].mxu0
    %2765 = vmatprep.mubr.f32.mxu0 0.0
    %2766 = vmatmul.mubr.f32.gmra.mrb[0].mxu0 %v2263
    %v2767 = vpop.f32.mrb[0].mxu0
    %v2768 = vadd.f32 %v2694, %v2767
    %v2769 = vpop.f32.mrb[0].mxu0
    %2770 = vdwg.mxu0
    %s2771 = scalar_lea.vmem %s39, 32
    %v2772 = vld [vmem:[%s2771] sm:$0xff]
    %v2773 = vld [vmem:[%s2771 + $0x8] sm:$0xff]
    %v2774 = vld [vmem:[%s2771 + $0x10] sm:$0xff]
    %v2775 = vld [vmem:[%s2771 + $0x18] sm:$0xff]
    %s2776 = scalar_lea.vmem %s41, 1
    %v2777 = vld [vmem:[%s2776] sm:$0x1]
    %v2779 = vlaneseq
    %v2780 = vshrl.u32 %v2779, 7
    %v2781 = vsub.s32 0, %v2780
    %v2782 = vrot.slane %v2777, %v2781
    %2784 = vmatprep.subr.mxu0 0.0
    %2785 = vmatpush1.msra.mxu0 %v2772
    %2786 = vmatprep.subr.mxu0 0.0
    %2787 = vmatpush1.msra.mxu0 %v2773
    %2788 = vmatprep.subr.mxu0 0.0
    %2789 = vmatpush1.msra.mxu0 %v2774
    %2790 = vmatprep.subr.mxu0 0.0
    %2791 = vmatpush1.msra.mxu0 %v2775
    %2792 = vmatprep.subr.mxu0 0.0
    %2793 = vmatpush1.msra.mxu0 0.0
    %2794 = vmatprep.subr.mxu0 0.0
    %2795 = vmatpush1.msra.mxu0 0.0
    %2796 = vmatprep.subr.mxu0 0.0
    %2797 = vmatpush1.msra.mxu0 0.0
    %2798 = vmatprep.subr.mxu0 0.0
    %2799 = vmatpush1.msra.mxu0 0.0
    %2800 = vmatprep.subr.mxu0 0.0
    %2801 = vmatpush1.msra.mxu0 0.0
    %2802 = vmatprep.subr.mxu0 0.0
    %2803 = vmatpush1.msra.mxu0 0.0
    %2804 = vmatprep.subr.mxu0 0.0
    %2805 = vmatpush1.msra.mxu0 0.0
    %2806 = vmatprep.subr.mxu0 0.0
    %2807 = vmatpush1.msra.mxu0 0.0
    %2808 = vmatprep.subr.mxu0 0.0
    %2809 = vmatpush1.msra.mxu0 0.0
    %2810 = vmatprep.subr.mxu0 0.0
    %2811 = vmatpush1.msra.mxu0 0.0
    %2812 = vmatprep.subr.mxu0 0.0
    %2813 = vmatpush1.msra.mxu0 0.0
    %2814 = vmatprep.subr.mxu0 0.0
    %2815 = vmatpush1.msra.mxu0 0.0
    %2816 = vmatprep.subr.mxu0 0.0
    %2817 = vmatpush1.msra.mxu0 0.0
    %2818 = vmatprep.subr.mxu0 0.0
    %2819 = vmatpush1.msra.mxu0 0.0
    %2820 = vmatprep.subr.mxu0 0.0
    %2821 = vmatpush1.msra.mxu0 0.0
    %2822 = vmatprep.subr.mxu0 0.0
    %2823 = vmatpush1.msra.mxu0 0.0
    %2824 = vmatprep.subr.mxu0 0.0
    %2825 = vmatpush1.msra.mxu0 0.0
    %2826 = vmatprep.subr.mxu0 0.0
    %2827 = vmatpush1.msra.mxu0 0.0
    %2828 = vmatprep.subr.mxu0 0.0
    %2829 = vmatpush1.msra.mxu0 0.0
    %2830 = vmatprep.subr.mxu0 0.0
    %2831 = vmatpush1.msra.mxu0 0.0
    %2832 = vmatprep.subr.mxu0 0.0
    %2833 = vmatpush1.msra.mxu0 0.0
    %2834 = vmatprep.subr.mxu0 0.0
    %2835 = vmatpush1.msra.mxu0 0.0
    %2836 = vmatprep.subr.mxu0 0.0
    %2837 = vmatpush1.msra.mxu0 0.0
    %2838 = vmatprep.subr.mxu0 0.0
    %2839 = vmatpush1.msra.mxu0 0.0
    %2840 = vmatprep.subr.mxu0 0.0
    %2841 = vmatpush1.msra.mxu0 0.0
    %2842 = vmatprep.subr.mxu0 0.0
    %2843 = vmatpush1.msra.mxu0 0.0
    %2844 = vmatprep.subr.mxu0 0.0
    %2845 = vmatpush1.msra.mxu0 0.0
    %2846 = vmatprep.subr.mxu0 0.0
    %2847 = vmatpush1.msra.mxu0 0.0
    %2848 = vmatprep.mubr.f32.mxu0 0.0
    %2849 = vmatmul.mubr.f32.gmra.mrb[0].mxu0 %v2260
    %v2850 = vpop.f32.mrb[0].mxu0
    %v2851 = vadd.f32 %v2782, %v2850
    %v2852 = vpop.f32.mrb[0].mxu0
    %2853 = vmatprep.mubr.f32.mxu0 0.0
    %2854 = vmatmul.mubr.f32.gmra.mrb[0].mxu0 %v2263
    %v2855 = vpop.f32.mrb[0].mxu0
    %v2856 = vadd.f32 %v2782, %v2855
    %v2857 = vpop.f32.mrb[0].mxu0
    %2858 = vdwg.mxu0
    %s2859 = scalar_lea.vmem %s69, 16
    %2860 = vst.msk [vmem:[%s2859] sm:$0xff] %vm425, %v2763
    %2861 = vst.msk [vmem:[%s2859 + $0x8] sm:$0x3] %vm2427, %v2768
    %s2862 = scalar_lea.vmem %s71, 16
    %2863 = vst.msk [vmem:[%s2862] sm:$0xff] %vm425, %v2851
    %2864 = vst.msk [vmem:[%s2862 + $0x8] sm:$0x3] %vm2427, %v2856
    %v2866 = vsel %vm425, %v2680, 0
    %v2869 = vsel %vm425, %v2763, 0
    %v2872 = vsel %vm425, %v2768, 0
    %2874 = vmatprep.subr.mxu0 0.0
    %2875 = vmatpush1.xpose.msra.mxu0 %v2869
    %2876 = vmatprep.subr.mxu0 0.0
    %2877 = vmatpush1.xpose.msra.mxu0 %v2872
    %2878 = vmatprep.subr.mxu0 0.0
    %2879 = vmatpush1.xpose.msra.mxu0 0.0
    %2880 = vmatprep.subr.mxu0 0.0
    %2881 = vmatpush1.xpose.msra.mxu0 0.0
    %2882 = vmatprep.subr.mxu0 0.0
    %2883 = vmatpush1.xpose.msra.mxu0 0.0
    %2884 = vmatprep.subr.mxu0 0.0
    %2885 = vmatpush1.xpose.msra.mxu0 0.0
    %2886 = vmatprep.subr.mxu0 0.0
    %2887 = vmatpush1.xpose.msra.mxu0 0.0
    %2888 = vmatprep.subr.mxu0 0.0
    %2889 = vmatpush1.xpose.msra.mxu0 0.0
    %2890 = vmatprep.subr.mxu0 0.0
    %2891 = vmatpush1.xpose.msra.mxu0 0.0
    %2892 = vmatprep.subr.mxu0 0.0
    %2893 = vmatpush1.xpose.msra.mxu0 0.0
    %2894 = vmatprep.subr.mxu0 0.0
    %2895 = vmatpush1.xpose.msra.mxu0 0.0
    %2896 = vmatprep.subr.mxu0 0.0
    %2897 = vmatpush1.xpose.msra.mxu0 0.0
    %2898 = vmatprep.subr.mxu0 0.0
    %2899 = vmatpush1.xpose.msra.mxu0 0.0
    %2900 = vmatprep.subr.mxu0 0.0
    %2901 = vmatpush1.xpose.msra.mxu0 0.0
    %2902 = vmatprep.subr.mxu0 0.0
    %2903 = vmatpush1.xpose.msra.mxu0 0.0
    %2904 = vmatprep.subr.mxu0 0.0
    %2905 = vmatpush1.xpose.msra.mxu0 0.0
    %2906 = vmatprep.subr.mxu0 0.0
    %2907 = vmatpush1.xpose.msra.mxu0 0.0
    %2908 = vmatprep.subr.mxu0 0.0
    %2909 = vmatpush1.xpose.msra.mxu0 0.0
    %2910 = vmatprep.subr.mxu0 0.0
    %2911 = vmatpush1.xpose.msra.mxu0 0.0
    %2912 = vmatprep.subr.mxu0 0.0
    %2913 = vmatpush1.xpose.msra.mxu0 0.0
    %2914 = vmatprep.subr.mxu0 0.0
    %2915 = vmatpush1.xpose.msra.mxu0 0.0
    %2916 = vmatprep.subr.mxu0 0.0
    %2917 = vmatpush1.xpose.msra.mxu0 0.0
    %2918 = vmatprep.subr.mxu0 0.0
    %2919 = vmatpush1.xpose.msra.mxu0 0.0
    %2920 = vmatprep.subr.mxu0 0.0
    %2921 = vmatpush1.xpose.msra.mxu0 0.0
    %2922 = vmatprep.subr.mxu0 0.0
    %2923 = vmatpush1.xpose.msra.mxu0 0.0
    %2924 = vmatprep.subr.mxu0 0.0
    %2925 = vmatpush1.xpose.msra.mxu0 0.0
    %2926 = vmatprep.subr.mxu0 0.0
    %2927 = vmatpush1.xpose.msra.mxu0 0.0
    %2928 = vmatprep.subr.mxu0 0.0
    %2929 = vmatpush1.xpose.msra.mxu0 0.0
    %2930 = vmatprep.subr.mxu0 0.0
    %2931 = vmatpush1.xpose.msra.mxu0 0.0
    %2932 = vmatprep.subr.mxu0 0.0
    %2933 = vmatpush1.xpose.msra.mxu0 0.0
    %2934 = vmatprep.subr.mxu0 0.0
    %2935 = vmatpush1.xpose.msra.mxu0 0.0
    %2936 = vmatprep.subr.mxu0 0.0
    %2937 = vmatpush1.xpose.msra.mxu0 0.0
    %2938 = vmatprep.mubr.f32.mxu0 0.0
    %2939 = vmatmul.mubr.f32.gmra.mrb[0].mxu0 %v2866
    %v2940 = vpop.f32.mrb[0].mxu0
    %v2941 = vadd.f32 %v177, %v2940
    %v2942 = vpop.f32.mrb[0].mxu0
    %2943 = vdwg.mxu0
    %v2944 = vsel %vm2510, %v2941, -inf
    %2945 = vmax.xlane.f32.xlu0 %v2944
    %v2946 = vpop.xlane.xlu0 %2945
    %v2947 = vsub.f32 %v2941, %v2946
    %v2948 = vmul.f32 %v2947, 1.442695
    %v2949 = vpow.pop %v2948
    %v2950 = vsel %vm2510, %v2949, 0.0
    %2951 = vadd.xlane.f32.xlu0 %v2950
    %v2952 = vpop.xlane.xlu0 %2951
    %v2953 = vrcp.pop %v2952
    %v2954 = vmul.f32 %v2949, %v2953
    %v2956 = vsel %vm2510, %v2954, 0
    %v2959 = vsel %vm2525, %v2856, 0
    %2961 = vmatprep.subr.mxu0 0.0
    %2962 = vmatpush1.msra.mxu0 %v2851
    %2963 = vmatprep.subr.mxu0 0.0
    %2964 = vmatpush1.msra.mxu0 %v2959
    %2965 = vmatprep.subr.mxu0 0.0
    %2966 = vmatpush1.msra.mxu0 0.0
    %2967 = vmatprep.subr.mxu0 0.0
    %2968 = vmatpush1.msra.mxu0 0.0
    %2969 = vmatprep.subr.mxu0 0.0
    %2970 = vmatpush1.msra.mxu0 0.0
    %2971 = vmatprep.subr.mxu0 0.0
    %2972 = vmatpush1.msra.mxu0 0.0
    %2973 = vmatprep.subr.mxu0 0.0
    %2974 = vmatpush1.msra.mxu0 0.0
    %2975 = vmatprep.subr.mxu0 0.0
    %2976 = vmatpush1.msra.mxu0 0.0
    %2977 = vmatprep.subr.mxu0 0.0
    %2978 = vmatpush1.msra.mxu0 0.0
    %2979 = vmatprep.subr.mxu0 0.0
    %2980 = vmatpush1.msra.mxu0 0.0
    %2981 = vmatprep.subr.mxu0 0.0
    %2982 = vmatpush1.msra.mxu0 0.0
    %2983 = vmatprep.subr.mxu0 0.0
    %2984 = vmatpush1.msra.mxu0 0.0
    %2985 = vmatprep.subr.mxu0 0.0
    %2986 = vmatpush1.msra.mxu0 0.0
    %2987 = vmatprep.subr.mxu0 0.0
    %2988 = vmatpush1.msra.mxu0 0.0
    %2989 = vmatprep.subr.mxu0 0.0
    %2990 = vmatpush1.msra.mxu0 0.0
    %2991 = vmatprep.subr.mxu0 0.0
    %2992 = vmatpush1.msra.mxu0 0.0
    %2993 = vmatprep.subr.mxu0 0.0
    %2994 = vmatpush1.msra.mxu0 0.0
    %2995 = vmatprep.subr.mxu0 0.0
    %2996 = vmatpush1.msra.mxu0 0.0
    %2997 = vmatprep.subr.mxu0 0.0
    %2998 = vmatpush1.msra.mxu0 0.0
    %2999 = vmatprep.subr.mxu0 0.0
    %3000 = vmatpush1.msra.mxu0 0.0
    %3001 = vmatprep.subr.mxu0 0.0
    %3002 = vmatpush1.msra.mxu0 0.0
    %3003 = vmatprep.subr.mxu0 0.0
    %3004 = vmatpush1.msra.mxu0 0.0
    %3005 = vmatprep.subr.mxu0 0.0
    %3006 = vmatpush1.msra.mxu0 0.0
    %3007 = vmatprep.subr.mxu0 0.0
    %3008 = vmatpush1.msra.mxu0 0.0
    %3009 = vmatprep.subr.mxu0 0.0
    %3010 = vmatpush1.msra.mxu0 0.0
    %3011 = vmatprep.subr.mxu0 0.0
    %3012 = vmatpush1.msra.mxu0 0.0
    %3013 = vmatprep.subr.mxu0 0.0
    %3014 = vmatpush1.msra.mxu0 0.0
    %3015 = vmatprep.subr.mxu0 0.0
    %3016 = vmatpush1.msra.mxu0 0.0
    %3017 = vmatprep.subr.mxu0 0.0
    %3018 = vmatpush1.msra.mxu0 0.0
    %3019 = vmatprep.subr.mxu0 0.0
    %3020 = vmatpush1.msra.mxu0 0.0
    %3021 = vmatprep.subr.mxu0 0.0
    %3022 = vmatpush1.msra.mxu0 0.0
    %3023 = vmatprep.subr.mxu0 0.0
    %3024 = vmatpush1.msra.mxu0 0.0
    %3025 = vmatprep.mubr.f32.mxu0 0.0
    %3026 = vmatmul.mubr.f32.gmra.mrb[0].mxu0 %v2956
    %v3027 = vpop.f32.mrb[0].mxu0
    %v3028 = vadd.f32 0.0, %v3027
    %v3029 = vpop.f32.mrb[0].mxu0
    %3030 = vdwg.mxu0
    %s3031 = scalar_lea.vmem %s43, 8
    %v3032 = vld [vmem:[%s3031] sm:$0xff]
    %v3034 = vsel %vm425, %v3028, 0
    %3036 = vmatprep.subr.mxu0 0.0
    %3037 = vmatpush1.msra.mxu0 %v3032
    %3038 = vmatprep.subr.mxu0 0.0
    %3039 = vmatpush1.msra.mxu0 0.0
    %3040 = vmatprep.subr.mxu0 0.0
    %3041 = vmatpush1.msra.mxu0 0.0
    %3042 = vmatprep.subr.mxu0 0.0
    %3043 = vmatpush1.msra.mxu0 0.0
    %3044 = vmatprep.subr.mxu0 0.0
    %3045 = vmatpush1.msra.mxu0 0.0
    %3046 = vmatprep.subr.mxu0 0.0
    %3047 = vmatpush1.msra.mxu0 0.0
    %3048 = vmatprep.subr.mxu0 0.0
    %3049 = vmatpush1.msra.mxu0 0.0
    %3050 = vmatprep.subr.mxu0 0.0
    %3051 = vmatpush1.msra.mxu0 0.0
    %3052 = vmatprep.subr.mxu0 0.0
    %3053 = vmatpush1.msra.mxu0 0.0
    %3054 = vmatprep.subr.mxu0 0.0
    %3055 = vmatpush1.msra.mxu0 0.0
    %3056 = vmatprep.subr.mxu0 0.0
    %3057 = vmatpush1.msra.mxu0 0.0
    %3058 = vmatprep.subr.mxu0 0.0
    %3059 = vmatpush1.msra.mxu0 0.0
    %3060 = vmatprep.subr.mxu0 0.0
    %3061 = vmatpush1.msra.mxu0 0.0
    %3062 = vmatprep.subr.mxu0 0.0
    %3063 = vmatpush1.msra.mxu0 0.0
    %3064 = vmatprep.subr.mxu0 0.0
    %3065 = vmatpush1.msra.mxu0 0.0
    %3066 = vmatprep.subr.mxu0 0.0
    %3067 = vmatpush1.msra.mxu0 0.0
    %3068 = vmatprep.subr.mxu0 0.0
    %3069 = vmatpush1.msra.mxu0 0.0
    %3070 = vmatprep.subr.mxu0 0.0
    %3071 = vmatpush1.msra.mxu0 0.0
    %3072 = vmatprep.subr.mxu0 0.0
    %3073 = vmatpush1.msra.mxu0 0.0
    %3074 = vmatprep.subr.mxu0 0.0
    %3075 = vmatpush1.msra.mxu0 0.0
    %3076 = vmatprep.subr.mxu0 0.0
    %3077 = vmatpush1.msra.mxu0 0.0
    %3078 = vmatprep.subr.mxu0 0.0
    %3079 = vmatpush1.msra.mxu0 0.0
    %3080 = vmatprep.subr.mxu0 0.0
    %3081 = vmatpush1.msra.mxu0 0.0
    %3082 = vmatprep.subr.mxu0 0.0
    %3083 = vmatpush1.msra.mxu0 0.0
    %3084 = vmatprep.subr.mxu0 0.0
    %3085 = vmatpush1.msra.mxu0 0.0
    %3086 = vmatprep.subr.mxu0 0.0
    %3087 = vmatpush1.msra.mxu0 0.0
    %3088 = vmatprep.subr.mxu0 0.0
    %3089 = vmatpush1.msra.mxu0 0.0
    %3090 = vmatprep.subr.mxu0 0.0
    %3091 = vmatpush1.msra.mxu0 0.0
    %3092 = vmatprep.subr.mxu0 0.0
    %3093 = vmatpush1.msra.mxu0 0.0
    %3094 = vmatprep.subr.mxu0 0.0
    %3095 = vmatpush1.msra.mxu0 0.0
    %3096 = vmatprep.subr.mxu0 0.0
    %3097 = vmatpush1.msra.mxu0 0.0
    %3098 = vmatprep.subr.mxu0 0.0
    %3099 = vmatpush1.msra.mxu0 0.0
    %3100 = vmatprep.mubr.f32.mxu0 0.0
    %3101 = vmatmul.mubr.f32.gmra.mrb[0].mxu0 %v3034
    %v3102 = vpop.f32.mrb[0].mxu0
    %v3103 = vadd.f32 0.0, %v3102
    %v3104 = vpop.f32.mrb[0].mxu0
    %3105 = vdwg.mxu0
    %v3107 = vsel %vm425, %v2596, 0
    %3109 = vmatprep.subr.mxu0 0.0
    %3110 = vmatpush1.msra.mxu0 %v2599
    %3111 = vmatprep.subr.mxu0 0.0
    %3112 = vmatpush1.msra.mxu0 0.0
    %3113 = vmatprep.subr.mxu0 0.0
    %3114 = vmatpush1.msra.mxu0 0.0
    %3115 = vmatprep.subr.mxu0 0.0
    %3116 = vmatpush1.msra.mxu0 0.0
    %3117 = vmatprep.subr.mxu0 0.0
    %3118 = vmatpush1.msra.mxu0 0.0
    %3119 = vmatprep.subr.mxu0 0.0
    %3120 = vmatpush1.msra.mxu0 0.0
    %3121 = vmatprep.subr.mxu0 0.0
    %3122 = vmatpush1.msra.mxu0 0.0
    %3123 = vmatprep.subr.mxu0 0.0
    %3124 = vmatpush1.msra.mxu0 0.0
    %3125 = vmatprep.subr.mxu0 0.0
    %3126 = vmatpush1.msra.mxu0 0.0
    %3127 = vmatprep.subr.mxu0 0.0
    %3128 = vmatpush1.msra.mxu0 0.0
    %3129 = vmatprep.subr.mxu0 0.0
    %3130 = vmatpush1.msra.mxu0 0.0
    %3131 = vmatprep.subr.mxu0 0.0
    %3132 = vmatpush1.msra.mxu0 0.0
    %3133 = vmatprep.subr.mxu0 0.0
    %3134 = vmatpush1.msra.mxu0 0.0
    %3135 = vmatprep.subr.mxu0 0.0
    %3136 = vmatpush1.msra.mxu0 0.0
    %3137 = vmatprep.subr.mxu0 0.0
    %3138 = vmatpush1.msra.mxu0 0.0
    %3139 = vmatprep.subr.mxu0 0.0
    %3140 = vmatpush1.msra.mxu0 0.0
    %3141 = vmatprep.subr.mxu0 0.0
    %3142 = vmatpush1.msra.mxu0 0.0
    %3143 = vmatprep.subr.mxu0 0.0
    %3144 = vmatpush1.msra.mxu0 0.0
    %3145 = vmatprep.subr.mxu0 0.0
    %3146 = vmatpush1.msra.mxu0 0.0
    %3147 = vmatprep.subr.mxu0 0.0
    %3148 = vmatpush1.msra.mxu0 0.0
    %3149 = vmatprep.subr.mxu0 0.0
    %3150 = vmatpush1.msra.mxu0 0.0
    %3151 = vmatprep.subr.mxu0 0.0
    %3152 = vmatpush1.msra.mxu0 0.0
    %3153 = vmatprep.subr.mxu0 0.0
    %3154 = vmatpush1.msra.mxu0 0.0
    %3155 = vmatprep.subr.mxu0 0.0
    %3156 = vmatpush1.msra.mxu0 0.0
    %3157 = vmatprep.subr.mxu0 0.0
    %3158 = vmatpush1.msra.mxu0 0.0
    %3159 = vmatprep.subr.mxu0 0.0
    %3160 = vmatpush1.msra.mxu0 0.0
    %3161 = vmatprep.subr.mxu0 0.0
    %3162 = vmatpush1.msra.mxu0 0.0
    %3163 = vmatprep.subr.mxu0 0.0
    %3164 = vmatpush1.msra.mxu0 0.0
    %3165 = vmatprep.subr.mxu0 0.0
    %3166 = vmatpush1.msra.mxu0 0.0
    %3167 = vmatprep.subr.mxu0 0.0
    %3168 = vmatpush1.msra.mxu0 0.0
    %3169 = vmatprep.subr.mxu0 0.0
    %3170 = vmatpush1.msra.mxu0 0.0
    %3171 = vmatprep.subr.mxu0 0.0
    %3172 = vmatpush1.msra.mxu0 0.0
    %3173 = vmatprep.mubr.f32.mxu0 0.0
    %3174 = vmatmul.mubr.f32.gmra.mrb[0].mxu0 %v3107
    %v3175 = vpop.f32.mrb[0].mxu0
    %v3176 = vadd.f32 %v3103, %v3175
    %v3177 = vpop.f32.mrb[0].mxu0
    %3178 = vdwg.mxu0
    %s3179 = scalar_lea.vmem %s31, 64
    %v3180 = vld [vmem:[%s3179] sm:$0xff]
    %v3181 = vld [vmem:[%s3179 + $0x8] sm:$0xff]
    %v3182 = vld [vmem:[%s3179 + $0x10] sm:$0xff]
    %v3183 = vld [vmem:[%s3179 + $0x18] sm:$0xff]
    %s3184 = scalar_lea.vmem %s33, 2
    %v3185 = vld [vmem:[%s3184] sm:$0x1]
    %v3187 = vlaneseq
    %v3188 = vshrl.u32 %v3187, 7
    %v3189 = vsub.s32 0, %v3188
    %v3190 = vrot.slane %v3185, %v3189
    %3192 = vmatprep.subr.mxu0 0.0
    %3193 = vmatpush1.msra.mxu0 %v3180
    %3194 = vmatprep.subr.mxu0 0.0
    %3195 = vmatpush1.msra.mxu0 %v3181
    %3196 = vmatprep.subr.mxu0 0.0
    %3197 = vmatpush1.msra.mxu0 %v3182
    %3198 = vmatprep.subr.mxu0 0.0
    %3199 = vmatpush1.msra.mxu0 %v3183
    %3200 = vmatprep.subr.mxu0 0.0
    %3201 = vmatpush1.msra.mxu0 0.0
    %3202 = vmatprep.subr.mxu0 0.0
    %3203 = vmatpush1.msra.mxu0 0.0
    %3204 = vmatprep.subr.mxu0 0.0
    %3205 = vmatpush1.msra.mxu0 0.0
    %3206 = vmatprep.subr.mxu0 0.0
    %3207 = vmatpush1.msra.mxu0 0.0
    %3208 = vmatprep.subr.mxu0 0.0
    %3209 = vmatpush1.msra.mxu0 0.0
    %3210 = vmatprep.subr.mxu0 0.0
    %3211 = vmatpush1.msra.mxu0 0.0
    %3212 = vmatprep.subr.mxu0 0.0
    %3213 = vmatpush1.msra.mxu0 0.0
    %3214 = vmatprep.subr.mxu0 0.0
    %3215 = vmatpush1.msra.mxu0 0.0
    %3216 = vmatprep.subr.mxu0 0.0
    %3217 = vmatpush1.msra.mxu0 0.0
    %3218 = vmatprep.subr.mxu0 0.0
    %3219 = vmatpush1.msra.mxu0 0.0
    %3220 = vmatprep.subr.mxu0 0.0
    %3221 = vmatpush1.msra.mxu0 0.0
    %3222 = vmatprep.subr.mxu0 0.0
    %3223 = vmatpush1.msra.mxu0 0.0
    %3224 = vmatprep.subr.mxu0 0.0
    %3225 = vmatpush1.msra.mxu0 0.0
    %3226 = vmatprep.subr.mxu0 0.0
    %3227 = vmatpush1.msra.mxu0 0.0
    %3228 = vmatprep.subr.mxu0 0.0
    %3229 = vmatpush1.msra.mxu0 0.0
    %3230 = vmatprep.subr.mxu0 0.0
    %3231 = vmatpush1.msra.mxu0 0.0
    %3232 = vmatprep.subr.mxu0 0.0
    %3233 = vmatpush1.msra.mxu0 0.0
    %3234 = vmatprep.subr.mxu0 0.0
    %3235 = vmatpush1.msra.mxu0 0.0
    %3236 = vmatprep.subr.mxu0 0.0
    %3237 = vmatpush1.msra.mxu0 0.0
    %3238 = vmatprep.subr.mxu0 0.0
    %3239 = vmatpush1.msra.mxu0 0.0
    %3240 = vmatprep.subr.mxu0 0.0
    %3241 = vmatpush1.msra.mxu0 0.0
    %3242 = vmatprep.subr.mxu0 0.0
    %3243 = vmatpush1.msra.mxu0 0.0
    %3244 = vmatprep.subr.mxu0 0.0
    %3245 = vmatpush1.msra.mxu0 0.0
    %3246 = vmatprep.subr.mxu0 0.0
    %3247 = vmatpush1.msra.mxu0 0.0
    %3248 = vmatprep.subr.mxu0 0.0
    %3249 = vmatpush1.msra.mxu0 0.0
    %3250 = vmatprep.subr.mxu0 0.0
    %3251 = vmatpush1.msra.mxu0 0.0
    %3252 = vmatprep.subr.mxu0 0.0
    %3253 = vmatpush1.msra.mxu0 0.0
    %3254 = vmatprep.subr.mxu0 0.0
    %3255 = vmatpush1.msra.mxu0 0.0
    %3256 = vmatprep.mubr.f32.mxu0 0.0
    %3257 = vmatmul.mubr.f32.gmra.mrb[0].mxu0 %v2176
    %v3258 = vpop.f32.mrb[0].mxu0
    %v3259 = vadd.f32 %v3190, %v3258
    %v3260 = vpop.f32.mrb[0].mxu0
    %3261 = vdwg.mxu0
    %s3262 = scalar_lea.vmem %s35, 64
    %v3263 = vld [vmem:[%s3262] sm:$0xff]
    %v3264 = vld [vmem:[%s3262 + $0x8] sm:$0xff]
    %v3265 = vld [vmem:[%s3262 + $0x10] sm:$0xff]
    %v3266 = vld [vmem:[%s3262 + $0x18] sm:$0xff]
    %s3267 = scalar_lea.vmem %s37, 2
    %v3268 = vld [vmem:[%s3267] sm:$0x1]
    %v3270 = vlaneseq
    %v3271 = vshrl.u32 %v3270, 7
    %v3272 = vsub.s32 0, %v3271
    %v3273 = vrot.slane %v3268, %v3272
    %3275 = vmatprep.subr.mxu0 0.0
    %3276 = vmatpush1.msra.mxu0 %v3263
    %3277 = vmatprep.subr.mxu0 0.0
    %3278 = vmatpush1.msra.mxu0 %v3264
    %3279 = vmatprep.subr.mxu0 0.0
    %3280 = vmatpush1.msra.mxu0 %v3265
    %3281 = vmatprep.subr.mxu0 0.0
    %3282 = vmatpush1.msra.mxu0 %v3266
    %3283 = vmatprep.subr.mxu0 0.0
    %3284 = vmatpush1.msra.mxu0 0.0
    %3285 = vmatprep.subr.mxu0 0.0
    %3286 = vmatpush1.msra.mxu0 0.0
    %3287 = vmatprep.subr.mxu0 0.0
    %3288 = vmatpush1.msra.mxu0 0.0
    %3289 = vmatprep.subr.mxu0 0.0
    %3290 = vmatpush1.msra.mxu0 0.0
    %3291 = vmatprep.subr.mxu0 0.0
    %3292 = vmatpush1.msra.mxu0 0.0
    %3293 = vmatprep.subr.mxu0 0.0
    %3294 = vmatpush1.msra.mxu0 0.0
    %3295 = vmatprep.subr.mxu0 0.0
    %3296 = vmatpush1.msra.mxu0 0.0
    %3297 = vmatprep.subr.mxu0 0.0
    %3298 = vmatpush1.msra.mxu0 0.0
    %3299 = vmatprep.subr.mxu0 0.0
    %3300 = vmatpush1.msra.mxu0 0.0
    %3301 = vmatprep.subr.mxu0 0.0
    %3302 = vmatpush1.msra.mxu0 0.0
    %3303 = vmatprep.subr.mxu0 0.0
    %3304 = vmatpush1.msra.mxu0 0.0
    %3305 = vmatprep.subr.mxu0 0.0
    %3306 = vmatpush1.msra.mxu0 0.0
    %3307 = vmatprep.subr.mxu0 0.0
    %3308 = vmatpush1.msra.mxu0 0.0
    %3309 = vmatprep.subr.mxu0 0.0
    %3310 = vmatpush1.msra.mxu0 0.0
    %3311 = vmatprep.subr.mxu0 0.0
    %3312 = vmatpush1.msra.mxu0 0.0
    %3313 = vmatprep.subr.mxu0 0.0
    %3314 = vmatpush1.msra.mxu0 0.0
    %3315 = vmatprep.subr.mxu0 0.0
    %3316 = vmatpush1.msra.mxu0 0.0
    %3317 = vmatprep.subr.mxu0 0.0
    %3318 = vmatpush1.msra.mxu0 0.0
    %3319 = vmatprep.subr.mxu0 0.0
    %3320 = vmatpush1.msra.mxu0 0.0
    %3321 = vmatprep.subr.mxu0 0.0
    %3322 = vmatpush1.msra.mxu0 0.0
    %3323 = vmatprep.subr.mxu0 0.0
    %3324 = vmatpush1.msra.mxu0 0.0
    %3325 = vmatprep.subr.mxu0 0.0
    %3326 = vmatpush1.msra.mxu0 0.0
    %3327 = vmatprep.subr.mxu0 0.0
    %3328 = vmatpush1.msra.mxu0 0.0
    %3329 = vmatprep.subr.mxu0 0.0
    %3330 = vmatpush1.msra.mxu0 0.0
    %3331 = vmatprep.subr.mxu0 0.0
    %3332 = vmatpush1.msra.mxu0 0.0
    %3333 = vmatprep.subr.mxu0 0.0
    %3334 = vmatpush1.msra.mxu0 0.0
    %3335 = vmatprep.subr.mxu0 0.0
    %3336 = vmatpush1.msra.mxu0 0.0
    %3337 = vmatprep.subr.mxu0 0.0
    %3338 = vmatpush1.msra.mxu0 0.0
    %3339 = vmatprep.mubr.f32.mxu0 0.0
    %3340 = vmatmul.mubr.f32.gmra.mrb[0].mxu0 %v2260
    %v3341 = vpop.f32.mrb[0].mxu0
    %v3342 = vadd.f32 %v3273, %v3341
    %v3343 = vpop.f32.mrb[0].mxu0
    %3344 = vmatprep.mubr.f32.mxu0 0.0
    %3345 = vmatmul.mubr.f32.gmra.mrb[0].mxu0 %v2263
    %v3346 = vpop.f32.mrb[0].mxu0
    %v3347 = vadd.f32 %v3273, %v3346
    %v3348 = vpop.f32.mrb[0].mxu0
    %3349 = vdwg.mxu0
    %s3350 = scalar_lea.vmem %s39, 64
    %v3351 = vld [vmem:[%s3350] sm:$0xff]
    %v3352 = vld [vmem:[%s3350 + $0x8] sm:$0xff]
    %v3353 = vld [vmem:[%s3350 + $0x10] sm:$0xff]
    %v3354 = vld [vmem:[%s3350 + $0x18] sm:$0xff]
    %s3355 = scalar_lea.vmem %s41, 2
    %v3356 = vld [vmem:[%s3355] sm:$0x1]
    %v3358 = vlaneseq
    %v3359 = vshrl.u32 %v3358, 7
    %v3360 = vsub.s32 0, %v3359
    %v3361 = vrot.slane %v3356, %v3360
    %3363 = vmatprep.subr.mxu0 0.0
    %3364 = vmatpush1.msra.mxu0 %v3351
    %3365 = vmatprep.subr.mxu0 0.0
    %3366 = vmatpush1.msra.mxu0 %v3352
    %3367 = vmatprep.subr.mxu0 0.0
    %3368 = vmatpush1.msra.mxu0 %v3353
    %3369 = vmatprep.subr.mxu0 0.0
    %3370 = vmatpush1.msra.mxu0 %v3354
    %3371 = vmatprep.subr.mxu0 0.0
    %3372 = vmatpush1.msra.mxu0 0.0
    %3373 = vmatprep.subr.mxu0 0.0
    %3374 = vmatpush1.msra.mxu0 0.0
    %3375 = vmatprep.subr.mxu0 0.0
    %3376 = vmatpush1.msra.mxu0 0.0
    %3377 = vmatprep.subr.mxu0 0.0
    %3378 = vmatpush1.msra.mxu0 0.0
    %3379 = vmatprep.subr.mxu0 0.0
    %3380 = vmatpush1.msra.mxu0 0.0
    %3381 = vmatprep.subr.mxu0 0.0
    %3382 = vmatpush1.msra.mxu0 0.0
    %3383 = vmatprep.subr.mxu0 0.0
    %3384 = vmatpush1.msra.mxu0 0.0
    %3385 = vmatprep.subr.mxu0 0.0
    %3386 = vmatpush1.msra.mxu0 0.0
    %3387 = vmatprep.subr.mxu0 0.0
    %3388 = vmatpush1.msra.mxu0 0.0
    %3389 = vmatprep.subr.mxu0 0.0
    %3390 = vmatpush1.msra.mxu0 0.0
    %3391 = vmatprep.subr.mxu0 0.0
    %3392 = vmatpush1.msra.mxu0 0.0
    %3393 = vmatprep.subr.mxu0 0.0
    %3394 = vmatpush1.msra.mxu0 0.0
    %3395 = vmatprep.subr.mxu0 0.0
    %3396 = vmatpush1.msra.mxu0 0.0
    %3397 = vmatprep.subr.mxu0 0.0
    %3398 = vmatpush1.msra.mxu0 0.0
    %3399 = vmatprep.subr.mxu0 0.0
    %3400 = vmatpush1.msra.mxu0 0.0
    %3401 = vmatprep.subr.mxu0 0.0
    %3402 = vmatpush1.msra.mxu0 0.0
    %3403 = vmatprep.subr.mxu0 0.0
    %3404 = vmatpush1.msra.mxu0 0.0
    %3405 = vmatprep.subr.mxu0 0.0
    %3406 = vmatpush1.msra.mxu0 0.0
    %3407 = vmatprep.subr.mxu0 0.0
    %3408 = vmatpush1.msra.mxu0 0.0
    %3409 = vmatprep.subr.mxu0 0.0
    %3410 = vmatpush1.msra.mxu0 0.0
    %3411 = vmatprep.subr.mxu0 0.0
    %3412 = vmatpush1.msra.mxu0 0.0
    %3413 = vmatprep.subr.mxu0 0.0
    %3414 = vmatpush1.msra.mxu0 0.0
    %3415 = vmatprep.subr.mxu0 0.0
    %3416 = vmatpush1.msra.mxu0 0.0
    %3417 = vmatprep.subr.mxu0 0.0
    %3418 = vmatpush1.msra.mxu0 0.0
    %3419 = vmatprep.subr.mxu0 0.0
    %3420 = vmatpush1.msra.mxu0 0.0
    %3421 = vmatprep.subr.mxu0 0.0
    %3422 = vmatpush1.msra.mxu0 0.0
    %3423 = vmatprep.subr.mxu0 0.0
    %3424 = vmatpush1.msra.mxu0 0.0
    %3425 = vmatprep.subr.mxu0 0.0
    %3426 = vmatpush1.msra.mxu0 0.0
    %3427 = vmatprep.mubr.f32.mxu0 0.0
    %3428 = vmatmul.mubr.f32.gmra.mrb[0].mxu0 %v2260
    %v3429 = vpop.f32.mrb[0].mxu0
    %v3430 = vadd.f32 %v3361, %v3429
    %v3431 = vpop.f32.mrb[0].mxu0
    %3432 = vmatprep.mubr.f32.mxu0 0.0
    %3433 = vmatmul.mubr.f32.gmra.mrb[0].mxu0 %v2263
    %v3434 = vpop.f32.mrb[0].mxu0
    %v3435 = vadd.f32 %v3361, %v3434
    %v3436 = vpop.f32.mrb[0].mxu0
    %3437 = vdwg.mxu0
    %s3438 = scalar_lea.vmem %s69, 32
    %3439 = vst.msk [vmem:[%s3438] sm:$0xff] %vm425, %v3342
    %3440 = vst.msk [vmem:[%s3438 + $0x8] sm:$0x3] %vm2427, %v3347
    %s3441 = scalar_lea.vmem %s71, 32
    %3442 = vst.msk [vmem:[%s3441] sm:$0xff] %vm425, %v3430
    %3443 = vst.msk [vmem:[%s3441 + $0x8] sm:$0x3] %vm2427, %v3435
    %v3445 = vsel %vm425, %v3259, 0
    %v3448 = vsel %vm425, %v3342, 0
    %v3451 = vsel %vm425, %v3347, 0
    %3453 = vmatprep.subr.mxu0 0.0
    %3454 = vmatpush1.xpose.msra.mxu0 %v3448
    %3455 = vmatprep.subr.mxu0 0.0
    %3456 = vmatpush1.xpose.msra.mxu0 %v3451
    %3457 = vmatprep.subr.mxu0 0.0
    %3458 = vmatpush1.xpose.msra.mxu0 0.0
    %3459 = vmatprep.subr.mxu0 0.0
    %3460 = vmatpush1.xpose.msra.mxu0 0.0
    %3461 = vmatprep.subr.mxu0 0.0
    %3462 = vmatpush1.xpose.msra.mxu0 0.0
    %3463 = vmatprep.subr.mxu0 0.0
    %3464 = vmatpush1.xpose.msra.mxu0 0.0
    %3465 = vmatprep.subr.mxu0 0.0
    %3466 = vmatpush1.xpose.msra.mxu0 0.0
    %3467 = vmatprep.subr.mxu0 0.0
    %3468 = vmatpush1.xpose.msra.mxu0 0.0
    %3469 = vmatprep.subr.mxu0 0.0
    %3470 = vmatpush1.xpose.msra.mxu0 0.0
    %3471 = vmatprep.subr.mxu0 0.0
    %3472 = vmatpush1.xpose.msra.mxu0 0.0
    %3473 = vmatprep.subr.mxu0 0.0
    %3474 = vmatpush1.xpose.msra.mxu0 0.0
    %3475 = vmatprep.subr.mxu0 0.0
    %3476 = vmatpush1.xpose.msra.mxu0 0.0
    %3477 = vmatprep.subr.mxu0 0.0
    %3478 = vmatpush1.xpose.msra.mxu0 0.0
    %3479 = vmatprep.subr.mxu0 0.0
    %3480 = vmatpush1.xpose.msra.mxu0 0.0
    %3481 = vmatprep.subr.mxu0 0.0
    %3482 = vmatpush1.xpose.msra.mxu0 0.0
    %3483 = vmatprep.subr.mxu0 0.0
    %3484 = vmatpush1.xpose.msra.mxu0 0.0
    %3485 = vmatprep.subr.mxu0 0.0
    %3486 = vmatpush1.xpose.msra.mxu0 0.0
    %3487 = vmatprep.subr.mxu0 0.0
    %3488 = vmatpush1.xpose.msra.mxu0 0.0
    %3489 = vmatprep.subr.mxu0 0.0
    %3490 = vmatpush1.xpose.msra.mxu0 0.0
    %3491 = vmatprep.subr.mxu0 0.0
    %3492 = vmatpush1.xpose.msra.mxu0 0.0
    %3493 = vmatprep.subr.mxu0 0.0
    %3494 = vmatpush1.xpose.msra.mxu0 0.0
    %3495 = vmatprep.subr.mxu0 0.0
    %3496 = vmatpush1.xpose.msra.mxu0 0.0
    %3497 = vmatprep.subr.mxu0 0.0
    %3498 = vmatpush1.xpose.msra.mxu0 0.0
    %3499 = vmatprep.subr.mxu0 0.0
    %3500 = vmatpush1.xpose.msra.mxu0 0.0
    %3501 = vmatprep.subr.mxu0 0.0
    %3502 = vmatpush1.xpose.msra.mxu0 0.0
    %3503 = vmatprep.subr.mxu0 0.0
    %3504 = vmatpush1.xpose.msra.mxu0 0.0
    %3505 = vmatprep.subr.mxu0 0.0
    %3506 = vmatpush1.xpose.msra.mxu0 0.0
    %3507 = vmatprep.subr.mxu0 0.0
    %3508 = vmatpush1.xpose.msra.mxu0 0.0
    %3509 = vmatprep.subr.mxu0 0.0
    %3510 = vmatpush1.xpose.msra.mxu0 0.0
    %3511 = vmatprep.subr.mxu0 0.0
    %3512 = vmatpush1.xpose.msra.mxu0 0.0
    %3513 = vmatprep.subr.mxu0 0.0
    %3514 = vmatpush1.xpose.msra.mxu0 0.0
    %3515 = vmatprep.subr.mxu0 0.0
    %3516 = vmatpush1.xpose.msra.mxu0 0.0
    %3517 = vmatprep.mubr.f32.mxu0 0.0
    %3518 = vmatmul.mubr.f32.gmra.mrb[0].mxu0 %v3445
    %v3519 = vpop.f32.mrb[0].mxu0
    %v3520 = vadd.f32 %v177, %v3519
    %v3521 = vpop.f32.mrb[0].mxu0
    %3522 = vdwg.mxu0
    %v3523 = vsel %vm2510, %v3520, -inf
    %3524 = vmax.xlane.f32.xlu0 %v3523
    %v3525 = vpop.xlane.xlu0 %3524
    %v3526 = vsub.f32 %v3520, %v3525
    %v3527 = vmul.f32 %v3526, 1.442695
    %v3528 = vpow.pop %v3527
    %v3529 = vsel %vm2510, %v3528, 0.0
    %3530 = vadd.xlane.f32.xlu0 %v3529
    %v3531 = vpop.xlane.xlu0 %3530
    %v3532 = vrcp.pop %v3531
    %v3533 = vmul.f32 %v3528, %v3532
    %v3535 = vsel %vm2510, %v3533, 0
    %v3538 = vsel %vm2525, %v3435, 0
    %3540 = vmatprep.subr.mxu0 0.0
    %3541 = vmatpush1.msra.mxu0 %v3430
    %3542 = vmatprep.subr.mxu0 0.0
    %3543 = vmatpush1.msra.mxu0 %v3538
    %3544 = vmatprep.subr.mxu0 0.0
    %3545 = vmatpush1.msra.mxu0 0.0
    %3546 = vmatprep.subr.mxu0 0.0
    %3547 = vmatpush1.msra.mxu0 0.0
    %3548 = vmatprep.subr.mxu0 0.0
    %3549 = vmatpush1.msra.mxu0 0.0
    %3550 = vmatprep.subr.mxu0 0.0
    %3551 = vmatpush1.msra.mxu0 0.0
    %3552 = vmatprep.subr.mxu0 0.0
    %3553 = vmatpush1.msra.mxu0 0.0
    %3554 = vmatprep.subr.mxu0 0.0
    %3555 = vmatpush1.msra.mxu0 0.0
    %3556 = vmatprep.subr.mxu0 0.0
    %3557 = vmatpush1.msra.mxu0 0.0
    %3558 = vmatprep.subr.mxu0 0.0
    %3559 = vmatpush1.msra.mxu0 0.0
    %3560 = vmatprep.subr.mxu0 0.0
    %3561 = vmatpush1.msra.mxu0 0.0
    %3562 = vmatprep.subr.mxu0 0.0
    %3563 = vmatpush1.msra.mxu0 0.0
    %3564 = vmatprep.subr.mxu0 0.0
    %3565 = vmatpush1.msra.mxu0 0.0
    %3566 = vmatprep.subr.mxu0 0.0
    %3567 = vmatpush1.msra.mxu0 0.0
    %3568 = vmatprep.subr.mxu0 0.0
    %3569 = vmatpush1.msra.mxu0 0.0
    %3570 = vmatprep.subr.mxu0 0.0
    %3571 = vmatpush1.msra.mxu0 0.0
    %3572 = vmatprep.subr.mxu0 0.0
    %3573 = vmatpush1.msra.mxu0 0.0
    %3574 = vmatprep.subr.mxu0 0.0
    %3575 = vmatpush1.msra.mxu0 0.0
    %3576 = vmatprep.subr.mxu0 0.0
    %3577 = vmatpush1.msra.mxu0 0.0
    %3578 = vmatprep.subr.mxu0 0.0
    %3579 = vmatpush1.msra.mxu0 0.0
    %3580 = vmatprep.subr.mxu0 0.0
    %3581 = vmatpush1.msra.mxu0 0.0
    %3582 = vmatprep.subr.mxu0 0.0
    %3583 = vmatpush1.msra.mxu0 0.0
    %3584 = vmatprep.subr.mxu0 0.0
    %3585 = vmatpush1.msra.mxu0 0.0
    %3586 = vmatprep.subr.mxu0 0.0
    %3587 = vmatpush1.msra.mxu0 0.0
    %3588 = vmatprep.subr.mxu0 0.0
    %3589 = vmatpush1.msra.mxu0 0.0
    %3590 = vmatprep.subr.mxu0 0.0
    %3591 = vmatpush1.msra.mxu0 0.0
    %3592 = vmatprep.subr.mxu0 0.0
    %3593 = vmatpush1.msra.mxu0 0.0
    %3594 = vmatprep.subr.mxu0 0.0
    %3595 = vmatpush1.msra.mxu0 0.0
    %3596 = vmatprep.subr.mxu0 0.0
    %3597 = vmatpush1.msra.mxu0 0.0
    %3598 = vmatprep.subr.mxu0 0.0
    %3599 = vmatpush1.msra.mxu0 0.0
    %3600 = vmatprep.subr.mxu0 0.0
    %3601 = vmatpush1.msra.mxu0 0.0
    %3602 = vmatprep.subr.mxu0 0.0
    %3603 = vmatpush1.msra.mxu0 0.0
    %3604 = vmatprep.mubr.f32.mxu0 0.0
    %3605 = vmatmul.mubr.f32.gmra.mrb[0].mxu0 %v3535
    %v3606 = vpop.f32.mrb[0].mxu0
    %v3607 = vadd.f32 0.0, %v3606
    %v3608 = vpop.f32.mrb[0].mxu0
    %3609 = vdwg.mxu0
    %s3610 = scalar_lea.vmem %s43, 16
    %v3611 = vld [vmem:[%s3610] sm:$0xff]
    %v3613 = vsel %vm425, %v3607, 0
    %3615 = vmatprep.subr.mxu0 0.0
    %3616 = vmatpush1.msra.mxu0 %v3611
    %3617 = vmatprep.subr.mxu0 0.0
    %3618 = vmatpush1.msra.mxu0 0.0
    %3619 = vmatprep.subr.mxu0 0.0
    %3620 = vmatpush1.msra.mxu0 0.0
    %3621 = vmatprep.subr.mxu0 0.0
    %3622 = vmatpush1.msra.mxu0 0.0
    %3623 = vmatprep.subr.mxu0 0.0
    %3624 = vmatpush1.msra.mxu0 0.0
    %3625 = vmatprep.subr.mxu0 0.0
    %3626 = vmatpush1.msra.mxu0 0.0
    %3627 = vmatprep.subr.mxu0 0.0
    %3628 = vmatpush1.msra.mxu0 0.0
    %3629 = vmatprep.subr.mxu0 0.0
    %3630 = vmatpush1.msra.mxu0 0.0
    %3631 = vmatprep.subr.mxu0 0.0
    %3632 = vmatpush1.msra.mxu0 0.0
    %3633 = vmatprep.subr.mxu0 0.0
    %3634 = vmatpush1.msra.mxu0 0.0
    %3635 = vmatprep.subr.mxu0 0.0
    %3636 = vmatpush1.msra.mxu0 0.0
    %3637 = vmatprep.subr.mxu0 0.0
    %3638 = vmatpush1.msra.mxu0 0.0
    %3639 = vmatprep.subr.mxu0 0.0
    %3640 = vmatpush1.msra.mxu0 0.0
    %3641 = vmatprep.subr.mxu0 0.0
    %3642 = vmatpush1.msra.mxu0 0.0
    %3643 = vmatprep.subr.mxu0 0.0
    %3644 = vmatpush1.msra.mxu0 0.0
    %3645 = vmatprep.subr.mxu0 0.0
    %3646 = vmatpush1.msra.mxu0 0.0
    %3647 = vmatprep.subr.mxu0 0.0
    %3648 = vmatpush1.msra.mxu0 0.0
    %3649 = vmatprep.subr.mxu0 0.0
    %3650 = vmatpush1.msra.mxu0 0.0
    %3651 = vmatprep.subr.mxu0 0.0
    %3652 = vmatpush1.msra.mxu0 0.0
    %3653 = vmatprep.subr.mxu0 0.0
    %3654 = vmatpush1.msra.mxu0 0.0
    %3655 = vmatprep.subr.mxu0 0.0
    %3656 = vmatpush1.msra.mxu0 0.0
    %3657 = vmatprep.subr.mxu0 0.0
    %3658 = vmatpush1.msra.mxu0 0.0
    %3659 = vmatprep.subr.mxu0 0.0
    %3660 = vmatpush1.msra.mxu0 0.0
    %3661 = vmatprep.subr.mxu0 0.0
    %3662 = vmatpush1.msra.mxu0 0.0
    %3663 = vmatprep.subr.mxu0 0.0
    %3664 = vmatpush1.msra.mxu0 0.0
    %3665 = vmatprep.subr.mxu0 0.0
    %3666 = vmatpush1.msra.mxu0 0.0
    %3667 = vmatprep.subr.mxu0 0.0
    %3668 = vmatpush1.msra.mxu0 0.0
    %3669 = vmatprep.subr.mxu0 0.0
    %3670 = vmatpush1.msra.mxu0 0.0
    %3671 = vmatprep.subr.mxu0 0.0
    %3672 = vmatpush1.msra.mxu0 0.0
    %3673 = vmatprep.subr.mxu0 0.0
    %3674 = vmatpush1.msra.mxu0 0.0
    %3675 = vmatprep.subr.mxu0 0.0
    %3676 = vmatpush1.msra.mxu0 0.0
    %3677 = vmatprep.subr.mxu0 0.0
    %3678 = vmatpush1.msra.mxu0 0.0
    %3679 = vmatprep.mubr.f32.mxu0 0.0
    %3680 = vmatmul.mubr.f32.gmra.mrb[0].mxu0 %v3613
    %v3681 = vpop.f32.mrb[0].mxu0
    %v3682 = vadd.f32 0.0, %v3681
    %v3683 = vpop.f32.mrb[0].mxu0
    %3684 = vdwg.mxu0
    %v3685 = vadd.f32 %v3176, %v3682
    %s3686 = scalar_lea.vmem %s31, 96
    %v3687 = vld [vmem:[%s3686] sm:$0xff]
    %v3688 = vld [vmem:[%s3686 + $0x8] sm:$0xff]
    %v3689 = vld [vmem:[%s3686 + $0x10] sm:$0xff]
    %v3690 = vld [vmem:[%s3686 + $0x18] sm:$0xff]
    %s3691 = scalar_lea.vmem %s33, 3
    %v3692 = vld [vmem:[%s3691] sm:$0x1]
    %v3694 = vlaneseq
    %v3695 = vshrl.u32 %v3694, 7
    %v3696 = vsub.s32 0, %v3695
    %v3697 = vrot.slane %v3692, %v3696
    %3699 = vmatprep.subr.mxu0 0.0
    %3700 = vmatpush1.msra.mxu0 %v3687
    %3701 = vmatprep.subr.mxu0 0.0
    %3702 = vmatpush1.msra.mxu0 %v3688
    %3703 = vmatprep.subr.mxu0 0.0
    %3704 = vmatpush1.msra.mxu0 %v3689
    %3705 = vmatprep.subr.mxu0 0.0
    %3706 = vmatpush1.msra.mxu0 %v3690
    %3707 = vmatprep.subr.mxu0 0.0
    %3708 = vmatpush1.msra.mxu0 0.0
    %3709 = vmatprep.subr.mxu0 0.0
    %3710 = vmatpush1.msra.mxu0 0.0
    %3711 = vmatprep.subr.mxu0 0.0
    %3712 = vmatpush1.msra.mxu0 0.0
    %3713 = vmatprep.subr.mxu0 0.0
    %3714 = vmatpush1.msra.mxu0 0.0
    %3715 = vmatprep.subr.mxu0 0.0
    %3716 = vmatpush1.msra.mxu0 0.0
    %3717 = vmatprep.subr.mxu0 0.0
    %3718 = vmatpush1.msra.mxu0 0.0
    %3719 = vmatprep.subr.mxu0 0.0
    %3720 = vmatpush1.msra.mxu0 0.0
    %3721 = vmatprep.subr.mxu0 0.0
    %3722 = vmatpush1.msra.mxu0 0.0
    %3723 = vmatprep.subr.mxu0 0.0
    %3724 = vmatpush1.msra.mxu0 0.0
    %3725 = vmatprep.subr.mxu0 0.0
    %3726 = vmatpush1.msra.mxu0 0.0
    %3727 = vmatprep.subr.mxu0 0.0
    %3728 = vmatpush1.msra.mxu0 0.0
    %3729 = vmatprep.subr.mxu0 0.0
    %3730 = vmatpush1.msra.mxu0 0.0
    %3731 = vmatprep.subr.mxu0 0.0
    %3732 = vmatpush1.msra.mxu0 0.0
    %3733 = vmatprep.subr.mxu0 0.0
    %3734 = vmatpush1.msra.mxu0 0.0
    %3735 = vmatprep.subr.mxu0 0.0
    %3736 = vmatpush1.msra.mxu0 0.0
    %3737 = vmatprep.subr.mxu0 0.0
    %3738 = vmatpush1.msra.mxu0 0.0
    %3739 = vmatprep.subr.mxu0 0.0
    %3740 = vmatpush1.msra.mxu0 0.0
    %3741 = vmatprep.subr.mxu0 0.0
    %3742 = vmatpush1.msra.mxu0 0.0
    %3743 = vmatprep.subr.mxu0 0.0
    %3744 = vmatpush1.msra.mxu0 0.0
    %3745 = vmatprep.subr.mxu0 0.0
    %3746 = vmatpush1.msra.mxu0 0.0
    %3747 = vmatprep.subr.mxu0 0.0
    %3748 = vmatpush1.msra.mxu0 0.0
    %3749 = vmatprep.subr.mxu0 0.0
    %3750 = vmatpush1.msra.mxu0 0.0
    %3751 = vmatprep.subr.mxu0 0.0
    %3752 = vmatpush1.msra.mxu0 0.0
    %3753 = vmatprep.subr.mxu0 0.0
    %3754 = vmatpush1.msra.mxu0 0.0
    %3755 = vmatprep.subr.mxu0 0.0
    %3756 = vmatpush1.msra.mxu0 0.0
    %3757 = vmatprep.subr.mxu0 0.0
    %3758 = vmatpush1.msra.mxu0 0.0
    %3759 = vmatprep.subr.mxu0 0.0
    %3760 = vmatpush1.msra.mxu0 0.0
    %3761 = vmatprep.subr.mxu0 0.0
    %3762 = vmatpush1.msra.mxu0 0.0
    %3763 = vmatprep.mubr.f32.mxu0 0.0
    %3764 = vmatmul.mubr.f32.gmra.mrb[0].mxu0 %v2176
    %v3765 = vpop.f32.mrb[0].mxu0
    %v3766 = vadd.f32 %v3697, %v3765
    %v3767 = vpop.f32.mrb[0].mxu0
    %3768 = vdwg.mxu0
    %s3769 = scalar_lea.vmem %s35, 96
    %v3770 = vld [vmem:[%s3769] sm:$0xff]
    %v3771 = vld [vmem:[%s3769 + $0x8] sm:$0xff]
    %v3772 = vld [vmem:[%s3769 + $0x10] sm:$0xff]
    %v3773 = vld [vmem:[%s3769 + $0x18] sm:$0xff]
    %s3774 = scalar_lea.vmem %s37, 3
    %v3775 = vld [vmem:[%s3774] sm:$0x1]
    %v3777 = vlaneseq
    %v3778 = vshrl.u32 %v3777, 7
    %v3779 = vsub.s32 0, %v3778
    %v3780 = vrot.slane %v3775, %v3779
    %3782 = vmatprep.subr.mxu0 0.0
    %3783 = vmatpush1.msra.mxu0 %v3770
    %3784 = vmatprep.subr.mxu0 0.0
    %3785 = vmatpush1.msra.mxu0 %v3771
    %3786 = vmatprep.subr.mxu0 0.0
    %3787 = vmatpush1.msra.mxu0 %v3772
    %3788 = vmatprep.subr.mxu0 0.0
    %3789 = vmatpush1.msra.mxu0 %v3773
    %3790 = vmatprep.subr.mxu0 0.0
    %3791 = vmatpush1.msra.mxu0 0.0
    %3792 = vmatprep.subr.mxu0 0.0
    %3793 = vmatpush1.msra.mxu0 0.0
    %3794 = vmatprep.subr.mxu0 0.0
    %3795 = vmatpush1.msra.mxu0 0.0
    %3796 = vmatprep.subr.mxu0 0.0
    %3797 = vmatpush1.msra.mxu0 0.0
    %3798 = vmatprep.subr.mxu0 0.0
    %3799 = vmatpush1.msra.mxu0 0.0
    %3800 = vmatprep.subr.mxu0 0.0
    %3801 = vmatpush1.msra.mxu0 0.0
    %3802 = vmatprep.subr.mxu0 0.0
    %3803 = vmatpush1.msra.mxu0 0.0
    %3804 = vmatprep.subr.mxu0 0.0
    %3805 = vmatpush1.msra.mxu0 0.0
    %3806 = vmatprep.subr.mxu0 0.0
    %3807 = vmatpush1.msra.mxu0 0.0
    %3808 = vmatprep.subr.mxu0 0.0
    %3809 = vmatpush1.msra.mxu0 0.0
    %3810 = vmatprep.subr.mxu0 0.0
    %3811 = vmatpush1.msra.mxu0 0.0
    %3812 = vmatprep.subr.mxu0 0.0
    %3813 = vmatpush1.msra.mxu0 0.0
    %3814 = vmatprep.subr.mxu0 0.0
    %3815 = vmatpush1.msra.mxu0 0.0
    %3816 = vmatprep.subr.mxu0 0.0
    %3817 = vmatpush1.msra.mxu0 0.0
    %3818 = vmatprep.subr.mxu0 0.0
    %3819 = vmatpush1.msra.mxu0 0.0
    %3820 = vmatprep.subr.mxu0 0.0
    %3821 = vmatpush1.msra.mxu0 0.0
    %3822 = vmatprep.subr.mxu0 0.0
    %3823 = vmatpush1.msra.mxu0 0.0
    %3824 = vmatprep.subr.mxu0 0.0
    %3825 = vmatpush1.msra.mxu0 0.0
    %3826 = vmatprep.subr.mxu0 0.0
    %3827 = vmatpush1.msra.mxu0 0.0
    %3828 = vmatprep.subr.mxu0 0.0
    %3829 = vmatpush1.msra.mxu0 0.0
    %3830 = vmatprep.subr.mxu0 0.0
    %3831 = vmatpush1.msra.mxu0 0.0
    %3832 = vmatprep.subr.mxu0 0.0
    %3833 = vmatpush1.msra.mxu0 0.0
    %3834 = vmatprep.subr.mxu0 0.0
    %3835 = vmatpush1.msra.mxu0 0.0
    %3836 = vmatprep.subr.mxu0 0.0
    %3837 = vmatpush1.msra.mxu0 0.0
    %3838 = vmatprep.subr.mxu0 0.0
    %3839 = vmatpush1.msra.mxu0 0.0
    %3840 = vmatprep.subr.mxu0 0.0
    %3841 = vmatpush1.msra.mxu0 0.0
    %3842 = vmatprep.subr.mxu0 0.0
    %3843 = vmatpush1.msra.mxu0 0.0
    %3844 = vmatprep.subr.mxu0 0.0
    %3845 = vmatpush1.msra.mxu0 0.0
    %3846 = vmatprep.mubr.f32.mxu0 0.0
    %3847 = vmatmul.mubr.f32.gmra.mrb[0].mxu0 %v2260
    %v3848 = vpop.f32.mrb[0].mxu0
    %v3849 = vadd.f32 %v3780, %v3848
    %v3850 = vpop.f32.mrb[0].mxu0
    %3851 = vmatprep.mubr.f32.mxu0 0.0
    %3852 = vmatmul.mubr.f32.gmra.mrb[0].mxu0 %v2263
    %v3853 = vpop.f32.mrb[0].mxu0
    %v3854 = vadd.f32 %v3780, %v3853
    %v3855 = vpop.f32.mrb[0].mxu0
    %3856 = vdwg.mxu0
    %s3857 = scalar_lea.vmem %s39, 96
    %v3858 = vld [vmem:[%s3857] sm:$0xff]
    %v3859 = vld [vmem:[%s3857 + $0x8] sm:$0xff]
    %v3860 = vld [vmem:[%s3857 + $0x10] sm:$0xff]
    %v3861 = vld [vmem:[%s3857 + $0x18] sm:$0xff]
    %s3862 = scalar_lea.vmem %s41, 3
    %v3863 = vld [vmem:[%s3862] sm:$0x1]
    %v3865 = vlaneseq
    %v3866 = vshrl.u32 %v3865, 7
    %v3867 = vsub.s32 0, %v3866
    %v3868 = vrot.slane %v3863, %v3867
    %3870 = vmatprep.subr.mxu0 0.0
    %3871 = vmatpush1.msra.mxu0 %v3858
    %3872 = vmatprep.subr.mxu0 0.0
    %3873 = vmatpush1.msra.mxu0 %v3859
    %3874 = vmatprep.subr.mxu0 0.0
    %3875 = vmatpush1.msra.mxu0 %v3860
    %3876 = vmatprep.subr.mxu0 0.0
    %3877 = vmatpush1.msra.mxu0 %v3861
    %3878 = vmatprep.subr.mxu0 0.0
    %3879 = vmatpush1.msra.mxu0 0.0
    %3880 = vmatprep.subr.mxu0 0.0
    %3881 = vmatpush1.msra.mxu0 0.0
    %3882 = vmatprep.subr.mxu0 0.0
    %3883 = vmatpush1.msra.mxu0 0.0
    %3884 = vmatprep.subr.mxu0 0.0
    %3885 = vmatpush1.msra.mxu0 0.0
    %3886 = vmatprep.subr.mxu0 0.0
    %3887 = vmatpush1.msra.mxu0 0.0
    %3888 = vmatprep.subr.mxu0 0.0
    %3889 = vmatpush1.msra.mxu0 0.0
    %3890 = vmatprep.subr.mxu0 0.0
    %3891 = vmatpush1.msra.mxu0 0.0
    %3892 = vmatprep.subr.mxu0 0.0
    %3893 = vmatpush1.msra.mxu0 0.0
    %3894 = vmatprep.subr.mxu0 0.0
    %3895 = vmatpush1.msra.mxu0 0.0
    %3896 = vmatprep.subr.mxu0 0.0
    %3897 = vmatpush1.msra.mxu0 0.0
    %3898 = vmatprep.subr.mxu0 0.0
    %3899 = vmatpush1.msra.mxu0 0.0
    %3900 = vmatprep.subr.mxu0 0.0
    %3901 = vmatpush1.msra.mxu0 0.0
    %3902 = vmatprep.subr.mxu0 0.0
    %3903 = vmatpush1.msra.mxu0 0.0
    %3904 = vmatprep.subr.mxu0 0.0
    %3905 = vmatpush1.msra.mxu0 0.0
    %3906 = vmatprep.subr.mxu0 0.0
    %3907 = vmatpush1.msra.mxu0 0.0
    %3908 = vmatprep.subr.mxu0 0.0
    %3909 = vmatpush1.msra.mxu0 0.0
    %3910 = vmatprep.subr.mxu0 0.0
    %3911 = vmatpush1.msra.mxu0 0.0
    %3912 = vmatprep.subr.mxu0 0.0
    %3913 = vmatpush1.msra.mxu0 0.0
    %3914 = vmatprep.subr.mxu0 0.0
    %3915 = vmatpush1.msra.mxu0 0.0
    %3916 = vmatprep.subr.mxu0 0.0
    %3917 = vmatpush1.msra.mxu0 0.0
    %3918 = vmatprep.subr.mxu0 0.0
    %3919 = vmatpush1.msra.mxu0 0.0
    %3920 = vmatprep.subr.mxu0 0.0
    %3921 = vmatpush1.msra.mxu0 0.0
    %3922 = vmatprep.subr.mxu0 0.0
    %3923 = vmatpush1.msra.mxu0 0.0
    %3924 = vmatprep.subr.mxu0 0.0
    %3925 = vmatpush1.msra.mxu0 0.0
    %3926 = vmatprep.subr.mxu0 0.0
    %3927 = vmatpush1.msra.mxu0 0.0
    %3928 = vmatprep.subr.mxu0 0.0
    %3929 = vmatpush1.msra.mxu0 0.0
    %3930 = vmatprep.subr.mxu0 0.0
    %3931 = vmatpush1.msra.mxu0 0.0
    %3932 = vmatprep.subr.mxu0 0.0
    %3933 = vmatpush1.msra.mxu0 0.0
    %3934 = vmatprep.mubr.f32.mxu0 0.0
    %3935 = vmatmul.mubr.f32.gmra.mrb[0].mxu0 %v2260
    %v3936 = vpop.f32.mrb[0].mxu0
    %v3937 = vadd.f32 %v3868, %v3936
    %v3938 = vpop.f32.mrb[0].mxu0
    %3939 = vmatprep.mubr.f32.mxu0 0.0
    %3940 = vmatmul.mubr.f32.gmra.mrb[0].mxu0 %v2263
    %v3941 = vpop.f32.mrb[0].mxu0
    %v3942 = vadd.f32 %v3868, %v3941
    %v3943 = vpop.f32.mrb[0].mxu0
    %3944 = vdwg.mxu0
    %s3945 = scalar_lea.vmem %s69, 48
    %3946 = vst.msk [vmem:[%s3945] sm:$0xff] %vm425, %v3849
    %3947 = vst.msk [vmem:[%s3945 + $0x8] sm:$0x3] %vm2427, %v3854
    %s3948 = scalar_lea.vmem %s71, 48
    %3949 = vst.msk [vmem:[%s3948] sm:$0xff] %vm425, %v3937
    %3950 = vst.msk [vmem:[%s3948 + $0x8] sm:$0x3] %vm2427, %v3942
    %v3952 = vsel %vm425, %v3766, 0
    %v3955 = vsel %vm425, %v3849, 0
    %v3958 = vsel %vm425, %v3854, 0
    %3960 = vmatprep.subr.mxu0 0.0
    %3961 = vmatpush1.xpose.msra.mxu0 %v3955
    %3962 = vmatprep.subr.mxu0 0.0
    %3963 = vmatpush1.xpose.msra.mxu0 %v3958
    %3964 = vmatprep.subr.mxu0 0.0
    %3965 = vmatpush1.xpose.msra.mxu0 0.0
    %3966 = vmatprep.subr.mxu0 0.0
    %3967 = vmatpush1.xpose.msra.mxu0 0.0
    %3968 = vmatprep.subr.mxu0 0.0
    %3969 = vmatpush1.xpose.msra.mxu0 0.0
    %3970 = vmatprep.subr.mxu0 0.0
    %3971 = vmatpush1.xpose.msra.mxu0 0.0
    %3972 = vmatprep.subr.mxu0 0.0
    %3973 = vmatpush1.xpose.msra.mxu0 0.0
    %3974 = vmatprep.subr.mxu0 0.0
    %3975 = vmatpush1.xpose.msra.mxu0 0.0
    %3976 = vmatprep.subr.mxu0 0.0
    %3977 = vmatpush1.xpose.msra.mxu0 0.0
    %3978 = vmatprep.subr.mxu0 0.0
    %3979 = vmatpush1.xpose.msra.mxu0 0.0
    %3980 = vmatprep.subr.mxu0 0.0
    %3981 = vmatpush1.xpose.msra.mxu0 0.0
    %3982 = vmatprep.subr.mxu0 0.0
    %3983 = vmatpush1.xpose.msra.mxu0 0.0
    %3984 = vmatprep.subr.mxu0 0.0
    %3985 = vmatpush1.xpose.msra.mxu0 0.0
    %3986 = vmatprep.subr.mxu0 0.0
    %3987 = vmatpush1.xpose.msra.mxu0 0.0
    %3988 = vmatprep.subr.mxu0 0.0
    %3989 = vmatpush1.xpose.msra.mxu0 0.0
    %3990 = vmatprep.subr.mxu0 0.0
    %3991 = vmatpush1.xpose.msra.mxu0 0.0
    %3992 = vmatprep.subr.mxu0 0.0
    %3993 = vmatpush1.xpose.msra.mxu0 0.0
    %3994 = vmatprep.subr.mxu0 0.0
    %3995 = vmatpush1.xpose.msra.mxu0 0.0
    %3996 = vmatprep.subr.mxu0 0.0
    %3997 = vmatpush1.xpose.msra.mxu0 0.0
    %3998 = vmatprep.subr.mxu0 0.0
    %3999 = vmatpush1.xpose.msra.mxu0 0.0
    %4000 = vmatprep.subr.mxu0 0.0
    %4001 = vmatpush1.xpose.msra.mxu0 0.0
    %4002 = vmatprep.subr.mxu0 0.0
    %4003 = vmatpush1.xpose.msra.mxu0 0.0
    %4004 = vmatprep.subr.mxu0 0.0
    %4005 = vmatpush1.xpose.msra.mxu0 0.0
    %4006 = vmatprep.subr.mxu0 0.0
    %4007 = vmatpush1.xpose.msra.mxu0 0.0
    %4008 = vmatprep.subr.mxu0 0.0
    %4009 = vmatpush1.xpose.msra.mxu0 0.0
    %4010 = vmatprep.subr.mxu0 0.0
    %4011 = vmatpush1.xpose.msra.mxu0 0.0
    %4012 = vmatprep.subr.mxu0 0.0
    %4013 = vmatpush1.xpose.msra.mxu0 0.0
    %4014 = vmatprep.subr.mxu0 0.0
    %4015 = vmatpush1.xpose.msra.mxu0 0.0
    %4016 = vmatprep.subr.mxu0 0.0
    %4017 = vmatpush1.xpose.msra.mxu0 0.0
    %4018 = vmatprep.subr.mxu0 0.0
    %4019 = vmatpush1.xpose.msra.mxu0 0.0
    %4020 = vmatprep.subr.mxu0 0.0
    %4021 = vmatpush1.xpose.msra.mxu0 0.0
    %4022 = vmatprep.subr.mxu0 0.0
    %4023 = vmatpush1.xpose.msra.mxu0 0.0
    %4024 = vmatprep.mubr.f32.mxu0 0.0
    %4025 = vmatmul.mubr.f32.gmra.mrb[0].mxu0 %v3952
    %v4026 = vpop.f32.mrb[0].mxu0
    %v4027 = vadd.f32 %v177, %v4026
    %v4028 = vpop.f32.mrb[0].mxu0
    %4029 = vdwg.mxu0
    %v4030 = vsel %vm2510, %v4027, -inf
    %4031 = vmax.xlane.f32.xlu0 %v4030
    %v4032 = vpop.xlane.xlu0 %4031
    %v4033 = vsub.f32 %v4027, %v4032
    %v4034 = vmul.f32 %v4033, 1.442695
    %v4035 = vpow.pop %v4034
    %v4036 = vsel %vm2510, %v4035, 0.0
    %4037 = vadd.xlane.f32.xlu0 %v4036
    %v4038 = vpop.xlane.xlu0 %4037
    %v4039 = vrcp.pop %v4038
    %v4040 = vmul.f32 %v4035, %v4039
    %v4042 = vsel %vm2510, %v4040, 0
    %v4045 = vsel %vm2525, %v3942, 0
    %4047 = vmatprep.subr.mxu0 0.0
    %4048 = vmatpush1.msra.mxu0 %v3937
    %4049 = vmatprep.subr.mxu0 0.0
    %4050 = vmatpush1.msra.mxu0 %v4045
    %4051 = vmatprep.subr.mxu0 0.0
    %4052 = vmatpush1.msra.mxu0 0.0
    %4053 = vmatprep.subr.mxu0 0.0
    %4054 = vmatpush1.msra.mxu0 0.0
    %4055 = vmatprep.subr.mxu0 0.0
    %4056 = vmatpush1.msra.mxu0 0.0
    %4057 = vmatprep.subr.mxu0 0.0
    %4058 = vmatpush1.msra.mxu0 0.0
    %4059 = vmatprep.subr.mxu0 0.0
    %4060 = vmatpush1.msra.mxu0 0.0
    %4061 = vmatprep.subr.mxu0 0.0
    %4062 = vmatpush1.msra.mxu0 0.0
    %4063 = vmatprep.subr.mxu0 0.0
    %4064 = vmatpush1.msra.mxu0 0.0
    %4065 = vmatprep.subr.mxu0 0.0
    %4066 = vmatpush1.msra.mxu0 0.0
    %4067 = vmatprep.subr.mxu0 0.0
    %4068 = vmatpush1.msra.mxu0 0.0
    %4069 = vmatprep.subr.mxu0 0.0
    %4070 = vmatpush1.msra.mxu0 0.0
    %4071 = vmatprep.subr.mxu0 0.0
    %4072 = vmatpush1.msra.mxu0 0.0
    %4073 = vmatprep.subr.mxu0 0.0
    %4074 = vmatpush1.msra.mxu0 0.0
    %4075 = vmatprep.subr.mxu0 0.0
    %4076 = vmatpush1.msra.mxu0 0.0
    %4077 = vmatprep.subr.mxu0 0.0
    %4078 = vmatpush1.msra.mxu0 0.0
    %4079 = vmatprep.subr.mxu0 0.0
    %4080 = vmatpush1.msra.mxu0 0.0
    %4081 = vmatprep.subr.mxu0 0.0
    %4082 = vmatpush1.msra.mxu0 0.0
    %4083 = vmatprep.subr.mxu0 0.0
    %4084 = vmatpush1.msra.mxu0 0.0
    %4085 = vmatprep.subr.mxu0 0.0
    %4086 = vmatpush1.msra.mxu0 0.0
    %4087 = vmatprep.subr.mxu0 0.0
    %4088 = vmatpush1.msra.mxu0 0.0
    %4089 = vmatprep.subr.mxu0 0.0
    %4090 = vmatpush1.msra.mxu0 0.0
    %4091 = vmatprep.subr.mxu0 0.0
    %4092 = vmatpush1.msra.mxu0 0.0
    %4093 = vmatprep.subr.mxu0 0.0
    %4094 = vmatpush1.msra.mxu0 0.0
    %4095 = vmatprep.subr.mxu0 0.0
    %4096 = vmatpush1.msra.mxu0 0.0
    %4097 = vmatprep.subr.mxu0 0.0
    %4098 = vmatpush1.msra.mxu0 0.0
    %4099 = vmatprep.subr.mxu0 0.0
    %4100 = vmatpush1.msra.mxu0 0.0
    %4101 = vmatprep.subr.mxu0 0.0
    %4102 = vmatpush1.msra.mxu0 0.0
    %4103 = vmatprep.subr.mxu0 0.0
    %4104 = vmatpush1.msra.mxu0 0.0
    %4105 = vmatprep.subr.mxu0 0.0
    %4106 = vmatpush1.msra.mxu0 0.0
    %4107 = vmatprep.subr.mxu0 0.0
    %4108 = vmatpush1.msra.mxu0 0.0
    %4109 = vmatprep.subr.mxu0 0.0
    %4110 = vmatpush1.msra.mxu0 0.0
    %4111 = vmatprep.mubr.f32.mxu0 0.0
    %4112 = vmatmul.mubr.f32.gmra.mrb[0].mxu0 %v4042
    %v4113 = vpop.f32.mrb[0].mxu0
    %v4114 = vadd.f32 0.0, %v4113
    %v4115 = vpop.f32.mrb[0].mxu0
    %4116 = vdwg.mxu0
    %s4117 = scalar_lea.vmem %s43, 24
    %v4118 = vld [vmem:[%s4117] sm:$0xff]
    %v4120 = vsel %vm425, %v4114, 0
    %4122 = vmatprep.subr.mxu0 0.0
    %4123 = vmatpush1.msra.mxu0 %v4118
    %4124 = vmatprep.subr.mxu0 0.0
    %4125 = vmatpush1.msra.mxu0 0.0
    %4126 = vmatprep.subr.mxu0 0.0
    %4127 = vmatpush1.msra.mxu0 0.0
    %4128 = vmatprep.subr.mxu0 0.0
    %4129 = vmatpush1.msra.mxu0 0.0
    %4130 = vmatprep.subr.mxu0 0.0
    %4131 = vmatpush1.msra.mxu0 0.0
    %4132 = vmatprep.subr.mxu0 0.0
    %4133 = vmatpush1.msra.mxu0 0.0
    %4134 = vmatprep.subr.mxu0 0.0
    %4135 = vmatpush1.msra.mxu0 0.0
    %4136 = vmatprep.subr.mxu0 0.0
    %4137 = vmatpush1.msra.mxu0 0.0
    %4138 = vmatprep.subr.mxu0 0.0
    %4139 = vmatpush1.msra.mxu0 0.0
    %4140 = vmatprep.subr.mxu0 0.0
    %4141 = vmatpush1.msra.mxu0 0.0
    %4142 = vmatprep.subr.mxu0 0.0
    %4143 = vmatpush1.msra.mxu0 0.0
    %4144 = vmatprep.subr.mxu0 0.0
    %4145 = vmatpush1.msra.mxu0 0.0
    %4146 = vmatprep.subr.mxu0 0.0
    %4147 = vmatpush1.msra.mxu0 0.0
    %4148 = vmatprep.subr.mxu0 0.0
    %4149 = vmatpush1.msra.mxu0 0.0
    %4150 = vmatprep.subr.mxu0 0.0
    %4151 = vmatpush1.msra.mxu0 0.0
    %4152 = vmatprep.subr.mxu0 0.0
    %4153 = vmatpush1.msra.mxu0 0.0
    %4154 = vmatprep.subr.mxu0 0.0
    %4155 = vmatpush1.msra.mxu0 0.0
    %4156 = vmatprep.subr.mxu0 0.0
    %4157 = vmatpush1.msra.mxu0 0.0
    %4158 = vmatprep.subr.mxu0 0.0
    %4159 = vmatpush1.msra.mxu0 0.0
    %4160 = vmatprep.subr.mxu0 0.0
    %4161 = vmatpush1.msra.mxu0 0.0
    %4162 = vmatprep.subr.mxu0 0.0
    %4163 = vmatpush1.msra.mxu0 0.0
    %4164 = vmatprep.subr.mxu0 0.0
    %4165 = vmatpush1.msra.mxu0 0.0
    %4166 = vmatprep.subr.mxu0 0.0
    %4167 = vmatpush1.msra.mxu0 0.0
    %4168 = vmatprep.subr.mxu0 0.0
    %4169 = vmatpush1.msra.mxu0 0.0
    %4170 = vmatprep.subr.mxu0 0.0
    %4171 = vmatpush1.msra.mxu0 0.0
    %4172 = vmatprep.subr.mxu0 0.0
    %4173 = vmatpush1.msra.mxu0 0.0
    %4174 = vmatprep.subr.mxu0 0.0
    %4175 = vmatpush1.msra.mxu0 0.0
    %4176 = vmatprep.subr.mxu0 0.0
    %4177 = vmatpush1.msra.mxu0 0.0
    %4178 = vmatprep.subr.mxu0 0.0
    %4179 = vmatpush1.msra.mxu0 0.0
    %4180 = vmatprep.subr.mxu0 0.0
    %4181 = vmatpush1.msra.mxu0 0.0
    %4182 = vmatprep.subr.mxu0 0.0
    %4183 = vmatpush1.msra.mxu0 0.0
    %4184 = vmatprep.subr.mxu0 0.0
    %4185 = vmatpush1.msra.mxu0 0.0
    %4186 = vmatprep.mubr.f32.mxu0 0.0
    %4187 = vmatmul.mubr.f32.gmra.mrb[0].mxu0 %v4120
    %v4188 = vpop.f32.mrb[0].mxu0
    %v4189 = vadd.f32 0.0, %v4188
    %v4190 = vpop.f32.mrb[0].mxu0
    %4191 = vdwg.mxu0
    %v4192 = vadd.f32 %v3685, %v4189
    %v4193 = vadd.f32 %v2163, %v4192
    %v4195 = vlaneseq
    %v4196 = vshrl.u32 %v4195, 7
    %v4197 = vsub.s32 0, %v4196
    %v4198 = vrot.slane %v143, %v4197
    %v4200 = vadd.f32 %v4193, %v4198
    %v4201 = vsel %vm189, %v4200, 0.0
    %4202 = vadd.xlane.f32.xlu0 %v4201
    %v4203 = vpop.xlane.xlu0 %4202
    %v4204 = vmul.f32 %v4203, %v2139
    %v4205 = vsub.f32 %v4200, %v4204
    %v4206 = vmul.f32 %v4205, %v4205
    %v4207 = vsel %vm189, %v4206, 0.0
    %4208 = vadd.xlane.f32.xlu0 %v4207
    %v4209 = vpop.xlane.xlu0 %4208
    %v4210 = vmul.f32 %v4209, %v2139
    %v4211 = vadd.f32 %v4210, 1e-05
    %v4212 = vrsqrt.pop %v4211
    %v4213 = vmul.f32 %v4205, %v4212
    %v4215 = vlaneseq
    %v4216 = vshrl.u32 %v4215, 7
    %v4217 = vsub.s32 0, %v4216
    %v4218 = vrot.slane %v146, %v4217
    %v4220 = vmul.f32 %v4213, %v4218
    %v4222 = vlaneseq
    %v4223 = vshrl.u32 %v4222, 7
    %v4224 = vsub.s32 0, %v4223
    %v4225 = vrot.slane %v147, %v4224
    %v4227 = vadd.f32 %v4220, %v4225
    %v4229 = vlaneseq
    %v4230 = vshrl.u32 %v4229, 7
    %v4231 = vsub.s32 0, %v4230
    %v4232 = vrot.slane %v154, %v4231
    %v4235 = vsel %vm189, %v4227, 0
    %4237 = vmatprep.subr.mxu0 0.0
    %4238 = vmatpush1.msra.mxu0 %v150
    %4239 = vmatprep.subr.mxu0 0.0
    %4240 = vmatpush1.msra.mxu0 %v151
    %4241 = vmatprep.subr.mxu0 0.0
    %4242 = vmatpush1.msra.mxu0 %v152
    %4243 = vmatprep.subr.mxu0 0.0
    %4244 = vmatpush1.msra.mxu0 %v153
    %4245 = vmatprep.subr.mxu0 0.0
    %4246 = vmatpush1.msra.mxu0 0.0
    %4247 = vmatprep.subr.mxu0 0.0
    %4248 = vmatpush1.msra.mxu0 0.0
    %4249 = vmatprep.subr.mxu0 0.0
    %4250 = vmatpush1.msra.mxu0 0.0
    %4251 = vmatprep.subr.mxu0 0.0
    %4252 = vmatpush1.msra.mxu0 0.0
    %4253 = vmatprep.subr.mxu0 0.0
    %4254 = vmatpush1.msra.mxu0 0.0
    %4255 = vmatprep.subr.mxu0 0.0
    %4256 = vmatpush1.msra.mxu0 0.0
    %4257 = vmatprep.subr.mxu0 0.0
    %4258 = vmatpush1.msra.mxu0 0.0
    %4259 = vmatprep.subr.mxu0 0.0
    %4260 = vmatpush1.msra.mxu0 0.0
    %4261 = vmatprep.subr.mxu0 0.0
    %4262 = vmatpush1.msra.mxu0 0.0
    %4263 = vmatprep.subr.mxu0 0.0
    %4264 = vmatpush1.msra.mxu0 0.0
    %4265 = vmatprep.subr.mxu0 0.0
    %4266 = vmatpush1.msra.mxu0 0.0
    %4267 = vmatprep.subr.mxu0 0.0
    %4268 = vmatpush1.msra.mxu0 0.0
    %4269 = vmatprep.subr.mxu0 0.0
    %4270 = vmatpush1.msra.mxu0 0.0
    %4271 = vmatprep.subr.mxu0 0.0
    %4272 = vmatpush1.msra.mxu0 0.0
    %4273 = vmatprep.subr.mxu0 0.0
    %4274 = vmatpush1.msra.mxu0 0.0
    %4275 = vmatprep.subr.mxu0 0.0
    %4276 = vmatpush1.msra.mxu0 0.0
    %4277 = vmatprep.subr.mxu0 0.0
    %4278 = vmatpush1.msra.mxu0 0.0
    %4279 = vmatprep.subr.mxu0 0.0
    %4280 = vmatpush1.msra.mxu0 0.0
    %4281 = vmatprep.subr.mxu0 0.0
    %4282 = vmatpush1.msra.mxu0 0.0
    %4283 = vmatprep.subr.mxu0 0.0
    %4284 = vmatpush1.msra.mxu0 0.0
    %4285 = vmatprep.subr.mxu0 0.0
    %4286 = vmatpush1.msra.mxu0 0.0
    %4287 = vmatprep.subr.mxu0 0.0
    %4288 = vmatpush1.msra.mxu0 0.0
    %4289 = vmatprep.subr.mxu0 0.0
    %4290 = vmatpush1.msra.mxu0 0.0
    %4291 = vmatprep.subr.mxu0 0.0
    %4292 = vmatpush1.msra.mxu0 0.0
    %4293 = vmatprep.subr.mxu0 0.0
    %4294 = vmatpush1.msra.mxu0 0.0
    %4295 = vmatprep.subr.mxu0 0.0
    %4296 = vmatpush1.msra.mxu0 0.0
    %4297 = vmatprep.subr.mxu0 0.0
    %4298 = vmatpush1.msra.mxu0 0.0
    %4299 = vmatprep.subr.mxu0 0.0
    %4300 = vmatpush1.msra.mxu0 0.0
    %4301 = vmatprep.mubr.f32.mxu0 0.0
    %4302 = vmatmul.mubr.f32.gmra.mrb[0].mxu0 %v4235
    %v4303 = vpop.f32.mrb[0].mxu0
    %v4304 = vadd.f32 %v4232, %v4303
    %v4305 = vpop.f32.mrb[0].mxu0
    %4306 = vdwg.mxu0
    %v4307 = vmul.f32 %v4304, 0.5
    %v4308 = vmul.f32 %v4304, 0.70710677
    %v4309 = vand.u32 2147483647, %v4308
    %v4310 = vmul.f32 %v4309, 0.3275911
    %v4311 = vadd.f32 %v4310, 1.0
    %v4312 = vrcp.pop %v4311
    %v4313 = vmul.f32 1.0, %v4312
    %v4314 = vmul.f32 %v4313, 1.0614054
    %v4315 = vadd.f32 %v4314, -1.4531521
    %v4316 = vmul.f32 %v4315, %v4313
    %v4317 = vadd.f32 %v4316, 1.4214138
    %v4318 = vmul.f32 %v4317, %v4313
    %v4319 = vadd.f32 %v4318, -0.28449672
    %v4320 = vmul.f32 %v4319, %v4313
    %v4321 = vadd.f32 %v4320, 0.2548296
    %v4322 = vmul.f32 %v4321, %v4313
    %v4323 = vsub.f32 0.0, %v4309
    %v4324 = vmul.f32 %v4323, %v4309
    %v4325 = vmul.f32 %v4324, 1.442695
    %v4326 = vpow.pop %v4325
    %v4327 = vmul.f32 %v4322, %v4326
    %v4328 = vsub.f32 1.0, %v4327
    %vm4329 = vcmp.ge.f32.partialorder %v4308, 0.0
    %v4330 = vsub.f32 0.0, %v4328
    %v4331 = vsel %vm4329, %v4328, %v4330
    %v4332 = vadd.f32 %v4331, 1.0
    %v4333 = vmul.f32 %v4307, %v4332
    %v4335 = vlaneseq
    %v4336 = vshrl.u32 %v4335, 7
    %v4337 = vsub.s32 0, %v4336
    %v4338 = vrot.slane %v163, %v4337
    %vm4340 = vcmask 523264
    %v4342 = vsel %vm4340, %v4333, 0
    %4344 = vmatprep.subr.mxu0 0.0
    %4345 = vmatpush1.msra.mxu0 %v155
    %4346 = vmatprep.subr.mxu0 0.0
    %4347 = vmatpush1.msra.mxu0 %v156
    %4348 = vmatprep.subr.mxu0 0.0
    %4349 = vmatpush1.msra.mxu0 %v157
    %4350 = vmatprep.subr.mxu0 0.0
    %4351 = vmatpush1.msra.mxu0 %v158
    %4352 = vmatprep.subr.mxu0 0.0
    %4353 = vmatpush1.msra.mxu0 %v159
    %4354 = vmatprep.subr.mxu0 0.0
    %4355 = vmatpush1.msra.mxu0 %v160
    %4356 = vmatprep.subr.mxu0 0.0
    %4357 = vmatpush1.msra.mxu0 %v161
    %4358 = vmatprep.subr.mxu0 0.0
    %4359 = vmatpush1.msra.mxu0 %v162
    %4360 = vmatprep.subr.mxu0 0.0
    %4361 = vmatpush1.msra.mxu0 0.0
    %4362 = vmatprep.subr.mxu0 0.0
    %4363 = vmatpush1.msra.mxu0 0.0
    %4364 = vmatprep.subr.mxu0 0.0
    %4365 = vmatpush1.msra.mxu0 0.0
    %4366 = vmatprep.subr.mxu0 0.0
    %4367 = vmatpush1.msra.mxu0 0.0
    %4368 = vmatprep.subr.mxu0 0.0
    %4369 = vmatpush1.msra.mxu0 0.0
    %4370 = vmatprep.subr.mxu0 0.0
    %4371 = vmatpush1.msra.mxu0 0.0
    %4372 = vmatprep.subr.mxu0 0.0
    %4373 = vmatpush1.msra.mxu0 0.0
    %4374 = vmatprep.subr.mxu0 0.0
    %4375 = vmatpush1.msra.mxu0 0.0
    %4376 = vmatprep.subr.mxu0 0.0
    %4377 = vmatpush1.msra.mxu0 0.0
    %4378 = vmatprep.subr.mxu0 0.0
    %4379 = vmatpush1.msra.mxu0 0.0
    %4380 = vmatprep.subr.mxu0 0.0
    %4381 = vmatpush1.msra.mxu0 0.0
    %4382 = vmatprep.subr.mxu0 0.0
    %4383 = vmatpush1.msra.mxu0 0.0
    %4384 = vmatprep.subr.mxu0 0.0
    %4385 = vmatpush1.msra.mxu0 0.0
    %4386 = vmatprep.subr.mxu0 0.0
    %4387 = vmatpush1.msra.mxu0 0.0
    %4388 = vmatprep.subr.mxu0 0.0
    %4389 = vmatpush1.msra.mxu0 0.0
    %4390 = vmatprep.subr.mxu0 0.0
    %4391 = vmatpush1.msra.mxu0 0.0
    %4392 = vmatprep.subr.mxu0 0.0
    %4393 = vmatpush1.msra.mxu0 0.0
    %4394 = vmatprep.subr.mxu0 0.0
    %4395 = vmatpush1.msra.mxu0 0.0
    %4396 = vmatprep.subr.mxu0 0.0
    %4397 = vmatpush1.msra.mxu0 0.0
    %4398 = vmatprep.subr.mxu0 0.0
    %4399 = vmatpush1.msra.mxu0 0.0
    %4400 = vmatprep.subr.mxu0 0.0
    %4401 = vmatpush1.msra.mxu0 0.0
    %4402 = vmatprep.subr.mxu0 0.0
    %4403 = vmatpush1.msra.mxu0 0.0
    %4404 = vmatprep.subr.mxu0 0.0
    %4405 = vmatpush1.msra.mxu0 0.0
    %4406 = vmatprep.subr.mxu0 0.0
    %4407 = vmatpush1.msra.mxu0 0.0
    %4408 = vmatprep.mubr.f32.mxu0 0.0
    %4409 = vmatmul.mubr.f32.gmra.mrb[0].mxu0 %v4342
    %v4410 = vpop.f32.mrb[0].mxu0
    %v4411 = vadd.f32 %v4338, %v4410
    %v4412 = vpop.f32.mrb[0].mxu0
    %4413 = vdwg.mxu0
    %v4414 = vadd.f32 %v4227, %v4411
    %v4415 = vsel %vm189, %v4414, 0.0
    %4416 = vadd.xlane.f32.xlu0 %v4415
    %v4417 = vpop.xlane.xlu0 %4416
    %v4418 = vmul.f32 %v4417, %v2139
    %v4419 = vsub.f32 %v4414, %v4418
    %v4420 = vmul.f32 %v4419, %v4419
    %v4421 = vsel %vm189, %v4420, 0.0
    %4422 = vadd.xlane.f32.xlu0 %v4421
    %v4423 = vpop.xlane.xlu0 %4422
    %v4424 = vmul.f32 %v4423, %v2139
    %v4425 = vadd.f32 %v4424, 1e-05
    %v4426 = vrsqrt.pop %v4425
    %v4427 = vmul.f32 %v4419, %v4426
    %v4429 = vlaneseq
    %v4430 = vshrl.u32 %v4429, 7
    %v4431 = vsub.s32 0, %v4430
    %v4432 = vrot.slane %v148, %v4431
    %v4434 = vmul.f32 %v4427, %v4432
    %v4436 = vlaneseq
    %v4437 = vshrl.u32 %v4436, 7
    %v4438 = vsub.s32 0, %v4437
    %v4439 = vrot.slane %v149, %v4438
    %v4441 = vadd.f32 %v4434, %v4439
    %4442 = vst.msk [vmem:[%s63] sm:$0xff] %vm189, %v4441
    %v4443 = vld [vmem:[%s1] sm:$0xff]
    %v4444 = vld [vmem:[%s3] sm:$0xff]
    %v4445 = vld [vmem:[%s3 + $0x8] sm:$0x3]
    %v4446 = vld [vmem:[%s7 + $0x1] sm:$0x1]
    %v4447 = vlaneseq
    %v4448 = vshrl.u32 %v4447, 7
    %v4449 = vsub.s32 0, %v4448
    %v4450 = vrot.slane %v4446, %v4449
    %v4451 = vadd.f32 %v141, %v4450
    %v4452 = vld [vmem:[%s9 + $0x1] sm:$0x1]
    %v4453 = vlaneseq
    %v4454 = vshrl.u32 %v4453, 7
    %v4455 = vsub.s32 0, %v4454
    %v4456 = vrot.slane %v4452, %v4455
    %v4457 = vld [vmem:[%s11] sm:$0xff]
    %v4458 = vld [vmem:[%s11 + $0x8] sm:$0xff]
    %v4459 = vld [vmem:[%s11 + $0x10] sm:$0xff]
    %v4460 = vld [vmem:[%s11 + $0x18] sm:$0xff]
    %v4461 = vld [vmem:[%s13] sm:$0x1]
    %v4463 = vlaneseq
    %v4464 = vshrl.u32 %v4463, 7
    %v4465 = vsub.s32 0, %v4464
    %v4466 = vrot.slane %v4461, %v4465
    %4469 = vrot.lane.b32.xlu0 %v4443, 96
    %v4470 = vpop.permute.xlu0 %4469
    %v4471 = vsel %vm189, %v4470, 0
    %4473 = vmatprep.subr.mxu0 0.0
    %4474 = vmatpush1.msra.mxu0 %v4457
    %4475 = vmatprep.subr.mxu0 0.0
    %4476 = vmatpush1.msra.mxu0 %v4458
    %4477 = vmatprep.subr.mxu0 0.0
    %4478 = vmatpush1.msra.mxu0 %v4459
    %4479 = vmatprep.subr.mxu0 0.0
    %4480 = vmatpush1.msra.mxu0 %v4460
    %4481 = vmatprep.subr.mxu0 0.0
    %4482 = vmatpush1.msra.mxu0 0.0
    %4483 = vmatprep.subr.mxu0 0.0
    %4484 = vmatpush1.msra.mxu0 0.0
    %4485 = vmatprep.subr.mxu0 0.0
    %4486 = vmatpush1.msra.mxu0 0.0
    %4487 = vmatprep.subr.mxu0 0.0
    %4488 = vmatpush1.msra.mxu0 0.0
    %4489 = vmatprep.subr.mxu0 0.0
    %4490 = vmatpush1.msra.mxu0 0.0
    %4491 = vmatprep.subr.mxu0 0.0
    %4492 = vmatpush1.msra.mxu0 0.0
    %4493 = vmatprep.subr.mxu0 0.0
    %4494 = vmatpush1.msra.mxu0 0.0
    %4495 = vmatprep.subr.mxu0 0.0
    %4496 = vmatpush1.msra.mxu0 0.0
    %4497 = vmatprep.subr.mxu0 0.0
    %4498 = vmatpush1.msra.mxu0 0.0
    %4499 = vmatprep.subr.mxu0 0.0
    %4500 = vmatpush1.msra.mxu0 0.0
    %4501 = vmatprep.subr.mxu0 0.0
    %4502 = vmatpush1.msra.mxu0 0.0
    %4503 = vmatprep.subr.mxu0 0.0
    %4504 = vmatpush1.msra.mxu0 0.0
    %4505 = vmatprep.subr.mxu0 0.0
    %4506 = vmatpush1.msra.mxu0 0.0
    %4507 = vmatprep.subr.mxu0 0.0
    %4508 = vmatpush1.msra.mxu0 0.0
    %4509 = vmatprep.subr.mxu0 0.0
    %4510 = vmatpush1.msra.mxu0 0.0
    %4511 = vmatprep.subr.mxu0 0.0
    %4512 = vmatpush1.msra.mxu0 0.0
    %4513 = vmatprep.subr.mxu0 0.0
    %4514 = vmatpush1.msra.mxu0 0.0
    %4515 = vmatprep.subr.mxu0 0.0
    %4516 = vmatpush1.msra.mxu0 0.0
    %4517 = vmatprep.subr.mxu0 0.0
    %4518 = vmatpush1.msra.mxu0 0.0
    %4519 = vmatprep.subr.mxu0 0.0
    %4520 = vmatpush1.msra.mxu0 0.0
    %4521 = vmatprep.subr.mxu0 0.0
    %4522 = vmatpush1.msra.mxu0 0.0
    %4523 = vmatprep.subr.mxu0 0.0
    %4524 = vmatpush1.msra.mxu0 0.0
    %4525 = vmatprep.subr.mxu0 0.0
    %4526 = vmatpush1.msra.mxu0 0.0
    %4527 = vmatprep.subr.mxu0 0.0
    %4528 = vmatpush1.msra.mxu0 0.0
    %4529 = vmatprep.subr.mxu0 0.0
    %4530 = vmatpush1.msra.mxu0 0.0
    %4531 = vmatprep.subr.mxu0 0.0
    %4532 = vmatpush1.msra.mxu0 0.0
    %4533 = vmatprep.subr.mxu0 0.0
    %4534 = vmatpush1.msra.mxu0 0.0
    %4535 = vmatprep.subr.mxu0 0.0
    %4536 = vmatpush1.msra.mxu0 0.0
    %4537 = vmatprep.mubr.f32.mxu0 0.0
    %4538 = vmatmul.mubr.f32.gmra.mrb[0].mxu0 %v4471
    %v4539 = vpop.f32.mrb[0].mxu0
    %v4540 = vadd.f32 %v4466, %v4539
    %v4541 = vpop.f32.mrb[0].mxu0
    %4542 = vdwg.mxu0
    %v4543 = vld [vmem:[%s15] sm:$0xff]
    %v4544 = vld [vmem:[%s15 + $0x8] sm:$0xff]
    %v4545 = vld [vmem:[%s15 + $0x10] sm:$0xff]
    %v4546 = vld [vmem:[%s15 + $0x18] sm:$0xff]
    %v4547 = vld [vmem:[%s17] sm:$0x1]
    %v4549 = vlaneseq
    %v4550 = vshrl.u32 %v4549, 7
    %v4551 = vsub.s32 0, %v4550
    %v4552 = vrot.slane %v4547, %v4551
    %4554 = vmatprep.subr.mxu0 0.0
    %4555 = vmatpush1.msra.mxu0 %v4543
    %4556 = vmatprep.subr.mxu0 0.0
    %4557 = vmatpush1.msra.mxu0 %v4544
    %4558 = vmatprep.subr.mxu0 0.0
    %4559 = vmatpush1.msra.mxu0 %v4545
    %4560 = vmatprep.subr.mxu0 0.0
    %4561 = vmatpush1.msra.mxu0 %v4546
    %4562 = vmatprep.subr.mxu0 0.0
    %4563 = vmatpush1.msra.mxu0 0.0
    %4564 = vmatprep.subr.mxu0 0.0
    %4565 = vmatpush1.msra.mxu0 0.0
    %4566 = vmatprep.subr.mxu0 0.0
    %4567 = vmatpush1.msra.mxu0 0.0
    %4568 = vmatprep.subr.mxu0 0.0
    %4569 = vmatpush1.msra.mxu0 0.0
    %4570 = vmatprep.subr.mxu0 0.0
    %4571 = vmatpush1.msra.mxu0 0.0
    %4572 = vmatprep.subr.mxu0 0.0
    %4573 = vmatpush1.msra.mxu0 0.0
    %4574 = vmatprep.subr.mxu0 0.0
    %4575 = vmatpush1.msra.mxu0 0.0
    %4576 = vmatprep.subr.mxu0 0.0
    %4577 = vmatpush1.msra.mxu0 0.0
    %4578 = vmatprep.subr.mxu0 0.0
    %4579 = vmatpush1.msra.mxu0 0.0
    %4580 = vmatprep.subr.mxu0 0.0
    %4581 = vmatpush1.msra.mxu0 0.0
    %4582 = vmatprep.subr.mxu0 0.0
    %4583 = vmatpush1.msra.mxu0 0.0
    %4584 = vmatprep.subr.mxu0 0.0
    %4585 = vmatpush1.msra.mxu0 0.0
    %4586 = vmatprep.subr.mxu0 0.0
    %4587 = vmatpush1.msra.mxu0 0.0
    %4588 = vmatprep.subr.mxu0 0.0
    %4589 = vmatpush1.msra.mxu0 0.0
    %4590 = vmatprep.subr.mxu0 0.0
    %4591 = vmatpush1.msra.mxu0 0.0
    %4592 = vmatprep.subr.mxu0 0.0
    %4593 = vmatpush1.msra.mxu0 0.0
    %4594 = vmatprep.subr.mxu0 0.0
    %4595 = vmatpush1.msra.mxu0 0.0
    %4596 = vmatprep.subr.mxu0 0.0
    %4597 = vmatpush1.msra.mxu0 0.0
    %4598 = vmatprep.subr.mxu0 0.0
    %4599 = vmatpush1.msra.mxu0 0.0
    %4600 = vmatprep.subr.mxu0 0.0
    %4601 = vmatpush1.msra.mxu0 0.0
    %4602 = vmatprep.subr.mxu0 0.0
    %4603 = vmatpush1.msra.mxu0 0.0
    %4604 = vmatprep.subr.mxu0 0.0
    %4605 = vmatpush1.msra.mxu0 0.0
    %4606 = vmatprep.subr.mxu0 0.0
    %4607 = vmatpush1.msra.mxu0 0.0
    %4608 = vmatprep.subr.mxu0 0.0
    %4609 = vmatpush1.msra.mxu0 0.0
    %4610 = vmatprep.subr.mxu0 0.0
    %4611 = vmatpush1.msra.mxu0 0.0
    %4612 = vmatprep.subr.mxu0 0.0
    %4613 = vmatpush1.msra.mxu0 0.0
    %4614 = vmatprep.subr.mxu0 0.0
    %4615 = vmatpush1.msra.mxu0 0.0
    %4616 = vmatprep.subr.mxu0 0.0
    %4617 = vmatpush1.msra.mxu0 0.0
    %4618 = vmatprep.mubr.f32.mxu0 0.0
    %4619 = vmatmul.mubr.f32.gmra.mrb[0].mxu0 %v4471
    %v4620 = vpop.f32.mrb[0].mxu0
    %v4621 = vadd.f32 %v4552, %v4620
    %v4622 = vpop.f32.mrb[0].mxu0
    %4623 = vdwg.mxu0
    %v4624 = vld [vmem:[%s19] sm:$0xff]
    %v4625 = vld [vmem:[%s19 + $0x8] sm:$0xff]
    %v4626 = vld [vmem:[%s19 + $0x10] sm:$0xff]
    %v4627 = vld [vmem:[%s19 + $0x18] sm:$0xff]
    %v4628 = vld [vmem:[%s21] sm:$0x1]
    %v4630 = vlaneseq
    %v4631 = vshrl.u32 %v4630, 7
    %v4632 = vsub.s32 0, %v4631
    %v4633 = vrot.slane %v4628, %v4632
    %4635 = vmatprep.subr.mxu0 0.0
    %4636 = vmatpush1.msra.mxu0 %v4624
    %4637 = vmatprep.subr.mxu0 0.0
    %4638 = vmatpush1.msra.mxu0 %v4625
    %4639 = vmatprep.subr.mxu0 0.0
    %4640 = vmatpush1.msra.mxu0 %v4626
    %4641 = vmatprep.subr.mxu0 0.0
    %4642 = vmatpush1.msra.mxu0 %v4627
    %4643 = vmatprep.subr.mxu0 0.0
    %4644 = vmatpush1.msra.mxu0 0.0
    %4645 = vmatprep.subr.mxu0 0.0
    %4646 = vmatpush1.msra.mxu0 0.0
    %4647 = vmatprep.subr.mxu0 0.0
    %4648 = vmatpush1.msra.mxu0 0.0
    %4649 = vmatprep.subr.mxu0 0.0
    %4650 = vmatpush1.msra.mxu0 0.0
    %4651 = vmatprep.subr.mxu0 0.0
    %4652 = vmatpush1.msra.mxu0 0.0
    %4653 = vmatprep.subr.mxu0 0.0
    %4654 = vmatpush1.msra.mxu0 0.0
    %4655 = vmatprep.subr.mxu0 0.0
    %4656 = vmatpush1.msra.mxu0 0.0
    %4657 = vmatprep.subr.mxu0 0.0
    %4658 = vmatpush1.msra.mxu0 0.0
    %4659 = vmatprep.subr.mxu0 0.0
    %4660 = vmatpush1.msra.mxu0 0.0
    %4661 = vmatprep.subr.mxu0 0.0
    %4662 = vmatpush1.msra.mxu0 0.0
    %4663 = vmatprep.subr.mxu0 0.0
    %4664 = vmatpush1.msra.mxu0 0.0
    %4665 = vmatprep.subr.mxu0 0.0
    %4666 = vmatpush1.msra.mxu0 0.0
    %4667 = vmatprep.subr.mxu0 0.0
    %4668 = vmatpush1.msra.mxu0 0.0
    %4669 = vmatprep.subr.mxu0 0.0
    %4670 = vmatpush1.msra.mxu0 0.0
    %4671 = vmatprep.subr.mxu0 0.0
    %4672 = vmatpush1.msra.mxu0 0.0
    %4673 = vmatprep.subr.mxu0 0.0
    %4674 = vmatpush1.msra.mxu0 0.0
    %4675 = vmatprep.subr.mxu0 0.0
    %4676 = vmatpush1.msra.mxu0 0.0
    %4677 = vmatprep.subr.mxu0 0.0
    %4678 = vmatpush1.msra.mxu0 0.0
    %4679 = vmatprep.subr.mxu0 0.0
    %4680 = vmatpush1.msra.mxu0 0.0
    %4681 = vmatprep.subr.mxu0 0.0
    %4682 = vmatpush1.msra.mxu0 0.0
    %4683 = vmatprep.subr.mxu0 0.0
    %4684 = vmatpush1.msra.mxu0 0.0
    %4685 = vmatprep.subr.mxu0 0.0
    %4686 = vmatpush1.msra.mxu0 0.0
    %4687 = vmatprep.subr.mxu0 0.0
    %4688 = vmatpush1.msra.mxu0 0.0
    %4689 = vmatprep.subr.mxu0 0.0
    %4690 = vmatpush1.msra.mxu0 0.0
    %4691 = vmatprep.subr.mxu0 0.0
    %4692 = vmatpush1.msra.mxu0 0.0
    %4693 = vmatprep.subr.mxu0 0.0
    %4694 = vmatpush1.msra.mxu0 0.0
    %4695 = vmatprep.subr.mxu0 0.0
    %4696 = vmatpush1.msra.mxu0 0.0
    %4697 = vmatprep.subr.mxu0 0.0
    %4698 = vmatpush1.msra.mxu0 0.0
    %4699 = vmatprep.mubr.f32.mxu0 0.0
    %4700 = vmatmul.mubr.f32.gmra.mrb[0].mxu0 %v4471
    %v4701 = vpop.f32.mrb[0].mxu0
    %v4702 = vadd.f32 %v4633, %v4701
    %v4703 = vpop.f32.mrb[0].mxu0
    %4704 = vdwg.mxu0
    %s4705 = scalar_lea.vmem [#allocation2], 32
    %4706 = vst.msk [vmem:[%s4705] sm:$0xff] %vm425, %v4621
    %s4707 = scalar_lea.vmem [#allocation4], 32
    %4708 = vst.msk [vmem:[%s4707] sm:$0xff] %vm425, %v4702
    %v4710 = vsel %vm425, %v4540, 0
    %v4713 = vsel %vm425, %v4621, 0
    %4715 = vmatprep.subr.mxu0 0.0
    %4716 = vmatpush1.xpose.msra.mxu0 %v4713
    %4717 = vmatprep.subr.mxu0 0.0
    %4718 = vmatpush1.xpose.msra.mxu0 0.0
    %4719 = vmatprep.subr.mxu0 0.0
    %4720 = vmatpush1.xpose.msra.mxu0 0.0
    %4721 = vmatprep.subr.mxu0 0.0
    %4722 = vmatpush1.xpose.msra.mxu0 0.0
    %4723 = vmatprep.subr.mxu0 0.0
    %4724 = vmatpush1.xpose.msra.mxu0 0.0
    %4725 = vmatprep.subr.mxu0 0.0
    %4726 = vmatpush1.xpose.msra.mxu0 0.0
    %4727 = vmatprep.subr.mxu0 0.0
    %4728 = vmatpush1.xpose.msra.mxu0 0.0
    %4729 = vmatprep.subr.mxu0 0.0
    %4730 = vmatpush1.xpose.msra.mxu0 0.0
    %4731 = vmatprep.subr.mxu0 0.0
    %4732 = vmatpush1.xpose.msra.mxu0 0.0
    %4733 = vmatprep.subr.mxu0 0.0
    %4734 = vmatpush1.xpose.msra.mxu0 0.0
    %4735 = vmatprep.subr.mxu0 0.0
    %4736 = vmatpush1.xpose.msra.mxu0 0.0
    %4737 = vmatprep.subr.mxu0 0.0
    %4738 = vmatpush1.xpose.msra.mxu0 0.0
    %4739 = vmatprep.subr.mxu0 0.0
    %4740 = vmatpush1.xpose.msra.mxu0 0.0
    %4741 = vmatprep.subr.mxu0 0.0
    %4742 = vmatpush1.xpose.msra.mxu0 0.0
    %4743 = vmatprep.subr.mxu0 0.0
    %4744 = vmatpush1.xpose.msra.mxu0 0.0
    %4745 = vmatprep.subr.mxu0 0.0
    %4746 = vmatpush1.xpose.msra.mxu0 0.0
    %4747 = vmatprep.subr.mxu0 0.0
    %4748 = vmatpush1.xpose.msra.mxu0 0.0
    %4749 = vmatprep.subr.mxu0 0.0
    %4750 = vmatpush1.xpose.msra.mxu0 0.0
    %4751 = vmatprep.subr.mxu0 0.0
    %4752 = vmatpush1.xpose.msra.mxu0 0.0
    %4753 = vmatprep.subr.mxu0 0.0
    %4754 = vmatpush1.xpose.msra.mxu0 0.0
    %4755 = vmatprep.subr.mxu0 0.0
    %4756 = vmatpush1.xpose.msra.mxu0 0.0
    %4757 = vmatprep.subr.mxu0 0.0
    %4758 = vmatpush1.xpose.msra.mxu0 0.0
    %4759 = vmatprep.subr.mxu0 0.0
    %4760 = vmatpush1.xpose.msra.mxu0 0.0
    %4761 = vmatprep.subr.mxu0 0.0
    %4762 = vmatpush1.xpose.msra.mxu0 0.0
    %4763 = vmatprep.subr.mxu0 0.0
    %4764 = vmatpush1.xpose.msra.mxu0 0.0
    %4765 = vmatprep.subr.mxu0 0.0
    %4766 = vmatpush1.xpose.msra.mxu0 0.0
    %4767 = vmatprep.subr.mxu0 0.0
    %4768 = vmatpush1.xpose.msra.mxu0 0.0
    %4769 = vmatprep.subr.mxu0 0.0
    %4770 = vmatpush1.xpose.msra.mxu0 0.0
    %4771 = vmatprep.subr.mxu0 0.0
    %4772 = vmatpush1.xpose.msra.mxu0 0.0
    %4773 = vmatprep.subr.mxu0 0.0
    %4774 = vmatpush1.xpose.msra.mxu0 0.0
    %4775 = vmatprep.subr.mxu0 0.0
    %4776 = vmatpush1.xpose.msra.mxu0 0.0
    %4777 = vmatprep.subr.mxu0 0.0
    %4778 = vmatpush1.xpose.msra.mxu0 0.0
    %4779 = vmatprep.mubr.f32.mxu0 0.0
    %4780 = vmatmul.mubr.f32.gmra.mrb[0].mxu0 %v4710
    %v4781 = vpop.f32.mrb[0].mxu0
    %v4782 = vadd.f32 %v4451, %v4781
    %v4783 = vpop.f32.mrb[0].mxu0
    %4784 = vdwg.mxu0
    %v4785 = vsel %vm425, %v4782, -inf
    %4786 = vmax.xlane.f32.xlu0 %v4785
    %v4787 = vpop.xlane.xlu0 %4786
    %v4788 = vsub.f32 %v4782, %v4787
    %v4789 = vmul.f32 %v4788, 1.442695
    %v4790 = vpow.pop %v4789
    %v4791 = vsel %vm425, %v4790, 0.0
    %4792 = vadd.xlane.f32.xlu0 %v4791
    %v4793 = vpop.xlane.xlu0 %4792
    %v4794 = vrcp.pop %v4793
    %v4795 = vmul.f32 %v4790, %v4794
    %v4797 = vsel %vm425, %v4795, 0
    %4799 = vmatprep.subr.mxu0 0.0
    %4800 = vmatpush1.msra.mxu0 %v4702
    %4801 = vmatprep.subr.mxu0 0.0
    %4802 = vmatpush1.msra.mxu0 0.0
    %4803 = vmatprep.subr.mxu0 0.0
    %4804 = vmatpush1.msra.mxu0 0.0
    %4805 = vmatprep.subr.mxu0 0.0
    %4806 = vmatpush1.msra.mxu0 0.0
    %4807 = vmatprep.subr.mxu0 0.0
    %4808 = vmatpush1.msra.mxu0 0.0
    %4809 = vmatprep.subr.mxu0 0.0
    %4810 = vmatpush1.msra.mxu0 0.0
    %4811 = vmatprep.subr.mxu0 0.0
    %4812 = vmatpush1.msra.mxu0 0.0
    %4813 = vmatprep.subr.mxu0 0.0
    %4814 = vmatpush1.msra.mxu0 0.0
    %4815 = vmatprep.subr.mxu0 0.0
    %4816 = vmatpush1.msra.mxu0 0.0
    %4817 = vmatprep.subr.mxu0 0.0
    %4818 = vmatpush1.msra.mxu0 0.0
    %4819 = vmatprep.subr.mxu0 0.0
    %4820 = vmatpush1.msra.mxu0 0.0
    %4821 = vmatprep.subr.mxu0 0.0
    %4822 = vmatpush1.msra.mxu0 0.0
    %4823 = vmatprep.subr.mxu0 0.0
    %4824 = vmatpush1.msra.mxu0 0.0
    %4825 = vmatprep.subr.mxu0 0.0
    %4826 = vmatpush1.msra.mxu0 0.0
    %4827 = vmatprep.subr.mxu0 0.0
    %4828 = vmatpush1.msra.mxu0 0.0
    %4829 = vmatprep.subr.mxu0 0.0
    %4830 = vmatpush1.msra.mxu0 0.0
    %4831 = vmatprep.subr.mxu0 0.0
    %4832 = vmatpush1.msra.mxu0 0.0
    %4833 = vmatprep.subr.mxu0 0.0
    %4834 = vmatpush1.msra.mxu0 0.0
    %4835 = vmatprep.subr.mxu0 0.0
    %4836 = vmatpush1.msra.mxu0 0.0
    %4837 = vmatprep.subr.mxu0 0.0
    %4838 = vmatpush1.msra.mxu0 0.0
    %4839 = vmatprep.subr.mxu0 0.0
    %4840 = vmatpush1.msra.mxu0 0.0
    %4841 = vmatprep.subr.mxu0 0.0
    %4842 = vmatpush1.msra.mxu0 0.0
    %4843 = vmatprep.subr.mxu0 0.0
    %4844 = vmatpush1.msra.mxu0 0.0
    %4845 = vmatprep.subr.mxu0 0.0
    %4846 = vmatpush1.msra.mxu0 0.0
    %4847 = vmatprep.subr.mxu0 0.0
    %4848 = vmatpush1.msra.mxu0 0.0
    %4849 = vmatprep.subr.mxu0 0.0
    %4850 = vmatpush1.msra.mxu0 0.0
    %4851 = vmatprep.subr.mxu0 0.0
    %4852 = vmatpush1.msra.mxu0 0.0
    %4853 = vmatprep.subr.mxu0 0.0
    %4854 = vmatpush1.msra.mxu0 0.0
    %4855 = vmatprep.subr.mxu0 0.0
    %4856 = vmatpush1.msra.mxu0 0.0
    %4857 = vmatprep.subr.mxu0 0.0
    %4858 = vmatpush1.msra.mxu0 0.0
    %4859 = vmatprep.subr.mxu0 0.0
    %4860 = vmatpush1.msra.mxu0 0.0
    %4861 = vmatprep.subr.mxu0 0.0
    %4862 = vmatpush1.msra.mxu0 0.0
    %4863 = vmatprep.mubr.f32.mxu0 0.0
    %4864 = vmatmul.mubr.f32.gmra.mrb[0].mxu0 %v4797
    %v4865 = vpop.f32.mrb[0].mxu0
    %v4866 = vadd.f32 0.0, %v4865
    %v4867 = vpop.f32.mrb[0].mxu0
    %4868 = vdwg.mxu0
    %v4869 = vld [vmem:[%s23] sm:$0xff]
    %v4870 = vld [vmem:[%s589] sm:$0xff]
    %v4871 = vld [vmem:[%s589 + $0x8] sm:$0xff]
    %v4872 = vld [vmem:[%s589 + $0x10] sm:$0xff]
    %v4873 = vld [vmem:[%s589 + $0x18] sm:$0xff]
    %v4874 = vld [vmem:[%s594] sm:$0x1]
    %v4876 = vlaneseq
    %v4877 = vshrl.u32 %v4876, 7
    %v4878 = vsub.s32 0, %v4877
    %v4879 = vrot.slane %v4874, %v4878
    %4881 = vmatprep.subr.mxu0 0.0
    %4882 = vmatpush1.msra.mxu0 %v4870
    %4883 = vmatprep.subr.mxu0 0.0
    %4884 = vmatpush1.msra.mxu0 %v4871
    %4885 = vmatprep.subr.mxu0 0.0
    %4886 = vmatpush1.msra.mxu0 %v4872
    %4887 = vmatprep.subr.mxu0 0.0
    %4888 = vmatpush1.msra.mxu0 %v4873
    %4889 = vmatprep.subr.mxu0 0.0
    %4890 = vmatpush1.msra.mxu0 0.0
    %4891 = vmatprep.subr.mxu0 0.0
    %4892 = vmatpush1.msra.mxu0 0.0
    %4893 = vmatprep.subr.mxu0 0.0
    %4894 = vmatpush1.msra.mxu0 0.0
    %4895 = vmatprep.subr.mxu0 0.0
    %4896 = vmatpush1.msra.mxu0 0.0
    %4897 = vmatprep.subr.mxu0 0.0
    %4898 = vmatpush1.msra.mxu0 0.0
    %4899 = vmatprep.subr.mxu0 0.0
    %4900 = vmatpush1.msra.mxu0 0.0
    %4901 = vmatprep.subr.mxu0 0.0
    %4902 = vmatpush1.msra.mxu0 0.0
    %4903 = vmatprep.subr.mxu0 0.0
    %4904 = vmatpush1.msra.mxu0 0.0
    %4905 = vmatprep.subr.mxu0 0.0
    %4906 = vmatpush1.msra.mxu0 0.0
    %4907 = vmatprep.subr.mxu0 0.0
    %4908 = vmatpush1.msra.mxu0 0.0
    %4909 = vmatprep.subr.mxu0 0.0
    %4910 = vmatpush1.msra.mxu0 0.0
    %4911 = vmatprep.subr.mxu0 0.0
    %4912 = vmatpush1.msra.mxu0 0.0
    %4913 = vmatprep.subr.mxu0 0.0
    %4914 = vmatpush1.msra.mxu0 0.0
    %4915 = vmatprep.subr.mxu0 0.0
    %4916 = vmatpush1.msra.mxu0 0.0
    %4917 = vmatprep.subr.mxu0 0.0
    %4918 = vmatpush1.msra.mxu0 0.0
    %4919 = vmatprep.subr.mxu0 0.0
    %4920 = vmatpush1.msra.mxu0 0.0
    %4921 = vmatprep.subr.mxu0 0.0
    %4922 = vmatpush1.msra.mxu0 0.0
    %4923 = vmatprep.subr.mxu0 0.0
    %4924 = vmatpush1.msra.mxu0 0.0
    %4925 = vmatprep.subr.mxu0 0.0
    %4926 = vmatpush1.msra.mxu0 0.0
    %4927 = vmatprep.subr.mxu0 0.0
    %4928 = vmatpush1.msra.mxu0 0.0
    %4929 = vmatprep.subr.mxu0 0.0
    %4930 = vmatpush1.msra.mxu0 0.0
    %4931 = vmatprep.subr.mxu0 0.0
    %4932 = vmatpush1.msra.mxu0 0.0
    %4933 = vmatprep.subr.mxu0 0.0
    %4934 = vmatpush1.msra.mxu0 0.0
    %4935 = vmatprep.subr.mxu0 0.0
    %4936 = vmatpush1.msra.mxu0 0.0
    %4937 = vmatprep.subr.mxu0 0.0
    %4938 = vmatpush1.msra.mxu0 0.0
    %4939 = vmatprep.subr.mxu0 0.0
    %4940 = vmatpush1.msra.mxu0 0.0
    %4941 = vmatprep.subr.mxu0 0.0
    %4942 = vmatpush1.msra.mxu0 0.0
    %4943 = vmatprep.subr.mxu0 0.0
    %4944 = vmatpush1.msra.mxu0 0.0
    %4945 = vmatprep.mubr.f32.mxu0 0.0
    %4946 = vmatmul.mubr.f32.gmra.mrb[0].mxu0 %v4471
    %v4947 = vpop.f32.mrb[0].mxu0
    %v4948 = vadd.f32 %v4879, %v4947
    %v4949 = vpop.f32.mrb[0].mxu0
    %4950 = vdwg.mxu0
    %v4951 = vld [vmem:[%s672] sm:$0xff]
    %v4952 = vld [vmem:[%s672 + $0x8] sm:$0xff]
    %v4953 = vld [vmem:[%s672 + $0x10] sm:$0xff]
    %v4954 = vld [vmem:[%s672 + $0x18] sm:$0xff]
    %v4955 = vld [vmem:[%s677] sm:$0x1]
    %v4957 = vlaneseq
    %v4958 = vshrl.u32 %v4957, 7
    %v4959 = vsub.s32 0, %v4958
    %v4960 = vrot.slane %v4955, %v4959
    %4962 = vmatprep.subr.mxu0 0.0
    %4963 = vmatpush1.msra.mxu0 %v4951
    %4964 = vmatprep.subr.mxu0 0.0
    %4965 = vmatpush1.msra.mxu0 %v4952
    %4966 = vmatprep.subr.mxu0 0.0
    %4967 = vmatpush1.msra.mxu0 %v4953
    %4968 = vmatprep.subr.mxu0 0.0
    %4969 = vmatpush1.msra.mxu0 %v4954
    %4970 = vmatprep.subr.mxu0 0.0
    %4971 = vmatpush1.msra.mxu0 0.0
    %4972 = vmatprep.subr.mxu0 0.0
    %4973 = vmatpush1.msra.mxu0 0.0
    %4974 = vmatprep.subr.mxu0 0.0
    %4975 = vmatpush1.msra.mxu0 0.0
    %4976 = vmatprep.subr.mxu0 0.0
    %4977 = vmatpush1.msra.mxu0 0.0
    %4978 = vmatprep.subr.mxu0 0.0
    %4979 = vmatpush1.msra.mxu0 0.0
    %4980 = vmatprep.subr.mxu0 0.0
    %4981 = vmatpush1.msra.mxu0 0.0
    %4982 = vmatprep.subr.mxu0 0.0
    %4983 = vmatpush1.msra.mxu0 0.0
    %4984 = vmatprep.subr.mxu0 0.0
    %4985 = vmatpush1.msra.mxu0 0.0
    %4986 = vmatprep.subr.mxu0 0.0
    %4987 = vmatpush1.msra.mxu0 0.0
    %4988 = vmatprep.subr.mxu0 0.0
    %4989 = vmatpush1.msra.mxu0 0.0
    %4990 = vmatprep.subr.mxu0 0.0
    %4991 = vmatpush1.msra.mxu0 0.0
    %4992 = vmatprep.subr.mxu0 0.0
    %4993 = vmatpush1.msra.mxu0 0.0
    %4994 = vmatprep.subr.mxu0 0.0
    %4995 = vmatpush1.msra.mxu0 0.0
    %4996 = vmatprep.subr.mxu0 0.0
    %4997 = vmatpush1.msra.mxu0 0.0
    %4998 = vmatprep.subr.mxu0 0.0
    %4999 = vmatpush1.msra.mxu0 0.0
    %5000 = vmatprep.subr.mxu0 0.0
    %5001 = vmatpush1.msra.mxu0 0.0
    %5002 = vmatprep.subr.mxu0 0.0
    %5003 = vmatpush1.msra.mxu0 0.0
    %5004 = vmatprep.subr.mxu0 0.0
    %5005 = vmatpush1.msra.mxu0 0.0
    %5006 = vmatprep.subr.mxu0 0.0
    %5007 = vmatpush1.msra.mxu0 0.0
    %5008 = vmatprep.subr.mxu0 0.0
    %5009 = vmatpush1.msra.mxu0 0.0
    %5010 = vmatprep.subr.mxu0 0.0
    %5011 = vmatpush1.msra.mxu0 0.0
    %5012 = vmatprep.subr.mxu0 0.0
    %5013 = vmatpush1.msra.mxu0 0.0
    %5014 = vmatprep.subr.mxu0 0.0
    %5015 = vmatpush1.msra.mxu0 0.0
    %5016 = vmatprep.subr.mxu0 0.0
    %5017 = vmatpush1.msra.mxu0 0.0
    %5018 = vmatprep.subr.mxu0 0.0
    %5019 = vmatpush1.msra.mxu0 0.0
    %5020 = vmatprep.subr.mxu0 0.0
    %5021 = vmatpush1.msra.mxu0 0.0
    %5022 = vmatprep.subr.mxu0 0.0
    %5023 = vmatpush1.msra.mxu0 0.0
    %5024 = vmatprep.subr.mxu0 0.0
    %5025 = vmatpush1.msra.mxu0 0.0
    %5026 = vmatprep.mubr.f32.mxu0 0.0
    %5027 = vmatmul.mubr.f32.gmra.mrb[0].mxu0 %v4471
    %v5028 = vpop.f32.mrb[0].mxu0
    %v5029 = vadd.f32 %v4960, %v5028
    %v5030 = vpop.f32.mrb[0].mxu0
    %5031 = vdwg.mxu0
    %v5032 = vld [vmem:[%s755] sm:$0xff]
    %v5033 = vld [vmem:[%s755 + $0x8] sm:$0xff]
    %v5034 = vld [vmem:[%s755 + $0x10] sm:$0xff]
    %v5035 = vld [vmem:[%s755 + $0x18] sm:$0xff]
    %v5036 = vld [vmem:[%s760] sm:$0x1]
    %v5038 = vlaneseq
    %v5039 = vshrl.u32 %v5038, 7
    %v5040 = vsub.s32 0, %v5039
    %v5041 = vrot.slane %v5036, %v5040
    %5043 = vmatprep.subr.mxu0 0.0
    %5044 = vmatpush1.msra.mxu0 %v5032
    %5045 = vmatprep.subr.mxu0 0.0
    %5046 = vmatpush1.msra.mxu0 %v5033
    %5047 = vmatprep.subr.mxu0 0.0
    %5048 = vmatpush1.msra.mxu0 %v5034
    %5049 = vmatprep.subr.mxu0 0.0
    %5050 = vmatpush1.msra.mxu0 %v5035
    %5051 = vmatprep.subr.mxu0 0.0
    %5052 = vmatpush1.msra.mxu0 0.0
    %5053 = vmatprep.subr.mxu0 0.0
    %5054 = vmatpush1.msra.mxu0 0.0
    %5055 = vmatprep.subr.mxu0 0.0
    %5056 = vmatpush1.msra.mxu0 0.0
    %5057 = vmatprep.subr.mxu0 0.0
    %5058 = vmatpush1.msra.mxu0 0.0
    %5059 = vmatprep.subr.mxu0 0.0
    %5060 = vmatpush1.msra.mxu0 0.0
    %5061 = vmatprep.subr.mxu0 0.0
    %5062 = vmatpush1.msra.mxu0 0.0
    %5063 = vmatprep.subr.mxu0 0.0
    %5064 = vmatpush1.msra.mxu0 0.0
    %5065 = vmatprep.subr.mxu0 0.0
    %5066 = vmatpush1.msra.mxu0 0.0
    %5067 = vmatprep.subr.mxu0 0.0
    %5068 = vmatpush1.msra.mxu0 0.0
    %5069 = vmatprep.subr.mxu0 0.0
    %5070 = vmatpush1.msra.mxu0 0.0
    %5071 = vmatprep.subr.mxu0 0.0
    %5072 = vmatpush1.msra.mxu0 0.0
    %5073 = vmatprep.subr.mxu0 0.0
    %5074 = vmatpush1.msra.mxu0 0.0
    %5075 = vmatprep.subr.mxu0 0.0
    %5076 = vmatpush1.msra.mxu0 0.0
    %5077 = vmatprep.subr.mxu0 0.0
    %5078 = vmatpush1.msra.mxu0 0.0
    %5079 = vmatprep.subr.mxu0 0.0
    %5080 = vmatpush1.msra.mxu0 0.0
    %5081 = vmatprep.subr.mxu0 0.0
    %5082 = vmatpush1.msra.mxu0 0.0
    %5083 = vmatprep.subr.mxu0 0.0
    %5084 = vmatpush1.msra.mxu0 0.0
    %5085 = vmatprep.subr.mxu0 0.0
    %5086 = vmatpush1.msra.mxu0 0.0
    %5087 = vmatprep.subr.mxu0 0.0
    %5088 = vmatpush1.msra.mxu0 0.0
    %5089 = vmatprep.subr.mxu0 0.0
    %5090 = vmatpush1.msra.mxu0 0.0
    %5091 = vmatprep.subr.mxu0 0.0
    %5092 = vmatpush1.msra.mxu0 0.0
    %5093 = vmatprep.subr.mxu0 0.0
    %5094 = vmatpush1.msra.mxu0 0.0
    %5095 = vmatprep.subr.mxu0 0.0
    %5096 = vmatpush1.msra.mxu0 0.0
    %5097 = vmatprep.subr.mxu0 0.0
    %5098 = vmatpush1.msra.mxu0 0.0
    %5099 = vmatprep.subr.mxu0 0.0
    %5100 = vmatpush1.msra.mxu0 0.0
    %5101 = vmatprep.subr.mxu0 0.0
    %5102 = vmatpush1.msra.mxu0 0.0
    %5103 = vmatprep.subr.mxu0 0.0
    %5104 = vmatpush1.msra.mxu0 0.0
    %5105 = vmatprep.subr.mxu0 0.0
    %5106 = vmatpush1.msra.mxu0 0.0
    %5107 = vmatprep.mubr.f32.mxu0 0.0
    %5108 = vmatmul.mubr.f32.gmra.mrb[0].mxu0 %v4471
    %v5109 = vpop.f32.mrb[0].mxu0
    %v5110 = vadd.f32 %v5041, %v5109
    %v5111 = vpop.f32.mrb[0].mxu0
    %5112 = vdwg.mxu0
    %s5113 = scalar_lea.vmem [#allocation2], 40
    %5114 = vst.msk [vmem:[%s5113] sm:$0xff] %vm425, %v5029
    %s5115 = scalar_lea.vmem [#allocation4], 40
    %5116 = vst.msk [vmem:[%s5115] sm:$0xff] %vm425, %v5110
    %v5118 = vsel %vm425, %v4948, 0
    %v5121 = vsel %vm425, %v5029, 0
    %5123 = vmatprep.subr.mxu0 0.0
    %5124 = vmatpush1.xpose.msra.mxu0 %v5121
    %5125 = vmatprep.subr.mxu0 0.0
    %5126 = vmatpush1.xpose.msra.mxu0 0.0
    %5127 = vmatprep.subr.mxu0 0.0
    %5128 = vmatpush1.xpose.msra.mxu0 0.0
    %5129 = vmatprep.subr.mxu0 0.0
    %5130 = vmatpush1.xpose.msra.mxu0 0.0
    %5131 = vmatprep.subr.mxu0 0.0
    %5132 = vmatpush1.xpose.msra.mxu0 0.0
    %5133 = vmatprep.subr.mxu0 0.0
    %5134 = vmatpush1.xpose.msra.mxu0 0.0
    %5135 = vmatprep.subr.mxu0 0.0
    %5136 = vmatpush1.xpose.msra.mxu0 0.0
    %5137 = vmatprep.subr.mxu0 0.0
    %5138 = vmatpush1.xpose.msra.mxu0 0.0
    %5139 = vmatprep.subr.mxu0 0.0
    %5140 = vmatpush1.xpose.msra.mxu0 0.0
    %5141 = vmatprep.subr.mxu0 0.0
    %5142 = vmatpush1.xpose.msra.mxu0 0.0
    %5143 = vmatprep.subr.mxu0 0.0
    %5144 = vmatpush1.xpose.msra.mxu0 0.0
    %5145 = vmatprep.subr.mxu0 0.0
    %5146 = vmatpush1.xpose.msra.mxu0 0.0
    %5147 = vmatprep.subr.mxu0 0.0
    %5148 = vmatpush1.xpose.msra.mxu0 0.0
    %5149 = vmatprep.subr.mxu0 0.0
    %5150 = vmatpush1.xpose.msra.mxu0 0.0
    %5151 = vmatprep.subr.mxu0 0.0
    %5152 = vmatpush1.xpose.msra.mxu0 0.0
    %5153 = vmatprep.subr.mxu0 0.0
    %5154 = vmatpush1.xpose.msra.mxu0 0.0
    %5155 = vmatprep.subr.mxu0 0.0
    %5156 = vmatpush1.xpose.msra.mxu0 0.0
    %5157 = vmatprep.subr.mxu0 0.0
    %5158 = vmatpush1.xpose.msra.mxu0 0.0
    %5159 = vmatprep.subr.mxu0 0.0
    %5160 = vmatpush1.xpose.msra.mxu0 0.0
    %5161 = vmatprep.subr.mxu0 0.0
    %5162 = vmatpush1.xpose.msra.mxu0 0.0
    %5163 = vmatprep.subr.mxu0 0.0
    %5164 = vmatpush1.xpose.msra.mxu0 0.0
    %5165 = vmatprep.subr.mxu0 0.0
    %5166 = vmatpush1.xpose.msra.mxu0 0.0
    %5167 = vmatprep.subr.mxu0 0.0
    %5168 = vmatpush1.xpose.msra.mxu0 0.0
    %5169 = vmatprep.subr.mxu0 0.0
    %5170 = vmatpush1.xpose.msra.mxu0 0.0
    %5171 = vmatprep.subr.mxu0 0.0
    %5172 = vmatpush1.xpose.msra.mxu0 0.0
    %5173 = vmatprep.subr.mxu0 0.0
    %5174 = vmatpush1.xpose.msra.mxu0 0.0
    %5175 = vmatprep.subr.mxu0 0.0
    %5176 = vmatpush1.xpose.msra.mxu0 0.0
    %5177 = vmatprep.subr.mxu0 0.0
    %5178 = vmatpush1.xpose.msra.mxu0 0.0
    %5179 = vmatprep.subr.mxu0 0.0
    %5180 = vmatpush1.xpose.msra.mxu0 0.0
    %5181 = vmatprep.subr.mxu0 0.0
    %5182 = vmatpush1.xpose.msra.mxu0 0.0
    %5183 = vmatprep.subr.mxu0 0.0
    %5184 = vmatpush1.xpose.msra.mxu0 0.0
    %5185 = vmatprep.subr.mxu0 0.0
    %5186 = vmatpush1.xpose.msra.mxu0 0.0
    %5187 = vmatprep.mubr.f32.mxu0 0.0
    %5188 = vmatmul.mubr.f32.gmra.mrb[0].mxu0 %v5118
    %v5189 = vpop.f32.mrb[0].mxu0
    %v5190 = vadd.f32 %v4451, %v5189
    %v5191 = vpop.f32.mrb[0].mxu0
    %5192 = vdwg.mxu0
    %v5193 = vsel %vm425, %v5190, -inf
    %5194 = vmax.xlane.f32.xlu0 %v5193
    %v5195 = vpop.xlane.xlu0 %5194
    %v5196 = vsub.f32 %v5190, %v5195
    %v5197 = vmul.f32 %v5196, 1.442695
    %v5198 = vpow.pop %v5197
    %v5199 = vsel %vm425, %v5198, 0.0
    %5200 = vadd.xlane.f32.xlu0 %v5199
    %v5201 = vpop.xlane.xlu0 %5200
    %v5202 = vrcp.pop %v5201
    %v5203 = vmul.f32 %v5198, %v5202
    %v5205 = vsel %vm425, %v5203, 0
    %5207 = vmatprep.subr.mxu0 0.0
    %5208 = vmatpush1.msra.mxu0 %v5110
    %5209 = vmatprep.subr.mxu0 0.0
    %5210 = vmatpush1.msra.mxu0 0.0
    %5211 = vmatprep.subr.mxu0 0.0
    %5212 = vmatpush1.msra.mxu0 0.0
    %5213 = vmatprep.subr.mxu0 0.0
    %5214 = vmatpush1.msra.mxu0 0.0
    %5215 = vmatprep.subr.mxu0 0.0
    %5216 = vmatpush1.msra.mxu0 0.0
    %5217 = vmatprep.subr.mxu0 0.0
    %5218 = vmatpush1.msra.mxu0 0.0
    %5219 = vmatprep.subr.mxu0 0.0
    %5220 = vmatpush1.msra.mxu0 0.0
    %5221 = vmatprep.subr.mxu0 0.0
    %5222 = vmatpush1.msra.mxu0 0.0
    %5223 = vmatprep.subr.mxu0 0.0
    %5224 = vmatpush1.msra.mxu0 0.0
    %5225 = vmatprep.subr.mxu0 0.0
    %5226 = vmatpush1.msra.mxu0 0.0
    %5227 = vmatprep.subr.mxu0 0.0
    %5228 = vmatpush1.msra.mxu0 0.0
    %5229 = vmatprep.subr.mxu0 0.0
    %5230 = vmatpush1.msra.mxu0 0.0
    %5231 = vmatprep.subr.mxu0 0.0
    %5232 = vmatpush1.msra.mxu0 0.0
    %5233 = vmatprep.subr.mxu0 0.0
    %5234 = vmatpush1.msra.mxu0 0.0
    %5235 = vmatprep.subr.mxu0 0.0
    %5236 = vmatpush1.msra.mxu0 0.0
    %5237 = vmatprep.subr.mxu0 0.0
    %5238 = vmatpush1.msra.mxu0 0.0
    %5239 = vmatprep.subr.mxu0 0.0
    %5240 = vmatpush1.msra.mxu0 0.0
    %5241 = vmatprep.subr.mxu0 0.0
    %5242 = vmatpush1.msra.mxu0 0.0
    %5243 = vmatprep.subr.mxu0 0.0
    %5244 = vmatpush1.msra.mxu0 0.0
    %5245 = vmatprep.subr.mxu0 0.0
    %5246 = vmatpush1.msra.mxu0 0.0
    %5247 = vmatprep.subr.mxu0 0.0
    %5248 = vmatpush1.msra.mxu0 0.0
    %5249 = vmatprep.subr.mxu0 0.0
    %5250 = vmatpush1.msra.mxu0 0.0
    %5251 = vmatprep.subr.mxu0 0.0
    %5252 = vmatpush1.msra.mxu0 0.0
    %5253 = vmatprep.subr.mxu0 0.0
    %5254 = vmatpush1.msra.mxu0 0.0
    %5255 = vmatprep.subr.mxu0 0.0
    %5256 = vmatpush1.msra.mxu0 0.0
    %5257 = vmatprep.subr.mxu0 0.0
    %5258 = vmatpush1.msra.mxu0 0.0
    %5259 = vmatprep.subr.mxu0 0.0
    %5260 = vmatpush1.msra.mxu0 0.0
    %5261 = vmatprep.subr.mxu0 0.0
    %5262 = vmatpush1.msra.mxu0 0.0
    %5263 = vmatprep.subr.mxu0 0.0
    %5264 = vmatpush1.msra.mxu0 0.0
    %5265 = vmatprep.subr.mxu0 0.0
    %5266 = vmatpush1.msra.mxu0 0.0
    %5267 = vmatprep.subr.mxu0 0.0
    %5268 = vmatpush1.msra.mxu0 0.0
    %5269 = vmatprep.subr.mxu0 0.0
    %5270 = vmatpush1.msra.mxu0 0.0
    %5271 = vmatprep.mubr.f32.mxu0 0.0
    %5272 = vmatmul.mubr.f32.gmra.mrb[0].mxu0 %v5205
    %v5273 = vpop.f32.mrb[0].mxu0
    %v5274 = vadd.f32 0.0, %v5273
    %v5275 = vpop.f32.mrb[0].mxu0
    %5276 = vdwg.mxu0
    %v5277 = vld [vmem:[%s1002] sm:$0xff]
    %v5279 = vsel %vm425, %v5274, 0
    %5281 = vmatprep.subr.mxu0 0.0
    %5282 = vmatpush1.msra.mxu0 %v5277
    %5283 = vmatprep.subr.mxu0 0.0
    %5284 = vmatpush1.msra.mxu0 0.0
    %5285 = vmatprep.subr.mxu0 0.0
    %5286 = vmatpush1.msra.mxu0 0.0
    %5287 = vmatprep.subr.mxu0 0.0
    %5288 = vmatpush1.msra.mxu0 0.0
    %5289 = vmatprep.subr.mxu0 0.0
    %5290 = vmatpush1.msra.mxu0 0.0
    %5291 = vmatprep.subr.mxu0 0.0
    %5292 = vmatpush1.msra.mxu0 0.0
    %5293 = vmatprep.subr.mxu0 0.0
    %5294 = vmatpush1.msra.mxu0 0.0
    %5295 = vmatprep.subr.mxu0 0.0
    %5296 = vmatpush1.msra.mxu0 0.0
    %5297 = vmatprep.subr.mxu0 0.0
    %5298 = vmatpush1.msra.mxu0 0.0
    %5299 = vmatprep.subr.mxu0 0.0
    %5300 = vmatpush1.msra.mxu0 0.0
    %5301 = vmatprep.subr.mxu0 0.0
    %5302 = vmatpush1.msra.mxu0 0.0
    %5303 = vmatprep.subr.mxu0 0.0
    %5304 = vmatpush1.msra.mxu0 0.0
    %5305 = vmatprep.subr.mxu0 0.0
    %5306 = vmatpush1.msra.mxu0 0.0
    %5307 = vmatprep.subr.mxu0 0.0
    %5308 = vmatpush1.msra.mxu0 0.0
    %5309 = vmatprep.subr.mxu0 0.0
    %5310 = vmatpush1.msra.mxu0 0.0
    %5311 = vmatprep.subr.mxu0 0.0
    %5312 = vmatpush1.msra.mxu0 0.0
    %5313 = vmatprep.subr.mxu0 0.0
    %5314 = vmatpush1.msra.mxu0 0.0
    %5315 = vmatprep.subr.mxu0 0.0
    %5316 = vmatpush1.msra.mxu0 0.0
    %5317 = vmatprep.subr.mxu0 0.0
    %5318 = vmatpush1.msra.mxu0 0.0
    %5319 = vmatprep.subr.mxu0 0.0
    %5320 = vmatpush1.msra.mxu0 0.0
    %5321 = vmatprep.subr.mxu0 0.0
    %5322 = vmatpush1.msra.mxu0 0.0
    %5323 = vmatprep.subr.mxu0 0.0
    %5324 = vmatpush1.msra.mxu0 0.0
    %5325 = vmatprep.subr.mxu0 0.0
    %5326 = vmatpush1.msra.mxu0 0.0
    %5327 = vmatprep.subr.mxu0 0.0
    %5328 = vmatpush1.msra.mxu0 0.0
    %5329 = vmatprep.subr.mxu0 0.0
    %5330 = vmatpush1.msra.mxu0 0.0
    %5331 = vmatprep.subr.mxu0 0.0
    %5332 = vmatpush1.msra.mxu0 0.0
    %5333 = vmatprep.subr.mxu0 0.0
    %5334 = vmatpush1.msra.mxu0 0.0
    %5335 = vmatprep.subr.mxu0 0.0
    %5336 = vmatpush1.msra.mxu0 0.0
    %5337 = vmatprep.subr.mxu0 0.0
    %5338 = vmatpush1.msra.mxu0 0.0
    %5339 = vmatprep.subr.mxu0 0.0
    %5340 = vmatpush1.msra.mxu0 0.0
    %5341 = vmatprep.subr.mxu0 0.0
    %5342 = vmatpush1.msra.mxu0 0.0
    %5343 = vmatprep.subr.mxu0 0.0
    %5344 = vmatpush1.msra.mxu0 0.0
    %5345 = vmatprep.mubr.f32.mxu0 0.0
    %5346 = vmatmul.mubr.f32.gmra.mrb[0].mxu0 %v5279
    %v5347 = vpop.f32.mrb[0].mxu0
    %v5348 = vadd.f32 0.0, %v5347
    %v5349 = vpop.f32.mrb[0].mxu0
    %5350 = vdwg.mxu0
    %v5352 = vsel %vm425, %v4866, 0
    %5354 = vmatprep.subr.mxu0 0.0
    %5355 = vmatpush1.msra.mxu0 %v4869
    %5356 = vmatprep.subr.mxu0 0.0
    %5357 = vmatpush1.msra.mxu0 0.0
    %5358 = vmatprep.subr.mxu0 0.0
    %5359 = vmatpush1.msra.mxu0 0.0
    %5360 = vmatprep.subr.mxu0 0.0
    %5361 = vmatpush1.msra.mxu0 0.0
    %5362 = vmatprep.subr.mxu0 0.0
    %5363 = vmatpush1.msra.mxu0 0.0
    %5364 = vmatprep.subr.mxu0 0.0
    %5365 = vmatpush1.msra.mxu0 0.0
    %5366 = vmatprep.subr.mxu0 0.0
    %5367 = vmatpush1.msra.mxu0 0.0
    %5368 = vmatprep.subr.mxu0 0.0
    %5369 = vmatpush1.msra.mxu0 0.0
    %5370 = vmatprep.subr.mxu0 0.0
    %5371 = vmatpush1.msra.mxu0 0.0
    %5372 = vmatprep.subr.mxu0 0.0
    %5373 = vmatpush1.msra.mxu0 0.0
    %5374 = vmatprep.subr.mxu0 0.0
    %5375 = vmatpush1.msra.mxu0 0.0
    %5376 = vmatprep.subr.mxu0 0.0
    %5377 = vmatpush1.msra.mxu0 0.0
    %5378 = vmatprep.subr.mxu0 0.0
    %5379 = vmatpush1.msra.mxu0 0.0
    %5380 = vmatprep.subr.mxu0 0.0
    %5381 = vmatpush1.msra.mxu0 0.0
    %5382 = vmatprep.subr.mxu0 0.0
    %5383 = vmatpush1.msra.mxu0 0.0
    %5384 = vmatprep.subr.mxu0 0.0
    %5385 = vmatpush1.msra.mxu0 0.0
    %5386 = vmatprep.subr.mxu0 0.0
    %5387 = vmatpush1.msra.mxu0 0.0
    %5388 = vmatprep.subr.mxu0 0.0
    %5389 = vmatpush1.msra.mxu0 0.0
    %5390 = vmatprep.subr.mxu0 0.0
    %5391 = vmatpush1.msra.mxu0 0.0
    %5392 = vmatprep.subr.mxu0 0.0
    %5393 = vmatpush1.msra.mxu0 0.0
    %5394 = vmatprep.subr.mxu0 0.0
    %5395 = vmatpush1.msra.mxu0 0.0
    %5396 = vmatprep.subr.mxu0 0.0
    %5397 = vmatpush1.msra.mxu0 0.0
    %5398 = vmatprep.subr.mxu0 0.0
    %5399 = vmatpush1.msra.mxu0 0.0
    %5400 = vmatprep.subr.mxu0 0.0
    %5401 = vmatpush1.msra.mxu0 0.0
    %5402 = vmatprep.subr.mxu0 0.0
    %5403 = vmatpush1.msra.mxu0 0.0
    %5404 = vmatprep.subr.mxu0 0.0
    %5405 = vmatpush1.msra.mxu0 0.0
    %5406 = vmatprep.subr.mxu0 0.0
    %5407 = vmatpush1.msra.mxu0 0.0
    %5408 = vmatprep.subr.mxu0 0.0
    %5409 = vmatpush1.msra.mxu0 0.0
    %5410 = vmatprep.subr.mxu0 0.0
    %5411 = vmatpush1.msra.mxu0 0.0
    %5412 = vmatprep.subr.mxu0 0.0
    %5413 = vmatpush1.msra.mxu0 0.0
    %5414 = vmatprep.subr.mxu0 0.0
    %5415 = vmatpush1.msra.mxu0 0.0
    %5416 = vmatprep.subr.mxu0 0.0
    %5417 = vmatpush1.msra.mxu0 0.0
    %5418 = vmatprep.mubr.f32.mxu0 0.0
    %5419 = vmatmul.mubr.f32.gmra.mrb[0].mxu0 %v5352
    %v5420 = vpop.f32.mrb[0].mxu0
    %v5421 = vadd.f32 %v5348, %v5420
    %v5422 = vpop.f32.mrb[0].mxu0
    %5423 = vdwg.mxu0
    %v5424 = vld [vmem:[%s1150] sm:$0xff]
    %v5425 = vld [vmem:[%s1150 + $0x8] sm:$0xff]
    %v5426 = vld [vmem:[%s1150 + $0x10] sm:$0xff]
    %v5427 = vld [vmem:[%s1150 + $0x18] sm:$0xff]
    %v5428 = vld [vmem:[%s1155] sm:$0x1]
    %v5430 = vlaneseq
    %v5431 = vshrl.u32 %v5430, 7
    %v5432 = vsub.s32 0, %v5431
    %v5433 = vrot.slane %v5428, %v5432
    %5435 = vmatprep.subr.mxu0 0.0
    %5436 = vmatpush1.msra.mxu0 %v5424
    %5437 = vmatprep.subr.mxu0 0.0
    %5438 = vmatpush1.msra.mxu0 %v5425
    %5439 = vmatprep.subr.mxu0 0.0
    %5440 = vmatpush1.msra.mxu0 %v5426
    %5441 = vmatprep.subr.mxu0 0.0
    %5442 = vmatpush1.msra.mxu0 %v5427
    %5443 = vmatprep.subr.mxu0 0.0
    %5444 = vmatpush1.msra.mxu0 0.0
    %5445 = vmatprep.subr.mxu0 0.0
    %5446 = vmatpush1.msra.mxu0 0.0
    %5447 = vmatprep.subr.mxu0 0.0
    %5448 = vmatpush1.msra.mxu0 0.0
    %5449 = vmatprep.subr.mxu0 0.0
    %5450 = vmatpush1.msra.mxu0 0.0
    %5451 = vmatprep.subr.mxu0 0.0
    %5452 = vmatpush1.msra.mxu0 0.0
    %5453 = vmatprep.subr.mxu0 0.0
    %5454 = vmatpush1.msra.mxu0 0.0
    %5455 = vmatprep.subr.mxu0 0.0
    %5456 = vmatpush1.msra.mxu0 0.0
    %5457 = vmatprep.subr.mxu0 0.0
    %5458 = vmatpush1.msra.mxu0 0.0
    %5459 = vmatprep.subr.mxu0 0.0
    %5460 = vmatpush1.msra.mxu0 0.0
    %5461 = vmatprep.subr.mxu0 0.0
    %5462 = vmatpush1.msra.mxu0 0.0
    %5463 = vmatprep.subr.mxu0 0.0
    %5464 = vmatpush1.msra.mxu0 0.0
    %5465 = vmatprep.subr.mxu0 0.0
    %5466 = vmatpush1.msra.mxu0 0.0
    %5467 = vmatprep.subr.mxu0 0.0
    %5468 = vmatpush1.msra.mxu0 0.0
    %5469 = vmatprep.subr.mxu0 0.0
    %5470 = vmatpush1.msra.mxu0 0.0
    %5471 = vmatprep.subr.mxu0 0.0
    %5472 = vmatpush1.msra.mxu0 0.0
    %5473 = vmatprep.subr.mxu0 0.0
    %5474 = vmatpush1.msra.mxu0 0.0
    %5475 = vmatprep.subr.mxu0 0.0
    %5476 = vmatpush1.msra.mxu0 0.0
    %5477 = vmatprep.subr.mxu0 0.0
    %5478 = vmatpush1.msra.mxu0 0.0
    %5479 = vmatprep.subr.mxu0 0.0
    %5480 = vmatpush1.msra.mxu0 0.0
    %5481 = vmatprep.subr.mxu0 0.0
    %5482 = vmatpush1.msra.mxu0 0.0
    %5483 = vmatprep.subr.mxu0 0.0
    %5484 = vmatpush1.msra.mxu0 0.0
    %5485 = vmatprep.subr.mxu0 0.0
    %5486 = vmatpush1.msra.mxu0 0.0
    %5487 = vmatprep.subr.mxu0 0.0
    %5488 = vmatpush1.msra.mxu0 0.0
    %5489 = vmatprep.subr.mxu0 0.0
    %5490 = vmatpush1.msra.mxu0 0.0
    %5491 = vmatprep.subr.mxu0 0.0
    %5492 = vmatpush1.msra.mxu0 0.0
    %5493 = vmatprep.subr.mxu0 0.0
    %5494 = vmatpush1.msra.mxu0 0.0
    %5495 = vmatprep.subr.mxu0 0.0
    %5496 = vmatpush1.msra.mxu0 0.0
    %5497 = vmatprep.subr.mxu0 0.0
    %5498 = vmatpush1.msra.mxu0 0.0
    %5499 = vmatprep.mubr.f32.mxu0 0.0
    %5500 = vmatmul.mubr.f32.gmra.mrb[0].mxu0 %v4471
    %v5501 = vpop.f32.mrb[0].mxu0
    %v5502 = vadd.f32 %v5433, %v5501
    %v5503 = vpop.f32.mrb[0].mxu0
    %5504 = vdwg.mxu0
    %v5505 = vld [vmem:[%s1233] sm:$0xff]
    %v5506 = vld [vmem:[%s1233 + $0x8] sm:$0xff]
    %v5507 = vld [vmem:[%s1233 + $0x10] sm:$0xff]
    %v5508 = vld [vmem:[%s1233 + $0x18] sm:$0xff]
    %v5509 = vld [vmem:[%s1238] sm:$0x1]
    %v5511 = vlaneseq
    %v5512 = vshrl.u32 %v5511, 7
    %v5513 = vsub.s32 0, %v5512
    %v5514 = vrot.slane %v5509, %v5513
    %5516 = vmatprep.subr.mxu0 0.0
    %5517 = vmatpush1.msra.mxu0 %v5505
    %5518 = vmatprep.subr.mxu0 0.0
    %5519 = vmatpush1.msra.mxu0 %v5506
    %5520 = vmatprep.subr.mxu0 0.0
    %5521 = vmatpush1.msra.mxu0 %v5507
    %5522 = vmatprep.subr.mxu0 0.0
    %5523 = vmatpush1.msra.mxu0 %v5508
    %5524 = vmatprep.subr.mxu0 0.0
    %5525 = vmatpush1.msra.mxu0 0.0
    %5526 = vmatprep.subr.mxu0 0.0
    %5527 = vmatpush1.msra.mxu0 0.0
    %5528 = vmatprep.subr.mxu0 0.0
    %5529 = vmatpush1.msra.mxu0 0.0
    %5530 = vmatprep.subr.mxu0 0.0
    %5531 = vmatpush1.msra.mxu0 0.0
    %5532 = vmatprep.subr.mxu0 0.0
    %5533 = vmatpush1.msra.mxu0 0.0
    %5534 = vmatprep.subr.mxu0 0.0
    %5535 = vmatpush1.msra.mxu0 0.0
    %5536 = vmatprep.subr.mxu0 0.0
    %5537 = vmatpush1.msra.mxu0 0.0
    %5538 = vmatprep.subr.mxu0 0.0
    %5539 = vmatpush1.msra.mxu0 0.0
    %5540 = vmatprep.subr.mxu0 0.0
    %5541 = vmatpush1.msra.mxu0 0.0
    %5542 = vmatprep.subr.mxu0 0.0
    %5543 = vmatpush1.msra.mxu0 0.0
    %5544 = vmatprep.subr.mxu0 0.0
    %5545 = vmatpush1.msra.mxu0 0.0
    %5546 = vmatprep.subr.mxu0 0.0
    %5547 = vmatpush1.msra.mxu0 0.0
    %5548 = vmatprep.subr.mxu0 0.0
    %5549 = vmatpush1.msra.mxu0 0.0
    %5550 = vmatprep.subr.mxu0 0.0
    %5551 = vmatpush1.msra.mxu0 0.0
    %5552 = vmatprep.subr.mxu0 0.0
    %5553 = vmatpush1.msra.mxu0 0.0
    %5554 = vmatprep.subr.mxu0 0.0
    %5555 = vmatpush1.msra.mxu0 0.0
    %5556 = vmatprep.subr.mxu0 0.0
    %5557 = vmatpush1.msra.mxu0 0.0
    %5558 = vmatprep.subr.mxu0 0.0
    %5559 = vmatpush1.msra.mxu0 0.0
    %5560 = vmatprep.subr.mxu0 0.0
    %5561 = vmatpush1.msra.mxu0 0.0
    %5562 = vmatprep.subr.mxu0 0.0
    %5563 = vmatpush1.msra.mxu0 0.0
    %5564 = vmatprep.subr.mxu0 0.0
    %5565 = vmatpush1.msra.mxu0 0.0
    %5566 = vmatprep.subr.mxu0 0.0
    %5567 = vmatpush1.msra.mxu0 0.0
    %5568 = vmatprep.subr.mxu0 0.0
    %5569 = vmatpush1.msra.mxu0 0.0
    %5570 = vmatprep.subr.mxu0 0.0
    %5571 = vmatpush1.msra.mxu0 0.0
    %5572 = vmatprep.subr.mxu0 0.0
    %5573 = vmatpush1.msra.mxu0 0.0
    %5574 = vmatprep.subr.mxu0 0.0
    %5575 = vmatpush1.msra.mxu0 0.0
    %5576 = vmatprep.subr.mxu0 0.0
    %5577 = vmatpush1.msra.mxu0 0.0
    %5578 = vmatprep.subr.mxu0 0.0
    %5579 = vmatpush1.msra.mxu0 0.0
    %5580 = vmatprep.mubr.f32.mxu0 0.0
    %5581 = vmatmul.mubr.f32.gmra.mrb[0].mxu0 %v4471
    %v5582 = vpop.f32.mrb[0].mxu0
    %v5583 = vadd.f32 %v5514, %v5582
    %v5584 = vpop.f32.mrb[0].mxu0
    %5585 = vdwg.mxu0
    %v5586 = vld [vmem:[%s1316] sm:$0xff]
    %v5587 = vld [vmem:[%s1316 + $0x8] sm:$0xff]
    %v5588 = vld [vmem:[%s1316 + $0x10] sm:$0xff]
    %v5589 = vld [vmem:[%s1316 + $0x18] sm:$0xff]
    %v5590 = vld [vmem:[%s1321] sm:$0x1]
    %v5592 = vlaneseq
    %v5593 = vshrl.u32 %v5592, 7
    %v5594 = vsub.s32 0, %v5593
    %v5595 = vrot.slane %v5590, %v5594
    %5597 = vmatprep.subr.mxu0 0.0
    %5598 = vmatpush1.msra.mxu0 %v5586
    %5599 = vmatprep.subr.mxu0 0.0
    %5600 = vmatpush1.msra.mxu0 %v5587
    %5601 = vmatprep.subr.mxu0 0.0
    %5602 = vmatpush1.msra.mxu0 %v5588
    %5603 = vmatprep.subr.mxu0 0.0
    %5604 = vmatpush1.msra.mxu0 %v5589
    %5605 = vmatprep.subr.mxu0 0.0
    %5606 = vmatpush1.msra.mxu0 0.0
    %5607 = vmatprep.subr.mxu0 0.0
    %5608 = vmatpush1.msra.mxu0 0.0
    %5609 = vmatprep.subr.mxu0 0.0
    %5610 = vmatpush1.msra.mxu0 0.0
    %5611 = vmatprep.subr.mxu0 0.0
    %5612 = vmatpush1.msra.mxu0 0.0
    %5613 = vmatprep.subr.mxu0 0.0
    %5614 = vmatpush1.msra.mxu0 0.0
    %5615 = vmatprep.subr.mxu0 0.0
    %5616 = vmatpush1.msra.mxu0 0.0
    %5617 = vmatprep.subr.mxu0 0.0
    %5618 = vmatpush1.msra.mxu0 0.0
    %5619 = vmatprep.subr.mxu0 0.0
    %5620 = vmatpush1.msra.mxu0 0.0
    %5621 = vmatprep.subr.mxu0 0.0
    %5622 = vmatpush1.msra.mxu0 0.0
    %5623 = vmatprep.subr.mxu0 0.0
    %5624 = vmatpush1.msra.mxu0 0.0
    %5625 = vmatprep.subr.mxu0 0.0
    %5626 = vmatpush1.msra.mxu0 0.0
    %5627 = vmatprep.subr.mxu0 0.0
    %5628 = vmatpush1.msra.mxu0 0.0
    %5629 = vmatprep.subr.mxu0 0.0
    %5630 = vmatpush1.msra.mxu0 0.0
    %5631 = vmatprep.subr.mxu0 0.0
    %5632 = vmatpush1.msra.mxu0 0.0
    %5633 = vmatprep.subr.mxu0 0.0
    %5634 = vmatpush1.msra.mxu0 0.0
    %5635 = vmatprep.subr.mxu0 0.0
    %5636 = vmatpush1.msra.mxu0 0.0
    %5637 = vmatprep.subr.mxu0 0.0
    %5638 = vmatpush1.msra.mxu0 0.0
    %5639 = vmatprep.subr.mxu0 0.0
    %5640 = vmatpush1.msra.mxu0 0.0
    %5641 = vmatprep.subr.mxu0 0.0
    %5642 = vmatpush1.msra.mxu0 0.0
    %5643 = vmatprep.subr.mxu0 0.0
    %5644 = vmatpush1.msra.mxu0 0.0
    %5645 = vmatprep.subr.mxu0 0.0
    %5646 = vmatpush1.msra.mxu0 0.0
    %5647 = vmatprep.subr.mxu0 0.0
    %5648 = vmatpush1.msra.mxu0 0.0
    %5649 = vmatprep.subr.mxu0 0.0
    %5650 = vmatpush1.msra.mxu0 0.0
    %5651 = vmatprep.subr.mxu0 0.0
    %5652 = vmatpush1.msra.mxu0 0.0
    %5653 = vmatprep.subr.mxu0 0.0
    %5654 = vmatpush1.msra.mxu0 0.0
    %5655 = vmatprep.subr.mxu0 0.0
    %5656 = vmatpush1.msra.mxu0 0.0
    %5657 = vmatprep.subr.mxu0 0.0
    %5658 = vmatpush1.msra.mxu0 0.0
    %5659 = vmatprep.subr.mxu0 0.0
    %5660 = vmatpush1.msra.mxu0 0.0
    %5661 = vmatprep.mubr.f32.mxu0 0.0
    %5662 = vmatmul.mubr.f32.gmra.mrb[0].mxu0 %v4471
    %v5663 = vpop.f32.mrb[0].mxu0
    %v5664 = vadd.f32 %v5595, %v5663
    %v5665 = vpop.f32.mrb[0].mxu0
    %5666 = vdwg.mxu0
    %s5667 = scalar_lea.vmem [#allocation2], 48
    %5668 = vst.msk [vmem:[%s5667] sm:$0xff] %vm425, %v5583
    %s5669 = scalar_lea.vmem [#allocation4], 48
    %5670 = vst.msk [vmem:[%s5669] sm:$0xff] %vm425, %v5664
    %v5672 = vsel %vm425, %v5502, 0
    %v5675 = vsel %vm425, %v5583, 0
    %5677 = vmatprep.subr.mxu0 0.0
    %5678 = vmatpush1.xpose.msra.mxu0 %v5675
    %5679 = vmatprep.subr.mxu0 0.0
    %5680 = vmatpush1.xpose.msra.mxu0 0.0
    %5681 = vmatprep.subr.mxu0 0.0
    %5682 = vmatpush1.xpose.msra.mxu0 0.0
    %5683 = vmatprep.subr.mxu0 0.0
    %5684 = vmatpush1.xpose.msra.mxu0 0.0
    %5685 = vmatprep.subr.mxu0 0.0
    %5686 = vmatpush1.xpose.msra.mxu0 0.0
    %5687 = vmatprep.subr.mxu0 0.0
    %5688 = vmatpush1.xpose.msra.mxu0 0.0
    %5689 = vmatprep.subr.mxu0 0.0
    %5690 = vmatpush1.xpose.msra.mxu0 0.0
    %5691 = vmatprep.subr.mxu0 0.0
    %5692 = vmatpush1.xpose.msra.mxu0 0.0
    %5693 = vmatprep.subr.mxu0 0.0
    %5694 = vmatpush1.xpose.msra.mxu0 0.0
    %5695 = vmatprep.subr.mxu0 0.0
    %5696 = vmatpush1.xpose.msra.mxu0 0.0
    %5697 = vmatprep.subr.mxu0 0.0
    %5698 = vmatpush1.xpose.msra.mxu0 0.0
    %5699 = vmatprep.subr.mxu0 0.0
    %5700 = vmatpush1.xpose.msra.mxu0 0.0
    %5701 = vmatprep.subr.mxu0 0.0
    %5702 = vmatpush1.xpose.msra.mxu0 0.0
    %5703 = vmatprep.subr.mxu0 0.0
    %5704 = vmatpush1.xpose.msra.mxu0 0.0
    %5705 = vmatprep.subr.mxu0 0.0
    %5706 = vmatpush1.xpose.msra.mxu0 0.0
    %5707 = vmatprep.subr.mxu0 0.0
    %5708 = vmatpush1.xpose.msra.mxu0 0.0
    %5709 = vmatprep.subr.mxu0 0.0
    %5710 = vmatpush1.xpose.msra.mxu0 0.0
    %5711 = vmatprep.subr.mxu0 0.0
    %5712 = vmatpush1.xpose.msra.mxu0 0.0
    %5713 = vmatprep.subr.mxu0 0.0
    %5714 = vmatpush1.xpose.msra.mxu0 0.0
    %5715 = vmatprep.subr.mxu0 0.0
    %5716 = vmatpush1.xpose.msra.mxu0 0.0
    %5717 = vmatprep.subr.mxu0 0.0
    %5718 = vmatpush1.xpose.msra.mxu0 0.0
    %5719 = vmatprep.subr.mxu0 0.0
    %5720 = vmatpush1.xpose.msra.mxu0 0.0
    %5721 = vmatprep.subr.mxu0 0.0
    %5722 = vmatpush1.xpose.msra.mxu0 0.0
    %5723 = vmatprep.subr.mxu0 0.0
    %5724 = vmatpush1.xpose.msra.mxu0 0.0
    %5725 = vmatprep.subr.mxu0 0.0
    %5726 = vmatpush1.xpose.msra.mxu0 0.0
    %5727 = vmatprep.subr.mxu0 0.0
    %5728 = vmatpush1.xpose.msra.mxu0 0.0
    %5729 = vmatprep.subr.mxu0 0.0
    %5730 = vmatpush1.xpose.msra.mxu0 0.0
    %5731 = vmatprep.subr.mxu0 0.0
    %5732 = vmatpush1.xpose.msra.mxu0 0.0
    %5733 = vmatprep.subr.mxu0 0.0
    %5734 = vmatpush1.xpose.msra.mxu0 0.0
    %5735 = vmatprep.subr.mxu0 0.0
    %5736 = vmatpush1.xpose.msra.mxu0 0.0
    %5737 = vmatprep.subr.mxu0 0.0
    %5738 = vmatpush1.xpose.msra.mxu0 0.0
    %5739 = vmatprep.subr.mxu0 0.0
    %5740 = vmatpush1.xpose.msra.mxu0 0.0
    %5741 = vmatprep.mubr.f32.mxu0 0.0
    %5742 = vmatmul.mubr.f32.gmra.mrb[0].mxu0 %v5672
    %v5743 = vpop.f32.mrb[0].mxu0
    %v5744 = vadd.f32 %v4451, %v5743
    %v5745 = vpop.f32.mrb[0].mxu0
    %5746 = vdwg.mxu0
    %v5747 = vsel %vm425, %v5744, -inf
    %5748 = vmax.xlane.f32.xlu0 %v5747
    %v5749 = vpop.xlane.xlu0 %5748
    %v5750 = vsub.f32 %v5744, %v5749
    %v5751 = vmul.f32 %v5750, 1.442695
    %v5752 = vpow.pop %v5751
    %v5753 = vsel %vm425, %v5752, 0.0
    %5754 = vadd.xlane.f32.xlu0 %v5753
    %v5755 = vpop.xlane.xlu0 %5754
    %v5756 = vrcp.pop %v5755
    %v5757 = vmul.f32 %v5752, %v5756
    %v5759 = vsel %vm425, %v5757, 0
    %5761 = vmatprep.subr.mxu0 0.0
    %5762 = vmatpush1.msra.mxu0 %v5664
    %5763 = vmatprep.subr.mxu0 0.0
    %5764 = vmatpush1.msra.mxu0 0.0
    %5765 = vmatprep.subr.mxu0 0.0
    %5766 = vmatpush1.msra.mxu0 0.0
    %5767 = vmatprep.subr.mxu0 0.0
    %5768 = vmatpush1.msra.mxu0 0.0
    %5769 = vmatprep.subr.mxu0 0.0
    %5770 = vmatpush1.msra.mxu0 0.0
    %5771 = vmatprep.subr.mxu0 0.0
    %5772 = vmatpush1.msra.mxu0 0.0
    %5773 = vmatprep.subr.mxu0 0.0
    %5774 = vmatpush1.msra.mxu0 0.0
    %5775 = vmatprep.subr.mxu0 0.0
    %5776 = vmatpush1.msra.mxu0 0.0
    %5777 = vmatprep.subr.mxu0 0.0
    %5778 = vmatpush1.msra.mxu0 0.0
    %5779 = vmatprep.subr.mxu0 0.0
    %5780 = vmatpush1.msra.mxu0 0.0
    %5781 = vmatprep.subr.mxu0 0.0
    %5782 = vmatpush1.msra.mxu0 0.0
    %5783 = vmatprep.subr.mxu0 0.0
    %5784 = vmatpush1.msra.mxu0 0.0
    %5785 = vmatprep.subr.mxu0 0.0
    %5786 = vmatpush1.msra.mxu0 0.0
    %5787 = vmatprep.subr.mxu0 0.0
    %5788 = vmatpush1.msra.mxu0 0.0
    %5789 = vmatprep.subr.mxu0 0.0
    %5790 = vmatpush1.msra.mxu0 0.0
    %5791 = vmatprep.subr.mxu0 0.0
    %5792 = vmatpush1.msra.mxu0 0.0
    %5793 = vmatprep.subr.mxu0 0.0
    %5794 = vmatpush1.msra.mxu0 0.0
    %5795 = vmatprep.subr.mxu0 0.0
    %5796 = vmatpush1.msra.mxu0 0.0
    %5797 = vmatprep.subr.mxu0 0.0
    %5798 = vmatpush1.msra.mxu0 0.0
    %5799 = vmatprep.subr.mxu0 0.0
    %5800 = vmatpush1.msra.mxu0 0.0
    %5801 = vmatprep.subr.mxu0 0.0
    %5802 = vmatpush1.msra.mxu0 0.0
    %5803 = vmatprep.subr.mxu0 0.0
    %5804 = vmatpush1.msra.mxu0 0.0
    %5805 = vmatprep.subr.mxu0 0.0
    %5806 = vmatpush1.msra.mxu0 0.0
    %5807 = vmatprep.subr.mxu0 0.0
    %5808 = vmatpush1.msra.mxu0 0.0
    %5809 = vmatprep.subr.mxu0 0.0
    %5810 = vmatpush1.msra.mxu0 0.0
    %5811 = vmatprep.subr.mxu0 0.0
    %5812 = vmatpush1.msra.mxu0 0.0
    %5813 = vmatprep.subr.mxu0 0.0
    %5814 = vmatpush1.msra.mxu0 0.0
    %5815 = vmatprep.subr.mxu0 0.0
    %5816 = vmatpush1.msra.mxu0 0.0
    %5817 = vmatprep.subr.mxu0 0.0
    %5818 = vmatpush1.msra.mxu0 0.0
    %5819 = vmatprep.subr.mxu0 0.0
    %5820 = vmatpush1.msra.mxu0 0.0
    %5821 = vmatprep.subr.mxu0 0.0
    %5822 = vmatpush1.msra.mxu0 0.0
    %5823 = vmatprep.subr.mxu0 0.0
    %5824 = vmatpush1.msra.mxu0 0.0
    %5825 = vmatprep.mubr.f32.mxu0 0.0
    %5826 = vmatmul.mubr.f32.gmra.mrb[0].mxu0 %v5759
    %v5827 = vpop.f32.mrb[0].mxu0
    %v5828 = vadd.f32 0.0, %v5827
    %v5829 = vpop.f32.mrb[0].mxu0
    %5830 = vdwg.mxu0
    %v5831 = vld [vmem:[%s1563] sm:$0xff]
    %v5833 = vsel %vm425, %v5828, 0
    %5835 = vmatprep.subr.mxu0 0.0
    %5836 = vmatpush1.msra.mxu0 %v5831
    %5837 = vmatprep.subr.mxu0 0.0
    %5838 = vmatpush1.msra.mxu0 0.0
    %5839 = vmatprep.subr.mxu0 0.0
    %5840 = vmatpush1.msra.mxu0 0.0
    %5841 = vmatprep.subr.mxu0 0.0
    %5842 = vmatpush1.msra.mxu0 0.0
    %5843 = vmatprep.subr.mxu0 0.0
    %5844 = vmatpush1.msra.mxu0 0.0
    %5845 = vmatprep.subr.mxu0 0.0
    %5846 = vmatpush1.msra.mxu0 0.0
    %5847 = vmatprep.subr.mxu0 0.0
    %5848 = vmatpush1.msra.mxu0 0.0
    %5849 = vmatprep.subr.mxu0 0.0
    %5850 = vmatpush1.msra.mxu0 0.0
    %5851 = vmatprep.subr.mxu0 0.0
    %5852 = vmatpush1.msra.mxu0 0.0
    %5853 = vmatprep.subr.mxu0 0.0
    %5854 = vmatpush1.msra.mxu0 0.0
    %5855 = vmatprep.subr.mxu0 0.0
    %5856 = vmatpush1.msra.mxu0 0.0
    %5857 = vmatprep.subr.mxu0 0.0
    %5858 = vmatpush1.msra.mxu0 0.0
    %5859 = vmatprep.subr.mxu0 0.0
    %5860 = vmatpush1.msra.mxu0 0.0
    %5861 = vmatprep.subr.mxu0 0.0
    %5862 = vmatpush1.msra.mxu0 0.0
    %5863 = vmatprep.subr.mxu0 0.0
    %5864 = vmatpush1.msra.mxu0 0.0
    %5865 = vmatprep.subr.mxu0 0.0
    %5866 = vmatpush1.msra.mxu0 0.0
    %5867 = vmatprep.subr.mxu0 0.0
    %5868 = vmatpush1.msra.mxu0 0.0
    %5869 = vmatprep.subr.mxu0 0.0
    %5870 = vmatpush1.msra.mxu0 0.0
    %5871 = vmatprep.subr.mxu0 0.0
    %5872 = vmatpush1.msra.mxu0 0.0
    %5873 = vmatprep.subr.mxu0 0.0
    %5874 = vmatpush1.msra.mxu0 0.0
    %5875 = vmatprep.subr.mxu0 0.0
    %5876 = vmatpush1.msra.mxu0 0.0
    %5877 = vmatprep.subr.mxu0 0.0
    %5878 = vmatpush1.msra.mxu0 0.0
    %5879 = vmatprep.subr.mxu0 0.0
    %5880 = vmatpush1.msra.mxu0 0.0
    %5881 = vmatprep.subr.mxu0 0.0
    %5882 = vmatpush1.msra.mxu0 0.0
    %5883 = vmatprep.subr.mxu0 0.0
    %5884 = vmatpush1.msra.mxu0 0.0
    %5885 = vmatprep.subr.mxu0 0.0
    %5886 = vmatpush1.msra.mxu0 0.0
    %5887 = vmatprep.subr.mxu0 0.0
    %5888 = vmatpush1.msra.mxu0 0.0
    %5889 = vmatprep.subr.mxu0 0.0
    %5890 = vmatpush1.msra.mxu0 0.0
    %5891 = vmatprep.subr.mxu0 0.0
    %5892 = vmatpush1.msra.mxu0 0.0
    %5893 = vmatprep.subr.mxu0 0.0
    %5894 = vmatpush1.msra.mxu0 0.0
    %5895 = vmatprep.subr.mxu0 0.0
    %5896 = vmatpush1.msra.mxu0 0.0
    %5897 = vmatprep.subr.mxu0 0.0
    %5898 = vmatpush1.msra.mxu0 0.0
    %5899 = vmatprep.mubr.f32.mxu0 0.0
    %5900 = vmatmul.mubr.f32.gmra.mrb[0].mxu0 %v5833
    %v5901 = vpop.f32.mrb[0].mxu0
    %v5902 = vadd.f32 0.0, %v5901
    %v5903 = vpop.f32.mrb[0].mxu0
    %5904 = vdwg.mxu0
    %v5905 = vadd.f32 %v5421, %v5902
    %v5906 = vld [vmem:[%s1639] sm:$0xff]
    %v5907 = vld [vmem:[%s1639 + $0x8] sm:$0xff]
    %v5908 = vld [vmem:[%s1639 + $0x10] sm:$0xff]
    %v5909 = vld [vmem:[%s1639 + $0x18] sm:$0xff]
    %v5910 = vld [vmem:[%s1644] sm:$0x1]
    %v5912 = vlaneseq
    %v5913 = vshrl.u32 %v5912, 7
    %v5914 = vsub.s32 0, %v5913
    %v5915 = vrot.slane %v5910, %v5914
    %5917 = vmatprep.subr.mxu0 0.0
    %5918 = vmatpush1.msra.mxu0 %v5906
    %5919 = vmatprep.subr.mxu0 0.0
    %5920 = vmatpush1.msra.mxu0 %v5907
    %5921 = vmatprep.subr.mxu0 0.0
    %5922 = vmatpush1.msra.mxu0 %v5908
    %5923 = vmatprep.subr.mxu0 0.0
    %5924 = vmatpush1.msra.mxu0 %v5909
    %5925 = vmatprep.subr.mxu0 0.0
    %5926 = vmatpush1.msra.mxu0 0.0
    %5927 = vmatprep.subr.mxu0 0.0
    %5928 = vmatpush1.msra.mxu0 0.0
    %5929 = vmatprep.subr.mxu0 0.0
    %5930 = vmatpush1.msra.mxu0 0.0
    %5931 = vmatprep.subr.mxu0 0.0
    %5932 = vmatpush1.msra.mxu0 0.0
    %5933 = vmatprep.subr.mxu0 0.0
    %5934 = vmatpush1.msra.mxu0 0.0
    %5935 = vmatprep.subr.mxu0 0.0
    %5936 = vmatpush1.msra.mxu0 0.0
    %5937 = vmatprep.subr.mxu0 0.0
    %5938 = vmatpush1.msra.mxu0 0.0
    %5939 = vmatprep.subr.mxu0 0.0
    %5940 = vmatpush1.msra.mxu0 0.0
    %5941 = vmatprep.subr.mxu0 0.0
    %5942 = vmatpush1.msra.mxu0 0.0
    %5943 = vmatprep.subr.mxu0 0.0
    %5944 = vmatpush1.msra.mxu0 0.0
    %5945 = vmatprep.subr.mxu0 0.0
    %5946 = vmatpush1.msra.mxu0 0.0
    %5947 = vmatprep.subr.mxu0 0.0
    %5948 = vmatpush1.msra.mxu0 0.0
    %5949 = vmatprep.subr.mxu0 0.0
    %5950 = vmatpush1.msra.mxu0 0.0
    %5951 = vmatprep.subr.mxu0 0.0
    %5952 = vmatpush1.msra.mxu0 0.0
    %5953 = vmatprep.subr.mxu0 0.0
    %5954 = vmatpush1.msra.mxu0 0.0
    %5955 = vmatprep.subr.mxu0 0.0
    %5956 = vmatpush1.msra.mxu0 0.0
    %5957 = vmatprep.subr.mxu0 0.0
    %5958 = vmatpush1.msra.mxu0 0.0
    %5959 = vmatprep.subr.mxu0 0.0
    %5960 = vmatpush1.msra.mxu0 0.0
    %5961 = vmatprep.subr.mxu0 0.0
    %5962 = vmatpush1.msra.mxu0 0.0
    %5963 = vmatprep.subr.mxu0 0.0
    %5964 = vmatpush1.msra.mxu0 0.0
    %5965 = vmatprep.subr.mxu0 0.0
    %5966 = vmatpush1.msra.mxu0 0.0
    %5967 = vmatprep.subr.mxu0 0.0
    %5968 = vmatpush1.msra.mxu0 0.0
    %5969 = vmatprep.subr.mxu0 0.0
    %5970 = vmatpush1.msra.mxu0 0.0
    %5971 = vmatprep.subr.mxu0 0.0
    %5972 = vmatpush1.msra.mxu0 0.0
    %5973 = vmatprep.subr.mxu0 0.0
    %5974 = vmatpush1.msra.mxu0 0.0
    %5975 = vmatprep.subr.mxu0 0.0
    %5976 = vmatpush1.msra.mxu0 0.0
    %5977 = vmatprep.subr.mxu0 0.0
    %5978 = vmatpush1.msra.mxu0 0.0
    %5979 = vmatprep.subr.mxu0 0.0
    %5980 = vmatpush1.msra.mxu0 0.0
    %5981 = vmatprep.mubr.f32.mxu0 0.0
    %5982 = vmatmul.mubr.f32.gmra.mrb[0].mxu0 %v4471
    %v5983 = vpop.f32.mrb[0].mxu0
    %v5984 = vadd.f32 %v5915, %v5983
    %v5985 = vpop.f32.mrb[0].mxu0
    %5986 = vdwg.mxu0
    %v5987 = vld [vmem:[%s1722] sm:$0xff]
    %v5988 = vld [vmem:[%s1722 + $0x8] sm:$0xff]
    %v5989 = vld [vmem:[%s1722 + $0x10] sm:$0xff]
    %v5990 = vld [vmem:[%s1722 + $0x18] sm:$0xff]
    %v5991 = vld [vmem:[%s1727] sm:$0x1]
    %v5993 = vlaneseq
    %v5994 = vshrl.u32 %v5993, 7
    %v5995 = vsub.s32 0, %v5994
    %v5996 = vrot.slane %v5991, %v5995
    %5998 = vmatprep.subr.mxu0 0.0
    %5999 = vmatpush1.msra.mxu0 %v5987
    %6000 = vmatprep.subr.mxu0 0.0
    %6001 = vmatpush1.msra.mxu0 %v5988
    %6002 = vmatprep.subr.mxu0 0.0
    %6003 = vmatpush1.msra.mxu0 %v5989
    %6004 = vmatprep.subr.mxu0 0.0
    %6005 = vmatpush1.msra.mxu0 %v5990
    %6006 = vmatprep.subr.mxu0 0.0
    %6007 = vmatpush1.msra.mxu0 0.0
    %6008 = vmatprep.subr.mxu0 0.0
    %6009 = vmatpush1.msra.mxu0 0.0
    %6010 = vmatprep.subr.mxu0 0.0
    %6011 = vmatpush1.msra.mxu0 0.0
    %6012 = vmatprep.subr.mxu0 0.0
    %6013 = vmatpush1.msra.mxu0 0.0
    %6014 = vmatprep.subr.mxu0 0.0
    %6015 = vmatpush1.msra.mxu0 0.0
    %6016 = vmatprep.subr.mxu0 0.0
    %6017 = vmatpush1.msra.mxu0 0.0
    %6018 = vmatprep.subr.mxu0 0.0
    %6019 = vmatpush1.msra.mxu0 0.0
    %6020 = vmatprep.subr.mxu0 0.0
    %6021 = vmatpush1.msra.mxu0 0.0
    %6022 = vmatprep.subr.mxu0 0.0
    %6023 = vmatpush1.msra.mxu0 0.0
    %6024 = vmatprep.subr.mxu0 0.0
    %6025 = vmatpush1.msra.mxu0 0.0
    %6026 = vmatprep.subr.mxu0 0.0
    %6027 = vmatpush1.msra.mxu0 0.0
    %6028 = vmatprep.subr.mxu0 0.0
    %6029 = vmatpush1.msra.mxu0 0.0
    %6030 = vmatprep.subr.mxu0 0.0
    %6031 = vmatpush1.msra.mxu0 0.0
    %6032 = vmatprep.subr.mxu0 0.0
    %6033 = vmatpush1.msra.mxu0 0.0
    %6034 = vmatprep.subr.mxu0 0.0
    %6035 = vmatpush1.msra.mxu0 0.0
    %6036 = vmatprep.subr.mxu0 0.0
    %6037 = vmatpush1.msra.mxu0 0.0
    %6038 = vmatprep.subr.mxu0 0.0
    %6039 = vmatpush1.msra.mxu0 0.0
    %6040 = vmatprep.subr.mxu0 0.0
    %6041 = vmatpush1.msra.mxu0 0.0
    %6042 = vmatprep.subr.mxu0 0.0
    %6043 = vmatpush1.msra.mxu0 0.0
    %6044 = vmatprep.subr.mxu0 0.0
    %6045 = vmatpush1.msra.mxu0 0.0
    %6046 = vmatprep.subr.mxu0 0.0
    %6047 = vmatpush1.msra.mxu0 0.0
    %6048 = vmatprep.subr.mxu0 0.0
    %6049 = vmatpush1.msra.mxu0 0.0
    %6050 = vmatprep.subr.mxu0 0.0
    %6051 = vmatpush1.msra.mxu0 0.0
    %6052 = vmatprep.subr.mxu0 0.0
    %6053 = vmatpush1.msra.mxu0 0.0
    %6054 = vmatprep.subr.mxu0 0.0
    %6055 = vmatpush1.msra.mxu0 0.0
    %6056 = vmatprep.subr.mxu0 0.0
    %6057 = vmatpush1.msra.mxu0 0.0
    %6058 = vmatprep.subr.mxu0 0.0
    %6059 = vmatpush1.msra.mxu0 0.0
    %6060 = vmatprep.subr.mxu0 0.0
    %6061 = vmatpush1.msra.mxu0 0.0
    %6062 = vmatprep.mubr.f32.mxu0 0.0
    %6063 = vmatmul.mubr.f32.gmra.mrb[0].mxu0 %v4471
    %v6064 = vpop.f32.mrb[0].mxu0
    %v6065 = vadd.f32 %v5996, %v6064
    %v6066 = vpop.f32.mrb[0].mxu0
    %6067 = vdwg.mxu0
    %v6068 = vld [vmem:[%s1805] sm:$0xff]
    %v6069 = vld [vmem:[%s1805 + $0x8] sm:$0xff]
    %v6070 = vld [vmem:[%s1805 + $0x10] sm:$0xff]
    %v6071 = vld [vmem:[%s1805 + $0x18] sm:$0xff]
    %v6072 = vld [vmem:[%s1810] sm:$0x1]
    %v6074 = vlaneseq
    %v6075 = vshrl.u32 %v6074, 7
    %v6076 = vsub.s32 0, %v6075
    %v6077 = vrot.slane %v6072, %v6076
    %6079 = vmatprep.subr.mxu0 0.0
    %6080 = vmatpush1.msra.mxu0 %v6068
    %6081 = vmatprep.subr.mxu0 0.0
    %6082 = vmatpush1.msra.mxu0 %v6069
    %6083 = vmatprep.subr.mxu0 0.0
    %6084 = vmatpush1.msra.mxu0 %v6070
    %6085 = vmatprep.subr.mxu0 0.0
    %6086 = vmatpush1.msra.mxu0 %v6071
    %6087 = vmatprep.subr.mxu0 0.0
    %6088 = vmatpush1.msra.mxu0 0.0
    %6089 = vmatprep.subr.mxu0 0.0
    %6090 = vmatpush1.msra.mxu0 0.0
    %6091 = vmatprep.subr.mxu0 0.0
    %6092 = vmatpush1.msra.mxu0 0.0
    %6093 = vmatprep.subr.mxu0 0.0
    %6094 = vmatpush1.msra.mxu0 0.0
    %6095 = vmatprep.subr.mxu0 0.0
    %6096 = vmatpush1.msra.mxu0 0.0
    %6097 = vmatprep.subr.mxu0 0.0
    %6098 = vmatpush1.msra.mxu0 0.0
    %6099 = vmatprep.subr.mxu0 0.0
    %6100 = vmatpush1.msra.mxu0 0.0
    %6101 = vmatprep.subr.mxu0 0.0
    %6102 = vmatpush1.msra.mxu0 0.0
    %6103 = vmatprep.subr.mxu0 0.0
    %6104 = vmatpush1.msra.mxu0 0.0
    %6105 = vmatprep.subr.mxu0 0.0
    %6106 = vmatpush1.msra.mxu0 0.0
    %6107 = vmatprep.subr.mxu0 0.0
    %6108 = vmatpush1.msra.mxu0 0.0
    %6109 = vmatprep.subr.mxu0 0.0
    %6110 = vmatpush1.msra.mxu0 0.0
    %6111 = vmatprep.subr.mxu0 0.0
    %6112 = vmatpush1.msra.mxu0 0.0
    %6113 = vmatprep.subr.mxu0 0.0
    %6114 = vmatpush1.msra.mxu0 0.0
    %6115 = vmatprep.subr.mxu0 0.0
    %6116 = vmatpush1.msra.mxu0 0.0
    %6117 = vmatprep.subr.mxu0 0.0
    %6118 = vmatpush1.msra.mxu0 0.0
    %6119 = vmatprep.subr.mxu0 0.0
    %6120 = vmatpush1.msra.mxu0 0.0
    %6121 = vmatprep.subr.mxu0 0.0
    %6122 = vmatpush1.msra.mxu0 0.0
    %6123 = vmatprep.subr.mxu0 0.0
    %6124 = vmatpush1.msra.mxu0 0.0
    %6125 = vmatprep.subr.mxu0 0.0
    %6126 = vmatpush1.msra.mxu0 0.0
    %6127 = vmatprep.subr.mxu0 0.0
    %6128 = vmatpush1.msra.mxu0 0.0
    %6129 = vmatprep.subr.mxu0 0.0
    %6130 = vmatpush1.msra.mxu0 0.0
    %6131 = vmatprep.subr.mxu0 0.0
    %6132 = vmatpush1.msra.mxu0 0.0
    %6133 = vmatprep.subr.mxu0 0.0
    %6134 = vmatpush1.msra.mxu0 0.0
    %6135 = vmatprep.subr.mxu0 0.0
    %6136 = vmatpush1.msra.mxu0 0.0
    %6137 = vmatprep.subr.mxu0 0.0
    %6138 = vmatpush1.msra.mxu0 0.0
    %6139 = vmatprep.subr.mxu0 0.0
    %6140 = vmatpush1.msra.mxu0 0.0
    %6141 = vmatprep.subr.mxu0 0.0
    %6142 = vmatpush1.msra.mxu0 0.0
    %6143 = vmatprep.mubr.f32.mxu0 0.0
    %6144 = vmatmul.mubr.f32.gmra.mrb[0].mxu0 %v4471
    %v6145 = vpop.f32.mrb[0].mxu0
    %v6146 = vadd.f32 %v6077, %v6145
    %v6147 = vpop.f32.mrb[0].mxu0
    %6148 = vdwg.mxu0
    %s6149 = scalar_lea.vmem [#allocation2], 56
    %6150 = vst.msk [vmem:[%s6149] sm:$0xff] %vm425, %v6065
    %s6151 = scalar_lea.vmem [#allocation4], 56
    %6152 = vst.msk [vmem:[%s6151] sm:$0xff] %vm425, %v6146
    %v6154 = vsel %vm425, %v5984, 0
    %v6157 = vsel %vm425, %v6065, 0
    %6159 = vmatprep.subr.mxu0 0.0
    %6160 = vmatpush1.xpose.msra.mxu0 %v6157
    %6161 = vmatprep.subr.mxu0 0.0
    %6162 = vmatpush1.xpose.msra.mxu0 0.0
    %6163 = vmatprep.subr.mxu0 0.0
    %6164 = vmatpush1.xpose.msra.mxu0 0.0
    %6165 = vmatprep.subr.mxu0 0.0
    %6166 = vmatpush1.xpose.msra.mxu0 0.0
    %6167 = vmatprep.subr.mxu0 0.0
    %6168 = vmatpush1.xpose.msra.mxu0 0.0
    %6169 = vmatprep.subr.mxu0 0.0
    %6170 = vmatpush1.xpose.msra.mxu0 0.0
    %6171 = vmatprep.subr.mxu0 0.0
    %6172 = vmatpush1.xpose.msra.mxu0 0.0
    %6173 = vmatprep.subr.mxu0 0.0
    %6174 = vmatpush1.xpose.msra.mxu0 0.0
    %6175 = vmatprep.subr.mxu0 0.0
    %6176 = vmatpush1.xpose.msra.mxu0 0.0
    %6177 = vmatprep.subr.mxu0 0.0
    %6178 = vmatpush1.xpose.msra.mxu0 0.0
    %6179 = vmatprep.subr.mxu0 0.0
    %6180 = vmatpush1.xpose.msra.mxu0 0.0
    %6181 = vmatprep.subr.mxu0 0.0
    %6182 = vmatpush1.xpose.msra.mxu0 0.0
    %6183 = vmatprep.subr.mxu0 0.0
    %6184 = vmatpush1.xpose.msra.mxu0 0.0
    %6185 = vmatprep.subr.mxu0 0.0
    %6186 = vmatpush1.xpose.msra.mxu0 0.0
    %6187 = vmatprep.subr.mxu0 0.0
    %6188 = vmatpush1.xpose.msra.mxu0 0.0
    %6189 = vmatprep.subr.mxu0 0.0
    %6190 = vmatpush1.xpose.msra.mxu0 0.0
    %6191 = vmatprep.subr.mxu0 0.0
    %6192 = vmatpush1.xpose.msra.mxu0 0.0
    %6193 = vmatprep.subr.mxu0 0.0
    %6194 = vmatpush1.xpose.msra.mxu0 0.0
    %6195 = vmatprep.subr.mxu0 0.0
    %6196 = vmatpush1.xpose.msra.mxu0 0.0
    %6197 = vmatprep.subr.mxu0 0.0
    %6198 = vmatpush1.xpose.msra.mxu0 0.0
    %6199 = vmatprep.subr.mxu0 0.0
    %6200 = vmatpush1.xpose.msra.mxu0 0.0
    %6201 = vmatprep.subr.mxu0 0.0
    %6202 = vmatpush1.xpose.msra.mxu0 0.0
    %6203 = vmatprep.subr.mxu0 0.0
    %6204 = vmatpush1.xpose.msra.mxu0 0.0
    %6205 = vmatprep.subr.mxu0 0.0
    %6206 = vmatpush1.xpose.msra.mxu0 0.0
    %6207 = vmatprep.subr.mxu0 0.0
    %6208 = vmatpush1.xpose.msra.mxu0 0.0
    %6209 = vmatprep.subr.mxu0 0.0
    %6210 = vmatpush1.xpose.msra.mxu0 0.0
    %6211 = vmatprep.subr.mxu0 0.0
    %6212 = vmatpush1.xpose.msra.mxu0 0.0
    %6213 = vmatprep.subr.mxu0 0.0
    %6214 = vmatpush1.xpose.msra.mxu0 0.0
    %6215 = vmatprep.subr.mxu0 0.0
    %6216 = vmatpush1.xpose.msra.mxu0 0.0
    %6217 = vmatprep.subr.mxu0 0.0
    %6218 = vmatpush1.xpose.msra.mxu0 0.0
    %6219 = vmatprep.subr.mxu0 0.0
    %6220 = vmatpush1.xpose.msra.mxu0 0.0
    %6221 = vmatprep.subr.mxu0 0.0
    %6222 = vmatpush1.xpose.msra.mxu0 0.0
    %6223 = vmatprep.mubr.f32.mxu0 0.0
    %6224 = vmatmul.mubr.f32.gmra.mrb[0].mxu0 %v6154
    %v6225 = vpop.f32.mrb[0].mxu0
    %v6226 = vadd.f32 %v4451, %v6225
    %v6227 = vpop.f32.mrb[0].mxu0
    %6228 = vdwg.mxu0
    %v6229 = vsel %vm425, %v6226, -inf
    %6230 = vmax.xlane.f32.xlu0 %v6229
    %v6231 = vpop.xlane.xlu0 %6230
    %v6232 = vsub.f32 %v6226, %v6231
    %v6233 = vmul.f32 %v6232, 1.442695
    %v6234 = vpow.pop %v6233
    %v6235 = vsel %vm425, %v6234, 0.0
    %6236 = vadd.xlane.f32.xlu0 %v6235
    %v6237 = vpop.xlane.xlu0 %6236
    %v6238 = vrcp.pop %v6237
    %v6239 = vmul.f32 %v6234, %v6238
    %v6241 = vsel %vm425, %v6239, 0
    %6243 = vmatprep.subr.mxu0 0.0
    %6244 = vmatpush1.msra.mxu0 %v6146
    %6245 = vmatprep.subr.mxu0 0.0
    %6246 = vmatpush1.msra.mxu0 0.0
    %6247 = vmatprep.subr.mxu0 0.0
    %6248 = vmatpush1.msra.mxu0 0.0
    %6249 = vmatprep.subr.mxu0 0.0
    %6250 = vmatpush1.msra.mxu0 0.0
    %6251 = vmatprep.subr.mxu0 0.0
    %6252 = vmatpush1.msra.mxu0 0.0
    %6253 = vmatprep.subr.mxu0 0.0
    %6254 = vmatpush1.msra.mxu0 0.0
    %6255 = vmatprep.subr.mxu0 0.0
    %6256 = vmatpush1.msra.mxu0 0.0
    %6257 = vmatprep.subr.mxu0 0.0
    %6258 = vmatpush1.msra.mxu0 0.0
    %6259 = vmatprep.subr.mxu0 0.0
    %6260 = vmatpush1.msra.mxu0 0.0
    %6261 = vmatprep.subr.mxu0 0.0
    %6262 = vmatpush1.msra.mxu0 0.0
    %6263 = vmatprep.subr.mxu0 0.0
    %6264 = vmatpush1.msra.mxu0 0.0
    %6265 = vmatprep.subr.mxu0 0.0
    %6266 = vmatpush1.msra.mxu0 0.0
    %6267 = vmatprep.subr.mxu0 0.0
    %6268 = vmatpush1.msra.mxu0 0.0
    %6269 = vmatprep.subr.mxu0 0.0
    %6270 = vmatpush1.msra.mxu0 0.0
    %6271 = vmatprep.subr.mxu0 0.0
    %6272 = vmatpush1.msra.mxu0 0.0
    %6273 = vmatprep.subr.mxu0 0.0
    %6274 = vmatpush1.msra.mxu0 0.0
    %6275 = vmatprep.subr.mxu0 0.0
    %6276 = vmatpush1.msra.mxu0 0.0
    %6277 = vmatprep.subr.mxu0 0.0
    %6278 = vmatpush1.msra.mxu0 0.0
    %6279 = vmatprep.subr.mxu0 0.0
    %6280 = vmatpush1.msra.mxu0 0.0
    %6281 = vmatprep.subr.mxu0 0.0
    %6282 = vmatpush1.msra.mxu0 0.0
    %6283 = vmatprep.subr.mxu0 0.0
    %6284 = vmatpush1.msra.mxu0 0.0
    %6285 = vmatprep.subr.mxu0 0.0
    %6286 = vmatpush1.msra.mxu0 0.0
    %6287 = vmatprep.subr.mxu0 0.0
    %6288 = vmatpush1.msra.mxu0 0.0
    %6289 = vmatprep.subr.mxu0 0.0
    %6290 = vmatpush1.msra.mxu0 0.0
    %6291 = vmatprep.subr.mxu0 0.0
    %6292 = vmatpush1.msra.mxu0 0.0
    %6293 = vmatprep.subr.mxu0 0.0
    %6294 = vmatpush1.msra.mxu0 0.0
    %6295 = vmatprep.subr.mxu0 0.0
    %6296 = vmatpush1.msra.mxu0 0.0
    %6297 = vmatprep.subr.mxu0 0.0
    %6298 = vmatpush1.msra.mxu0 0.0
    %6299 = vmatprep.subr.mxu0 0.0
    %6300 = vmatpush1.msra.mxu0 0.0
    %6301 = vmatprep.subr.mxu0 0.0
    %6302 = vmatpush1.msra.mxu0 0.0
    %6303 = vmatprep.subr.mxu0 0.0
    %6304 = vmatpush1.msra.mxu0 0.0
    %6305 = vmatprep.subr.mxu0 0.0
    %6306 = vmatpush1.msra.mxu0 0.0
    %6307 = vmatprep.mubr.f32.mxu0 0.0
    %6308 = vmatmul.mubr.f32.gmra.mrb[0].mxu0 %v6241
    %v6309 = vpop.f32.mrb[0].mxu0
    %v6310 = vadd.f32 0.0, %v6309
    %v6311 = vpop.f32.mrb[0].mxu0
    %6312 = vdwg.mxu0
    %v6313 = vld [vmem:[%s2052] sm:$0xff]
    %v6315 = vsel %vm425, %v6310, 0
    %6317 = vmatprep.subr.mxu0 0.0
    %6318 = vmatpush1.msra.mxu0 %v6313
    %6319 = vmatprep.subr.mxu0 0.0
    %6320 = vmatpush1.msra.mxu0 0.0
    %6321 = vmatprep.subr.mxu0 0.0
    %6322 = vmatpush1.msra.mxu0 0.0
    %6323 = vmatprep.subr.mxu0 0.0
    %6324 = vmatpush1.msra.mxu0 0.0
    %6325 = vmatprep.subr.mxu0 0.0
    %6326 = vmatpush1.msra.mxu0 0.0
    %6327 = vmatprep.subr.mxu0 0.0
    %6328 = vmatpush1.msra.mxu0 0.0
    %6329 = vmatprep.subr.mxu0 0.0
    %6330 = vmatpush1.msra.mxu0 0.0
    %6331 = vmatprep.subr.mxu0 0.0
    %6332 = vmatpush1.msra.mxu0 0.0
    %6333 = vmatprep.subr.mxu0 0.0
    %6334 = vmatpush1.msra.mxu0 0.0
    %6335 = vmatprep.subr.mxu0 0.0
    %6336 = vmatpush1.msra.mxu0 0.0
    %6337 = vmatprep.subr.mxu0 0.0
    %6338 = vmatpush1.msra.mxu0 0.0
    %6339 = vmatprep.subr.mxu0 0.0
    %6340 = vmatpush1.msra.mxu0 0.0
    %6341 = vmatprep.subr.mxu0 0.0
    %6342 = vmatpush1.msra.mxu0 0.0
    %6343 = vmatprep.subr.mxu0 0.0
    %6344 = vmatpush1.msra.mxu0 0.0
    %6345 = vmatprep.subr.mxu0 0.0
    %6346 = vmatpush1.msra.mxu0 0.0
    %6347 = vmatprep.subr.mxu0 0.0
    %6348 = vmatpush1.msra.mxu0 0.0
    %6349 = vmatprep.subr.mxu0 0.0
    %6350 = vmatpush1.msra.mxu0 0.0
    %6351 = vmatprep.subr.mxu0 0.0
    %6352 = vmatpush1.msra.mxu0 0.0
    %6353 = vmatprep.subr.mxu0 0.0
    %6354 = vmatpush1.msra.mxu0 0.0
    %6355 = vmatprep.subr.mxu0 0.0
    %6356 = vmatpush1.msra.mxu0 0.0
    %6357 = vmatprep.subr.mxu0 0.0
    %6358 = vmatpush1.msra.mxu0 0.0
    %6359 = vmatprep.subr.mxu0 0.0
    %6360 = vmatpush1.msra.mxu0 0.0
    %6361 = vmatprep.subr.mxu0 0.0
    %6362 = vmatpush1.msra.mxu0 0.0
    %6363 = vmatprep.subr.mxu0 0.0
    %6364 = vmatpush1.msra.mxu0 0.0
    %6365 = vmatprep.subr.mxu0 0.0
    %6366 = vmatpush1.msra.mxu0 0.0
    %6367 = vmatprep.subr.mxu0 0.0
    %6368 = vmatpush1.msra.mxu0 0.0
    %6369 = vmatprep.subr.mxu0 0.0
    %6370 = vmatpush1.msra.mxu0 0.0
    %6371 = vmatprep.subr.mxu0 0.0
    %6372 = vmatpush1.msra.mxu0 0.0
    %6373 = vmatprep.subr.mxu0 0.0
    %6374 = vmatpush1.msra.mxu0 0.0
    %6375 = vmatprep.subr.mxu0 0.0
    %6376 = vmatpush1.msra.mxu0 0.0
    %6377 = vmatprep.subr.mxu0 0.0
    %6378 = vmatpush1.msra.mxu0 0.0
    %6379 = vmatprep.subr.mxu0 0.0
    %6380 = vmatpush1.msra.mxu0 0.0
    %6381 = vmatprep.mubr.f32.mxu0 0.0
    %6382 = vmatmul.mubr.f32.gmra.mrb[0].mxu0 %v6315
    %v6383 = vpop.f32.mrb[0].mxu0
    %v6384 = vadd.f32 0.0, %v6383
    %v6385 = vpop.f32.mrb[0].mxu0
    %6386 = vdwg.mxu0
    %v6387 = vadd.f32 %v5905, %v6384
    %6389 = vrot.lane.b32.xlu0 %v6387, 32
    %v6390 = vpop.permute.xlu0 %6389
    %v6392 = vadd.f32 %v4443, %v6390
    %6393 = vrot.lane.b32.xlu0 %v2133, 32
    %v6394 = vpop.permute.xlu0 %6393
    %v6396 = vadd.f32 %v6392, %v6394
    %6398 = vrot.lane.b32.xlu0 %v6396, 96
    %v6399 = vpop.permute.xlu0 %6398
    %v6401 = vsel %vm189, %v6399, 0.0
    %6402 = vadd.xlane.f32.xlu0 %v6401
    %v6403 = vpop.xlane.xlu0 %6402
    %v6404 = vmul.f32 %v6403, %v2139
    %v6405 = vsub.f32 %v6396, %v6404
    %v6406 = vmul.f32 %v6405, %v6405
    %6408 = vrot.lane.b32.xlu0 %v6406, 96
    %v6409 = vpop.permute.xlu0 %6408
    %v6411 = vsel %vm189, %v6409, 0.0
    %6412 = vadd.xlane.f32.xlu0 %v6411
    %v6413 = vpop.xlane.xlu0 %6412
    %v6414 = vmul.f32 %v6413, %v2139
    %v6415 = vadd.f32 %v6414, 1e-05
    %v6416 = vrsqrt.pop %v6415
    %v6417 = vmul.f32 %v6405, %v6416
    %6418 = vrot.lane.b32.xlu0 %v2154, 32
    %v6419 = vpop.permute.xlu0 %6418
    %v6421 = vmul.f32 %v6417, %v6419
    %6422 = vrot.lane.b32.xlu0 %v2161, 32
    %v6423 = vpop.permute.xlu0 %6422
    %v6425 = vadd.f32 %v6421, %v6423
    %v6426 = vld [vmem:[%s31] sm:$0xff]
    %v6427 = vld [vmem:[%s31 + $0x8] sm:$0xff]
    %v6428 = vld [vmem:[%s31 + $0x10] sm:$0xff]
    %v6429 = vld [vmem:[%s31 + $0x18] sm:$0xff]
    %v6430 = vld [vmem:[%s33] sm:$0x1]
    %v6432 = vlaneseq
    %v6433 = vshrl.u32 %v6432, 7
    %v6434 = vsub.s32 0, %v6433
    %v6435 = vrot.slane %v6430, %v6434
    %6438 = vrot.lane.b32.xlu0 %v6425, 96
    %v6439 = vpop.permute.xlu0 %6438
    %v6440 = vsel %vm189, %v6439, 0
    %6442 = vmatprep.subr.mxu0 0.0
    %6443 = vmatpush1.msra.mxu0 %v6426
    %6444 = vmatprep.subr.mxu0 0.0
    %6445 = vmatpush1.msra.mxu0 %v6427
    %6446 = vmatprep.subr.mxu0 0.0
    %6447 = vmatpush1.msra.mxu0 %v6428
    %6448 = vmatprep.subr.mxu0 0.0
    %6449 = vmatpush1.msra.mxu0 %v6429
    %6450 = vmatprep.subr.mxu0 0.0
    %6451 = vmatpush1.msra.mxu0 0.0
    %6452 = vmatprep.subr.mxu0 0.0
    %6453 = vmatpush1.msra.mxu0 0.0
    %6454 = vmatprep.subr.mxu0 0.0
    %6455 = vmatpush1.msra.mxu0 0.0
    %6456 = vmatprep.subr.mxu0 0.0
    %6457 = vmatpush1.msra.mxu0 0.0
    %6458 = vmatprep.subr.mxu0 0.0
    %6459 = vmatpush1.msra.mxu0 0.0
    %6460 = vmatprep.subr.mxu0 0.0
    %6461 = vmatpush1.msra.mxu0 0.0
    %6462 = vmatprep.subr.mxu0 0.0
    %6463 = vmatpush1.msra.mxu0 0.0
    %6464 = vmatprep.subr.mxu0 0.0
    %6465 = vmatpush1.msra.mxu0 0.0
    %6466 = vmatprep.subr.mxu0 0.0
    %6467 = vmatpush1.msra.mxu0 0.0
    %6468 = vmatprep.subr.mxu0 0.0
    %6469 = vmatpush1.msra.mxu0 0.0
    %6470 = vmatprep.subr.mxu0 0.0
    %6471 = vmatpush1.msra.mxu0 0.0
    %6472 = vmatprep.subr.mxu0 0.0
    %6473 = vmatpush1.msra.mxu0 0.0
    %6474 = vmatprep.subr.mxu0 0.0
    %6475 = vmatpush1.msra.mxu0 0.0
    %6476 = vmatprep.subr.mxu0 0.0
    %6477 = vmatpush1.msra.mxu0 0.0
    %6478 = vmatprep.subr.mxu0 0.0
    %6479 = vmatpush1.msra.mxu0 0.0
    %6480 = vmatprep.subr.mxu0 0.0
    %6481 = vmatpush1.msra.mxu0 0.0
    %6482 = vmatprep.subr.mxu0 0.0
    %6483 = vmatpush1.msra.mxu0 0.0
    %6484 = vmatprep.subr.mxu0 0.0
    %6485 = vmatpush1.msra.mxu0 0.0
    %6486 = vmatprep.subr.mxu0 0.0
    %6487 = vmatpush1.msra.mxu0 0.0
    %6488 = vmatprep.subr.mxu0 0.0
    %6489 = vmatpush1.msra.mxu0 0.0
    %6490 = vmatprep.subr.mxu0 0.0
    %6491 = vmatpush1.msra.mxu0 0.0
    %6492 = vmatprep.subr.mxu0 0.0
    %6493 = vmatpush1.msra.mxu0 0.0
    %6494 = vmatprep.subr.mxu0 0.0
    %6495 = vmatpush1.msra.mxu0 0.0
    %6496 = vmatprep.subr.mxu0 0.0
    %6497 = vmatpush1.msra.mxu0 0.0
    %6498 = vmatprep.subr.mxu0 0.0
    %6499 = vmatpush1.msra.mxu0 0.0
    %6500 = vmatprep.subr.mxu0 0.0
    %6501 = vmatpush1.msra.mxu0 0.0
    %6502 = vmatprep.subr.mxu0 0.0
    %6503 = vmatpush1.msra.mxu0 0.0
    %6504 = vmatprep.subr.mxu0 0.0
    %6505 = vmatpush1.msra.mxu0 0.0
    %6506 = vmatprep.mubr.f32.mxu0 0.0
    %6507 = vmatmul.mubr.f32.gmra.mrb[0].mxu0 %v6440
    %v6508 = vpop.f32.mrb[0].mxu0
    %v6509 = vadd.f32 %v6435, %v6508
    %v6510 = vpop.f32.mrb[0].mxu0
    %6511 = vdwg.mxu0
    %v6512 = vld [vmem:[%s35] sm:$0xff]
    %v6513 = vld [vmem:[%s35 + $0x8] sm:$0xff]
    %v6514 = vld [vmem:[%s35 + $0x10] sm:$0xff]
    %v6515 = vld [vmem:[%s35 + $0x18] sm:$0xff]
    %v6516 = vld [vmem:[%s37] sm:$0x1]
    %v6518 = vlaneseq
    %v6519 = vshrl.u32 %v6518, 7
    %v6520 = vsub.s32 0, %v6519
    %v6521 = vrot.slane %v6516, %v6520
    %6525 = vrot.lane.b32.xlu0 %v4444, 96
    %v6526 = vpop.permute.xlu0 %6525
    %6527 = vrot.lane.b32.xlu0 %v4445, 96
    %v6528 = vpop.permute.xlu0 %6527
    %v6529 = vsel %vm189, %v6526, 0
    %v6531 = vsel %vm189, %v6528, 0
    %6533 = vmatprep.subr.mxu0 0.0
    %6534 = vmatpush1.msra.mxu0 %v6512
    %6535 = vmatprep.subr.mxu0 0.0
    %6536 = vmatpush1.msra.mxu0 %v6513
    %6537 = vmatprep.subr.mxu0 0.0
    %6538 = vmatpush1.msra.mxu0 %v6514
    %6539 = vmatprep.subr.mxu0 0.0
    %6540 = vmatpush1.msra.mxu0 %v6515
    %6541 = vmatprep.subr.mxu0 0.0
    %6542 = vmatpush1.msra.mxu0 0.0
    %6543 = vmatprep.subr.mxu0 0.0
    %6544 = vmatpush1.msra.mxu0 0.0
    %6545 = vmatprep.subr.mxu0 0.0
    %6546 = vmatpush1.msra.mxu0 0.0
    %6547 = vmatprep.subr.mxu0 0.0
    %6548 = vmatpush1.msra.mxu0 0.0
    %6549 = vmatprep.subr.mxu0 0.0
    %6550 = vmatpush1.msra.mxu0 0.0
    %6551 = vmatprep.subr.mxu0 0.0
    %6552 = vmatpush1.msra.mxu0 0.0
    %6553 = vmatprep.subr.mxu0 0.0
    %6554 = vmatpush1.msra.mxu0 0.0
    %6555 = vmatprep.subr.mxu0 0.0
    %6556 = vmatpush1.msra.mxu0 0.0
    %6557 = vmatprep.subr.mxu0 0.0
    %6558 = vmatpush1.msra.mxu0 0.0
    %6559 = vmatprep.subr.mxu0 0.0
    %6560 = vmatpush1.msra.mxu0 0.0
    %6561 = vmatprep.subr.mxu0 0.0
    %6562 = vmatpush1.msra.mxu0 0.0
    %6563 = vmatprep.subr.mxu0 0.0
    %6564 = vmatpush1.msra.mxu0 0.0
    %6565 = vmatprep.subr.mxu0 0.0
    %6566 = vmatpush1.msra.mxu0 0.0
    %6567 = vmatprep.subr.mxu0 0.0
    %6568 = vmatpush1.msra.mxu0 0.0
    %6569 = vmatprep.subr.mxu0 0.0
    %6570 = vmatpush1.msra.mxu0 0.0
    %6571 = vmatprep.subr.mxu0 0.0
    %6572 = vmatpush1.msra.mxu0 0.0
    %6573 = vmatprep.subr.mxu0 0.0
    %6574 = vmatpush1.msra.mxu0 0.0
    %6575 = vmatprep.subr.mxu0 0.0
    %6576 = vmatpush1.msra.mxu0 0.0
    %6577 = vmatprep.subr.mxu0 0.0
    %6578 = vmatpush1.msra.mxu0 0.0
    %6579 = vmatprep.subr.mxu0 0.0
    %6580 = vmatpush1.msra.mxu0 0.0
    %6581 = vmatprep.subr.mxu0 0.0
    %6582 = vmatpush1.msra.mxu0 0.0
    %6583 = vmatprep.subr.mxu0 0.0
    %6584 = vmatpush1.msra.mxu0 0.0
    %6585 = vmatprep.subr.mxu0 0.0
    %6586 = vmatpush1.msra.mxu0 0.0
    %6587 = vmatprep.subr.mxu0 0.0
    %6588 = vmatpush1.msra.mxu0 0.0
    %6589 = vmatprep.subr.mxu0 0.0
    %6590 = vmatpush1.msra.mxu0 0.0
    %6591 = vmatprep.subr.mxu0 0.0
    %6592 = vmatpush1.msra.mxu0 0.0
    %6593 = vmatprep.subr.mxu0 0.0
    %6594 = vmatpush1.msra.mxu0 0.0
    %6595 = vmatprep.subr.mxu0 0.0
    %6596 = vmatpush1.msra.mxu0 0.0
    %6597 = vmatprep.mubr.f32.mxu0 0.0
    %6598 = vmatmul.mubr.f32.gmra.mrb[0].mxu0 %v6529
    %v6599 = vpop.f32.mrb[0].mxu0
    %v6600 = vadd.f32 %v6521, %v6599
    %v6601 = vpop.f32.mrb[0].mxu0
    %6602 = vmatprep.mubr.f32.mxu0 0.0
    %6603 = vmatmul.mubr.f32.gmra.mrb[0].mxu0 %v6531
    %v6604 = vpop.f32.mrb[0].mxu0
    %v6605 = vadd.f32 %v6521, %v6604
    %v6606 = vpop.f32.mrb[0].mxu0
    %6607 = vdwg.mxu0
    %v6608 = vld [vmem:[%s39] sm:$0xff]
    %v6609 = vld [vmem:[%s39 + $0x8] sm:$0xff]
    %v6610 = vld [vmem:[%s39 + $0x10] sm:$0xff]
    %v6611 = vld [vmem:[%s39 + $0x18] sm:$0xff]
    %v6612 = vld [vmem:[%s41] sm:$0x1]
    %v6614 = vlaneseq
    %v6615 = vshrl.u32 %v6614, 7
    %v6616 = vsub.s32 0, %v6615
    %v6617 = vrot.slane %v6612, %v6616
    %6619 = vmatprep.subr.mxu0 0.0
    %6620 = vmatpush1.msra.mxu0 %v6608
    %6621 = vmatprep.subr.mxu0 0.0
    %6622 = vmatpush1.msra.mxu0 %v6609
    %6623 = vmatprep.subr.mxu0 0.0
    %6624 = vmatpush1.msra.mxu0 %v6610
    %6625 = vmatprep.subr.mxu0 0.0
    %6626 = vmatpush1.msra.mxu0 %v6611
    %6627 = vmatprep.subr.mxu0 0.0
    %6628 = vmatpush1.msra.mxu0 0.0
    %6629 = vmatprep.subr.mxu0 0.0
    %6630 = vmatpush1.msra.mxu0 0.0
    %6631 = vmatprep.subr.mxu0 0.0
    %6632 = vmatpush1.msra.mxu0 0.0
    %6633 = vmatprep.subr.mxu0 0.0
    %6634 = vmatpush1.msra.mxu0 0.0
    %6635 = vmatprep.subr.mxu0 0.0
    %6636 = vmatpush1.msra.mxu0 0.0
    %6637 = vmatprep.subr.mxu0 0.0
    %6638 = vmatpush1.msra.mxu0 0.0
    %6639 = vmatprep.subr.mxu0 0.0
    %6640 = vmatpush1.msra.mxu0 0.0
    %6641 = vmatprep.subr.mxu0 0.0
    %6642 = vmatpush1.msra.mxu0 0.0
    %6643 = vmatprep.subr.mxu0 0.0
    %6644 = vmatpush1.msra.mxu0 0.0
    %6645 = vmatprep.subr.mxu0 0.0
    %6646 = vmatpush1.msra.mxu0 0.0
    %6647 = vmatprep.subr.mxu0 0.0
    %6648 = vmatpush1.msra.mxu0 0.0
    %6649 = vmatprep.subr.mxu0 0.0
    %6650 = vmatpush1.msra.mxu0 0.0
    %6651 = vmatprep.subr.mxu0 0.0
    %6652 = vmatpush1.msra.mxu0 0.0
    %6653 = vmatprep.subr.mxu0 0.0
    %6654 = vmatpush1.msra.mxu0 0.0
    %6655 = vmatprep.subr.mxu0 0.0
    %6656 = vmatpush1.msra.mxu0 0.0
    %6657 = vmatprep.subr.mxu0 0.0
    %6658 = vmatpush1.msra.mxu0 0.0
    %6659 = vmatprep.subr.mxu0 0.0
    %6660 = vmatpush1.msra.mxu0 0.0
    %6661 = vmatprep.subr.mxu0 0.0
    %6662 = vmatpush1.msra.mxu0 0.0
    %6663 = vmatprep.subr.mxu0 0.0
    %6664 = vmatpush1.msra.mxu0 0.0
    %6665 = vmatprep.subr.mxu0 0.0
    %6666 = vmatpush1.msra.mxu0 0.0
    %6667 = vmatprep.subr.mxu0 0.0
    %6668 = vmatpush1.msra.mxu0 0.0
    %6669 = vmatprep.subr.mxu0 0.0
    %6670 = vmatpush1.msra.mxu0 0.0
    %6671 = vmatprep.subr.mxu0 0.0
    %6672 = vmatpush1.msra.mxu0 0.0
    %6673 = vmatprep.subr.mxu0 0.0
    %6674 = vmatpush1.msra.mxu0 0.0
    %6675 = vmatprep.subr.mxu0 0.0
    %6676 = vmatpush1.msra.mxu0 0.0
    %6677 = vmatprep.subr.mxu0 0.0
    %6678 = vmatpush1.msra.mxu0 0.0
    %6679 = vmatprep.subr.mxu0 0.0
    %6680 = vmatpush1.msra.mxu0 0.0
    %6681 = vmatprep.subr.mxu0 0.0
    %6682 = vmatpush1.msra.mxu0 0.0
    %6683 = vmatprep.mubr.f32.mxu0 0.0
    %6684 = vmatmul.mubr.f32.gmra.mrb[0].mxu0 %v6529
    %v6685 = vpop.f32.mrb[0].mxu0
    %v6686 = vadd.f32 %v6617, %v6685
    %v6687 = vpop.f32.mrb[0].mxu0
    %6688 = vmatprep.mubr.f32.mxu0 0.0
    %6689 = vmatmul.mubr.f32.gmra.mrb[0].mxu0 %v6531
    %v6690 = vpop.f32.mrb[0].mxu0
    %v6691 = vadd.f32 %v6617, %v6690
    %v6692 = vpop.f32.mrb[0].mxu0
    %6693 = vdwg.mxu0
    %s6694 = scalar_lea.vmem %s69, 64
    %6695 = vst.msk [vmem:[%s6694] sm:$0xff] %vm425, %v6600
    %6696 = vst.msk [vmem:[%s6694 + $0x8] sm:$0x3] %vm2427, %v6605
    %s6697 = scalar_lea.vmem %s71, 64
    %6698 = vst.msk [vmem:[%s6697] sm:$0xff] %vm425, %v6686
    %6699 = vst.msk [vmem:[%s6697 + $0x8] sm:$0x3] %vm2427, %v6691
    %v6701 = vsel %vm425, %v6509, 0
    %v6704 = vsel %vm425, %v6600, 0
    %v6707 = vsel %vm425, %v6605, 0
    %6709 = vmatprep.subr.mxu0 0.0
    %6710 = vmatpush1.xpose.msra.mxu0 %v6704
    %6711 = vmatprep.subr.mxu0 0.0
    %6712 = vmatpush1.xpose.msra.mxu0 %v6707
    %6713 = vmatprep.subr.mxu0 0.0
    %6714 = vmatpush1.xpose.msra.mxu0 0.0
    %6715 = vmatprep.subr.mxu0 0.0
    %6716 = vmatpush1.xpose.msra.mxu0 0.0
    %6717 = vmatprep.subr.mxu0 0.0
    %6718 = vmatpush1.xpose.msra.mxu0 0.0
    %6719 = vmatprep.subr.mxu0 0.0
    %6720 = vmatpush1.xpose.msra.mxu0 0.0
    %6721 = vmatprep.subr.mxu0 0.0
    %6722 = vmatpush1.xpose.msra.mxu0 0.0
    %6723 = vmatprep.subr.mxu0 0.0
    %6724 = vmatpush1.xpose.msra.mxu0 0.0
    %6725 = vmatprep.subr.mxu0 0.0
    %6726 = vmatpush1.xpose.msra.mxu0 0.0
    %6727 = vmatprep.subr.mxu0 0.0
    %6728 = vmatpush1.xpose.msra.mxu0 0.0
    %6729 = vmatprep.subr.mxu0 0.0
    %6730 = vmatpush1.xpose.msra.mxu0 0.0
    %6731 = vmatprep.subr.mxu0 0.0
    %6732 = vmatpush1.xpose.msra.mxu0 0.0
    %6733 = vmatprep.subr.mxu0 0.0
    %6734 = vmatpush1.xpose.msra.mxu0 0.0
    %6735 = vmatprep.subr.mxu0 0.0
    %6736 = vmatpush1.xpose.msra.mxu0 0.0
    %6737 = vmatprep.subr.mxu0 0.0
    %6738 = vmatpush1.xpose.msra.mxu0 0.0
    %6739 = vmatprep.subr.mxu0 0.0
    %6740 = vmatpush1.xpose.msra.mxu0 0.0
    %6741 = vmatprep.subr.mxu0 0.0
    %6742 = vmatpush1.xpose.msra.mxu0 0.0
    %6743 = vmatprep.subr.mxu0 0.0
    %6744 = vmatpush1.xpose.msra.mxu0 0.0
    %6745 = vmatprep.subr.mxu0 0.0
    %6746 = vmatpush1.xpose.msra.mxu0 0.0
    %6747 = vmatprep.subr.mxu0 0.0
    %6748 = vmatpush1.xpose.msra.mxu0 0.0
    %6749 = vmatprep.subr.mxu0 0.0
    %6750 = vmatpush1.xpose.msra.mxu0 0.0
    %6751 = vmatprep.subr.mxu0 0.0
    %6752 = vmatpush1.xpose.msra.mxu0 0.0
    %6753 = vmatprep.subr.mxu0 0.0
    %6754 = vmatpush1.xpose.msra.mxu0 0.0
    %6755 = vmatprep.subr.mxu0 0.0
    %6756 = vmatpush1.xpose.msra.mxu0 0.0
    %6757 = vmatprep.subr.mxu0 0.0
    %6758 = vmatpush1.xpose.msra.mxu0 0.0
    %6759 = vmatprep.subr.mxu0 0.0
    %6760 = vmatpush1.xpose.msra.mxu0 0.0
    %6761 = vmatprep.subr.mxu0 0.0
    %6762 = vmatpush1.xpose.msra.mxu0 0.0
    %6763 = vmatprep.subr.mxu0 0.0
    %6764 = vmatpush1.xpose.msra.mxu0 0.0
    %6765 = vmatprep.subr.mxu0 0.0
    %6766 = vmatpush1.xpose.msra.mxu0 0.0
    %6767 = vmatprep.subr.mxu0 0.0
    %6768 = vmatpush1.xpose.msra.mxu0 0.0
    %6769 = vmatprep.subr.mxu0 0.0
    %6770 = vmatpush1.xpose.msra.mxu0 0.0
    %6771 = vmatprep.subr.mxu0 0.0
    %6772 = vmatpush1.xpose.msra.mxu0 0.0
    %6773 = vmatprep.mubr.f32.mxu0 0.0
    %6774 = vmatmul.mubr.f32.gmra.mrb[0].mxu0 %v6701
    %v6775 = vpop.f32.mrb[0].mxu0
    %v6776 = vadd.f32 %v4456, %v6775
    %v6777 = vpop.f32.mrb[0].mxu0
    %6778 = vdwg.mxu0
    %v6779 = vsel %vm2510, %v6776, -inf
    %6780 = vmax.xlane.f32.xlu0 %v6779
    %v6781 = vpop.xlane.xlu0 %6780
    %v6782 = vsub.f32 %v6776, %v6781
    %v6783 = vmul.f32 %v6782, 1.442695
    %v6784 = vpow.pop %v6783
    %v6785 = vsel %vm2510, %v6784, 0.0
    %6786 = vadd.xlane.f32.xlu0 %v6785
    %v6787 = vpop.xlane.xlu0 %6786
    %v6788 = vrcp.pop %v6787
    %v6789 = vmul.f32 %v6784, %v6788
    %v6791 = vsel %vm2510, %v6789, 0
    %v6794 = vsel %vm2525, %v6691, 0
    %6796 = vmatprep.subr.mxu0 0.0
    %6797 = vmatpush1.msra.mxu0 %v6686
    %6798 = vmatprep.subr.mxu0 0.0
    %6799 = vmatpush1.msra.mxu0 %v6794
    %6800 = vmatprep.subr.mxu0 0.0
    %6801 = vmatpush1.msra.mxu0 0.0
    %6802 = vmatprep.subr.mxu0 0.0
    %6803 = vmatpush1.msra.mxu0 0.0
    %6804 = vmatprep.subr.mxu0 0.0
    %6805 = vmatpush1.msra.mxu0 0.0
    %6806 = vmatprep.subr.mxu0 0.0
    %6807 = vmatpush1.msra.mxu0 0.0
    %6808 = vmatprep.subr.mxu0 0.0
    %6809 = vmatpush1.msra.mxu0 0.0
    %6810 = vmatprep.subr.mxu0 0.0
    %6811 = vmatpush1.msra.mxu0 0.0
    %6812 = vmatprep.subr.mxu0 0.0
    %6813 = vmatpush1.msra.mxu0 0.0
    %6814 = vmatprep.subr.mxu0 0.0
    %6815 = vmatpush1.msra.mxu0 0.0
    %6816 = vmatprep.subr.mxu0 0.0
    %6817 = vmatpush1.msra.mxu0 0.0
    %6818 = vmatprep.subr.mxu0 0.0
    %6819 = vmatpush1.msra.mxu0 0.0
    %6820 = vmatprep.subr.mxu0 0.0
    %6821 = vmatpush1.msra.mxu0 0.0
    %6822 = vmatprep.subr.mxu0 0.0
    %6823 = vmatpush1.msra.mxu0 0.0
    %6824 = vmatprep.subr.mxu0 0.0
    %6825 = vmatpush1.msra.mxu0 0.0
    %6826 = vmatprep.subr.mxu0 0.0
    %6827 = vmatpush1.msra.mxu0 0.0
    %6828 = vmatprep.subr.mxu0 0.0
    %6829 = vmatpush1.msra.mxu0 0.0
    %6830 = vmatprep.subr.mxu0 0.0
    %6831 = vmatpush1.msra.mxu0 0.0
    %6832 = vmatprep.subr.mxu0 0.0
    %6833 = vmatpush1.msra.mxu0 0.0
    %6834 = vmatprep.subr.mxu0 0.0
    %6835 = vmatpush1.msra.mxu0 0.0
    %6836 = vmatprep.subr.mxu0 0.0
    %6837 = vmatpush1.msra.mxu0 0.0
    %6838 = vmatprep.subr.mxu0 0.0
    %6839 = vmatpush1.msra.mxu0 0.0
    %6840 = vmatprep.subr.mxu0 0.0
    %6841 = vmatpush1.msra.mxu0 0.0
    %6842 = vmatprep.subr.mxu0 0.0
    %6843 = vmatpush1.msra.mxu0 0.0
    %6844 = vmatprep.subr.mxu0 0.0
    %6845 = vmatpush1.msra.mxu0 0.0
    %6846 = vmatprep.subr.mxu0 0.0
    %6847 = vmatpush1.msra.mxu0 0.0
    %6848 = vmatprep.subr.mxu0 0.0
    %6849 = vmatpush1.msra.mxu0 0.0
    %6850 = vmatprep.subr.mxu0 0.0
    %6851 = vmatpush1.msra.mxu0 0.0
    %6852 = vmatprep.subr.mxu0 0.0
    %6853 = vmatpush1.msra.mxu0 0.0
    %6854 = vmatprep.subr.mxu0 0.0
    %6855 = vmatpush1.msra.mxu0 0.0
    %6856 = vmatprep.subr.mxu0 0.0
    %6857 = vmatpush1.msra.mxu0 0.0
    %6858 = vmatprep.subr.mxu0 0.0
    %6859 = vmatpush1.msra.mxu0 0.0
    %6860 = vmatprep.mubr.f32.mxu0 0.0
    %6861 = vmatmul.mubr.f32.gmra.mrb[0].mxu0 %v6791
    %v6862 = vpop.f32.mrb[0].mxu0
    %v6863 = vadd.f32 0.0, %v6862
    %v6864 = vpop.f32.mrb[0].mxu0
    %6865 = vdwg.mxu0
    %v6866 = vld [vmem:[%s43] sm:$0xff]
    %v6867 = vld [vmem:[%s2600] sm:$0xff]
    %v6868 = vld [vmem:[%s2600 + $0x8] sm:$0xff]
    %v6869 = vld [vmem:[%s2600 + $0x10] sm:$0xff]
    %v6870 = vld [vmem:[%s2600 + $0x18] sm:$0xff]
    %v6871 = vld [vmem:[%s2605] sm:$0x1]
    %v6873 = vlaneseq
    %v6874 = vshrl.u32 %v6873, 7
    %v6875 = vsub.s32 0, %v6874
    %v6876 = vrot.slane %v6871, %v6875
    %6878 = vmatprep.subr.mxu0 0.0
    %6879 = vmatpush1.msra.mxu0 %v6867
    %6880 = vmatprep.subr.mxu0 0.0
    %6881 = vmatpush1.msra.mxu0 %v6868
    %6882 = vmatprep.subr.mxu0 0.0
    %6883 = vmatpush1.msra.mxu0 %v6869
    %6884 = vmatprep.subr.mxu0 0.0
    %6885 = vmatpush1.msra.mxu0 %v6870
    %6886 = vmatprep.subr.mxu0 0.0
    %6887 = vmatpush1.msra.mxu0 0.0
    %6888 = vmatprep.subr.mxu0 0.0
    %6889 = vmatpush1.msra.mxu0 0.0
    %6890 = vmatprep.subr.mxu0 0.0
    %6891 = vmatpush1.msra.mxu0 0.0
    %6892 = vmatprep.subr.mxu0 0.0
    %6893 = vmatpush1.msra.mxu0 0.0
    %6894 = vmatprep.subr.mxu0 0.0
    %6895 = vmatpush1.msra.mxu0 0.0
    %6896 = vmatprep.subr.mxu0 0.0
    %6897 = vmatpush1.msra.mxu0 0.0
    %6898 = vmatprep.subr.mxu0 0.0
    %6899 = vmatpush1.msra.mxu0 0.0
    %6900 = vmatprep.subr.mxu0 0.0
    %6901 = vmatpush1.msra.mxu0 0.0
    %6902 = vmatprep.subr.mxu0 0.0
    %6903 = vmatpush1.msra.mxu0 0.0
    %6904 = vmatprep.subr.mxu0 0.0
    %6905 = vmatpush1.msra.mxu0 0.0
    %6906 = vmatprep.subr.mxu0 0.0
    %6907 = vmatpush1.msra.mxu0 0.0
    %6908 = vmatprep.subr.mxu0 0.0
    %6909 = vmatpush1.msra.mxu0 0.0
    %6910 = vmatprep.subr.mxu0 0.0
    %6911 = vmatpush1.msra.mxu0 0.0
    %6912 = vmatprep.subr.mxu0 0.0
    %6913 = vmatpush1.msra.mxu0 0.0
    %6914 = vmatprep.subr.mxu0 0.0
    %6915 = vmatpush1.msra.mxu0 0.0
    %6916 = vmatprep.subr.mxu0 0.0
    %6917 = vmatpush1.msra.mxu0 0.0
    %6918 = vmatprep.subr.mxu0 0.0
    %6919 = vmatpush1.msra.mxu0 0.0
    %6920 = vmatprep.subr.mxu0 0.0
    %6921 = vmatpush1.msra.mxu0 0.0
    %6922 = vmatprep.subr.mxu0 0.0
    %6923 = vmatpush1.msra.mxu0 0.0
    %6924 = vmatprep.subr.mxu0 0.0
    %6925 = vmatpush1.msra.mxu0 0.0
    %6926 = vmatprep.subr.mxu0 0.0
    %6927 = vmatpush1.msra.mxu0 0.0
    %6928 = vmatprep.subr.mxu0 0.0
    %6929 = vmatpush1.msra.mxu0 0.0
    %6930 = vmatprep.subr.mxu0 0.0
    %6931 = vmatpush1.msra.mxu0 0.0
    %6932 = vmatprep.subr.mxu0 0.0
    %6933 = vmatpush1.msra.mxu0 0.0
    %6934 = vmatprep.subr.mxu0 0.0
    %6935 = vmatpush1.msra.mxu0 0.0
    %6936 = vmatprep.subr.mxu0 0.0
    %6937 = vmatpush1.msra.mxu0 0.0
    %6938 = vmatprep.subr.mxu0 0.0
    %6939 = vmatpush1.msra.mxu0 0.0
    %6940 = vmatprep.subr.mxu0 0.0
    %6941 = vmatpush1.msra.mxu0 0.0
    %6942 = vmatprep.mubr.f32.mxu0 0.0
    %6943 = vmatmul.mubr.f32.gmra.mrb[0].mxu0 %v6440
    %v6944 = vpop.f32.mrb[0].mxu0
    %v6945 = vadd.f32 %v6876, %v6944
    %v6946 = vpop.f32.mrb[0].mxu0
    %6947 = vdwg.mxu0
    %v6948 = vld [vmem:[%s2683] sm:$0xff]
    %v6949 = vld [vmem:[%s2683 + $0x8] sm:$0xff]
    %v6950 = vld [vmem:[%s2683 + $0x10] sm:$0xff]
    %v6951 = vld [vmem:[%s2683 + $0x18] sm:$0xff]
    %v6952 = vld [vmem:[%s2688] sm:$0x1]
    %v6954 = vlaneseq
    %v6955 = vshrl.u32 %v6954, 7
    %v6956 = vsub.s32 0, %v6955
    %v6957 = vrot.slane %v6952, %v6956
    %6959 = vmatprep.subr.mxu0 0.0
    %6960 = vmatpush1.msra.mxu0 %v6948
    %6961 = vmatprep.subr.mxu0 0.0
    %6962 = vmatpush1.msra.mxu0 %v6949
    %6963 = vmatprep.subr.mxu0 0.0
    %6964 = vmatpush1.msra.mxu0 %v6950
    %6965 = vmatprep.subr.mxu0 0.0
    %6966 = vmatpush1.msra.mxu0 %v6951
    %6967 = vmatprep.subr.mxu0 0.0
    %6968 = vmatpush1.msra.mxu0 0.0
    %6969 = vmatprep.subr.mxu0 0.0
    %6970 = vmatpush1.msra.mxu0 0.0
    %6971 = vmatprep.subr.mxu0 0.0
    %6972 = vmatpush1.msra.mxu0 0.0
    %6973 = vmatprep.subr.mxu0 0.0
    %6974 = vmatpush1.msra.mxu0 0.0
    %6975 = vmatprep.subr.mxu0 0.0
    %6976 = vmatpush1.msra.mxu0 0.0
    %6977 = vmatprep.subr.mxu0 0.0
    %6978 = vmatpush1.msra.mxu0 0.0
    %6979 = vmatprep.subr.mxu0 0.0
    %6980 = vmatpush1.msra.mxu0 0.0
    %6981 = vmatprep.subr.mxu0 0.0
    %6982 = vmatpush1.msra.mxu0 0.0
    %6983 = vmatprep.subr.mxu0 0.0
    %6984 = vmatpush1.msra.mxu0 0.0
    %6985 = vmatprep.subr.mxu0 0.0
    %6986 = vmatpush1.msra.mxu0 0.0
    %6987 = vmatprep.subr.mxu0 0.0
    %6988 = vmatpush1.msra.mxu0 0.0
    %6989 = vmatprep.subr.mxu0 0.0
    %6990 = vmatpush1.msra.mxu0 0.0
    %6991 = vmatprep.subr.mxu0 0.0
    %6992 = vmatpush1.msra.mxu0 0.0
    %6993 = vmatprep.subr.mxu0 0.0
    %6994 = vmatpush1.msra.mxu0 0.0
    %6995 = vmatprep.subr.mxu0 0.0
    %6996 = vmatpush1.msra.mxu0 0.0
    %6997 = vmatprep.subr.mxu0 0.0
    %6998 = vmatpush1.msra.mxu0 0.0
    %6999 = vmatprep.subr.mxu0 0.0
    %7000 = vmatpush1.msra.mxu0 0.0
    %7001 = vmatprep.subr.mxu0 0.0
    %7002 = vmatpush1.msra.mxu0 0.0
    %7003 = vmatprep.subr.mxu0 0.0
    %7004 = vmatpush1.msra.mxu0 0.0
    %7005 = vmatprep.subr.mxu0 0.0
    %7006 = vmatpush1.msra.mxu0 0.0
    %7007 = vmatprep.subr.mxu0 0.0
    %7008 = vmatpush1.msra.mxu0 0.0
    %7009 = vmatprep.subr.mxu0 0.0
    %7010 = vmatpush1.msra.mxu0 0.0
    %7011 = vmatprep.subr.mxu0 0.0
    %7012 = vmatpush1.msra.mxu0 0.0
    %7013 = vmatprep.subr.mxu0 0.0
    %7014 = vmatpush1.msra.mxu0 0.0
    %7015 = vmatprep.subr.mxu0 0.0
    %7016 = vmatpush1.msra.mxu0 0.0
    %7017 = vmatprep.subr.mxu0 0.0
    %7018 = vmatpush1.msra.mxu0 0.0
    %7019 = vmatprep.subr.mxu0 0.0
    %7020 = vmatpush1.msra.mxu0 0.0
    %7021 = vmatprep.subr.mxu0 0.0
    %7022 = vmatpush1.msra.mxu0 0.0
    %7023 = vmatprep.mubr.f32.mxu0 0.0
    %7024 = vmatmul.mubr.f32.gmra.mrb[0].mxu0 %v6529
    %v7025 = vpop.f32.mrb[0].mxu0
    %v7026 = vadd.f32 %v6957, %v7025
    %v7027 = vpop.f32.mrb[0].mxu0
    %7028 = vmatprep.mubr.f32.mxu0 0.0
    %7029 = vmatmul.mubr.f32.gmra.mrb[0].mxu0 %v6531
    %v7030 = vpop.f32.mrb[0].mxu0
    %v7031 = vadd.f32 %v6957, %v7030
    %v7032 = vpop.f32.mrb[0].mxu0
    %7033 = vdwg.mxu0
    %v7034 = vld [vmem:[%s2771] sm:$0xff]
    %v7035 = vld [vmem:[%s2771 + $0x8] sm:$0xff]
    %v7036 = vld [vmem:[%s2771 + $0x10] sm:$0xff]
    %v7037 = vld [vmem:[%s2771 + $0x18] sm:$0xff]
    %v7038 = vld [vmem:[%s2776] sm:$0x1]
    %v7040 = vlaneseq
    %v7041 = vshrl.u32 %v7040, 7
    %v7042 = vsub.s32 0, %v7041
    %v7043 = vrot.slane %v7038, %v7042
    %7045 = vmatprep.subr.mxu0 0.0
    %7046 = vmatpush1.msra.mxu0 %v7034
    %7047 = vmatprep.subr.mxu0 0.0
    %7048 = vmatpush1.msra.mxu0 %v7035
    %7049 = vmatprep.subr.mxu0 0.0
    %7050 = vmatpush1.msra.mxu0 %v7036
    %7051 = vmatprep.subr.mxu0 0.0
    %7052 = vmatpush1.msra.mxu0 %v7037
    %7053 = vmatprep.subr.mxu0 0.0
    %7054 = vmatpush1.msra.mxu0 0.0
    %7055 = vmatprep.subr.mxu0 0.0
    %7056 = vmatpush1.msra.mxu0 0.0
    %7057 = vmatprep.subr.mxu0 0.0
    %7058 = vmatpush1.msra.mxu0 0.0
    %7059 = vmatprep.subr.mxu0 0.0
    %7060 = vmatpush1.msra.mxu0 0.0
    %7061 = vmatprep.subr.mxu0 0.0
    %7062 = vmatpush1.msra.mxu0 0.0
    %7063 = vmatprep.subr.mxu0 0.0
    %7064 = vmatpush1.msra.mxu0 0.0
    %7065 = vmatprep.subr.mxu0 0.0
    %7066 = vmatpush1.msra.mxu0 0.0
    %7067 = vmatprep.subr.mxu0 0.0
    %7068 = vmatpush1.msra.mxu0 0.0
    %7069 = vmatprep.subr.mxu0 0.0
    %7070 = vmatpush1.msra.mxu0 0.0
    %7071 = vmatprep.subr.mxu0 0.0
    %7072 = vmatpush1.msra.mxu0 0.0
    %7073 = vmatprep.subr.mxu0 0.0
    %7074 = vmatpush1.msra.mxu0 0.0
    %7075 = vmatprep.subr.mxu0 0.0
    %7076 = vmatpush1.msra.mxu0 0.0
    %7077 = vmatprep.subr.mxu0 0.0
    %7078 = vmatpush1.msra.mxu0 0.0
    %7079 = vmatprep.subr.mxu0 0.0
    %7080 = vmatpush1.msra.mxu0 0.0
    %7081 = vmatprep.subr.mxu0 0.0
    %7082 = vmatpush1.msra.mxu0 0.0
    %7083 = vmatprep.subr.mxu0 0.0
    %7084 = vmatpush1.msra.mxu0 0.0
    %7085 = vmatprep.subr.mxu0 0.0
    %7086 = vmatpush1.msra.mxu0 0.0
    %7087 = vmatprep.subr.mxu0 0.0
    %7088 = vmatpush1.msra.mxu0 0.0
    %7089 = vmatprep.subr.mxu0 0.0
    %7090 = vmatpush1.msra.mxu0 0.0
    %7091 = vmatprep.subr.mxu0 0.0
    %7092 = vmatpush1.msra.mxu0 0.0
    %7093 = vmatprep.subr.mxu0 0.0
    %7094 = vmatpush1.msra.mxu0 0.0
    %7095 = vmatprep.subr.mxu0 0.0
    %7096 = vmatpush1.msra.mxu0 0.0
    %7097 = vmatprep.subr.mxu0 0.0
    %7098 = vmatpush1.msra.mxu0 0.0
    %7099 = vmatprep.subr.mxu0 0.0
    %7100 = vmatpush1.msra.mxu0 0.0
    %7101 = vmatprep.subr.mxu0 0.0
    %7102 = vmatpush1.msra.mxu0 0.0
    %7103 = vmatprep.subr.mxu0 0.0
    %7104 = vmatpush1.msra.mxu0 0.0
    %7105 = vmatprep.subr.mxu0 0.0
    %7106 = vmatpush1.msra.mxu0 0.0
    %7107 = vmatprep.subr.mxu0 0.0
    %7108 = vmatpush1.msra.mxu0 0.0
    %7109 = vmatprep.mubr.f32.mxu0 0.0
    %7110 = vmatmul.mubr.f32.gmra.mrb[0].mxu0 %v6529
    %v7111 = vpop.f32.mrb[0].mxu0
    %v7112 = vadd.f32 %v7043, %v7111
    %v7113 = vpop.f32.mrb[0].mxu0
    %7114 = vmatprep.mubr.f32.mxu0 0.0
    %7115 = vmatmul.mubr.f32.gmra.mrb[0].mxu0 %v6531
    %v7116 = vpop.f32.mrb[0].mxu0
    %v7117 = vadd.f32 %v7043, %v7116
    %v7118 = vpop.f32.mrb[0].mxu0
    %7119 = vdwg.mxu0
    %s7120 = scalar_lea.vmem %s69, 80
    %7121 = vst.msk [vmem:[%s7120] sm:$0xff] %vm425, %v7026
    %7122 = vst.msk [vmem:[%s7120 + $0x8] sm:$0x3] %vm2427, %v7031
    %s7123 = scalar_lea.vmem %s71, 80
    %7124 = vst.msk [vmem:[%s7123] sm:$0xff] %vm425, %v7112
    %7125 = vst.msk [vmem:[%s7123 + $0x8] sm:$0x3] %vm2427, %v7117
    %v7127 = vsel %vm425, %v6945, 0
    %v7130 = vsel %vm425, %v7026, 0
    %v7133 = vsel %vm425, %v7031, 0
    %7135 = vmatprep.subr.mxu0 0.0
    %7136 = vmatpush1.xpose.msra.mxu0 %v7130
    %7137 = vmatprep.subr.mxu0 0.0
    %7138 = vmatpush1.xpose.msra.mxu0 %v7133
    %7139 = vmatprep.subr.mxu0 0.0
    %7140 = vmatpush1.xpose.msra.mxu0 0.0
    %7141 = vmatprep.subr.mxu0 0.0
    %7142 = vmatpush1.xpose.msra.mxu0 0.0
    %7143 = vmatprep.subr.mxu0 0.0
    %7144 = vmatpush1.xpose.msra.mxu0 0.0
    %7145 = vmatprep.subr.mxu0 0.0
    %7146 = vmatpush1.xpose.msra.mxu0 0.0
    %7147 = vmatprep.subr.mxu0 0.0
    %7148 = vmatpush1.xpose.msra.mxu0 0.0
    %7149 = vmatprep.subr.mxu0 0.0
    %7150 = vmatpush1.xpose.msra.mxu0 0.0
    %7151 = vmatprep.subr.mxu0 0.0
    %7152 = vmatpush1.xpose.msra.mxu0 0.0
    %7153 = vmatprep.subr.mxu0 0.0
    %7154 = vmatpush1.xpose.msra.mxu0 0.0
    %7155 = vmatprep.subr.mxu0 0.0
    %7156 = vmatpush1.xpose.msra.mxu0 0.0
    %7157 = vmatprep.subr.mxu0 0.0
    %7158 = vmatpush1.xpose.msra.mxu0 0.0
    %7159 = vmatprep.subr.mxu0 0.0
    %7160 = vmatpush1.xpose.msra.mxu0 0.0
    %7161 = vmatprep.subr.mxu0 0.0
    %7162 = vmatpush1.xpose.msra.mxu0 0.0
    %7163 = vmatprep.subr.mxu0 0.0
    %7164 = vmatpush1.xpose.msra.mxu0 0.0
    %7165 = vmatprep.subr.mxu0 0.0
    %7166 = vmatpush1.xpose.msra.mxu0 0.0
    %7167 = vmatprep.subr.mxu0 0.0
    %7168 = vmatpush1.xpose.msra.mxu0 0.0
    %7169 = vmatprep.subr.mxu0 0.0
    %7170 = vmatpush1.xpose.msra.mxu0 0.0
    %7171 = vmatprep.subr.mxu0 0.0
    %7172 = vmatpush1.xpose.msra.mxu0 0.0
    %7173 = vmatprep.subr.mxu0 0.0
    %7174 = vmatpush1.xpose.msra.mxu0 0.0
    %7175 = vmatprep.subr.mxu0 0.0
    %7176 = vmatpush1.xpose.msra.mxu0 0.0
    %7177 = vmatprep.subr.mxu0 0.0
    %7178 = vmatpush1.xpose.msra.mxu0 0.0
    %7179 = vmatprep.subr.mxu0 0.0
    %7180 = vmatpush1.xpose.msra.mxu0 0.0
    %7181 = vmatprep.subr.mxu0 0.0
    %7182 = vmatpush1.xpose.msra.mxu0 0.0
    %7183 = vmatprep.subr.mxu0 0.0
    %7184 = vmatpush1.xpose.msra.mxu0 0.0
    %7185 = vmatprep.subr.mxu0 0.0
    %7186 = vmatpush1.xpose.msra.mxu0 0.0
    %7187 = vmatprep.subr.mxu0 0.0
    %7188 = vmatpush1.xpose.msra.mxu0 0.0
    %7189 = vmatprep.subr.mxu0 0.0
    %7190 = vmatpush1.xpose.msra.mxu0 0.0
    %7191 = vmatprep.subr.mxu0 0.0
    %7192 = vmatpush1.xpose.msra.mxu0 0.0
    %7193 = vmatprep.subr.mxu0 0.0
    %7194 = vmatpush1.xpose.msra.mxu0 0.0
    %7195 = vmatprep.subr.mxu0 0.0
    %7196 = vmatpush1.xpose.msra.mxu0 0.0
    %7197 = vmatprep.subr.mxu0 0.0
    %7198 = vmatpush1.xpose.msra.mxu0 0.0
    %7199 = vmatprep.mubr.f32.mxu0 0.0
    %7200 = vmatmul.mubr.f32.gmra.mrb[0].mxu0 %v7127
    %v7201 = vpop.f32.mrb[0].mxu0
    %v7202 = vadd.f32 %v4456, %v7201
    %v7203 = vpop.f32.mrb[0].mxu0
    %7204 = vdwg.mxu0
    %v7205 = vsel %vm2510, %v7202, -inf
    %7206 = vmax.xlane.f32.xlu0 %v7205
    %v7207 = vpop.xlane.xlu0 %7206
    %v7208 = vsub.f32 %v7202, %v7207
    %v7209 = vmul.f32 %v7208, 1.442695
    %v7210 = vpow.pop %v7209
    %v7211 = vsel %vm2510, %v7210, 0.0
    %7212 = vadd.xlane.f32.xlu0 %v7211
    %v7213 = vpop.xlane.xlu0 %7212
    %v7214 = vrcp.pop %v7213
    %v7215 = vmul.f32 %v7210, %v7214
    %v7217 = vsel %vm2510, %v7215, 0
    %v7220 = vsel %vm2525, %v7117, 0
    %7222 = vmatprep.subr.mxu0 0.0
    %7223 = vmatpush1.msra.mxu0 %v7112
    %7224 = vmatprep.subr.mxu0 0.0
    %7225 = vmatpush1.msra.mxu0 %v7220
    %7226 = vmatprep.subr.mxu0 0.0
    %7227 = vmatpush1.msra.mxu0 0.0
    %7228 = vmatprep.subr.mxu0 0.0
    %7229 = vmatpush1.msra.mxu0 0.0
    %7230 = vmatprep.subr.mxu0 0.0
    %7231 = vmatpush1.msra.mxu0 0.0
    %7232 = vmatprep.subr.mxu0 0.0
    %7233 = vmatpush1.msra.mxu0 0.0
    %7234 = vmatprep.subr.mxu0 0.0
    %7235 = vmatpush1.msra.mxu0 0.0
    %7236 = vmatprep.subr.mxu0 0.0
    %7237 = vmatpush1.msra.mxu0 0.0
    %7238 = vmatprep.subr.mxu0 0.0
    %7239 = vmatpush1.msra.mxu0 0.0
    %7240 = vmatprep.subr.mxu0 0.0
    %7241 = vmatpush1.msra.mxu0 0.0
    %7242 = vmatprep.subr.mxu0 0.0
    %7243 = vmatpush1.msra.mxu0 0.0
    %7244 = vmatprep.subr.mxu0 0.0
    %7245 = vmatpush1.msra.mxu0 0.0
    %7246 = vmatprep.subr.mxu0 0.0
    %7247 = vmatpush1.msra.mxu0 0.0
    %7248 = vmatprep.subr.mxu0 0.0
    %7249 = vmatpush1.msra.mxu0 0.0
    %7250 = vmatprep.subr.mxu0 0.0
    %7251 = vmatpush1.msra.mxu0 0.0
    %7252 = vmatprep.subr.mxu0 0.0
    %7253 = vmatpush1.msra.mxu0 0.0
    %7254 = vmatprep.subr.mxu0 0.0
    %7255 = vmatpush1.msra.mxu0 0.0
    %7256 = vmatprep.subr.mxu0 0.0
    %7257 = vmatpush1.msra.mxu0 0.0
    %7258 = vmatprep.subr.mxu0 0.0
    %7259 = vmatpush1.msra.mxu0 0.0
    %7260 = vmatprep.subr.mxu0 0.0
    %7261 = vmatpush1.msra.mxu0 0.0
    %7262 = vmatprep.subr.mxu0 0.0
    %7263 = vmatpush1.msra.mxu0 0.0
    %7264 = vmatprep.subr.mxu0 0.0
    %7265 = vmatpush1.msra.mxu0 0.0
    %7266 = vmatprep.subr.mxu0 0.0
    %7267 = vmatpush1.msra.mxu0 0.0
    %7268 = vmatprep.subr.mxu0 0.0
    %7269 = vmatpush1.msra.mxu0 0.0
    %7270 = vmatprep.subr.mxu0 0.0
    %7271 = vmatpush1.msra.mxu0 0.0
    %7272 = vmatprep.subr.mxu0 0.0
    %7273 = vmatpush1.msra.mxu0 0.0
    %7274 = vmatprep.subr.mxu0 0.0
    %7275 = vmatpush1.msra.mxu0 0.0
    %7276 = vmatprep.subr.mxu0 0.0
    %7277 = vmatpush1.msra.mxu0 0.0
    %7278 = vmatprep.subr.mxu0 0.0
    %7279 = vmatpush1.msra.mxu0 0.0
    %7280 = vmatprep.subr.mxu0 0.0
    %7281 = vmatpush1.msra.mxu0 0.0
    %7282 = vmatprep.subr.mxu0 0.0
    %7283 = vmatpush1.msra.mxu0 0.0
    %7284 = vmatprep.subr.mxu0 0.0
    %7285 = vmatpush1.msra.mxu0 0.0
    %7286 = vmatprep.mubr.f32.mxu0 0.0
    %7287 = vmatmul.mubr.f32.gmra.mrb[0].mxu0 %v7217
    %v7288 = vpop.f32.mrb[0].mxu0
    %v7289 = vadd.f32 0.0, %v7288
    %v7290 = vpop.f32.mrb[0].mxu0
    %7291 = vdwg.mxu0
    %v7292 = vld [vmem:[%s3031] sm:$0xff]
    %v7294 = vsel %vm425, %v7289, 0
    %7296 = vmatprep.subr.mxu0 0.0
    %7297 = vmatpush1.msra.mxu0 %v7292
    %7298 = vmatprep.subr.mxu0 0.0
    %7299 = vmatpush1.msra.mxu0 0.0
    %7300 = vmatprep.subr.mxu0 0.0
    %7301 = vmatpush1.msra.mxu0 0.0
    %7302 = vmatprep.subr.mxu0 0.0
    %7303 = vmatpush1.msra.mxu0 0.0
    %7304 = vmatprep.subr.mxu0 0.0
    %7305 = vmatpush1.msra.mxu0 0.0
    %7306 = vmatprep.subr.mxu0 0.0
    %7307 = vmatpush1.msra.mxu0 0.0
    %7308 = vmatprep.subr.mxu0 0.0
    %7309 = vmatpush1.msra.mxu0 0.0
    %7310 = vmatprep.subr.mxu0 0.0
    %7311 = vmatpush1.msra.mxu0 0.0
    %7312 = vmatprep.subr.mxu0 0.0
    %7313 = vmatpush1.msra.mxu0 0.0
    %7314 = vmatprep.subr.mxu0 0.0
    %7315 = vmatpush1.msra.mxu0 0.0
    %7316 = vmatprep.subr.mxu0 0.0
    %7317 = vmatpush1.msra.mxu0 0.0
    %7318 = vmatprep.subr.mxu0 0.0
    %7319 = vmatpush1.msra.mxu0 0.0
    %7320 = vmatprep.subr.mxu0 0.0
    %7321 = vmatpush1.msra.mxu0 0.0
    %7322 = vmatprep.subr.mxu0 0.0
    %7323 = vmatpush1.msra.mxu0 0.0
    %7324 = vmatprep.subr.mxu0 0.0
    %7325 = vmatpush1.msra.mxu0 0.0
    %7326 = vmatprep.subr.mxu0 0.0
    %7327 = vmatpush1.msra.mxu0 0.0
    %7328 = vmatprep.subr.mxu0 0.0
    %7329 = vmatpush1.msra.mxu0 0.0
    %7330 = vmatprep.subr.mxu0 0.0
    %7331 = vmatpush1.msra.mxu0 0.0
    %7332 = vmatprep.subr.mxu0 0.0
    %7333 = vmatpush1.msra.mxu0 0.0
    %7334 = vmatprep.subr.mxu0 0.0
    %7335 = vmatpush1.msra.mxu0 0.0
    %7336 = vmatprep.subr.mxu0 0.0
    %7337 = vmatpush1.msra.mxu0 0.0
    %7338 = vmatprep.subr.mxu0 0.0
    %7339 = vmatpush1.msra.mxu0 0.0
    %7340 = vmatprep.subr.mxu0 0.0
    %7341 = vmatpush1.msra.mxu0 0.0
    %7342 = vmatprep.subr.mxu0 0.0
    %7343 = vmatpush1.msra.mxu0 0.0
    %7344 = vmatprep.subr.mxu0 0.0
    %7345 = vmatpush1.msra.mxu0 0.0
    %7346 = vmatprep.subr.mxu0 0.0
    %7347 = vmatpush1.msra.mxu0 0.0
    %7348 = vmatprep.subr.mxu0 0.0
    %7349 = vmatpush1.msra.mxu0 0.0
    %7350 = vmatprep.subr.mxu0 0.0
    %7351 = vmatpush1.msra.mxu0 0.0
    %7352 = vmatprep.subr.mxu0 0.0
    %7353 = vmatpush1.msra.mxu0 0.0
    %7354 = vmatprep.subr.mxu0 0.0
    %7355 = vmatpush1.msra.mxu0 0.0
    %7356 = vmatprep.subr.mxu0 0.0
    %7357 = vmatpush1.msra.mxu0 0.0
    %7358 = vmatprep.subr.mxu0 0.0
    %7359 = vmatpush1.msra.mxu0 0.0
    %7360 = vmatprep.mubr.f32.mxu0 0.0
    %7361 = vmatmul.mubr.f32.gmra.mrb[0].mxu0 %v7294
    %v7362 = vpop.f32.mrb[0].mxu0
    %v7363 = vadd.f32 0.0, %v7362
    %v7364 = vpop.f32.mrb[0].mxu0
    %7365 = vdwg.mxu0
    %v7367 = vsel %vm425, %v6863, 0
    %7369 = vmatprep.subr.mxu0 0.0
    %7370 = vmatpush1.msra.mxu0 %v6866
    %7371 = vmatprep.subr.mxu0 0.0
    %7372 = vmatpush1.msra.mxu0 0.0
    %7373 = vmatprep.subr.mxu0 0.0
    %7374 = vmatpush1.msra.mxu0 0.0
    %7375 = vmatprep.subr.mxu0 0.0
    %7376 = vmatpush1.msra.mxu0 0.0
    %7377 = vmatprep.subr.mxu0 0.0
    %7378 = vmatpush1.msra.mxu0 0.0
    %7379 = vmatprep.subr.mxu0 0.0
    %7380 = vmatpush1.msra.mxu0 0.0
    %7381 = vmatprep.subr.mxu0 0.0
    %7382 = vmatpush1.msra.mxu0 0.0
    %7383 = vmatprep.subr.mxu0 0.0
    %7384 = vmatpush1.msra.mxu0 0.0
    %7385 = vmatprep.subr.mxu0 0.0
    %7386 = vmatpush1.msra.mxu0 0.0
    %7387 = vmatprep.subr.mxu0 0.0
    %7388 = vmatpush1.msra.mxu0 0.0
    %7389 = vmatprep.subr.mxu0 0.0
    %7390 = vmatpush1.msra.mxu0 0.0
    %7391 = vmatprep.subr.mxu0 0.0
    %7392 = vmatpush1.msra.mxu0 0.0
    %7393 = vmatprep.subr.mxu0 0.0
    %7394 = vmatpush1.msra.mxu0 0.0
    %7395 = vmatprep.subr.mxu0 0.0
    %7396 = vmatpush1.msra.mxu0 0.0
    %7397 = vmatprep.subr.mxu0 0.0
    %7398 = vmatpush1.msra.mxu0 0.0
    %7399 = vmatprep.subr.mxu0 0.0
    %7400 = vmatpush1.msra.mxu0 0.0
    %7401 = vmatprep.subr.mxu0 0.0
    %7402 = vmatpush1.msra.mxu0 0.0
    %7403 = vmatprep.subr.mxu0 0.0
    %7404 = vmatpush1.msra.mxu0 0.0
    %7405 = vmatprep.subr.mxu0 0.0
    %7406 = vmatpush1.msra.mxu0 0.0
    %7407 = vmatprep.subr.mxu0 0.0
    %7408 = vmatpush1.msra.mxu0 0.0
    %7409 = vmatprep.subr.mxu0 0.0
    %7410 = vmatpush1.msra.mxu0 0.0
    %7411 = vmatprep.subr.mxu0 0.0
    %7412 = vmatpush1.msra.mxu0 0.0
    %7413 = vmatprep.subr.mxu0 0.0
    %7414 = vmatpush1.msra.mxu0 0.0
    %7415 = vmatprep.subr.mxu0 0.0
    %7416 = vmatpush1.msra.mxu0 0.0
    %7417 = vmatprep.subr.mxu0 0.0
    %7418 = vmatpush1.msra.mxu0 0.0
    %7419 = vmatprep.subr.mxu0 0.0
    %7420 = vmatpush1.msra.mxu0 0.0
    %7421 = vmatprep.subr.mxu0 0.0
    %7422 = vmatpush1.msra.mxu0 0.0
    %7423 = vmatprep.subr.mxu0 0.0
    %7424 = vmatpush1.msra.mxu0 0.0
    %7425 = vmatprep.subr.mxu0 0.0
    %7426 = vmatpush1.msra.mxu0 0.0
    %7427 = vmatprep.subr.mxu0 0.0
    %7428 = vmatpush1.msra.mxu0 0.0
    %7429 = vmatprep.subr.mxu0 0.0
    %7430 = vmatpush1.msra.mxu0 0.0
    %7431 = vmatprep.subr.mxu0 0.0
    %7432 = vmatpush1.msra.mxu0 0.0
    %7433 = vmatprep.mubr.f32.mxu0 0.0
    %7434 = vmatmul.mubr.f32.gmra.mrb[0].mxu0 %v7367
    %v7435 = vpop.f32.mrb[0].mxu0
    %v7436 = vadd.f32 %v7363, %v7435
    %v7437 = vpop.f32.mrb[0].mxu0
    %7438 = vdwg.mxu0
    %v7439 = vld [vmem:[%s3179] sm:$0xff]
    %v7440 = vld [vmem:[%s3179 + $0x8] sm:$0xff]
    %v7441 = vld [vmem:[%s3179 + $0x10] sm:$0xff]
    %v7442 = vld [vmem:[%s3179 + $0x18] sm:$0xff]
    %v7443 = vld [vmem:[%s3184] sm:$0x1]
    %v7445 = vlaneseq
    %v7446 = vshrl.u32 %v7445, 7
    %v7447 = vsub.s32 0, %v7446
    %v7448 = vrot.slane %v7443, %v7447
    %7450 = vmatprep.subr.mxu0 0.0
    %7451 = vmatpush1.msra.mxu0 %v7439
    %7452 = vmatprep.subr.mxu0 0.0
    %7453 = vmatpush1.msra.mxu0 %v7440
    %7454 = vmatprep.subr.mxu0 0.0
    %7455 = vmatpush1.msra.mxu0 %v7441
    %7456 = vmatprep.subr.mxu0 0.0
    %7457 = vmatpush1.msra.mxu0 %v7442
    %7458 = vmatprep.subr.mxu0 0.0
    %7459 = vmatpush1.msra.mxu0 0.0
    %7460 = vmatprep.subr.mxu0 0.0
    %7461 = vmatpush1.msra.mxu0 0.0
    %7462 = vmatprep.subr.mxu0 0.0
    %7463 = vmatpush1.msra.mxu0 0.0
    %7464 = vmatprep.subr.mxu0 0.0
    %7465 = vmatpush1.msra.mxu0 0.0
    %7466 = vmatprep.subr.mxu0 0.0
    %7467 = vmatpush1.msra.mxu0 0.0
    %7468 = vmatprep.subr.mxu0 0.0
    %7469 = vmatpush1.msra.mxu0 0.0
    %7470 = vmatprep.subr.mxu0 0.0
    %7471 = vmatpush1.msra.mxu0 0.0
    %7472 = vmatprep.subr.mxu0 0.0
    %7473 = vmatpush1.msra.mxu0 0.0
    %7474 = vmatprep.subr.mxu0 0.0
    %7475 = vmatpush1.msra.mxu0 0.0
    %7476 = vmatprep.subr.mxu0 0.0
    %7477 = vmatpush1.msra.mxu0 0.0
    %7478 = vmatprep.subr.mxu0 0.0
    %7479 = vmatpush1.msra.mxu0 0.0
    %7480 = vmatprep.subr.mxu0 0.0
    %7481 = vmatpush1.msra.mxu0 0.0
    %7482 = vmatprep.subr.mxu0 0.0
    %7483 = vmatpush1.msra.mxu0 0.0
    %7484 = vmatprep.subr.mxu0 0.0
    %7485 = vmatpush1.msra.mxu0 0.0
    %7486 = vmatprep.subr.mxu0 0.0
    %7487 = vmatpush1.msra.mxu0 0.0
    %7488 = vmatprep.subr.mxu0 0.0
    %7489 = vmatpush1.msra.mxu0 0.0
    %7490 = vmatprep.subr.mxu0 0.0
    %7491 = vmatpush1.msra.mxu0 0.0
    %7492 = vmatprep.subr.mxu0 0.0
    %7493 = vmatpush1.msra.mxu0 0.0
    %7494 = vmatprep.subr.mxu0 0.0
    %7495 = vmatpush1.msra.mxu0 0.0
    %7496 = vmatprep.subr.mxu0 0.0
    %7497 = vmatpush1.msra.mxu0 0.0
    %7498 = vmatprep.subr.mxu0 0.0
    %7499 = vmatpush1.msra.mxu0 0.0
    %7500 = vmatprep.subr.mxu0 0.0
    %7501 = vmatpush1.msra.mxu0 0.0
    %7502 = vmatprep.subr.mxu0 0.0
    %7503 = vmatpush1.msra.mxu0 0.0
    %7504 = vmatprep.subr.mxu0 0.0
    %7505 = vmatpush1.msra.mxu0 0.0
    %7506 = vmatprep.subr.mxu0 0.0
    %7507 = vmatpush1.msra.mxu0 0.0
    %7508 = vmatprep.subr.mxu0 0.0
    %7509 = vmatpush1.msra.mxu0 0.0
    %7510 = vmatprep.subr.mxu0 0.0
    %7511 = vmatpush1.msra.mxu0 0.0
    %7512 = vmatprep.subr.mxu0 0.0
    %7513 = vmatpush1.msra.mxu0 0.0
    %7514 = vmatprep.mubr.f32.mxu0 0.0
    %7515 = vmatmul.mubr.f32.gmra.mrb[0].mxu0 %v6440
    %v7516 = vpop.f32.mrb[0].mxu0
    %v7517 = vadd.f32 %v7448, %v7516
    %v7518 = vpop.f32.mrb[0].mxu0
    %7519 = vdwg.mxu0
    %v7520 = vld [vmem:[%s3262] sm:$0xff]
    %v7521 = vld [vmem:[%s3262 + $0x8] sm:$0xff]
    %v7522 = vld [vmem:[%s3262 + $0x10] sm:$0xff]
    %v7523 = vld [vmem:[%s3262 + $0x18] sm:$0xff]
    %v7524 = vld [vmem:[%s3267] sm:$0x1]
    %v7526 = vlaneseq
    %v7527 = vshrl.u32 %v7526, 7
    %v7528 = vsub.s32 0, %v7527
    %v7529 = vrot.slane %v7524, %v7528
    %7531 = vmatprep.subr.mxu0 0.0
    %7532 = vmatpush1.msra.mxu0 %v7520
    %7533 = vmatprep.subr.mxu0 0.0
    %7534 = vmatpush1.msra.mxu0 %v7521
    %7535 = vmatprep.subr.mxu0 0.0
    %7536 = vmatpush1.msra.mxu0 %v7522
    %7537 = vmatprep.subr.mxu0 0.0
    %7538 = vmatpush1.msra.mxu0 %v7523
    %7539 = vmatprep.subr.mxu0 0.0
    %7540 = vmatpush1.msra.mxu0 0.0
    %7541 = vmatprep.subr.mxu0 0.0
    %7542 = vmatpush1.msra.mxu0 0.0
    %7543 = vmatprep.subr.mxu0 0.0
    %7544 = vmatpush1.msra.mxu0 0.0
    %7545 = vmatprep.subr.mxu0 0.0
    %7546 = vmatpush1.msra.mxu0 0.0
    %7547 = vmatprep.subr.mxu0 0.0
    %7548 = vmatpush1.msra.mxu0 0.0
    %7549 = vmatprep.subr.mxu0 0.0
    %7550 = vmatpush1.msra.mxu0 0.0
    %7551 = vmatprep.subr.mxu0 0.0
    %7552 = vmatpush1.msra.mxu0 0.0
    %7553 = vmatprep.subr.mxu0 0.0
    %7554 = vmatpush1.msra.mxu0 0.0
    %7555 = vmatprep.subr.mxu0 0.0
    %7556 = vmatpush1.msra.mxu0 0.0
    %7557 = vmatprep.subr.mxu0 0.0
    %7558 = vmatpush1.msra.mxu0 0.0
    %7559 = vmatprep.subr.mxu0 0.0
    %7560 = vmatpush1.msra.mxu0 0.0
    %7561 = vmatprep.subr.mxu0 0.0
    %7562 = vmatpush1.msra.mxu0 0.0
    %7563 = vmatprep.subr.mxu0 0.0
    %7564 = vmatpush1.msra.mxu0 0.0
    %7565 = vmatprep.subr.mxu0 0.0
    %7566 = vmatpush1.msra.mxu0 0.0
    %7567 = vmatprep.subr.mxu0 0.0
    %7568 = vmatpush1.msra.mxu0 0.0
    %7569 = vmatprep.subr.mxu0 0.0
    %7570 = vmatpush1.msra.mxu0 0.0
    %7571 = vmatprep.subr.mxu0 0.0
    %7572 = vmatpush1.msra.mxu0 0.0
    %7573 = vmatprep.subr.mxu0 0.0
    %7574 = vmatpush1.msra.mxu0 0.0
    %7575 = vmatprep.subr.mxu0 0.0
    %7576 = vmatpush1.msra.mxu0 0.0
    %7577 = vmatprep.subr.mxu0 0.0
    %7578 = vmatpush1.msra.mxu0 0.0
    %7579 = vmatprep.subr.mxu0 0.0
    %7580 = vmatpush1.msra.mxu0 0.0
    %7581 = vmatprep.subr.mxu0 0.0
    %7582 = vmatpush1.msra.mxu0 0.0
    %7583 = vmatprep.subr.mxu0 0.0
    %7584 = vmatpush1.msra.mxu0 0.0
    %7585 = vmatprep.subr.mxu0 0.0
    %7586 = vmatpush1.msra.mxu0 0.0
    %7587 = vmatprep.subr.mxu0 0.0
    %7588 = vmatpush1.msra.mxu0 0.0
    %7589 = vmatprep.subr.mxu0 0.0
    %7590 = vmatpush1.msra.mxu0 0.0
    %7591 = vmatprep.subr.mxu0 0.0
    %7592 = vmatpush1.msra.mxu0 0.0
    %7593 = vmatprep.subr.mxu0 0.0
    %7594 = vmatpush1.msra.mxu0 0.0
    %7595 = vmatprep.mubr.f32.mxu0 0.0
    %7596 = vmatmul.mubr.f32.gmra.mrb[0].mxu0 %v6529
    %v7597 = vpop.f32.mrb[0].mxu0
    %v7598 = vadd.f32 %v7529, %v7597
    %v7599 = vpop.f32.mrb[0].mxu0
    %7600 = vmatprep.mubr.f32.mxu0 0.0
    %7601 = vmatmul.mubr.f32.gmra.mrb[0].mxu0 %v6531
    %v7602 = vpop.f32.mrb[0].mxu0
    %v7603 = vadd.f32 %v7529, %v7602
    %v7604 = vpop.f32.mrb[0].mxu0
    %7605 = vdwg.mxu0
    %v7606 = vld [vmem:[%s3350] sm:$0xff]
    %v7607 = vld [vmem:[%s3350 + $0x8] sm:$0xff]
    %v7608 = vld [vmem:[%s3350 + $0x10] sm:$0xff]
    %v7609 = vld [vmem:[%s3350 + $0x18] sm:$0xff]
    %v7610 = vld [vmem:[%s3355] sm:$0x1]
    %v7612 = vlaneseq
    %v7613 = vshrl.u32 %v7612, 7
    %v7614 = vsub.s32 0, %v7613
    %v7615 = vrot.slane %v7610, %v7614
    %7617 = vmatprep.subr.mxu0 0.0
    %7618 = vmatpush1.msra.mxu0 %v7606
    %7619 = vmatprep.subr.mxu0 0.0
    %7620 = vmatpush1.msra.mxu0 %v7607
    %7621 = vmatprep.subr.mxu0 0.0
    %7622 = vmatpush1.msra.mxu0 %v7608
    %7623 = vmatprep.subr.mxu0 0.0
    %7624 = vmatpush1.msra.mxu0 %v7609
    %7625 = vmatprep.subr.mxu0 0.0
    %7626 = vmatpush1.msra.mxu0 0.0
    %7627 = vmatprep.subr.mxu0 0.0
    %7628 = vmatpush1.msra.mxu0 0.0
    %7629 = vmatprep.subr.mxu0 0.0
    %7630 = vmatpush1.msra.mxu0 0.0
    %7631 = vmatprep.subr.mxu0 0.0
    %7632 = vmatpush1.msra.mxu0 0.0
    %7633 = vmatprep.subr.mxu0 0.0
    %7634 = vmatpush1.msra.mxu0 0.0
    %7635 = vmatprep.subr.mxu0 0.0
    %7636 = vmatpush1.msra.mxu0 0.0
    %7637 = vmatprep.subr.mxu0 0.0
    %7638 = vmatpush1.msra.mxu0 0.0
    %7639 = vmatprep.subr.mxu0 0.0
    %7640 = vmatpush1.msra.mxu0 0.0
    %7641 = vmatprep.subr.mxu0 0.0
    %7642 = vmatpush1.msra.mxu0 0.0
    %7643 = vmatprep.subr.mxu0 0.0
    %7644 = vmatpush1.msra.mxu0 0.0
    %7645 = vmatprep.subr.mxu0 0.0
    %7646 = vmatpush1.msra.mxu0 0.0
    %7647 = vmatprep.subr.mxu0 0.0
    %7648 = vmatpush1.msra.mxu0 0.0
    %7649 = vmatprep.subr.mxu0 0.0
    %7650 = vmatpush1.msra.mxu0 0.0
    %7651 = vmatprep.subr.mxu0 0.0
    %7652 = vmatpush1.msra.mxu0 0.0
    %7653 = vmatprep.subr.mxu0 0.0
    %7654 = vmatpush1.msra.mxu0 0.0
    %7655 = vmatprep.subr.mxu0 0.0
    %7656 = vmatpush1.msra.mxu0 0.0
    %7657 = vmatprep.subr.mxu0 0.0
    %7658 = vmatpush1.msra.mxu0 0.0
    %7659 = vmatprep.subr.mxu0 0.0
    %7660 = vmatpush1.msra.mxu0 0.0
    %7661 = vmatprep.subr.mxu0 0.0
    %7662 = vmatpush1.msra.mxu0 0.0
    %7663 = vmatprep.subr.mxu0 0.0
    %7664 = vmatpush1.msra.mxu0 0.0
    %7665 = vmatprep.subr.mxu0 0.0
    %7666 = vmatpush1.msra.mxu0 0.0
    %7667 = vmatprep.subr.mxu0 0.0
    %7668 = vmatpush1.msra.mxu0 0.0
    %7669 = vmatprep.subr.mxu0 0.0
    %7670 = vmatpush1.msra.mxu0 0.0
    %7671 = vmatprep.subr.mxu0 0.0
    %7672 = vmatpush1.msra.mxu0 0.0
    %7673 = vmatprep.subr.mxu0 0.0
    %7674 = vmatpush1.msra.mxu0 0.0
    %7675 = vmatprep.subr.mxu0 0.0
    %7676 = vmatpush1.msra.mxu0 0.0
    %7677 = vmatprep.subr.mxu0 0.0
    %7678 = vmatpush1.msra.mxu0 0.0
    %7679 = vmatprep.subr.mxu0 0.0
    %7680 = vmatpush1.msra.mxu0 0.0
    %7681 = vmatprep.mubr.f32.mxu0 0.0
    %7682 = vmatmul.mubr.f32.gmra.mrb[0].mxu0 %v6529
    %v7683 = vpop.f32.mrb[0].mxu0
    %v7684 = vadd.f32 %v7615, %v7683
    %v7685 = vpop.f32.mrb[0].mxu0
    %7686 = vmatprep.mubr.f32.mxu0 0.0
    %7687 = vmatmul.mubr.f32.gmra.mrb[0].mxu0 %v6531
    %v7688 = vpop.f32.mrb[0].mxu0
    %v7689 = vadd.f32 %v7615, %v7688
    %v7690 = vpop.f32.mrb[0].mxu0
    %7691 = vdwg.mxu0
    %s7692 = scalar_lea.vmem %s69, 96
    %7693 = vst.msk [vmem:[%s7692] sm:$0xff] %vm425, %v7598
    %7694 = vst.msk [vmem:[%s7692 + $0x8] sm:$0x3] %vm2427, %v7603
    %s7695 = scalar_lea.vmem %s71, 96
    %7696 = vst.msk [vmem:[%s7695] sm:$0xff] %vm425, %v7684
    %7697 = vst.msk [vmem:[%s7695 + $0x8] sm:$0x3] %vm2427, %v7689
    %v7699 = vsel %vm425, %v7517, 0
    %v7702 = vsel %vm425, %v7598, 0
    %v7705 = vsel %vm425, %v7603, 0
    %7707 = vmatprep.subr.mxu0 0.0
    %7708 = vmatpush1.xpose.msra.mxu0 %v7702
    %7709 = vmatprep.subr.mxu0 0.0
    %7710 = vmatpush1.xpose.msra.mxu0 %v7705
    %7711 = vmatprep.subr.mxu0 0.0
    %7712 = vmatpush1.xpose.msra.mxu0 0.0
    %7713 = vmatprep.subr.mxu0 0.0
    %7714 = vmatpush1.xpose.msra.mxu0 0.0
    %7715 = vmatprep.subr.mxu0 0.0
    %7716 = vmatpush1.xpose.msra.mxu0 0.0
    %7717 = vmatprep.subr.mxu0 0.0
    %7718 = vmatpush1.xpose.msra.mxu0 0.0
    %7719 = vmatprep.subr.mxu0 0.0
    %7720 = vmatpush1.xpose.msra.mxu0 0.0
    %7721 = vmatprep.subr.mxu0 0.0
    %7722 = vmatpush1.xpose.msra.mxu0 0.0
    %7723 = vmatprep.subr.mxu0 0.0
    %7724 = vmatpush1.xpose.msra.mxu0 0.0
    %7725 = vmatprep.subr.mxu0 0.0
    %7726 = vmatpush1.xpose.msra.mxu0 0.0
    %7727 = vmatprep.subr.mxu0 0.0
    %7728 = vmatpush1.xpose.msra.mxu0 0.0
    %7729 = vmatprep.subr.mxu0 0.0
    %7730 = vmatpush1.xpose.msra.mxu0 0.0
    %7731 = vmatprep.subr.mxu0 0.0
    %7732 = vmatpush1.xpose.msra.mxu0 0.0
    %7733 = vmatprep.subr.mxu0 0.0
    %7734 = vmatpush1.xpose.msra.mxu0 0.0
    %7735 = vmatprep.subr.mxu0 0.0
    %7736 = vmatpush1.xpose.msra.mxu0 0.0
    %7737 = vmatprep.subr.mxu0 0.0
    %7738 = vmatpush1.xpose.msra.mxu0 0.0
    %7739 = vmatprep.subr.mxu0 0.0
    %7740 = vmatpush1.xpose.msra.mxu0 0.0
    %7741 = vmatprep.subr.mxu0 0.0
    %7742 = vmatpush1.xpose.msra.mxu0 0.0
    %7743 = vmatprep.subr.mxu0 0.0
    %7744 = vmatpush1.xpose.msra.mxu0 0.0
    %7745 = vmatprep.subr.mxu0 0.0
    %7746 = vmatpush1.xpose.msra.mxu0 0.0
    %7747 = vmatprep.subr.mxu0 0.0
    %7748 = vmatpush1.xpose.msra.mxu0 0.0
    %7749 = vmatprep.subr.mxu0 0.0
    %7750 = vmatpush1.xpose.msra.mxu0 0.0
    %7751 = vmatprep.subr.mxu0 0.0
    %7752 = vmatpush1.xpose.msra.mxu0 0.0
    %7753 = vmatprep.subr.mxu0 0.0
    %7754 = vmatpush1.xpose.msra.mxu0 0.0
    %7755 = vmatprep.subr.mxu0 0.0
    %7756 = vmatpush1.xpose.msra.mxu0 0.0
    %7757 = vmatprep.subr.mxu0 0.0
    %7758 = vmatpush1.xpose.msra.mxu0 0.0
    %7759 = vmatprep.subr.mxu0 0.0
    %7760 = vmatpush1.xpose.msra.mxu0 0.0
    %7761 = vmatprep.subr.mxu0 0.0
    %7762 = vmatpush1.xpose.msra.mxu0 0.0
    %7763 = vmatprep.subr.mxu0 0.0
    %7764 = vmatpush1.xpose.msra.mxu0 0.0
    %7765 = vmatprep.subr.mxu0 0.0
    %7766 = vmatpush1.xpose.msra.mxu0 0.0
    %7767 = vmatprep.subr.mxu0 0.0
    %7768 = vmatpush1.xpose.msra.mxu0 0.0
    %7769 = vmatprep.subr.mxu0 0.0
    %7770 = vmatpush1.xpose.msra.mxu0 0.0
    %7771 = vmatprep.mubr.f32.mxu0 0.0
    %7772 = vmatmul.mubr.f32.gmra.mrb[0].mxu0 %v7699
    %v7773 = vpop.f32.mrb[0].mxu0
    %v7774 = vadd.f32 %v4456, %v7773
    %v7775 = vpop.f32.mrb[0].mxu0
    %7776 = vdwg.mxu0
    %v7777 = vsel %vm2510, %v7774, -inf
    %7778 = vmax.xlane.f32.xlu0 %v7777
    %v7779 = vpop.xlane.xlu0 %7778
    %v7780 = vsub.f32 %v7774, %v7779
    %v7781 = vmul.f32 %v7780, 1.442695
    %v7782 = vpow.pop %v7781
    %v7783 = vsel %vm2510, %v7782, 0.0
    %7784 = vadd.xlane.f32.xlu0 %v7783
    %v7785 = vpop.xlane.xlu0 %7784
    %v7786 = vrcp.pop %v7785
    %v7787 = vmul.f32 %v7782, %v7786
    %v7789 = vsel %vm2510, %v7787, 0
    %v7792 = vsel %vm2525, %v7689, 0
    %7794 = vmatprep.subr.mxu0 0.0
    %7795 = vmatpush1.msra.mxu0 %v7684
    %7796 = vmatprep.subr.mxu0 0.0
    %7797 = vmatpush1.msra.mxu0 %v7792
    %7798 = vmatprep.subr.mxu0 0.0
    %7799 = vmatpush1.msra.mxu0 0.0
    %7800 = vmatprep.subr.mxu0 0.0
    %7801 = vmatpush1.msra.mxu0 0.0
    %7802 = vmatprep.subr.mxu0 0.0
    %7803 = vmatpush1.msra.mxu0 0.0
    %7804 = vmatprep.subr.mxu0 0.0
    %7805 = vmatpush1.msra.mxu0 0.0
    %7806 = vmatprep.subr.mxu0 0.0
    %7807 = vmatpush1.msra.mxu0 0.0
    %7808 = vmatprep.subr.mxu0 0.0
    %7809 = vmatpush1.msra.mxu0 0.0
    %7810 = vmatprep.subr.mxu0 0.0
    %7811 = vmatpush1.msra.mxu0 0.0
    %7812 = vmatprep.subr.mxu0 0.0
    %7813 = vmatpush1.msra.mxu0 0.0
    %7814 = vmatprep.subr.mxu0 0.0
    %7815 = vmatpush1.msra.mxu0 0.0
    %7816 = vmatprep.subr.mxu0 0.0
    %7817 = vmatpush1.msra.mxu0 0.0
    %7818 = vmatprep.subr.mxu0 0.0
    %7819 = vmatpush1.msra.mxu0 0.0
    %7820 = vmatprep.subr.mxu0 0.0
    %7821 = vmatpush1.msra.mxu0 0.0
    %7822 = vmatprep.subr.mxu0 0.0
    %7823 = vmatpush1.msra.mxu0 0.0
    %7824 = vmatprep.subr.mxu0 0.0
    %7825 = vmatpush1.msra.mxu0 0.0
    %7826 = vmatprep.subr.mxu0 0.0
    %7827 = vmatpush1.msra.mxu0 0.0
    %7828 = vmatprep.subr.mxu0 0.0
    %7829 = vmatpush1.msra.mxu0 0.0
    %7830 = vmatprep.subr.mxu0 0.0
    %7831 = vmatpush1.msra.mxu0 0.0
    %7832 = vmatprep.subr.mxu0 0.0
    %7833 = vmatpush1.msra.mxu0 0.0
    %7834 = vmatprep.subr.mxu0 0.0
    %7835 = vmatpush1.msra.mxu0 0.0
    %7836 = vmatprep.subr.mxu0 0.0
    %7837 = vmatpush1.msra.mxu0 0.0
    %7838 = vmatprep.subr.mxu0 0.0
    %7839 = vmatpush1.msra.mxu0 0.0
    %7840 = vmatprep.subr.mxu0 0.0
    %7841 = vmatpush1.msra.mxu0 0.0
    %7842 = vmatprep.subr.mxu0 0.0
    %7843 = vmatpush1.msra.mxu0 0.0
    %7844 = vmatprep.subr.mxu0 0.0
    %7845 = vmatpush1.msra.mxu0 0.0
    %7846 = vmatprep.subr.mxu0 0.0
    %7847 = vmatpush1.msra.mxu0 0.0
    %7848 = vmatprep.subr.mxu0 0.0
    %7849 = vmatpush1.msra.mxu0 0.0
    %7850 = vmatprep.subr.mxu0 0.0
    %7851 = vmatpush1.msra.mxu0 0.0
    %7852 = vmatprep.subr.mxu0 0.0
    %7853 = vmatpush1.msra.mxu0 0.0
    %7854 = vmatprep.subr.mxu0 0.0
    %7855 = vmatpush1.msra.mxu0 0.0
    %7856 = vmatprep.subr.mxu0 0.0
    %7857 = vmatpush1.msra.mxu0 0.0
    %7858 = vmatprep.mubr.f32.mxu0 0.0
    %7859 = vmatmul.mubr.f32.gmra.mrb[0].mxu0 %v7789
    %v7860 = vpop.f32.mrb[0].mxu0
    %v7861 = vadd.f32 0.0, %v7860
    %v7862 = vpop.f32.mrb[0].mxu0
    %7863 = vdwg.mxu0
    %v7864 = vld [vmem:[%s3610] sm:$0xff]
    %v7866 = vsel %vm425, %v7861, 0
    %7868 = vmatprep.subr.mxu0 0.0
    %7869 = vmatpush1.msra.mxu0 %v7864
    %7870 = vmatprep.subr.mxu0 0.0
    %7871 = vmatpush1.msra.mxu0 0.0
    %7872 = vmatprep.subr.mxu0 0.0
    %7873 = vmatpush1.msra.mxu0 0.0
    %7874 = vmatprep.subr.mxu0 0.0
    %7875 = vmatpush1.msra.mxu0 0.0
    %7876 = vmatprep.subr.mxu0 0.0
    %7877 = vmatpush1.msra.mxu0 0.0
    %7878 = vmatprep.subr.mxu0 0.0
    %7879 = vmatpush1.msra.mxu0 0.0
    %7880 = vmatprep.subr.mxu0 0.0
    %7881 = vmatpush1.msra.mxu0 0.0
    %7882 = vmatprep.subr.mxu0 0.0
    %7883 = vmatpush1.msra.mxu0 0.0
    %7884 = vmatprep.subr.mxu0 0.0
    %7885 = vmatpush1.msra.mxu0 0.0
    %7886 = vmatprep.subr.mxu0 0.0
    %7887 = vmatpush1.msra.mxu0 0.0
    %7888 = vmatprep.subr.mxu0 0.0
    %7889 = vmatpush1.msra.mxu0 0.0
    %7890 = vmatprep.subr.mxu0 0.0
    %7891 = vmatpush1.msra.mxu0 0.0
    %7892 = vmatprep.subr.mxu0 0.0
    %7893 = vmatpush1.msra.mxu0 0.0
    %7894 = vmatprep.subr.mxu0 0.0
    %7895 = vmatpush1.msra.mxu0 0.0
    %7896 = vmatprep.subr.mxu0 0.0
    %7897 = vmatpush1.msra.mxu0 0.0
    %7898 = vmatprep.subr.mxu0 0.0
    %7899 = vmatpush1.msra.mxu0 0.0
    %7900 = vmatprep.subr.mxu0 0.0
    %7901 = vmatpush1.msra.mxu0 0.0
    %7902 = vmatprep.subr.mxu0 0.0
    %7903 = vmatpush1.msra.mxu0 0.0
    %7904 = vmatprep.subr.mxu0 0.0
    %7905 = vmatpush1.msra.mxu0 0.0
    %7906 = vmatprep.subr.mxu0 0.0
    %7907 = vmatpush1.msra.mxu0 0.0
    %7908 = vmatprep.subr.mxu0 0.0
    %7909 = vmatpush1.msra.mxu0 0.0
    %7910 = vmatprep.subr.mxu0 0.0
    %7911 = vmatpush1.msra.mxu0 0.0
    %7912 = vmatprep.subr.mxu0 0.0
    %7913 = vmatpush1.msra.mxu0 0.0
    %7914 = vmatprep.subr.mxu0 0.0
    %7915 = vmatpush1.msra.mxu0 0.0
    %7916 = vmatprep.subr.mxu0 0.0
    %7917 = vmatpush1.msra.mxu0 0.0
    %7918 = vmatprep.subr.mxu0 0.0
    %7919 = vmatpush1.msra.mxu0 0.0
    %7920 = vmatprep.subr.mxu0 0.0
    %7921 = vmatpush1.msra.mxu0 0.0
    %7922 = vmatprep.subr.mxu0 0.0
    %7923 = vmatpush1.msra.mxu0 0.0
    %7924 = vmatprep.subr.mxu0 0.0
    %7925 = vmatpush1.msra.mxu0 0.0
    %7926 = vmatprep.subr.mxu0 0.0
    %7927 = vmatpush1.msra.mxu0 0.0
    %7928 = vmatprep.subr.mxu0 0.0
    %7929 = vmatpush1.msra.mxu0 0.0
    %7930 = vmatprep.subr.mxu0 0.0
    %7931 = vmatpush1.msra.mxu0 0.0
    %7932 = vmatprep.mubr.f32.mxu0 0.0
    %7933 = vmatmul.mubr.f32.gmra.mrb[0].mxu0 %v7866
    %v7934 = vpop.f32.mrb[0].mxu0
    %v7935 = vadd.f32 0.0, %v7934
    %v7936 = vpop.f32.mrb[0].mxu0
    %7937 = vdwg.mxu0
    %v7938 = vadd.f32 %v7436, %v7935
    %v7939 = vld [vmem:[%s3686] sm:$0xff]
    %v7940 = vld [vmem:[%s3686 + $0x8] sm:$0xff]
    %v7941 = vld [vmem:[%s3686 + $0x10] sm:$0xff]
    %v7942 = vld [vmem:[%s3686 + $0x18] sm:$0xff]
    %v7943 = vld [vmem:[%s3691] sm:$0x1]
    %v7945 = vlaneseq
    %v7946 = vshrl.u32 %v7945, 7
    %v7947 = vsub.s32 0, %v7946
    %v7948 = vrot.slane %v7943, %v7947
    %7950 = vmatprep.subr.mxu0 0.0
    %7951 = vmatpush1.msra.mxu0 %v7939
    %7952 = vmatprep.subr.mxu0 0.0
    %7953 = vmatpush1.msra.mxu0 %v7940
    %7954 = vmatprep.subr.mxu0 0.0
    %7955 = vmatpush1.msra.mxu0 %v7941
    %7956 = vmatprep.subr.mxu0 0.0
    %7957 = vmatpush1.msra.mxu0 %v7942
    %7958 = vmatprep.subr.mxu0 0.0
    %7959 = vmatpush1.msra.mxu0 0.0
    %7960 = vmatprep.subr.mxu0 0.0
    %7961 = vmatpush1.msra.mxu0 0.0
    %7962 = vmatprep.subr.mxu0 0.0
    %7963 = vmatpush1.msra.mxu0 0.0
    %7964 = vmatprep.subr.mxu0 0.0
    %7965 = vmatpush1.msra.mxu0 0.0
    %7966 = vmatprep.subr.mxu0 0.0
    %7967 = vmatpush1.msra.mxu0 0.0
    %7968 = vmatprep.subr.mxu0 0.0
    %7969 = vmatpush1.msra.mxu0 0.0
    %7970 = vmatprep.subr.mxu0 0.0
    %7971 = vmatpush1.msra.mxu0 0.0
    %7972 = vmatprep.subr.mxu0 0.0
    %7973 = vmatpush1.msra.mxu0 0.0
    %7974 = vmatprep.subr.mxu0 0.0
    %7975 = vmatpush1.msra.mxu0 0.0
    %7976 = vmatprep.subr.mxu0 0.0
    %7977 = vmatpush1.msra.mxu0 0.0
    %7978 = vmatprep.subr.mxu0 0.0
    %7979 = vmatpush1.msra.mxu0 0.0
    %7980 = vmatprep.subr.mxu0 0.0
    %7981 = vmatpush1.msra.mxu0 0.0
    %7982 = vmatprep.subr.mxu0 0.0
    %7983 = vmatpush1.msra.mxu0 0.0
    %7984 = vmatprep.subr.mxu0 0.0
    %7985 = vmatpush1.msra.mxu0 0.0
    %7986 = vmatprep.subr.mxu0 0.0
    %7987 = vmatpush1.msra.mxu0 0.0
    %7988 = vmatprep.subr.mxu0 0.0
    %7989 = vmatpush1.msra.mxu0 0.0
    %7990 = vmatprep.subr.mxu0 0.0
    %7991 = vmatpush1.msra.mxu0 0.0
    %7992 = vmatprep.subr.mxu0 0.0
    %7993 = vmatpush1.msra.mxu0 0.0
    %7994 = vmatprep.subr.mxu0 0.0
    %7995 = vmatpush1.msra.mxu0 0.0
    %7996 = vmatprep.subr.mxu0 0.0
    %7997 = vmatpush1.msra.mxu0 0.0
    %7998 = vmatprep.subr.mxu0 0.0
    %7999 = vmatpush1.msra.mxu0 0.0
    %8000 = vmatprep.subr.mxu0 0.0
    %8001 = vmatpush1.msra.mxu0 0.0
    %8002 = vmatprep.subr.mxu0 0.0
    %8003 = vmatpush1.msra.mxu0 0.0
    %8004 = vmatprep.subr.mxu0 0.0
    %8005 = vmatpush1.msra.mxu0 0.0
    %8006 = vmatprep.subr.mxu0 0.0
    %8007 = vmatpush1.msra.mxu0 0.0
    %8008 = vmatprep.subr.mxu0 0.0
    %8009 = vmatpush1.msra.mxu0 0.0
    %8010 = vmatprep.subr.mxu0 0.0
    %8011 = vmatpush1.msra.mxu0 0.0
    %8012 = vmatprep.subr.mxu0 0.0
    %8013 = vmatpush1.msra.mxu0 0.0
    %8014 = vmatprep.mubr.f32.mxu0 0.0
    %8015 = vmatmul.mubr.f32.gmra.mrb[0].mxu0 %v6440
    %v8016 = vpop.f32.mrb[0].mxu0
    %v8017 = vadd.f32 %v7948, %v8016
    %v8018 = vpop.f32.mrb[0].mxu0
    %8019 = vdwg.mxu0
    %v8020 = vld [vmem:[%s3769] sm:$0xff]
    %v8021 = vld [vmem:[%s3769 + $0x8] sm:$0xff]
    %v8022 = vld [vmem:[%s3769 + $0x10] sm:$0xff]
    %v8023 = vld [vmem:[%s3769 + $0x18] sm:$0xff]
    %v8024 = vld [vmem:[%s3774] sm:$0x1]
    %v8026 = vlaneseq
    %v8027 = vshrl.u32 %v8026, 7
    %v8028 = vsub.s32 0, %v8027
    %v8029 = vrot.slane %v8024, %v8028
    %8031 = vmatprep.subr.mxu0 0.0
    %8032 = vmatpush1.msra.mxu0 %v8020
    %8033 = vmatprep.subr.mxu0 0.0
    %8034 = vmatpush1.msra.mxu0 %v8021
    %8035 = vmatprep.subr.mxu0 0.0
    %8036 = vmatpush1.msra.mxu0 %v8022
    %8037 = vmatprep.subr.mxu0 0.0
    %8038 = vmatpush1.msra.mxu0 %v8023
    %8039 = vmatprep.subr.mxu0 0.0
    %8040 = vmatpush1.msra.mxu0 0.0
    %8041 = vmatprep.subr.mxu0 0.0
    %8042 = vmatpush1.msra.mxu0 0.0
    %8043 = vmatprep.subr.mxu0 0.0
    %8044 = vmatpush1.msra.mxu0 0.0
    %8045 = vmatprep.subr.mxu0 0.0
    %8046 = vmatpush1.msra.mxu0 0.0
    %8047 = vmatprep.subr.mxu0 0.0
    %8048 = vmatpush1.msra.mxu0 0.0
    %8049 = vmatprep.subr.mxu0 0.0
    %8050 = vmatpush1.msra.mxu0 0.0
    %8051 = vmatprep.subr.mxu0 0.0
    %8052 = vmatpush1.msra.mxu0 0.0
    %8053 = vmatprep.subr.mxu0 0.0
    %8054 = vmatpush1.msra.mxu0 0.0
    %8055 = vmatprep.subr.mxu0 0.0
    %8056 = vmatpush1.msra.mxu0 0.0
    %8057 = vmatprep.subr.mxu0 0.0
    %8058 = vmatpush1.msra.mxu0 0.0
    %8059 = vmatprep.subr.mxu0 0.0
    %8060 = vmatpush1.msra.mxu0 0.0
    %8061 = vmatprep.subr.mxu0 0.0
    %8062 = vmatpush1.msra.mxu0 0.0
    %8063 = vmatprep.subr.mxu0 0.0
    %8064 = vmatpush1.msra.mxu0 0.0
    %8065 = vmatprep.subr.mxu0 0.0
    %8066 = vmatpush1.msra.mxu0 0.0
    %8067 = vmatprep.subr.mxu0 0.0
    %8068 = vmatpush1.msra.mxu0 0.0
    %8069 = vmatprep.subr.mxu0 0.0
    %8070 = vmatpush1.msra.mxu0 0.0
    %8071 = vmatprep.subr.mxu0 0.0
    %8072 = vmatpush1.msra.mxu0 0.0
    %8073 = vmatprep.subr.mxu0 0.0
    %8074 = vmatpush1.msra.mxu0 0.0
    %8075 = vmatprep.subr.mxu0 0.0
    %8076 = vmatpush1.msra.mxu0 0.0
    %8077 = vmatprep.subr.mxu0 0.0
    %8078 = vmatpush1.msra.mxu0 0.0
    %8079 = vmatprep.subr.mxu0 0.0
    %8080 = vmatpush1.msra.mxu0 0.0
    %8081 = vmatprep.subr.mxu0 0.0
    %8082 = vmatpush1.msra.mxu0 0.0
    %8083 = vmatprep.subr.mxu0 0.0
    %8084 = vmatpush1.msra.mxu0 0.0
    %8085 = vmatprep.subr.mxu0 0.0
    %8086 = vmatpush1.msra.mxu0 0.0
    %8087 = vmatprep.subr.mxu0 0.0
    %8088 = vmatpush1.msra.mxu0 0.0
    %8089 = vmatprep.subr.mxu0 0.0
    %8090 = vmatpush1.msra.mxu0 0.0
    %8091 = vmatprep.subr.mxu0 0.0
    %8092 = vmatpush1.msra.mxu0 0.0
    %8093 = vmatprep.subr.mxu0 0.0
    %8094 = vmatpush1.msra.mxu0 0.0
    %8095 = vmatprep.mubr.f32.mxu0 0.0
    %8096 = vmatmul.mubr.f32.gmra.mrb[0].mxu0 %v6529
    %v8097 = vpop.f32.mrb[0].mxu0
    %v8098 = vadd.f32 %v8029, %v8097
    %v8099 = vpop.f32.mrb[0].mxu0
    %8100 = vmatprep.mubr.f32.mxu0 0.0
    %8101 = vmatmul.mubr.f32.gmra.mrb[0].mxu0 %v6531
    %v8102 = vpop.f32.mrb[0].mxu0
    %v8103 = vadd.f32 %v8029, %v8102
    %v8104 = vpop.f32.mrb[0].mxu0
    %8105 = vdwg.mxu0
    %v8106 = vld [vmem:[%s3857] sm:$0xff]
    %v8107 = vld [vmem:[%s3857 + $0x8] sm:$0xff]
    %v8108 = vld [vmem:[%s3857 + $0x10] sm:$0xff]
    %v8109 = vld [vmem:[%s3857 + $0x18] sm:$0xff]
    %v8110 = vld [vmem:[%s3862] sm:$0x1]
    %v8112 = vlaneseq
    %v8113 = vshrl.u32 %v8112, 7
    %v8114 = vsub.s32 0, %v8113
    %v8115 = vrot.slane %v8110, %v8114
    %8117 = vmatprep.subr.mxu0 0.0
    %8118 = vmatpush1.msra.mxu0 %v8106
    %8119 = vmatprep.subr.mxu0 0.0
    %8120 = vmatpush1.msra.mxu0 %v8107
    %8121 = vmatprep.subr.mxu0 0.0
    %8122 = vmatpush1.msra.mxu0 %v8108
    %8123 = vmatprep.subr.mxu0 0.0
    %8124 = vmatpush1.msra.mxu0 %v8109
    %8125 = vmatprep.subr.mxu0 0.0
    %8126 = vmatpush1.msra.mxu0 0.0
    %8127 = vmatprep.subr.mxu0 0.0
    %8128 = vmatpush1.msra.mxu0 0.0
    %8129 = vmatprep.subr.mxu0 0.0
    %8130 = vmatpush1.msra.mxu0 0.0
    %8131 = vmatprep.subr.mxu0 0.0
    %8132 = vmatpush1.msra.mxu0 0.0
    %8133 = vmatprep.subr.mxu0 0.0
    %8134 = vmatpush1.msra.mxu0 0.0
    %8135 = vmatprep.subr.mxu0 0.0
    %8136 = vmatpush1.msra.mxu0 0.0
    %8137 = vmatprep.subr.mxu0 0.0
    %8138 = vmatpush1.msra.mxu0 0.0
    %8139 = vmatprep.subr.mxu0 0.0
    %8140 = vmatpush1.msra.mxu0 0.0
    %8141 = vmatprep.subr.mxu0 0.0
    %8142 = vmatpush1.msra.mxu0 0.0
    %8143 = vmatprep.subr.mxu0 0.0
    %8144 = vmatpush1.msra.mxu0 0.0
    %8145 = vmatprep.subr.mxu0 0.0
    %8146 = vmatpush1.msra.mxu0 0.0
    %8147 = vmatprep.subr.mxu0 0.0
    %8148 = vmatpush1.msra.mxu0 0.0
    %8149 = vmatprep.subr.mxu0 0.0
    %8150 = vmatpush1.msra.mxu0 0.0
    %8151 = vmatprep.subr.mxu0 0.0
    %8152 = vmatpush1.msra.mxu0 0.0
    %8153 = vmatprep.subr.mxu0 0.0
    %8154 = vmatpush1.msra.mxu0 0.0
    %8155 = vmatprep.subr.mxu0 0.0
    %8156 = vmatpush1.msra.mxu0 0.0
    %8157 = vmatprep.subr.mxu0 0.0
    %8158 = vmatpush1.msra.mxu0 0.0
    %8159 = vmatprep.subr.mxu0 0.0
    %8160 = vmatpush1.msra.mxu0 0.0
    %8161 = vmatprep.subr.mxu0 0.0
    %8162 = vmatpush1.msra.mxu0 0.0
    %8163 = vmatprep.subr.mxu0 0.0
    %8164 = vmatpush1.msra.mxu0 0.0
    %8165 = vmatprep.subr.mxu0 0.0
    %8166 = vmatpush1.msra.mxu0 0.0
    %8167 = vmatprep.subr.mxu0 0.0
    %8168 = vmatpush1.msra.mxu0 0.0
    %8169 = vmatprep.subr.mxu0 0.0
    %8170 = vmatpush1.msra.mxu0 0.0
    %8171 = vmatprep.subr.mxu0 0.0
    %8172 = vmatpush1.msra.mxu0 0.0
    %8173 = vmatprep.subr.mxu0 0.0
    %8174 = vmatpush1.msra.mxu0 0.0
    %8175 = vmatprep.subr.mxu0 0.0
    %8176 = vmatpush1.msra.mxu0 0.0
    %8177 = vmatprep.subr.mxu0 0.0
    %8178 = vmatpush1.msra.mxu0 0.0
    %8179 = vmatprep.subr.mxu0 0.0
    %8180 = vmatpush1.msra.mxu0 0.0
    %8181 = vmatprep.mubr.f32.mxu0 0.0
    %8182 = vmatmul.mubr.f32.gmra.mrb[0].mxu0 %v6529
    %v8183 = vpop.f32.mrb[0].mxu0
    %v8184 = vadd.f32 %v8115, %v8183
    %v8185 = vpop.f32.mrb[0].mxu0
    %8186 = vmatprep.mubr.f32.mxu0 0.0
    %8187 = vmatmul.mubr.f32.gmra.mrb[0].mxu0 %v6531
    %v8188 = vpop.f32.mrb[0].mxu0
    %v8189 = vadd.f32 %v8115, %v8188
    %v8190 = vpop.f32.mrb[0].mxu0
    %8191 = vdwg.mxu0
    %s8192 = scalar_lea.vmem %s69, 112
    %8193 = vst.msk [vmem:[%s8192] sm:$0xff] %vm425, %v8098
    %8194 = vst.msk [vmem:[%s8192 + $0x8] sm:$0x3] %vm2427, %v8103
    %s8195 = scalar_lea.vmem %s71, 112
    %8196 = vst.msk [vmem:[%s8195] sm:$0xff] %vm425, %v8184
    %8197 = vst.msk [vmem:[%s8195 + $0x8] sm:$0x3] %vm2427, %v8189
    %v8199 = vsel %vm425, %v8017, 0
    %v8202 = vsel %vm425, %v8098, 0
    %v8205 = vsel %vm425, %v8103, 0
    %8207 = vmatprep.subr.mxu0 0.0
    %8208 = vmatpush1.xpose.msra.mxu0 %v8202
    %8209 = vmatprep.subr.mxu0 0.0
    %8210 = vmatpush1.xpose.msra.mxu0 %v8205
    %8211 = vmatprep.subr.mxu0 0.0
    %8212 = vmatpush1.xpose.msra.mxu0 0.0
    %8213 = vmatprep.subr.mxu0 0.0
    %8214 = vmatpush1.xpose.msra.mxu0 0.0
    %8215 = vmatprep.subr.mxu0 0.0
    %8216 = vmatpush1.xpose.msra.mxu0 0.0
    %8217 = vmatprep.subr.mxu0 0.0
    %8218 = vmatpush1.xpose.msra.mxu0 0.0
    %8219 = vmatprep.subr.mxu0 0.0
    %8220 = vmatpush1.xpose.msra.mxu0 0.0
    %8221 = vmatprep.subr.mxu0 0.0
    %8222 = vmatpush1.xpose.msra.mxu0 0.0
    %8223 = vmatprep.subr.mxu0 0.0
    %8224 = vmatpush1.xpose.msra.mxu0 0.0
    %8225 = vmatprep.subr.mxu0 0.0
    %8226 = vmatpush1.xpose.msra.mxu0 0.0
    %8227 = vmatprep.subr.mxu0 0.0
    %8228 = vmatpush1.xpose.msra.mxu0 0.0
    %8229 = vmatprep.subr.mxu0 0.0
    %8230 = vmatpush1.xpose.msra.mxu0 0.0
    %8231 = vmatprep.subr.mxu0 0.0
    %8232 = vmatpush1.xpose.msra.mxu0 0.0
    %8233 = vmatprep.subr.mxu0 0.0
    %8234 = vmatpush1.xpose.msra.mxu0 0.0
    %8235 = vmatprep.subr.mxu0 0.0
    %8236 = vmatpush1.xpose.msra.mxu0 0.0
    %8237 = vmatprep.subr.mxu0 0.0
    %8238 = vmatpush1.xpose.msra.mxu0 0.0
    %8239 = vmatprep.subr.mxu0 0.0
    %8240 = vmatpush1.xpose.msra.mxu0 0.0
    %8241 = vmatprep.subr.mxu0 0.0
    %8242 = vmatpush1.xpose.msra.mxu0 0.0
    %8243 = vmatprep.subr.mxu0 0.0
    %8244 = vmatpush1.xpose.msra.mxu0 0.0
    %8245 = vmatprep.subr.mxu0 0.0
    %8246 = vmatpush1.xpose.msra.mxu0 0.0
    %8247 = vmatprep.subr.mxu0 0.0
    %8248 = vmatpush1.xpose.msra.mxu0 0.0
    %8249 = vmatprep.subr.mxu0 0.0
    %8250 = vmatpush1.xpose.msra.mxu0 0.0
    %8251 = vmatprep.subr.mxu0 0.0
    %8252 = vmatpush1.xpose.msra.mxu0 0.0
    %8253 = vmatprep.subr.mxu0 0.0
    %8254 = vmatpush1.xpose.msra.mxu0 0.0
    %8255 = vmatprep.subr.mxu0 0.0
    %8256 = vmatpush1.xpose.msra.mxu0 0.0
    %8257 = vmatprep.subr.mxu0 0.0
    %8258 = vmatpush1.xpose.msra.mxu0 0.0
    %8259 = vmatprep.subr.mxu0 0.0
    %8260 = vmatpush1.xpose.msra.mxu0 0.0
    %8261 = vmatprep.subr.mxu0 0.0
    %8262 = vmatpush1.xpose.msra.mxu0 0.0
    %8263 = vmatprep.subr.mxu0 0.0
    %8264 = vmatpush1.xpose.msra.mxu0 0.0
    %8265 = vmatprep.subr.mxu0 0.0
    %8266 = vmatpush1.xpose.msra.mxu0 0.0
    %8267 = vmatprep.subr.mxu0 0.0
    %8268 = vmatpush1.xpose.msra.mxu0 0.0
    %8269 = vmatprep.subr.mxu0 0.0
    %8270 = vmatpush1.xpose.msra.mxu0 0.0
    %8271 = vmatprep.mubr.f32.mxu0 0.0
    %8272 = vmatmul.mubr.f32.gmra.mrb[0].mxu0 %v8199
    %v8273 = vpop.f32.mrb[0].mxu0
    %v8274 = vadd.f32 %v4456, %v8273
    %v8275 = vpop.f32.mrb[0].mxu0
    %8276 = vdwg.mxu0
    %v8277 = vsel %vm2510, %v8274, -inf
    %8278 = vmax.xlane.f32.xlu0 %v8277
    %v8279 = vpop.xlane.xlu0 %8278
    %v8280 = vsub.f32 %v8274, %v8279
    %v8281 = vmul.f32 %v8280, 1.442695
    %v8282 = vpow.pop %v8281
    %v8283 = vsel %vm2510, %v8282, 0.0
    %8284 = vadd.xlane.f32.xlu0 %v8283
    %v8285 = vpop.xlane.xlu0 %8284
    %v8286 = vrcp.pop %v8285
    %v8287 = vmul.f32 %v8282, %v8286
    %v8289 = vsel %vm2510, %v8287, 0
    %v8292 = vsel %vm2525, %v8189, 0
    %8294 = vmatprep.subr.mxu0 0.0
    %8295 = vmatpush1.msra.mxu0 %v8184
    %8296 = vmatprep.subr.mxu0 0.0
    %8297 = vmatpush1.msra.mxu0 %v8292
    %8298 = vmatprep.subr.mxu0 0.0
    %8299 = vmatpush1.msra.mxu0 0.0
    %8300 = vmatprep.subr.mxu0 0.0
    %8301 = vmatpush1.msra.mxu0 0.0
    %8302 = vmatprep.subr.mxu0 0.0
    %8303 = vmatpush1.msra.mxu0 0.0
    %8304 = vmatprep.subr.mxu0 0.0
    %8305 = vmatpush1.msra.mxu0 0.0
    %8306 = vmatprep.subr.mxu0 0.0
    %8307 = vmatpush1.msra.mxu0 0.0
    %8308 = vmatprep.subr.mxu0 0.0
    %8309 = vmatpush1.msra.mxu0 0.0
    %8310 = vmatprep.subr.mxu0 0.0
    %8311 = vmatpush1.msra.mxu0 0.0
    %8312 = vmatprep.subr.mxu0 0.0
    %8313 = vmatpush1.msra.mxu0 0.0
    %8314 = vmatprep.subr.mxu0 0.0
    %8315 = vmatpush1.msra.mxu0 0.0
    %8316 = vmatprep.subr.mxu0 0.0
    %8317 = vmatpush1.msra.mxu0 0.0
    %8318 = vmatprep.subr.mxu0 0.0
    %8319 = vmatpush1.msra.mxu0 0.0
    %8320 = vmatprep.subr.mxu0 0.0
    %8321 = vmatpush1.msra.mxu0 0.0
    %8322 = vmatprep.subr.mxu0 0.0
    %8323 = vmatpush1.msra.mxu0 0.0
    %8324 = vmatprep.subr.mxu0 0.0
    %8325 = vmatpush1.msra.mxu0 0.0
    %8326 = vmatprep.subr.mxu0 0.0
    %8327 = vmatpush1.msra.mxu0 0.0
    %8328 = vmatprep.subr.mxu0 0.0
    %8329 = vmatpush1.msra.mxu0 0.0
    %8330 = vmatprep.subr.mxu0 0.0
    %8331 = vmatpush1.msra.mxu0 0.0
    %8332 = vmatprep.subr.mxu0 0.0
    %8333 = vmatpush1.msra.mxu0 0.0
    %8334 = vmatprep.subr.mxu0 0.0
    %8335 = vmatpush1.msra.mxu0 0.0
    %8336 = vmatprep.subr.mxu0 0.0
    %8337 = vmatpush1.msra.mxu0 0.0
    %8338 = vmatprep.subr.mxu0 0.0
    %8339 = vmatpush1.msra.mxu0 0.0
    %8340 = vmatprep.subr.mxu0 0.0
    %8341 = vmatpush1.msra.mxu0 0.0
    %8342 = vmatprep.subr.mxu0 0.0
    %8343 = vmatpush1.msra.mxu0 0.0
    %8344 = vmatprep.subr.mxu0 0.0
    %8345 = vmatpush1.msra.mxu0 0.0
    %8346 = vmatprep.subr.mxu0 0.0
    %8347 = vmatpush1.msra.mxu0 0.0
    %8348 = vmatprep.subr.mxu0 0.0
    %8349 = vmatpush1.msra.mxu0 0.0
    %8350 = vmatprep.subr.mxu0 0.0
    %8351 = vmatpush1.msra.mxu0 0.0
    %8352 = vmatprep.subr.mxu0 0.0
    %8353 = vmatpush1.msra.mxu0 0.0
    %8354 = vmatprep.subr.mxu0 0.0
    %8355 = vmatpush1.msra.mxu0 0.0
    %8356 = vmatprep.subr.mxu0 0.0
    %8357 = vmatpush1.msra.mxu0 0.0
    %8358 = vmatprep.mubr.f32.mxu0 0.0
    %8359 = vmatmul.mubr.f32.gmra.mrb[0].mxu0 %v8289
    %v8360 = vpop.f32.mrb[0].mxu0
    %v8361 = vadd.f32 0.0, %v8360
    %v8362 = vpop.f32.mrb[0].mxu0
    %8363 = vdwg.mxu0
    %v8364 = vld [vmem:[%s4117] sm:$0xff]
    %v8366 = vsel %vm425, %v8361, 0
    %8368 = vmatprep.subr.mxu0 0.0
    %8369 = vmatpush1.msra.mxu0 %v8364
    %8370 = vmatprep.subr.mxu0 0.0
    %8371 = vmatpush1.msra.mxu0 0.0
    %8372 = vmatprep.subr.mxu0 0.0
    %8373 = vmatpush1.msra.mxu0 0.0
    %8374 = vmatprep.subr.mxu0 0.0
    %8375 = vmatpush1.msra.mxu0 0.0
    %8376 = vmatprep.subr.mxu0 0.0
    %8377 = vmatpush1.msra.mxu0 0.0
    %8378 = vmatprep.subr.mxu0 0.0
    %8379 = vmatpush1.msra.mxu0 0.0
    %8380 = vmatprep.subr.mxu0 0.0
    %8381 = vmatpush1.msra.mxu0 0.0
    %8382 = vmatprep.subr.mxu0 0.0
    %8383 = vmatpush1.msra.mxu0 0.0
    %8384 = vmatprep.subr.mxu0 0.0
    %8385 = vmatpush1.msra.mxu0 0.0
    %8386 = vmatprep.subr.mxu0 0.0
    %8387 = vmatpush1.msra.mxu0 0.0
    %8388 = vmatprep.subr.mxu0 0.0
    %8389 = vmatpush1.msra.mxu0 0.0
    %8390 = vmatprep.subr.mxu0 0.0
    %8391 = vmatpush1.msra.mxu0 0.0
    %8392 = vmatprep.subr.mxu0 0.0
    %8393 = vmatpush1.msra.mxu0 0.0
    %8394 = vmatprep.subr.mxu0 0.0
    %8395 = vmatpush1.msra.mxu0 0.0
    %8396 = vmatprep.subr.mxu0 0.0
    %8397 = vmatpush1.msra.mxu0 0.0
    %8398 = vmatprep.subr.mxu0 0.0
    %8399 = vmatpush1.msra.mxu0 0.0
    %8400 = vmatprep.subr.mxu0 0.0
    %8401 = vmatpush1.msra.mxu0 0.0
    %8402 = vmatprep.subr.mxu0 0.0
    %8403 = vmatpush1.msra.mxu0 0.0
    %8404 = vmatprep.subr.mxu0 0.0
    %8405 = vmatpush1.msra.mxu0 0.0
    %8406 = vmatprep.subr.mxu0 0.0
    %8407 = vmatpush1.msra.mxu0 0.0
    %8408 = vmatprep.subr.mxu0 0.0
    %8409 = vmatpush1.msra.mxu0 0.0
    %8410 = vmatprep.subr.mxu0 0.0
    %8411 = vmatpush1.msra.mxu0 0.0
    %8412 = vmatprep.subr.mxu0 0.0
    %8413 = vmatpush1.msra.mxu0 0.0
    %8414 = vmatprep.subr.mxu0 0.0
    %8415 = vmatpush1.msra.mxu0 0.0
    %8416 = vmatprep.subr.mxu0 0.0
    %8417 = vmatpush1.msra.mxu0 0.0
    %8418 = vmatprep.subr.mxu0 0.0
    %8419 = vmatpush1.msra.mxu0 0.0
    %8420 = vmatprep.subr.mxu0 0.0
    %8421 = vmatpush1.msra.mxu0 0.0
    %8422 = vmatprep.subr.mxu0 0.0
    %8423 = vmatpush1.msra.mxu0 0.0
    %8424 = vmatprep.subr.mxu0 0.0
    %8425 = vmatpush1.msra.mxu0 0.0
    %8426 = vmatprep.subr.mxu0 0.0
    %8427 = vmatpush1.msra.mxu0 0.0
    %8428 = vmatprep.subr.mxu0 0.0
    %8429 = vmatpush1.msra.mxu0 0.0
    %8430 = vmatprep.subr.mxu0 0.0
    %8431 = vmatpush1.msra.mxu0 0.0
    %8432 = vmatprep.mubr.f32.mxu0 0.0
    %8433 = vmatmul.mubr.f32.gmra.mrb[0].mxu0 %v8366
    %v8434 = vpop.f32.mrb[0].mxu0
    %v8435 = vadd.f32 0.0, %v8434
    %v8436 = vpop.f32.mrb[0].mxu0
    %8437 = vdwg.mxu0
    %v8438 = vadd.f32 %v7938, %v8435
    %8440 = vrot.lane.b32.xlu0 %v8438, 32
    %v8441 = vpop.permute.xlu0 %8440
    %v8443 = vadd.f32 %v6425, %v8441
    %8444 = vrot.lane.b32.xlu0 %v4198, 32
    %v8445 = vpop.permute.xlu0 %8444
    %v8447 = vadd.f32 %v8443, %v8445
    %8449 = vrot.lane.b32.xlu0 %v8447, 96
    %v8450 = vpop.permute.xlu0 %8449
    %v8452 = vsel %vm189, %v8450, 0.0
    %8453 = vadd.xlane.f32.xlu0 %v8452
    %v8454 = vpop.xlane.xlu0 %8453
    %v8455 = vmul.f32 %v8454, %v2139
    %v8456 = vsub.f32 %v8447, %v8455
    %v8457 = vmul.f32 %v8456, %v8456
    %8459 = vrot.lane.b32.xlu0 %v8457, 96
    %v8460 = vpop.permute.xlu0 %8459
    %v8462 = vsel %vm189, %v8460, 0.0
    %8463 = vadd.xlane.f32.xlu0 %v8462
    %v8464 = vpop.xlane.xlu0 %8463
    %v8465 = vmul.f32 %v8464, %v2139
    %v8466 = vadd.f32 %v8465, 1e-05
    %v8467 = vrsqrt.pop %v8466
    %v8468 = vmul.f32 %v8456, %v8467
    %8469 = vrot.lane.b32.xlu0 %v4218, 32
    %v8470 = vpop.permute.xlu0 %8469
    %v8472 = vmul.f32 %v8468, %v8470
    %8473 = vrot.lane.b32.xlu0 %v4225, 32
    %v8474 = vpop.permute.xlu0 %8473
    %v8476 = vadd.f32 %v8472, %v8474
    %8478 = vrot.lane.b32.xlu0 %v8476, 96
    %v8479 = vpop.permute.xlu0 %8478
    %v8480 = vsel %vm189, %v8479, 0
    %8482 = vmatprep.subr.mxu0 0.0
    %8483 = vmatpush1.msra.mxu0 %v150
    %8484 = vmatprep.subr.mxu0 0.0
    %8485 = vmatpush1.msra.mxu0 %v151
    %8486 = vmatprep.subr.mxu0 0.0
    %8487 = vmatpush1.msra.mxu0 %v152
    %8488 = vmatprep.subr.mxu0 0.0
    %8489 = vmatpush1.msra.mxu0 %v153
    %8490 = vmatprep.subr.mxu0 0.0
    %8491 = vmatpush1.msra.mxu0 0.0
    %8492 = vmatprep.subr.mxu0 0.0
    %8493 = vmatpush1.msra.mxu0 0.0
    %8494 = vmatprep.subr.mxu0 0.0
    %8495 = vmatpush1.msra.mxu0 0.0
    %8496 = vmatprep.subr.mxu0 0.0
    %8497 = vmatpush1.msra.mxu0 0.0
    %8498 = vmatprep.subr.mxu0 0.0
    %8499 = vmatpush1.msra.mxu0 0.0
    %8500 = vmatprep.subr.mxu0 0.0
    %8501 = vmatpush1.msra.mxu0 0.0
    %8502 = vmatprep.subr.mxu0 0.0
    %8503 = vmatpush1.msra.mxu0 0.0
    %8504 = vmatprep.subr.mxu0 0.0
    %8505 = vmatpush1.msra.mxu0 0.0
    %8506 = vmatprep.subr.mxu0 0.0
    %8507 = vmatpush1.msra.mxu0 0.0
    %8508 = vmatprep.subr.mxu0 0.0
    %8509 = vmatpush1.msra.mxu0 0.0
    %8510 = vmatprep.subr.mxu0 0.0
    %8511 = vmatpush1.msra.mxu0 0.0
    %8512 = vmatprep.subr.mxu0 0.0
    %8513 = vmatpush1.msra.mxu0 0.0
    %8514 = vmatprep.subr.mxu0 0.0
    %8515 = vmatpush1.msra.mxu0 0.0
    %8516 = vmatprep.subr.mxu0 0.0
    %8517 = vmatpush1.msra.mxu0 0.0
    %8518 = vmatprep.subr.mxu0 0.0
    %8519 = vmatpush1.msra.mxu0 0.0
    %8520 = vmatprep.subr.mxu0 0.0
    %8521 = vmatpush1.msra.mxu0 0.0
    %8522 = vmatprep.subr.mxu0 0.0
    %8523 = vmatpush1.msra.mxu0 0.0
    %8524 = vmatprep.subr.mxu0 0.0
    %8525 = vmatpush1.msra.mxu0 0.0
    %8526 = vmatprep.subr.mxu0 0.0
    %8527 = vmatpush1.msra.mxu0 0.0
    %8528 = vmatprep.subr.mxu0 0.0
    %8529 = vmatpush1.msra.mxu0 0.0
    %8530 = vmatprep.subr.mxu0 0.0
    %8531 = vmatpush1.msra.mxu0 0.0
    %8532 = vmatprep.subr.mxu0 0.0
    %8533 = vmatpush1.msra.mxu0 0.0
    %8534 = vmatprep.subr.mxu0 0.0
    %8535 = vmatpush1.msra.mxu0 0.0
    %8536 = vmatprep.subr.mxu0 0.0
    %8537 = vmatpush1.msra.mxu0 0.0
    %8538 = vmatprep.subr.mxu0 0.0
    %8539 = vmatpush1.msra.mxu0 0.0
    %8540 = vmatprep.subr.mxu0 0.0
    %8541 = vmatpush1.msra.mxu0 0.0
    %8542 = vmatprep.subr.mxu0 0.0
    %8543 = vmatpush1.msra.mxu0 0.0
    %8544 = vmatprep.subr.mxu0 0.0
    %8545 = vmatpush1.msra.mxu0 0.0
    %8546 = vmatprep.mubr.f32.mxu0 0.0
    %8547 = vmatmul.mubr.f32.gmra.mrb[0].mxu0 %v8480
    %v8548 = vpop.f32.mrb[0].mxu0
    %v8549 = vadd.f32 %v4232, %v8548
    %v8550 = vpop.f32.mrb[0].mxu0
    %8551 = vdwg.mxu0
    %v8552 = vmul.f32 %v8549, 0.5
    %v8553 = vmul.f32 %v8549, 0.70710677
    %v8554 = vand.u32 2147483647, %v8553
    %v8555 = vmul.f32 %v8554, 0.3275911
    %v8556 = vadd.f32 %v8555, 1.0
    %v8557 = vrcp.pop %v8556
    %v8558 = vmul.f32 1.0, %v8557
    %v8559 = vmul.f32 %v8558, 1.0614054
    %v8560 = vadd.f32 %v8559, -1.4531521
    %v8561 = vmul.f32 %v8560, %v8558
    %v8562 = vadd.f32 %v8561, 1.4214138
    %v8563 = vmul.f32 %v8562, %v8558
    %v8564 = vadd.f32 %v8563, -0.28449672
    %v8565 = vmul.f32 %v8564, %v8558
    %v8566 = vadd.f32 %v8565, 0.2548296
    %v8567 = vmul.f32 %v8566, %v8558
    %v8568 = vsub.f32 0.0, %v8554
    %v8569 = vmul.f32 %v8568, %v8554
    %v8570 = vmul.f32 %v8569, 1.442695
    %v8571 = vpow.pop %v8570
    %v8572 = vmul.f32 %v8567, %v8571
    %v8573 = vsub.f32 1.0, %v8572
    %vm8574 = vcmp.ge.f32.partialorder %v8553, 0.0
    %v8575 = vsub.f32 0.0, %v8573
    %v8576 = vsel %vm8574, %v8573, %v8575
    %v8577 = vadd.f32 %v8576, 1.0
    %v8578 = vmul.f32 %v8552, %v8577
    %v8580 = vsel %vm4340, %v8578, 0
    %8582 = vmatprep.subr.mxu0 0.0
    %8583 = vmatpush1.msra.mxu0 %v155
    %8584 = vmatprep.subr.mxu0 0.0
    %8585 = vmatpush1.msra.mxu0 %v156
    %8586 = vmatprep.subr.mxu0 0.0
    %8587 = vmatpush1.msra.mxu0 %v157
    %8588 = vmatprep.subr.mxu0 0.0
    %8589 = vmatpush1.msra.mxu0 %v158
    %8590 = vmatprep.subr.mxu0 0.0
    %8591 = vmatpush1.msra.mxu0 %v159
    %8592 = vmatprep.subr.mxu0 0.0
    %8593 = vmatpush1.msra.mxu0 %v160
    %8594 = vmatprep.subr.mxu0 0.0
    %8595 = vmatpush1.msra.mxu0 %v161
    %8596 = vmatprep.subr.mxu0 0.0
    %8597 = vmatpush1.msra.mxu0 %v162
    %8598 = vmatprep.subr.mxu0 0.0
    %8599 = vmatpush1.msra.mxu0 0.0
    %8600 = vmatprep.subr.mxu0 0.0
    %8601 = vmatpush1.msra.mxu0 0.0
    %8602 = vmatprep.subr.mxu0 0.0
    %8603 = vmatpush1.msra.mxu0 0.0
    %8604 = vmatprep.subr.mxu0 0.0
    %8605 = vmatpush1.msra.mxu0 0.0
    %8606 = vmatprep.subr.mxu0 0.0
    %8607 = vmatpush1.msra.mxu0 0.0
    %8608 = vmatprep.subr.mxu0 0.0
    %8609 = vmatpush1.msra.mxu0 0.0
    %8610 = vmatprep.subr.mxu0 0.0
    %8611 = vmatpush1.msra.mxu0 0.0
    %8612 = vmatprep.subr.mxu0 0.0
    %8613 = vmatpush1.msra.mxu0 0.0
    %8614 = vmatprep.subr.mxu0 0.0
    %8615 = vmatpush1.msra.mxu0 0.0
    %8616 = vmatprep.subr.mxu0 0.0
    %8617 = vmatpush1.msra.mxu0 0.0
    %8618 = vmatprep.subr.mxu0 0.0
    %8619 = vmatpush1.msra.mxu0 0.0
    %8620 = vmatprep.subr.mxu0 0.0
    %8621 = vmatpush1.msra.mxu0 0.0
    %8622 = vmatprep.subr.mxu0 0.0
    %8623 = vmatpush1.msra.mxu0 0.0
    %8624 = vmatprep.subr.mxu0 0.0
    %8625 = vmatpush1.msra.mxu0 0.0
    %8626 = vmatprep.subr.mxu0 0.0
    %8627 = vmatpush1.msra.mxu0 0.0
    %8628 = vmatprep.subr.mxu0 0.0
    %8629 = vmatpush1.msra.mxu0 0.0
    %8630 = vmatprep.subr.mxu0 0.0
    %8631 = vmatpush1.msra.mxu0 0.0
    %8632 = vmatprep.subr.mxu0 0.0
    %8633 = vmatpush1.msra.mxu0 0.0
    %8634 = vmatprep.subr.mxu0 0.0
    %8635 = vmatpush1.msra.mxu0 0.0
    %8636 = vmatprep.subr.mxu0 0.0
    %8637 = vmatpush1.msra.mxu0 0.0
    %8638 = vmatprep.subr.mxu0 0.0
    %8639 = vmatpush1.msra.mxu0 0.0
    %8640 = vmatprep.subr.mxu0 0.0
    %8641 = vmatpush1.msra.mxu0 0.0
    %8642 = vmatprep.subr.mxu0 0.0
    %8643 = vmatpush1.msra.mxu0 0.0
    %8644 = vmatprep.subr.mxu0 0.0
    %8645 = vmatpush1.msra.mxu0 0.0
    %8646 = vmatprep.mubr.f32.mxu0 0.0
    %8647 = vmatmul.mubr.f32.gmra.mrb[0].mxu0 %v8580
    %v8648 = vpop.f32.mrb[0].mxu0
    %v8649 = vadd.f32 %v4338, %v8648
    %v8650 = vpop.f32.mrb[0].mxu0
    %8651 = vdwg.mxu0
    %8653 = vrot.lane.b32.xlu0 %v8649, 32
    %v8654 = vpop.permute.xlu0 %8653
    %v8656 = vadd.f32 %v8476, %v8654
    %8658 = vrot.lane.b32.xlu0 %v8656, 96
    %v8659 = vpop.permute.xlu0 %8658
    %v8661 = vsel %vm189, %v8659, 0.0
    %8662 = vadd.xlane.f32.xlu0 %v8661
    %v8663 = vpop.xlane.xlu0 %8662
    %v8664 = vmul.f32 %v8663, %v2139
    %v8665 = vsub.f32 %v8656, %v8664
    %v8666 = vmul.f32 %v8665, %v8665
    %8668 = vrot.lane.b32.xlu0 %v8666, 96
    %v8669 = vpop.permute.xlu0 %8668
    %v8671 = vsel %vm189, %v8669, 0.0
    %8672 = vadd.xlane.f32.xlu0 %v8671
    %v8673 = vpop.xlane.xlu0 %8672
    %v8674 = vmul.f32 %v8673, %v2139
    %v8675 = vadd.f32 %v8674, 1e-05
    %v8676 = vrsqrt.pop %v8675
    %v8677 = vmul.f32 %v8665, %v8676
    %8678 = vrot.lane.b32.xlu0 %v4432, 32
    %v8679 = vpop.permute.xlu0 %8678
    %v8681 = vmul.f32 %v8677, %v8679
    %8682 = vrot.lane.b32.xlu0 %v4439, 32
    %v8683 = vpop.permute.xlu0 %8682
    %v8685 = vadd.f32 %v8681, %v8683
    %vm8686 = vcmask 523520
    %8687 = vst.msk [vmem:[%s63] sm:$0xff] %vm8686, %v8685
    // Predicated region
    $region126: #{decoder_layer_forward.1} parent=1 // pred_check
      _
    $region127: #{decoder_layer_forward.1} parent=1 // pred_check_branch
      %8689 = sbr.rel (0) target = $region129
    $region128: #{decoder_layer_forward.1} parent=1 // pred_region
      _
    $region129: #{decoder_layer_forward.1} parent=1 // pred_fallthru
      _
    // Predicated region
    $region130: #{decoder_layer_forward.1} parent=1 // pred_check
      _
    $region131: #{decoder_layer_forward.1} parent=1 // pred_check_branch
      %8691 = sbr.rel (0) target = $region133
    $region132: #{decoder_layer_forward.1} parent=1 // pred_region
      %s8693 = ssub.s32 1024, 1024
      %8694 = vsyncadd [#allocation3], %s8693
      %s8695 = sshll.u32 [#allocation2], 4
      %s8696 = int_to_ptr.vmem [resolvable:$true] %s8695
      %8701 = dma.vmem_to_hbm [thread:$0]  %s8696, 1024, %s65, [#allocation3], 128, 128, 8
    $region133: #{decoder_layer_forward.1} parent=1 // pred_fallthru
      _
    // Predicated region
    $region134: #{decoder_layer_forward.1} parent=1 // pred_check
      _
    $region135: #{decoder_layer_forward.1} parent=1 // pred_check_branch
      %8703 = sbr.rel (0) target = $region137
    $region136: #{decoder_layer_forward.1} parent=1 // pred_region
      %s8705 = ssub.s32 1024, 1024
      %8706 = vsyncadd [#allocation5], %s8705
      %s8707 = sshll.u32 [#allocation4], 4
      %s8708 = int_to_ptr.vmem [resolvable:$true] %s8707
      %8713 = dma.vmem_to_hbm [thread:$0]  %s8708, 1024, %s67, [#allocation5], 128, 128, 8
    $region137: #{decoder_layer_forward.1} parent=1 // pred_fallthru
      _
    // Predicated region
    $region138: #{decoder_layer_forward.1} parent=1 // pred_check
      _
    $region139: #{decoder_layer_forward.1} parent=1 // pred_check_branch
      %8715 = sbr.rel (0) target = $region141
    $region140: #{decoder_layer_forward.1} parent=1 // pred_region
      _
    $region141: #{decoder_layer_forward.1} parent=1 // pred_fallthru
      _
    // Predicated region
    $region142: #{decoder_layer_forward.1} parent=1 // pred_check
      _
    $region143: #{decoder_layer_forward.1} parent=1 // pred_check_branch
      %8717 = sbr.rel (0) target = $region145
    $region144: #{decoder_layer_forward.1} parent=1 // pred_region
      _
    $region145: #{decoder_layer_forward.1} parent=1 // pred_fallthru
      _
    // Predicated region
    $region146: #{decoder_layer_forward.1} parent=1 // pred_check
      _
    $region147: #{decoder_layer_forward.1} parent=1 // pred_check_branch
      %8719 = sbr.rel (0) target = $region149
    $region148: #{decoder_layer_forward.1} parent=1 // pred_region
      _
    $region149: #{decoder_layer_forward.1} parent=1 // pred_fallthru
      _
    // Predicated region
    $region150: #{decoder_layer_forward.1} parent=1 // pred_check
      _
    $region151: #{decoder_layer_forward.1} parent=1 // pred_check_branch
      %8721 = sbr.rel (0) target = $region153
    $region152: #{decoder_layer_forward.1} parent=1 // pred_region
      %8722 = dma.done [#allocation3], 1024
    $region153: #{decoder_layer_forward.1} parent=1 // pred_fallthru
      _
    // Predicated region
    $region154: #{decoder_layer_forward.1} parent=1 // pred_check
      _
    $region155: #{decoder_layer_forward.1} parent=1 // pred_check_branch
      %8724 = sbr.rel (0) target = $region157
    $region156: #{decoder_layer_forward.1} parent=1 // pred_region
      %8725 = dma.done [#allocation5], 1024
    $region157: #{decoder_layer_forward.1} parent=1 // pred_fallthru
      _
    // Predicated region
    $region158: #{decoder_layer_forward.1} parent=1 // pred_check
      _
    $region159: #{decoder_layer_forward.1} parent=1 // pred_check_branch
      %8727 = sbr.rel (0) target = $region161
    $region160: #{decoder_layer_forward.1} parent=1 // pred_region
      _
    $region161: #{decoder_layer_forward.1} parent=1 // pred_fallthru
      _
    // Predicated region
    $region162: #{decoder_layer_forward.1} parent=1 // pred_check
      _
    $region163: #{decoder_layer_forward.1} parent=1 // pred_check_branch
      %8729 = sbr.rel (0) target = $region165
    $region164: #{decoder_layer_forward.1} parent=1 // pred_region
      _
    $region165: #{decoder_layer_forward.1} parent=1 // pred_fallthru
      _
    %8730 = vsyncpa [#allocation3], 1
    %8731 = vsyncpa [#allocation5], 1

</llo_original>
